<compile_context>
chip_gen: v6e
topology: v6e:2x2x1
jax: 0.10.0
libtpu: 0.0.40
codegen_flags: <defaults>
</compile_context>

<pallas_src>
import jax
import jax.numpy as jnp
from jax import lax
from jax.experimental import pallas as pl
from jax.experimental.pallas import tpu as pltpu


def _round_up(x, m):
    return ((x + m - 1) // m) * m


def _strip_vmem_bytes(th, W, Cin, Cp):
    """Rough per-strip VMEM footprint (intermediates + pipelined output block)."""
    lane = 128
    in_slab = (th + 4) * _round_up(W + 4, 16) * _round_up(Cin, lane) * 2       # bf16 slice
    p1 = (th + 2) * _round_up(W + 2, 16) * _round_up(9 * Cin, lane) * 2        # bf16 patch
    h1_f32 = (th + 2) * _round_up(W + 2, 8) * Cp * 4
    h1_bf16 = (th + 2) * _round_up(W + 2, 16) * Cp * 2
    acc = th * _round_up(W, 8) * Cp * 4
    out_blk = 2 * th * _round_up(W, 8) * Cp * 4                                # double-buffered
    return in_slab + p1 + h1_f32 + h1_bf16 + acc + out_blk


def _pick_tile_h(H, W, Cin, Cp, budget_bytes=12 << 20, max_th=64):
    """Strip height: multiple of 8, <= max_th, fits a per-strip VMEM budget,
    then re-balanced so padding H up to a multiple of TH wastes few rows."""
    th = min(max_th, _round_up(H, 8))
    while th > 8 and _strip_vmem_bytes(th, W, Cin, Cp) > budget_bytes:
        th -= 8
    s = -(-H // th)                      # number of strips
    th = _round_up(-(-H // s), 8)        # balanced strip height (<= th, multiple of 8)
    return th


def _make_double_conv_kernel(H, W, TH, Cin, Cp):
    """Kernel factory closing over static shape params (H is the *real* height)."""
    taps = [(ky, kx) for ky in range(3) for kx in range(3)]

    def kernel(x_ref, w1_ref, b1_ref, w2_ref, b2_ref, o_ref):
        # x_ref : (H_pad+4, W+4, Cin) bf16   full zero-padded image (resident per n)
        # w1_ref: (9*Cin, Cp)          bf16   conv1 weights, im2col-flattened
        # b1_ref: (1, Cp)              f32
        # w2_ref: (9, Cp, Cp)          bf16   conv2 weights, one (Cp, Cp) slab per tap
        # b2_ref: (1, Cp)              f32
        # o_ref : (TH, W, Cp)          f32    lane-dense output strip
        t = pl.program_id(1)
        row0 = pl.multiple_of(t * TH, TH)

        # Input strip + 2-row halo (covers both 3x3 convs).
        x_slab = x_ref[pl.ds(row0, TH + 4), :, :]                  # (TH+4, W+4, Cin) bf16

        # ---- conv1: single im2col contraction, K = 9*Cin, bf16 operands, f32 acc.
        p1 = jnp.concatenate(
            [x_slab[ky:ky + TH + 2, kx:kx + W + 2, :] for ky, kx in taps],
            axis=-1)                                               # (TH+2, W+2, 9*Cin)
        h1 = jnp.einsum("hwk,ko->hwo", p1, w1_ref[...],
                        preferred_element_type=jnp.float32)        # (TH+2, W+2, Cp)
        h1 = jnp.maximum(h1 + b1_ref[...].reshape(1, 1, Cp), 0.0)

        # Zero conv1 activations outside the real image (implements conv2's zero
        # padding and masks the padded-H tail). Slab row i -> image row t*TH-1+i,
        # slab col j -> image col j-1.
        rows = t * TH - 1 + lax.broadcasted_iota(jnp.int32, (TH + 2, W + 2, 1), 0)
        cols = lax.broadcasted_iota(jnp.int32, (TH + 2, W + 2, 1), 1) - 1
        valid = (rows >= 0) & (rows < H) & (cols >= 0) & (cols < W)
        h1 = jnp.where(valid, h1, 0.0)
        h1b = h1.astype(jnp.bfloat16)                              # bf16 operand for conv2

        # ---- conv2: 9 per-tap (K = Cp) matmuls accumulated in f32.
        # Avoids the (TH, W, 9*Cp) concatenated patch (9x less scratch); the
        # extra f32 vector adds are cheap relative to the Cp x Cp matmuls.
        acc = None
        for i, (ky, kx) in enumerate(taps):
            tap = h1b[ky:ky + TH, kx:kx + W, :]                    # (TH, W, Cp)
            part = jnp.einsum("hwc,co->hwo", tap, w2_ref[i],
                              preferred_element_type=jnp.float32)  # (TH, W, Cp) f32
            acc = part if acc is None else acc + part

        out = jnp.maximum(acc + b2_ref[...].reshape(1, 1, Cp), 0.0)
        o_ref[...] = out.astype(o_ref.dtype)                       # lane-dense store

    return kernel


def double_conv(x_nchw, w1, b1, w2, b2):
    """x_nchw: (N, Cin, H, W); w1: (3,3,Cin,Cout); w2: (3,3,Cout,Cout)."""
    N, Cin, H, W = x_nchw.shape
    Cout = w1.shape[-1]
    Cp = _round_up(Cout, 128)                  # lane-dense channel padding
    TH = _pick_tile_h(H, W, Cin, Cp)           # H-strip tile (multiple of 8)
    H_pad = _round_up(H, TH)
    S = H_pad // TH

    # NCHW -> NHWC with a 2-pixel spatial halo; rows padded up to H_pad so every
    # strip is full height. bf16 input halves the resident-image VMEM/DMA cost.
    x = jnp.transpose(x_nchw, (0, 2, 3, 1))
    xp = jnp.pad(x, ((0, 0), (2, H_pad - H + 2), (2, 2), (0, 0))).astype(jnp.bfloat16)

    # Flatten / pad weights once. Padded output channels stay exactly 0 through
    # both convs + ReLU (zero weight columns, zero bias entries).
    w1_flat = jnp.pad(w1.reshape(9 * Cin, Cout),
                      ((0, 0), (0, Cp - Cout))).astype(jnp.bfloat16)
    w2_p = jnp.pad(w2, ((0, 0), (0, 0), (0, Cp - Cout), (0, Cp - Cout)))
    w2_p = w2_p.reshape(9, Cp, Cp).astype(jnp.bfloat16)
    b1_p = jnp.pad(b1, (0, Cp - Cout)).astype(jnp.float32).reshape(1, Cp)
    b2_p = jnp.pad(b2, (0, Cp - Cout)).astype(jnp.float32).reshape(1, Cp)

    flops = 2 * N * H_pad * W * 9 * (Cin * Cp + Cp * Cp)
    bytes_accessed = (xp.size * 2 + w1_flat.size * 2 + w2_p.size * 2
                      + (b1_p.size + b2_p.size) * 4 + N * H_pad * W * Cp * 4)
    cost = pl.CostEstimate(flops=flops, transcendentals=0,
                           bytes_accessed=bytes_accessed)

    # Explicit scoped-VMEM limit from the footprint estimate (with headroom),
    # clamped to stay within every generation's physical VMEM.
    resident_in = 2 * (H_pad + 4) * _round_up(W + 4, 16) * _round_up(Cin, 128) * 2
    weight_bytes = 2 * ((w1_flat.size + w2_p.size) * 2 + (b1_p.size + b2_p.size) * 4)
    est = resident_in + weight_bytes + _strip_vmem_bytes(TH, W, Cin, Cp)
    vmem_limit = int(min(max(2 * est, 32 << 20), 60 << 20))

    out_p = pl.pallas_call(
        _make_double_conv_kernel(H, W, TH, Cin, Cp),
        out_shape=jax.ShapeDtypeStruct((N, H_pad, W, Cp), jnp.float32),
        grid=(N, S),
        in_specs=[
            # Full padded image, resident across the strip axis (index ignores t).
            pl.BlockSpec((None, H_pad + 4, W + 4, Cin), lambda n, t: (n, 0, 0, 0)),
            pl.BlockSpec((9 * Cin, Cp), lambda n, t: (0, 0)),
            pl.BlockSpec((1, Cp), lambda n, t: (0, 0)),
            pl.BlockSpec((9, Cp, Cp), lambda n, t: (0, 0, 0)),
            pl.BlockSpec((1, Cp), lambda n, t: (0, 0)),
        ],
        out_specs=pl.BlockSpec((None, TH, W, Cp), lambda n, t: (n, t, 0, 0)),
        compiler_params=pltpu.CompilerParams(
            dimension_semantics=("parallel", "arbitrary"),
            vmem_limit_bytes=vmem_limit),
        cost_estimate=cost,
    )(xp, w1_flat, b1_p, w2_p, b2_p)

    # Drop H/channel padding, NHWC -> NCHW (PyTorch output convention).
    return jnp.transpose(out_p[:, :H, :, :Cout], (0, 3, 1, 2))


def reference_double_conv(x_nchw, w1, b1, w2, b2):
    """Pure-JAX f32 reference (lax.conv) for correctness checking."""
    w1_oihw = jnp.transpose(w1, (3, 2, 0, 1))
    w2_oihw = jnp.transpose(w2, (3, 2, 0, 1))
    y = lax.conv_general_dilated(
        x_nchw, w1_oihw, window_strides=(1, 1), padding="SAME",
        dimension_numbers=("NCHW", "OIHW", "NCHW"))
    y = jnp.maximum(y + b1.reshape(1, -1, 1, 1), 0.0)
    y = lax.conv_general_dilated(
        y, w2_oihw, window_strides=(1, 1), padding="SAME",
        dimension_numbers=("NCHW", "OIHW", "NCHW"))
    y = jnp.maximum(y + b2.reshape(1, -1, 1, 1), 0.0)
    return y


if __name__ == "__main__":
    N, Cin, Cout, H, W = 2, 4, 8, 16, 16

    key = jax.random.PRNGKey(0)
    kx, kw1, kb1, kw2, kb2 = jax.random.split(key, 5)

    x = jax.random.normal(kx, (N, Cin, H, W), dtype=jnp.float32)
    # Deterministic synthetic parameters (shapes from nn.Conv2d(..., 3, padding=1)).
    w1 = 0.1 * jax.random.normal(kw1, (3, 3, Cin, Cout), dtype=jnp.float32)
    b1 = 0.1 * jax.random.normal(kb1, (Cout,), dtype=jnp.float32)
    w2 = 0.1 * jax.random.normal(kw2, (3, 3, Cout, Cout), dtype=jnp.float32)
    b2 = 0.1 * jax.random.normal(kb2, (Cout,), dtype=jnp.float32)

    out = jax.block_until_ready(double_conv(x, w1, b1, w2, b2))

    ref = reference_double_conv(x, w1, b1, w2, b2)
    assert out.shape == (N, Cout, H, W)
    # bf16 MXU operands (f32 accumulation) -> loosened tolerance vs f32 reference.
    assert jnp.allclose(out, ref, atol=5e-2, rtol=5e-2), "mismatch vs JAX reference"

    print("KERNEL_OK")
</pallas_src>

<mosaic_0001>
module attributes {stable_mosaic.version = 11 : i64} {
  func.func @kernel(%arg0: i32, %arg1: i32, %arg2: memref<1x20x20x4xbf16, #tpu.memory_space<vmem>>, %arg3: memref<36x128xbf16, #tpu.memory_space<vmem>>, %arg4: memref<1x128xf32, #tpu.memory_space<vmem>>, %arg5: memref<9x128x128xbf16, #tpu.memory_space<vmem>>, %arg6: memref<1x128xf32, #tpu.memory_space<vmem>>, %arg7: memref<1x16x16x128xf32, #tpu.memory_space<vmem>>) attributes {dimension_semantics = [#tpu.dimension_semantics<parallel>, #tpu.dimension_semantics<arbitrary>], iteration_bounds = array<i64: 2, 1>, scalar_prefetch = 0 : i64, scratch_operands = 0 : i64, tpu.core_type = #tpu.core_type<tc>, window_params = [{transform_indices = @transform_0, window_bounds = array<i64: 1, 20, 20, 4>}, {pipeline_mode = #tpu.pipeline_mode<synchronous>, transform_indices = @transform_1, window_bounds = array<i64: 36, 128>}, {pipeline_mode = #tpu.pipeline_mode<synchronous>, transform_indices = @transform_2, window_bounds = array<i64: 1, 128>}, {pipeline_mode = #tpu.pipeline_mode<synchronous>, transform_indices = @transform_3, window_bounds = array<i64: 9, 128, 128>}, {pipeline_mode = #tpu.pipeline_mode<synchronous>, transform_indices = @transform_4, window_bounds = array<i64: 1, 128>}, {transform_indices = @transform_5, window_bounds = array<i64: 1, 16, 16, 128>}]} {
    %c16_i32 = arith.constant 16 : i32
    %0 = arith.muli %arg1, %c16_i32 : i32
    %1 = tpu.assume_multiple %0, 16 : i32
    %c0 = arith.constant 0 : index
    %2 = arith.index_cast %1 : i32 to index
    %c0_0 = arith.constant 0 : index
    %c0_1 = arith.constant 0 : index
    %3 = vector.load %arg2[%c0, %2, %c0_0, %c0_1] : memref<1x20x20x4xbf16, #tpu.memory_space<vmem>>, vector<1x20x20x4xbf16>
    %4 = vector.shape_cast %3 : vector<1x20x20x4xbf16> to vector<20x20x4xbf16>
    %5 = vector.extract_strided_slice %4 {offsets = [0, 0, 0], sizes = [18, 18, 4], strides = [1, 1, 1]} : vector<20x20x4xbf16> to vector<18x18x4xbf16>
    %6 = vector.extract_strided_slice %4 {offsets = [0, 1, 0], sizes = [18, 18, 4], strides = [1, 1, 1]} : vector<20x20x4xbf16> to vector<18x18x4xbf16>
    %7 = vector.extract_strided_slice %4 {offsets = [0, 2, 0], sizes = [18, 18, 4], strides = [1, 1, 1]} : vector<20x20x4xbf16> to vector<18x18x4xbf16>
    %8 = vector.extract_strided_slice %4 {offsets = [1, 0, 0], sizes = [18, 18, 4], strides = [1, 1, 1]} : vector<20x20x4xbf16> to vector<18x18x4xbf16>
    %9 = vector.extract_strided_slice %4 {offsets = [1, 1, 0], sizes = [18, 18, 4], strides = [1, 1, 1]} : vector<20x20x4xbf16> to vector<18x18x4xbf16>
    %10 = vector.extract_strided_slice %4 {offsets = [1, 2, 0], sizes = [18, 18, 4], strides = [1, 1, 1]} : vector<20x20x4xbf16> to vector<18x18x4xbf16>
    %11 = vector.extract_strided_slice %4 {offsets = [2, 0, 0], sizes = [18, 18, 4], strides = [1, 1, 1]} : vector<20x20x4xbf16> to vector<18x18x4xbf16>
    %12 = vector.extract_strided_slice %4 {offsets = [2, 1, 0], sizes = [18, 18, 4], strides = [1, 1, 1]} : vector<20x20x4xbf16> to vector<18x18x4xbf16>
    %13 = vector.extract_strided_slice %4 {offsets = [2, 2, 0], sizes = [18, 18, 4], strides = [1, 1, 1]} : vector<20x20x4xbf16> to vector<18x18x4xbf16>
    %14 = tpu.concatenate %5, %6, %7, %8, %9, %10, %11, %12, %13 in 2 : vector<18x18x4xbf16>, vector<18x18x4xbf16>, vector<18x18x4xbf16>, vector<18x18x4xbf16>, vector<18x18x4xbf16>, vector<18x18x4xbf16>, vector<18x18x4xbf16>, vector<18x18x4xbf16>, vector<18x18x4xbf16> -> vector<18x18x36xbf16>
    %c0_2 = arith.constant 0 : index
    %c0_3 = arith.constant 0 : index
    %15 = vector.load %arg3[%c0_2, %c0_3] : memref<36x128xbf16, #tpu.memory_space<vmem>>, vector<36x128xbf16>
    "tpu.trace_start"() <{level = 10 : i32, message = "hwk,ko->hwo"}> : () -> ()
    %cst = arith.constant dense<0.000000e+00> : vector<18x18x128xf32>
    %16 = tpu.matmul %14, %15, %cst {dimension_numbers = #tpu.dot_dimension_numbers<[2], [0], [0, 1], [1], [0, 0, 0, 1, 1, 1], [], []>} : vector<18x18x36xbf16>, vector<36x128xbf16>, vector<18x18x128xf32> -> vector<18x18x128xf32>
    "tpu.trace_stop"() : () -> ()
    %c0_4 = arith.constant 0 : index
    %c0_5 = arith.constant 0 : index
    %17 = vector.load %arg4[%c0_4, %c0_5] : memref<1x128xf32, #tpu.memory_space<vmem>>, vector<1x128xf32>
    %18 = vector.shape_cast %17 : vector<1x128xf32> to vector<1x1x128xf32>
    %19 = vector.broadcast %18 : vector<1x1x128xf32> to vector<18x18x128xf32>
    %20 = arith.addf %16, %19 : vector<18x18x128xf32>
    %cst_6 = arith.constant 0.000000e+00 : f32
    %21 = vector.broadcast %cst_6 : f32 to vector<18x18x128xf32>
    %22 = arith.maximumf %20, %21 : vector<18x18x128xf32>
    %c16_i32_7 = arith.constant 16 : i32
    %23 = arith.muli %arg1, %c16_i32_7 : i32
    %c1_i32 = arith.constant 1 : i32
    %24 = arith.subi %23, %c1_i32 : i32
    %25 = tpu.iota {dimensions = array<i32: 0>} : vector<18x18x1xi32>
    %26 = vector.broadcast %24 : i32 to vector<18x18x1xi32>
    %27 = arith.addi %26, %25 : vector<18x18x1xi32>
    %28 = tpu.iota {dimensions = array<i32: 1>} : vector<18x18x1xi32>
    %c1_i32_8 = arith.constant 1 : i32
    %29 = vector.broadcast %c1_i32_8 : i32 to vector<18x18x1xi32>
    %30 = arith.subi %28, %29 : vector<18x18x1xi32>
    %c0_i32 = arith.constant 0 : i32
    %31 = vector.broadcast %c0_i32 : i32 to vector<18x18x1xi32>
    %32 = arith.cmpi sge, %27, %31 : vector<18x18x1xi32>
    %c16_i32_9 = arith.constant 16 : i32
    %33 = vector.broadcast %c16_i32_9 : i32 to vector<18x18x1xi32>
    %34 = arith.cmpi slt, %27, %33 : vector<18x18x1xi32>
    %35 = arith.andi %32, %34 : vector<18x18x1xi1>
    %c0_i32_10 = arith.constant 0 : i32
    %36 = vector.broadcast %c0_i32_10 : i32 to vector<18x18x1xi32>
    %37 = arith.cmpi sge, %30, %36 : vector<18x18x1xi32>
    %38 = arith.andi %35, %37 : vector<18x18x1xi1>
    %c16_i32_11 = arith.constant 16 : i32
    %39 = vector.broadcast %c16_i32_11 : i32 to vector<18x18x1xi32>
    %40 = arith.cmpi slt, %30, %39 : vector<18x18x1xi32>
    %41 = arith.andi %38, %40 : vector<18x18x1xi1>
    %cst_12 = arith.constant 0.000000e+00 : f32
    %42 = vector.shape_cast %41 : vector<18x18x1xi1> to vector<18x18x1xi1>
    %43 = vector.broadcast %42 : vector<18x18x1xi1> to vector<18x18x128xi1>
    %44 = vector.broadcast %cst_12 : f32 to vector<18x18x128xf32>
    %45 = arith.select %43, %22, %44 : vector<18x18x128xi1>, vector<18x18x128xf32>
    %46 = arith.truncf %45 : vector<18x18x128xf32> to vector<18x18x128xbf16>
    %47 = vector.extract_strided_slice %46 {offsets = [0, 0, 0], sizes = [16, 16, 128], strides = [1, 1, 1]} : vector<18x18x128xbf16> to vector<16x16x128xbf16>
    %c0_13 = arith.constant 0 : index
    %c0_14 = arith.constant 0 : index
    %c0_15 = arith.constant 0 : index
    %48 = vector.load %arg5[%c0_13, %c0_14, %c0_15] : memref<9x128x128xbf16, #tpu.memory_space<vmem>>, vector<1x128x128xbf16>
    %49 = vector.shape_cast %48 : vector<1x128x128xbf16> to vector<128x128xbf16>
    "tpu.trace_start"() <{level = 10 : i32, message = "hwc,co->hwo"}> : () -> ()
    %cst_16 = arith.constant dense<0.000000e+00> : vector<16x16x128xf32>
    %50 = tpu.matmul %47, %49, %cst_16 {dimension_numbers = #tpu.dot_dimension_numbers<[2], [0], [0, 1], [1], [0, 0, 0, 1, 1, 1], [], []>} : vector<16x16x128xbf16>, vector<128x128xbf16>, vector<16x16x128xf32> -> vector<16x16x128xf32>
    "tpu.trace_stop"() : () -> ()
    %51 = vector.extract_strided_slice %46 {offsets = [0, 1, 0], sizes = [16, 16, 128], strides = [1, 1, 1]} : vector<18x18x128xbf16> to vector<16x16x128xbf16>
    %c1 = arith.constant 1 : index
    %c0_17 = arith.constant 0 : index
    %c0_18 = arith.constant 0 : index
    %52 = vector.load %arg5[%c1, %c0_17, %c0_18] : memref<9x128x128xbf16, #tpu.memory_space<vmem>>, vector<1x128x128xbf16>
    %53 = vector.shape_cast %52 : vector<1x128x128xbf16> to vector<128x128xbf16>
    "tpu.trace_start"() <{level = 10 : i32, message = "hwc,co->hwo"}> : () -> ()
    %cst_19 = arith.constant dense<0.000000e+00> : vector<16x16x128xf32>
    %54 = tpu.matmul %51, %53, %cst_19 {dimension_numbers = #tpu.dot_dimension_numbers<[2], [0], [0, 1], [1], [0, 0, 0, 1, 1, 1], [], []>} : vector<16x16x128xbf16>, vector<128x128xbf16>, vector<16x16x128xf32> -> vector<16x16x128xf32>
    "tpu.trace_stop"() : () -> ()
    %55 = arith.addf %50, %54 : vector<16x16x128xf32>
    %56 = vector.extract_strided_slice %46 {offsets = [0, 2, 0], sizes = [16, 16, 128], strides = [1, 1, 1]} : vector<18x18x128xbf16> to vector<16x16x128xbf16>
    %c2 = arith.constant 2 : index
    %c0_20 = arith.constant 0 : index
    %c0_21 = arith.constant 0 : index
    %57 = vector.load %arg5[%c2, %c0_20, %c0_21] : memref<9x128x128xbf16, #tpu.memory_space<vmem>>, vector<1x128x128xbf16>
    %58 = vector.shape_cast %57 : vector<1x128x128xbf16> to vector<128x128xbf16>
    "tpu.trace_start"() <{level = 10 : i32, message = "hwc,co->hwo"}> : () -> ()
    %cst_22 = arith.constant dense<0.000000e+00> : vector<16x16x128xf32>
    %59 = tpu.matmul %56, %58, %cst_22 {dimension_numbers = #tpu.dot_dimension_numbers<[2], [0], [0, 1], [1], [0, 0, 0, 1, 1, 1], [], []>} : vector<16x16x128xbf16>, vector<128x128xbf16>, vector<16x16x128xf32> -> vector<16x16x128xf32>
    "tpu.trace_stop"() : () -> ()
    %60 = arith.addf %55, %59 : vector<16x16x128xf32>
    %61 = vector.extract_strided_slice %46 {offsets = [1, 0, 0], sizes = [16, 16, 128], strides = [1, 1, 1]} : vector<18x18x128xbf16> to vector<16x16x128xbf16>
    %c3 = arith.constant 3 : index
    %c0_23 = arith.constant 0 : index
    %c0_24 = arith.constant 0 : index
    %62 = vector.load %arg5[%c3, %c0_23, %c0_24] : memref<9x128x128xbf16, #tpu.memory_space<vmem>>, vector<1x128x128xbf16>
    %63 = vector.shape_cast %62 : vector<1x128x128xbf16> to vector<128x128xbf16>
    "tpu.trace_start"() <{level = 10 : i32, message = "hwc,co->hwo"}> : () -> ()
    %cst_25 = arith.constant dense<0.000000e+00> : vector<16x16x128xf32>
    %64 = tpu.matmul %61, %63, %cst_25 {dimension_numbers = #tpu.dot_dimension_numbers<[2], [0], [0, 1], [1], [0, 0, 0, 1, 1, 1], [], []>} : vector<16x16x128xbf16>, vector<128x128xbf16>, vector<16x16x128xf32> -> vector<16x16x128xf32>
    "tpu.trace_stop"() : () -> ()
    %65 = arith.addf %60, %64 : vector<16x16x128xf32>
    %66 = vector.extract_strided_slice %46 {offsets = [1, 1, 0], sizes = [16, 16, 128], strides = [1, 1, 1]} : vector<18x18x128xbf16> to vector<16x16x128xbf16>
    %c4 = arith.constant 4 : index
    %c0_26 = arith.constant 0 : index
    %c0_27 = arith.constant 0 : index
    %67 = vector.load %arg5[%c4, %c0_26, %c0_27] : memref<9x128x128xbf16, #tpu.memory_space<vmem>>, vector<1x128x128xbf16>
    %68 = vector.shape_cast %67 : vector<1x128x128xbf16> to vector<128x128xbf16>
    "tpu.trace_start"() <{level = 10 : i32, message = "hwc,co->hwo"}> : () -> ()
    %cst_28 = arith.constant dense<0.000000e+00> : vector<16x16x128xf32>
    %69 = tpu.matmul %66, %68, %cst_28 {dimension_numbers = #tpu.dot_dimension_numbers<[2], [0], [0, 1], [1], [0, 0, 0, 1, 1, 1], [], []>} : vector<16x16x128xbf16>, vector<128x128xbf16>, vector<16x16x128xf32> -> vector<16x16x128xf32>
    "tpu.trace_stop"() : () -> ()
    %70 = arith.addf %65, %69 : vector<16x16x128xf32>
    %71 = vector.extract_strided_slice %46 {offsets = [1, 2, 0], sizes = [16, 16, 128], strides = [1, 1, 1]} : vector<18x18x128xbf16> to vector<16x16x128xbf16>
    %c5 = arith.constant 5 : index
    %c0_29 = arith.constant 0 : index
    %c0_30 = arith.constant 0 : index
    %72 = vector.load %arg5[%c5, %c0_29, %c0_30] : memref<9x128x128xbf16, #tpu.memory_space<vmem>>, vector<1x128x128xbf16>
    %73 = vector.shape_cast %72 : vector<1x128x128xbf16> to vector<128x128xbf16>
    "tpu.trace_start"() <{level = 10 : i32, message = "hwc,co->hwo"}> : () -> ()
    %cst_31 = arith.constant dense<0.000000e+00> : vector<16x16x128xf32>
    %74 = tpu.matmul %71, %73, %cst_31 {dimension_numbers = #tpu.dot_dimension_numbers<[2], [0], [0, 1], [1], [0, 0, 0, 1, 1, 1], [], []>} : vector<16x16x128xbf16>, vector<128x128xbf16>, vector<16x16x128xf32> -> vector<16x16x128xf32>
    "tpu.trace_stop"() : () -> ()
    %75 = arith.addf %70, %74 : vector<16x16x128xf32>
    %76 = vector.extract_strided_slice %46 {offsets = [2, 0, 0], sizes = [16, 16, 128], strides = [1, 1, 1]} : vector<18x18x128xbf16> to vector<16x16x128xbf16>
    %c6 = arith.constant 6 : index
    %c0_32 = arith.constant 0 : index
    %c0_33 = arith.constant 0 : index
    %77 = vector.load %arg5[%c6, %c0_32, %c0_33] : memref<9x128x128xbf16, #tpu.memory_space<vmem>>, vector<1x128x128xbf16>
    %78 = vector.shape_cast %77 : vector<1x128x128xbf16> to vector<128x128xbf16>
    "tpu.trace_start"() <{level = 10 : i32, message = "hwc,co->hwo"}> : () -> ()
    %cst_34 = arith.constant dense<0.000000e+00> : vector<16x16x128xf32>
    %79 = tpu.matmul %76, %78, %cst_34 {dimension_numbers = #tpu.dot_dimension_numbers<[2], [0], [0, 1], [1], [0, 0, 0, 1, 1, 1], [], []>} : vector<16x16x128xbf16>, vector<128x128xbf16>, vector<16x16x128xf32> -> vector<16x16x128xf32>
    "tpu.trace_stop"() : () -> ()
    %80 = arith.addf %75, %79 : vector<16x16x128xf32>
    %81 = vector.extract_strided_slice %46 {offsets = [2, 1, 0], sizes = [16, 16, 128], strides = [1, 1, 1]} : vector<18x18x128xbf16> to vector<16x16x128xbf16>
    %c7 = arith.constant 7 : index
    %c0_35 = arith.constant 0 : index
    %c0_36 = arith.constant 0 : index
    %82 = vector.load %arg5[%c7, %c0_35, %c0_36] : memref<9x128x128xbf16, #tpu.memory_space<vmem>>, vector<1x128x128xbf16>
    %83 = vector.shape_cast %82 : vector<1x128x128xbf16> to vector<128x128xbf16>
    "tpu.trace_start"() <{level = 10 : i32, message = "hwc,co->hwo"}> : () -> ()
    %cst_37 = arith.constant dense<0.000000e+00> : vector<16x16x128xf32>
    %84 = tpu.matmul %81, %83, %cst_37 {dimension_numbers = #tpu.dot_dimension_numbers<[2], [0], [0, 1], [1], [0, 0, 0, 1, 1, 1], [], []>} : vector<16x16x128xbf16>, vector<128x128xbf16>, vector<16x16x128xf32> -> vector<16x16x128xf32>
    "tpu.trace_stop"() : () -> ()
    %85 = arith.addf %80, %84 : vector<16x16x128xf32>
    %86 = vector.extract_strided_slice %46 {offsets = [2, 2, 0], sizes = [16, 16, 128], strides = [1, 1, 1]} : vector<18x18x128xbf16> to vector<16x16x128xbf16>
    %c8 = arith.constant 8 : index
    %c0_38 = arith.constant 0 : index
    %c0_39 = arith.constant 0 : index
    %87 = vector.load %arg5[%c8, %c0_38, %c0_39] : memref<9x128x128xbf16, #tpu.memory_space<vmem>>, vector<1x128x128xbf16>
    %88 = vector.shape_cast %87 : vector<1x128x128xbf16> to vector<128x128xbf16>
    "tpu.trace_start"() <{level = 10 : i32, message = "hwc,co->hwo"}> : () -> ()
    %cst_40 = arith.constant dense<0.000000e+00> : vector<16x16x128xf32>
    %89 = tpu.matmul %86, %88, %cst_40 {dimension_numbers = #tpu.dot_dimension_numbers<[2], [0], [0, 1], [1], [0, 0, 0, 1, 1, 1], [], []>} : vector<16x16x128xbf16>, vector<128x128xbf16>, vector<16x16x128xf32> -> vector<16x16x128xf32>
    "tpu.trace_stop"() : () -> ()
    %90 = arith.addf %85, %89 : vector<16x16x128xf32>
    %c0_41 = arith.constant 0 : index
    %c0_42 = arith.constant 0 : index
    %91 = vector.load %arg6[%c0_41, %c0_42] : memref<1x128xf32, #tpu.memory_space<vmem>>, vector<1x128xf32>
    %92 = vector.shape_cast %91 : vector<1x128xf32> to vector<1x1x128xf32>
    %93 = vector.broadcast %92 : vector<1x1x128xf32> to vector<16x16x128xf32>
    %94 = arith.addf %90, %93 : vector<16x16x128xf32>
    %cst_43 = arith.constant 0.000000e+00 : f32
    %95 = vector.broadcast %cst_43 : f32 to vector<16x16x128xf32>
    %96 = arith.maximumf %94, %95 : vector<16x16x128xf32>
    %c0_44 = arith.constant 0 : index
    %c0_45 = arith.constant 0 : index
    %c0_46 = arith.constant 0 : index
    %c0_47 = arith.constant 0 : index
    %97 = vector.load %arg7[%c0_44, %c0_45, %c0_46, %c0_47] : memref<1x16x16x128xf32, #tpu.memory_space<vmem>>, vector<1x16x16x128xf32>
    %98 = vector.shape_cast %97 : vector<1x16x16x128xf32> to vector<16x16x128xf32>
    %99 = vector.shape_cast %96 : vector<16x16x128xf32> to vector<1x16x16x128xf32>
    tpu.vector_store %arg7[%c0_44, %c0_45, %c0_46, %c0_47], %99 {strides = array<i32>} : memref<1x16x16x128xf32, #tpu.memory_space<vmem>>, vector<1x16x16x128xf32>,
    return
  }
  func.func @transform_0(%arg0: i32, %arg1: i32) -> (i32, i32, i32, i32) {
    %c0_i32 = arith.constant 0 : i32
    %c0_i32_0 = arith.constant 0 : i32
    %c0_i32_1 = arith.constant 0 : i32
    %c0_i32_2 = arith.constant 0 : i32
    return %arg0, %c0_i32, %c0_i32_0, %c0_i32_1 : i32, i32, i32, i32
  }
  func.func @transform_1(%arg0: i32, %arg1: i32) -> (i32, i32) {
    %c0_i32 = arith.constant 0 : i32
    %c0_i32_0 = arith.constant 0 : i32
    %c0_i32_1 = arith.constant 0 : i32
    return %c0_i32, %c0_i32_0 : i32, i32
  }
  func.func @transform_2(%arg0: i32, %arg1: i32) -> (i32, i32) {
    %c0_i32 = arith.constant 0 : i32
    %c0_i32_0 = arith.constant 0 : i32
    %c0_i32_1 = arith.constant 0 : i32
    return %c0_i32, %c0_i32_0 : i32, i32
  }
  func.func @transform_3(%arg0: i32, %arg1: i32) -> (i32, i32, i32) {
    %c0_i32 = arith.constant 0 : i32
    %c0_i32_0 = arith.constant 0 : i32
    %c0_i32_1 = arith.constant 0 : i32
    %c0_i32_2 = arith.constant 0 : i32
    return %c0_i32, %c0_i32_0, %c0_i32_1 : i32, i32, i32
  }
  func.func @transform_4(%arg0: i32, %arg1: i32) -> (i32, i32) {
    %c0_i32 = arith.constant 0 : i32
    %c0_i32_0 = arith.constant 0 : i32
    %c0_i32_1 = arith.constant 0 : i32
    return %c0_i32, %c0_i32_0 : i32, i32
  }
  func.func @transform_5(%arg0: i32, %arg1: i32) -> (i32, i32, i32, i32) {
    %c0_i32 = arith.constant 0 : i32
    %c0_i32_0 = arith.constant 0 : i32
    %c0_i32_1 = arith.constant 0 : i32
    return %arg0, %arg1, %c0_i32, %c0_i32_0 : i32, i32, i32, i32
  }
}

</mosaic_0001>

<llo_original>
// kernel: tpu_custom_call.1
$region0: #{tpu_custom_call.1}
  #allocation0 [shape = 'u32[]', space=smem, size = 0x4, offset = 0x4, fixed_abs, tag = 'smem constant byte address 0x4 - core index']
  #allocation1 [shape = 'u32[144,128]{1,0:T(1,128)}', space=vmem, size = 0x12000, scoped, tag = 'internal scratch']
  %s0 = inlined_call_operand.vmem [shape: bf16[2,20,20,4], index: 0, kind: input, shape index: {}]
  %s1 = inlined_call_operand.vmem [shape: bf16[36,128], index: 1, kind: input, shape index: {}]
  %s2 = inlined_call_operand.vmem [shape: f32[1,128], index: 2, kind: input, shape index: {}]
  %s3 = inlined_call_operand.hbm [shape: bf16[9,128,128], index: 3, kind: input, shape index: {}]
  %s4 = inlined_call_operand.vmem [shape: f32[1,128], index: 4, kind: input, shape index: {}]
  %s5 = inlined_call_operand.hbm [shape: f32[2,16,16,128], index: 5, kind: output, shape index: {}]
  %s6 = sld [smem:[#allocation0]]
  $region57: #{tpu_custom_call.1} parent=0
    _
  %s8 = ssub.s32 1, %s6
  %s9 = scalar_select 0, %s8, %s6
  $region1: #{tpu_custom_call.1} parent=0
    #allocation2 [shape = 'u8[294912]{0}', space=vmem, size = 0x48000, scoped, tag = 'input window, operand 3, single buffered']
    #allocation3 [shape = 's32[2]{0}', space=sflag, size = 0x8, scoped, tag = 'scoped memory for tpu_custom_call.1']
    #allocation4 [shape = 's32[2]{0}', space=sflag, size = 0x8, scoped, tag = 'scoped memory for tpu_custom_call.1']
    #allocation5 [shape = 'u8[262144]{0}', space=vmem, size = 0x40000, scoped, tag = 'output window, operand 0']
    %10 = vsyncpa [#allocation3], 0
    %11 = vsyncpa [#allocation4], 0
    %s12 = scalar_lea.sflag [#allocation4], 1
    %13 = vsyncpa %s12, 0
    loop: start=0, step=1, limit=4
    $region2: #{tpu_custom_call.1} parent=1 // loop_pre_header
      _
    $region3: #{tpu_custom_call.1} parent=1 // loop_header
      %s15 = sphi 0, %s19
      %p16 = scmp.ge.s32.totalorder %s15, 4
      %s22 = sphi 0, %s34
      %s23 = sphi 0, %s30
      %s24 = sphi 0, %s22
      %s25 = sphi 0, %s23
      %s26 = sphi 0, %s24
      %s27 = sphi 0, %s25
      %s37 = sphi 0, %s39
      %s40 = sphi 0, %s37
      %s41 = sphi 0, %s40
      %s57 = sphi 0, %s41
      %s61 = sphi 0, %s61
      %s63 = sphi 0, %s61
      %s64 = sphi 0, %s63
      %s78 = sphi 0, %s64
      %s82 = sphi 0, %s82
      %s84 = sphi 0, %s82
      %s85 = sphi 0, %s84
      %s99 = sphi 0, %s85
      %s103 = sphi 0, %s103
      %s105 = sphi 0, %s103
      %s106 = sphi 0, %s105
      %s120 = sphi 0, %s106
      %s124 = sphi 0, %s124
      %s126 = sphi 0, %s124
      %s127 = sphi 0, %s126
      %s141 = sphi 0, %s127
      %s149 = sphi 0, %s151
      %s152 = sphi 0, %s149
      %s153 = sphi 0, %s152
      %s169 = sphi 0, %s153
    $region4: #{tpu_custom_call.1} parent=1 // loop_header_branch
      %18 = sbr.rel (%p16) target = $region8
    $region5: #{tpu_custom_call.1} parent=1 // loop_body
      %s20 = ssub.s32 %s15, 1
      %s21 = ssub.s32 %s15, 2
      %s28 = sadd.s32 1, %s23
      %p29 = scmp.ge.s32.totalorder %s28, 1
      %s30 = scalar_select %p29, 0, %s28
      %s31 = sadd.s32 1, %s22
      %s32 = scalar_select %p29, %s31, %s22
      %p33 = scmp.ge.s32.totalorder %s32, 2
      %s34 = scalar_select %p33, 0, %s32
      %s35 = ssub.s32 %s22, %s34
      %p36 = scmp.eq.s32.totalorder %s35, 0
      %s38 = sadd.s32 %s37, 1
      %s39 = scalar_select %p36, %s37, %s38
      %p42 = pneg %p36
      %p43 = scmp.eq.s32.totalorder %s15, 1
      %p44 = por %p42, %p43
      %p45 = scmp.ne.s32.totalorder %s37, %s40
      %p46 = scmp.eq.s32.totalorder %s15, 0
      %p47 = por %p45, %p46
      %p48 = scmp.ne.s32.totalorder %s37, %s40
      %p49 = scmp.eq.s32.totalorder %s20, 1
      %p50 = por %p48, %p49
      %p51 = scmp.ne.s32.totalorder %s40, %s41
      %p52 = scmp.eq.s32.totalorder %s20, 0
      %p53 = por %p51, %p52
      %p54 = scmp.ne.s32.totalorder %s40, %s41
      %p55 = scmp.eq.s32.totalorder %s21, 1
      %p56 = por %p54, %p55
      %p58 = scmp.ne.s32.totalorder %s41, %s57
      %p59 = scmp.eq.s32.totalorder %s21, 0
      %p60 = por %p58, %p59
      %s62 = sadd.s32 %s61, 1
      %p65 = scmp.eq.s32.totalorder %s15, 1
      %p66 = scmp.ne.s32.totalorder %s61, %s63
      %p67 = scmp.eq.s32.totalorder %s15, 0
      %p68 = por %p66, %p67
      %p69 = scmp.ne.s32.totalorder %s61, %s63
      %p70 = scmp.eq.s32.totalorder %s20, 1
      %p71 = por %p69, %p70
      %p72 = scmp.ne.s32.totalorder %s63, %s64
      %p73 = scmp.eq.s32.totalorder %s20, 0
      %p74 = por %p72, %p73
      %p75 = scmp.ne.s32.totalorder %s63, %s64
      %p76 = scmp.eq.s32.totalorder %s21, 1
      %p77 = por %p75, %p76
      %p79 = scmp.ne.s32.totalorder %s64, %s78
      %p80 = scmp.eq.s32.totalorder %s21, 0
      %p81 = por %p79, %p80
      %s83 = sadd.s32 %s82, 1
      %p86 = scmp.eq.s32.totalorder %s15, 1
      %p87 = scmp.ne.s32.totalorder %s82, %s84
      %p88 = scmp.eq.s32.totalorder %s15, 0
      %p89 = por %p87, %p88
      %p90 = scmp.ne.s32.totalorder %s82, %s84
      %p91 = scmp.eq.s32.totalorder %s20, 1
      %p92 = por %p90, %p91
      %p93 = scmp.ne.s32.totalorder %s84, %s85
      %p94 = scmp.eq.s32.totalorder %s20, 0
      %p95 = por %p93, %p94
      %p96 = scmp.ne.s32.totalorder %s84, %s85
      %p97 = scmp.eq.s32.totalorder %s21, 1
      %p98 = por %p96, %p97
      %p100 = scmp.ne.s32.totalorder %s85, %s99
      %p101 = scmp.eq.s32.totalorder %s21, 0
      %p102 = por %p100, %p101
      %s104 = sadd.s32 %s103, 1
      %p107 = scmp.eq.s32.totalorder %s15, 1
      %p108 = scmp.ne.s32.totalorder %s103, %s105
      %p109 = scmp.eq.s32.totalorder %s15, 0
      %p110 = por %p108, %p109
      %p111 = scmp.ne.s32.totalorder %s103, %s105
      %p112 = scmp.eq.s32.totalorder %s20, 1
      %p113 = por %p111, %p112
      %p114 = scmp.ne.s32.totalorder %s105, %s106
      %p115 = scmp.eq.s32.totalorder %s20, 0
      %p116 = por %p114, %p115
      %p117 = scmp.ne.s32.totalorder %s105, %s106
      %p118 = scmp.eq.s32.totalorder %s21, 1
      %p119 = por %p117, %p118
      %p121 = scmp.ne.s32.totalorder %s106, %s120
      %p122 = scmp.eq.s32.totalorder %s21, 0
      %p123 = por %p121, %p122
      %s125 = sadd.s32 %s124, 1
      %p128 = scmp.eq.s32.totalorder %s15, 1
      %p129 = scmp.ne.s32.totalorder %s124, %s126
      %p130 = scmp.eq.s32.totalorder %s15, 0
      %p131 = por %p129, %p130
      %p132 = scmp.ne.s32.totalorder %s124, %s126
      %p133 = scmp.eq.s32.totalorder %s20, 1
      %p134 = por %p132, %p133
      %p135 = scmp.ne.s32.totalorder %s126, %s127
      %p136 = scmp.eq.s32.totalorder %s20, 0
      %p137 = por %p135, %p136
      %p138 = scmp.ne.s32.totalorder %s126, %s127
      %p139 = scmp.eq.s32.totalorder %s21, 1
      %p140 = por %p138, %p139
      %p142 = scmp.ne.s32.totalorder %s127, %s141
      %p143 = scmp.eq.s32.totalorder %s21, 0
      %p144 = por %p142, %p143
      %s145 = ssub.s32 %s22, %s34
      %s146 = ssub.s32 %s23, %s30
      %s147 = sor.u32 %s145, %s146
      %p148 = scmp.eq.s32.totalorder %s147, 0
      %s150 = sadd.s32 %s149, 1
      %s151 = scalar_select %p148, %s149, %s150
      %p154 = pneg %p148
      %p155 = scmp.eq.s32.totalorder %s15, 1
      %p156 = por %p154, %p155
      %p157 = scmp.ne.s32.totalorder %s149, %s152
      %p158 = scmp.eq.s32.totalorder %s15, 0
      %p159 = por %p157, %p158
      %p160 = scmp.ne.s32.totalorder %s149, %s152
      %p161 = scmp.eq.s32.totalorder %s20, 1
      %p162 = por %p160, %p161
      %p163 = scmp.ne.s32.totalorder %s152, %s153
      %p164 = scmp.eq.s32.totalorder %s20, 0
      %p165 = por %p163, %p164
      %p166 = scmp.ne.s32.totalorder %s152, %s153
      %p167 = scmp.eq.s32.totalorder %s21, 1
      %p168 = por %p166, %p167
      %p170 = scmp.ne.s32.totalorder %s153, %s169
      %p171 = scmp.eq.s32.totalorder %s21, 0
      %p172 = por %p170, %p171
      %p173 = scmp.le.s32.totalorder 1, %s15
      %p174 = scmp.lt.s32.totalorder %s15, 3
      %p175 = pnand %p173, %p174
      %p176 = pneg %p175
      // Predicated region
      $region9: #{tpu_custom_call.1} parent=5 // pred_check
        _
      $region10: #{tpu_custom_call.1} parent=5 // pred_check_branch
        %178 = sbr.rel (%p175) target = $region12
      $region11: #{tpu_custom_call.1} parent=5 // pred_region
        %s179 = ssub.s32 %s15, 1
        // Predicated region
        $region13: #{tpu_custom_call.1} parent=11 // pred_check
          %p180 = pneg %p74
        $region14: #{tpu_custom_call.1} parent=11 // pred_check_branch
          %182 = sbr.rel (%p180) target = $region16
        $region15: #{tpu_custom_call.1} parent=11 // pred_region
          _
        $region16: #{tpu_custom_call.1} parent=11 // pred_fallthru
          _
        // Predicated region
        $region17: #{tpu_custom_call.1} parent=11 // pred_check
          %p183 = pneg %p95
        $region18: #{tpu_custom_call.1} parent=11 // pred_check_branch
          %185 = sbr.rel (%p183) target = $region20
        $region19: #{tpu_custom_call.1} parent=11 // pred_region
          _
        $region20: #{tpu_custom_call.1} parent=11 // pred_fallthru
          _
        // Predicated region
        $region21: #{tpu_custom_call.1} parent=11 // pred_check
          %p186 = pneg %p116
        $region22: #{tpu_custom_call.1} parent=11 // pred_check_branch
          %188 = sbr.rel (%p186) target = $region24
        $region23: #{tpu_custom_call.1} parent=11 // pred_region
          %s190 = ssub.s32 9216, 9216
          %191 = vsyncadd [#allocation3], %s190
          %s192 = sshll.u32 [#allocation2], 4
          %s193 = int_to_ptr.vmem [resolvable:$true] %s192
          %198 = dma.hbm_to_vmem [thread:$0]  %s3, 9216, %s193, [#allocation3], 64, 64, 4
        $region24: #{tpu_custom_call.1} parent=11 // pred_fallthru
          _
        // Predicated region
        $region25: #{tpu_custom_call.1} parent=11 // pred_check
          %p199 = pneg %p137
        $region26: #{tpu_custom_call.1} parent=11 // pred_check_branch
          %201 = sbr.rel (%p199) target = $region28
        $region27: #{tpu_custom_call.1} parent=11 // pred_region
          _
        $region28: #{tpu_custom_call.1} parent=11 // pred_fallthru
          _
      $region12: #{tpu_custom_call.1} parent=5 // pred_fallthru
        _
      %p202 = scmp.lt.s32.totalorder %s15, 2
      // Predicated region
      $region29: #{tpu_custom_call.1} parent=5 // pred_check
        %p203 = pneg %p202
      $region30: #{tpu_custom_call.1} parent=5 // pred_check_branch
        %205 = sbr.rel (%p203) target = $region32
      $region31: #{tpu_custom_call.1} parent=5 // pred_region
        // Predicated region
        $region33: #{tpu_custom_call.1} parent=31 // pred_check
          %p206 = pneg %p47
        $region34: #{tpu_custom_call.1} parent=31 // pred_check_branch
          %208 = sbr.rel (%p206) target = $region36
        $region35: #{tpu_custom_call.1} parent=31 // pred_region
          %p209 = scmp.lt.s32.totalorder %s22, 1
          %s210 = scalar_select %p209, %s22, 1
          %s211 = smul.addr %s210, 60
          %s212 = smul.addr %s211, 4
          %s213 = scalar_lea.vmem %s0, %s212
        $region36: #{tpu_custom_call.1} parent=31 // pred_fallthru
          _
      $region32: #{tpu_custom_call.1} parent=5 // pred_fallthru
        _
      %p214 = scmp.le.s32.totalorder 1, %s15
      %p215 = scmp.lt.s32.totalorder %s15, 3
      %p216 = pnand %p214, %p215
      %p217 = pneg %p216
      // Predicated region
      $region37: #{tpu_custom_call.1} parent=5 // pred_check
        _
      $region38: #{tpu_custom_call.1} parent=5 // pred_check_branch
        %219 = sbr.rel (%p216) target = $region40
      $region39: #{tpu_custom_call.1} parent=5 // pred_region
        %s220 = ssub.s32 %s15, 1
        // Predicated region
        $region41: #{tpu_custom_call.1} parent=39 // pred_check
          %p221 = pneg %p116
        $region42: #{tpu_custom_call.1} parent=39 // pred_check_branch
          %223 = sbr.rel (%p221) target = $region44
        $region43: #{tpu_custom_call.1} parent=39 // pred_region
          %224 = dma.done [#allocation3], 9216
        $region44: #{tpu_custom_call.1} parent=39 // pred_fallthru
          _
        %p225 = scmp.lt.s32.totalorder %s24, 1
        %s226 = scalar_select %p225, %s24, 1
        %s227 = smul.addr %s226, 60
        %s228 = smul.addr %s227, 4
        %s229 = scalar_lea.vmem %s0, %s228
        %p230 = pneg %p53
        %p231 = pneg %p50
        %p232 = pneg %p74
        %p233 = pneg %p71
        %p234 = pneg %p95
        %p235 = pneg %p92
        %p236 = pneg %p116
        %p237 = pneg %p113
        %p238 = pneg %p137
        %p239 = pneg %p134
        %p240 = pneg %p165
        %p241 = pneg %p162
        %s242 = sand.u32 %s152, 1
        %s243 = scalar_lea.sflag [#allocation4], %s242
        %s244 = sand.u32 %s152, 1
        %s245 = smul.addr %s244, 256
        %s246 = scalar_lea.vmem [#allocation5], %s245
        %p247 = scmp.lt.s32.totalorder %s24, 1
        %s248 = scalar_select %p247, %s24, 1
        %s249 = smul.addr %s248, 60
        %s250 = smul.addr %s249, 4
        %s251 = scalar_lea.vmem %s0, %s250
        %s252 = smul.u32 16, %s25
        %s254 = smul.u32 %s25, 16
        %s255 = smul.u32 %s254, 3
        %s256 = smul.addr %s255, 4
        %s257 = scalar_lea.vmem %s251, %s256
        %v258 = vld [vmem:[%s257] sm:$0xf]
        %v259 = vld [vmem:[%s257 + $0x4] sm:$0xf]
        %v260 = vld [vmem:[%s257 + $0x8] sm:$0x3]
        %v261 = vld [vmem:[%s257 + $0xc] sm:$0xf]
        %v262 = vld [vmem:[%s257 + $0x10] sm:$0xf]
        %v263 = vld [vmem:[%s257 + $0x14] sm:$0x3]
        %v264 = vld [vmem:[%s257 + $0x18] sm:$0xf]
        %v265 = vld [vmem:[%s257 + $0x1c] sm:$0xf]
        %v266 = vld [vmem:[%s257 + $0x20] sm:$0x3]
        %v267 = vld [vmem:[%s257 + $0x24] sm:$0xf]
        %v268 = vld [vmem:[%s257 + $0x28] sm:$0xf]
        %v269 = vld [vmem:[%s257 + $0x2c] sm:$0x3]
        %v270 = vld [vmem:[%s257 + $0x30] sm:$0xf]
        %v271 = vld [vmem:[%s257 + $0x34] sm:$0xf]
        %v272 = vld [vmem:[%s257 + $0x38] sm:$0x3]
        %v273 = vld [vmem:[%s257 + $0x3c] sm:$0xf]
        %v274 = vld [vmem:[%s257 + $0x40] sm:$0xf]
        %v275 = vld [vmem:[%s257 + $0x44] sm:$0x3]
        %v276 = vld [vmem:[%s257 + $0x48] sm:$0xf]
        %v277 = vld [vmem:[%s257 + $0x4c] sm:$0xf]
        %v278 = vld [vmem:[%s257 + $0x50] sm:$0x3]
        %v279 = vld [vmem:[%s257 + $0x54] sm:$0xf]
        %v280 = vld [vmem:[%s257 + $0x58] sm:$0xf]
        %v281 = vld [vmem:[%s257 + $0x5c] sm:$0x3]
        %v282 = vld [vmem:[%s257 + $0x60] sm:$0xf]
        %v283 = vld [vmem:[%s257 + $0x64] sm:$0xf]
        %v284 = vld [vmem:[%s257 + $0x68] sm:$0x3]
        %v285 = vld [vmem:[%s257 + $0x6c] sm:$0xf]
        %v286 = vld [vmem:[%s257 + $0x70] sm:$0xf]
        %v287 = vld [vmem:[%s257 + $0x74] sm:$0x3]
        %v288 = vld [vmem:[%s257 + $0x78] sm:$0xf]
        %v289 = vld [vmem:[%s257 + $0x7c] sm:$0xf]
        %v290 = vld [vmem:[%s257 + $0x80] sm:$0x3]
        %v291 = vld [vmem:[%s257 + $0x84] sm:$0xf]
        %v292 = vld [vmem:[%s257 + $0x88] sm:$0xf]
        %v293 = vld [vmem:[%s257 + $0x8c] sm:$0x3]
        %v294 = vld [vmem:[%s257 + $0x90] sm:$0xf]
        %v295 = vld [vmem:[%s257 + $0x94] sm:$0xf]
        %v296 = vld [vmem:[%s257 + $0x98] sm:$0x3]
        %v297 = vld [vmem:[%s257 + $0x9c] sm:$0xf]
        %v298 = vld [vmem:[%s257 + $0xa0] sm:$0xf]
        %v299 = vld [vmem:[%s257 + $0xa4] sm:$0x3]
        %v300 = vld [vmem:[%s257 + $0xa8] sm:$0xf]
        %v301 = vld [vmem:[%s257 + $0xac] sm:$0xf]
        %v302 = vld [vmem:[%s257 + $0xb0] sm:$0x3]
        %v303 = vld [vmem:[%s257 + $0xb4] sm:$0xf]
        %v304 = vld [vmem:[%s257 + $0xb8] sm:$0xf]
        %v305 = vld [vmem:[%s257 + $0xbc] sm:$0x3]
        %v306 = vld [vmem:[%s257 + $0xc0] sm:$0xf]
        %v307 = vld [vmem:[%s257 + $0xc4] sm:$0xf]
        %v308 = vld [vmem:[%s257 + $0xc8] sm:$0x3]
        %v309 = vld [vmem:[%s257 + $0xcc] sm:$0xf]
        %v310 = vld [vmem:[%s257 + $0xd0] sm:$0xf]
        %v311 = vld [vmem:[%s257 + $0xd4] sm:$0x3]
        %v312 = vld [vmem:[%s257 + $0xd8] sm:$0xf]
        %v313 = vld [vmem:[%s257 + $0xdc] sm:$0xf]
        %v314 = vld [vmem:[%s257 + $0xe0] sm:$0x3]
        %v315 = vld [vmem:[%s257 + $0xe4] sm:$0xf]
        %v316 = vld [vmem:[%s257 + $0xe8] sm:$0xf]
        %v317 = vld [vmem:[%s257 + $0xec] sm:$0x3]
        %v372 = vunpack.c.l.b16 %v258
        %v373 = vunpack.c.l.b16 %v259
        %v374 = vunpack.c.l.b16 %v260
        %v375 = vunpack.c.l.b16 %v261
        %v376 = vunpack.c.l.b16 %v262
        %v377 = vunpack.c.l.b16 %v263
        %v378 = vunpack.c.l.b16 %v264
        %v379 = vunpack.c.l.b16 %v265
        %v380 = vunpack.c.l.b16 %v266
        %v381 = vunpack.c.l.b16 %v267
        %v382 = vunpack.c.l.b16 %v268
        %v383 = vunpack.c.l.b16 %v269
        %v384 = vunpack.c.l.b16 %v270
        %v385 = vunpack.c.l.b16 %v271
        %v386 = vunpack.c.l.b16 %v272
        %v387 = vunpack.c.l.b16 %v273
        %v388 = vunpack.c.l.b16 %v274
        %v389 = vunpack.c.l.b16 %v275
        %v390 = vunpack.c.l.b16 %v276
        %v391 = vunpack.c.l.b16 %v277
        %v392 = vunpack.c.l.b16 %v278
        %v393 = vunpack.c.l.b16 %v279
        %v394 = vunpack.c.l.b16 %v280
        %v395 = vunpack.c.l.b16 %v281
        %v396 = vunpack.c.l.b16 %v282
        %v397 = vunpack.c.l.b16 %v283
        %v398 = vunpack.c.l.b16 %v284
        %v399 = vunpack.c.l.b16 %v285
        %v400 = vunpack.c.l.b16 %v286
        %v401 = vunpack.c.l.b16 %v287
        %v402 = vunpack.c.l.b16 %v288
        %v403 = vunpack.c.l.b16 %v289
        %v404 = vunpack.c.l.b16 %v290
        %v405 = vunpack.c.l.b16 %v291
        %v406 = vunpack.c.l.b16 %v292
        %v407 = vunpack.c.l.b16 %v293
        %v408 = vunpack.c.l.b16 %v294
        %v409 = vunpack.c.l.b16 %v295
        %v410 = vunpack.c.l.b16 %v296
        %v411 = vunpack.c.l.b16 %v297
        %v412 = vunpack.c.l.b16 %v298
        %v413 = vunpack.c.l.b16 %v299
        %v414 = vunpack.c.l.b16 %v300
        %v415 = vunpack.c.l.b16 %v301
        %v416 = vunpack.c.l.b16 %v302
        %v417 = vunpack.c.l.b16 %v303
        %v418 = vunpack.c.l.b16 %v304
        %v419 = vunpack.c.l.b16 %v305
        %v420 = vunpack.c.l.b16 %v306
        %v421 = vunpack.c.l.b16 %v307
        %v422 = vunpack.c.l.b16 %v308
        %v423 = vunpack.c.l.b16 %v309
        %v424 = vunpack.c.l.b16 %v310
        %v425 = vunpack.c.l.b16 %v311
        %v426 = vpack.c.b16 %v373, %v372
        %v427 = vpack.c.b16 %v374, %v374
        %v428 = vpack.c.b16 %v376, %v375
        %v429 = vpack.c.b16 %v377, %v377
        %v430 = vpack.c.b16 %v379, %v378
        %v431 = vpack.c.b16 %v380, %v380
        %v432 = vpack.c.b16 %v382, %v381
        %v433 = vpack.c.b16 %v383, %v383
        %v434 = vpack.c.b16 %v385, %v384
        %v435 = vpack.c.b16 %v386, %v386
        %v436 = vpack.c.b16 %v388, %v387
        %v437 = vpack.c.b16 %v389, %v389
        %v438 = vpack.c.b16 %v391, %v390
        %v439 = vpack.c.b16 %v392, %v392
        %v440 = vpack.c.b16 %v394, %v393
        %v441 = vpack.c.b16 %v395, %v395
        %v442 = vpack.c.b16 %v397, %v396
        %v443 = vpack.c.b16 %v398, %v398
        %v444 = vpack.c.b16 %v400, %v399
        %v445 = vpack.c.b16 %v401, %v401
        %v446 = vpack.c.b16 %v403, %v402
        %v447 = vpack.c.b16 %v404, %v404
        %v448 = vpack.c.b16 %v406, %v405
        %v449 = vpack.c.b16 %v407, %v407
        %v450 = vpack.c.b16 %v409, %v408
        %v451 = vpack.c.b16 %v410, %v410
        %v452 = vpack.c.b16 %v412, %v411
        %v453 = vpack.c.b16 %v413, %v413
        %v454 = vpack.c.b16 %v415, %v414
        %v455 = vpack.c.b16 %v416, %v416
        %v456 = vpack.c.b16 %v418, %v417
        %v457 = vpack.c.b16 %v419, %v419
        %v458 = vpack.c.b16 %v421, %v420
        %v459 = vpack.c.b16 %v422, %v422
        %v460 = vpack.c.b16 %v424, %v423
        %v461 = vpack.c.b16 %v425, %v425
        %vm462 = vsmask.f32 7424
        %v464 = vshrl.u32 %v426, 16
        %v466 = vshll.u32 %v426, 16
        %v468 = vrot.slane %v466, 1
        %v469 = vor.u32 %v464, %v468
        %v471 = vshll.u32 %v427, 16
        %v473 = vrot.slane %v471, 1
        %v474 = vsel %vm462, %v469, %v473
        %v475 = vshrl.u32 %v427, 16
        %v477 = vor.u32 %v475, %v473
        %v479 = vshrl.u32 %v428, 16
        %v481 = vshll.u32 %v428, 16
        %v483 = vrot.slane %v481, 1
        %v484 = vor.u32 %v479, %v483
        %v486 = vshll.u32 %v429, 16
        %v488 = vrot.slane %v486, 1
        %v489 = vsel %vm462, %v484, %v488
        %v490 = vshrl.u32 %v429, 16
        %v492 = vor.u32 %v490, %v488
        %v494 = vshrl.u32 %v430, 16
        %v496 = vshll.u32 %v430, 16
        %v498 = vrot.slane %v496, 1
        %v499 = vor.u32 %v494, %v498
        %v501 = vshll.u32 %v431, 16
        %v503 = vrot.slane %v501, 1
        %v504 = vsel %vm462, %v499, %v503
        %v505 = vshrl.u32 %v431, 16
        %v507 = vor.u32 %v505, %v503
        %v509 = vshrl.u32 %v432, 16
        %v511 = vshll.u32 %v432, 16
        %v513 = vrot.slane %v511, 1
        %v514 = vor.u32 %v509, %v513
        %v516 = vshll.u32 %v433, 16
        %v518 = vrot.slane %v516, 1
        %v519 = vsel %vm462, %v514, %v518
        %v520 = vshrl.u32 %v433, 16
        %v522 = vor.u32 %v520, %v518
        %v524 = vshrl.u32 %v434, 16
        %v526 = vshll.u32 %v434, 16
        %v528 = vrot.slane %v526, 1
        %v529 = vor.u32 %v524, %v528
        %v531 = vshll.u32 %v435, 16
        %v533 = vrot.slane %v531, 1
        %v534 = vsel %vm462, %v529, %v533
        %v535 = vshrl.u32 %v435, 16
        %v537 = vor.u32 %v535, %v533
        %v539 = vshrl.u32 %v436, 16
        %v541 = vshll.u32 %v436, 16
        %v543 = vrot.slane %v541, 1
        %v544 = vor.u32 %v539, %v543
        %v546 = vshll.u32 %v437, 16
        %v548 = vrot.slane %v546, 1
        %v549 = vsel %vm462, %v544, %v548
        %v550 = vshrl.u32 %v437, 16
        %v552 = vor.u32 %v550, %v548
        %v554 = vshrl.u32 %v438, 16
        %v556 = vshll.u32 %v438, 16
        %v558 = vrot.slane %v556, 1
        %v559 = vor.u32 %v554, %v558
        %v561 = vshll.u32 %v439, 16
        %v563 = vrot.slane %v561, 1
        %v564 = vsel %vm462, %v559, %v563
        %v565 = vshrl.u32 %v439, 16
        %v567 = vor.u32 %v565, %v563
        %v569 = vshrl.u32 %v440, 16
        %v571 = vshll.u32 %v440, 16
        %v573 = vrot.slane %v571, 1
        %v574 = vor.u32 %v569, %v573
        %v576 = vshll.u32 %v441, 16
        %v578 = vrot.slane %v576, 1
        %v579 = vsel %vm462, %v574, %v578
        %v580 = vshrl.u32 %v441, 16
        %v582 = vor.u32 %v580, %v578
        %v584 = vshrl.u32 %v442, 16
        %v586 = vshll.u32 %v442, 16
        %v588 = vrot.slane %v586, 1
        %v589 = vor.u32 %v584, %v588
        %v591 = vshll.u32 %v443, 16
        %v593 = vrot.slane %v591, 1
        %v594 = vsel %vm462, %v589, %v593
        %v595 = vshrl.u32 %v443, 16
        %v597 = vor.u32 %v595, %v593
        %v599 = vshrl.u32 %v444, 16
        %v601 = vshll.u32 %v444, 16
        %v603 = vrot.slane %v601, 1
        %v604 = vor.u32 %v599, %v603
        %v606 = vshll.u32 %v445, 16
        %v608 = vrot.slane %v606, 1
        %v609 = vsel %vm462, %v604, %v608
        %v610 = vshrl.u32 %v445, 16
        %v612 = vor.u32 %v610, %v608
        %v614 = vshrl.u32 %v446, 16
        %v616 = vshll.u32 %v446, 16
        %v618 = vrot.slane %v616, 1
        %v619 = vor.u32 %v614, %v618
        %v621 = vshll.u32 %v447, 16
        %v623 = vrot.slane %v621, 1
        %v624 = vsel %vm462, %v619, %v623
        %v625 = vshrl.u32 %v447, 16
        %v627 = vor.u32 %v625, %v623
        %v629 = vshrl.u32 %v448, 16
        %v631 = vshll.u32 %v448, 16
        %v633 = vrot.slane %v631, 1
        %v634 = vor.u32 %v629, %v633
        %v636 = vshll.u32 %v449, 16
        %v638 = vrot.slane %v636, 1
        %v639 = vsel %vm462, %v634, %v638
        %v640 = vshrl.u32 %v449, 16
        %v642 = vor.u32 %v640, %v638
        %v644 = vshrl.u32 %v450, 16
        %v646 = vshll.u32 %v450, 16
        %v648 = vrot.slane %v646, 1
        %v649 = vor.u32 %v644, %v648
        %v651 = vshll.u32 %v451, 16
        %v653 = vrot.slane %v651, 1
        %v654 = vsel %vm462, %v649, %v653
        %v655 = vshrl.u32 %v451, 16
        %v657 = vor.u32 %v655, %v653
        %v659 = vshrl.u32 %v452, 16
        %v661 = vshll.u32 %v452, 16
        %v663 = vrot.slane %v661, 1
        %v664 = vor.u32 %v659, %v663
        %v666 = vshll.u32 %v453, 16
        %v668 = vrot.slane %v666, 1
        %v669 = vsel %vm462, %v664, %v668
        %v670 = vshrl.u32 %v453, 16
        %v672 = vor.u32 %v670, %v668
        %v674 = vshrl.u32 %v454, 16
        %v676 = vshll.u32 %v454, 16
        %v678 = vrot.slane %v676, 1
        %v679 = vor.u32 %v674, %v678
        %v681 = vshll.u32 %v455, 16
        %v683 = vrot.slane %v681, 1
        %v684 = vsel %vm462, %v679, %v683
        %v685 = vshrl.u32 %v455, 16
        %v687 = vor.u32 %v685, %v683
        %v689 = vshrl.u32 %v456, 16
        %v691 = vshll.u32 %v456, 16
        %v693 = vrot.slane %v691, 1
        %v694 = vor.u32 %v689, %v693
        %v696 = vshll.u32 %v457, 16
        %v698 = vrot.slane %v696, 1
        %v699 = vsel %vm462, %v694, %v698
        %v700 = vshrl.u32 %v457, 16
        %v702 = vor.u32 %v700, %v698
        %v704 = vshrl.u32 %v458, 16
        %v706 = vshll.u32 %v458, 16
        %v708 = vrot.slane %v706, 1
        %v709 = vor.u32 %v704, %v708
        %v711 = vshll.u32 %v459, 16
        %v713 = vrot.slane %v711, 1
        %v714 = vsel %vm462, %v709, %v713
        %v715 = vshrl.u32 %v459, 16
        %v717 = vor.u32 %v715, %v713
        %v719 = vshrl.u32 %v460, 16
        %v721 = vshll.u32 %v460, 16
        %v723 = vrot.slane %v721, 1
        %v724 = vor.u32 %v719, %v723
        %v726 = vshll.u32 %v461, 16
        %v728 = vrot.slane %v726, 1
        %v729 = vsel %vm462, %v724, %v728
        %v730 = vshrl.u32 %v461, 16
        %v732 = vor.u32 %v730, %v728
        %733 = vrot.lane.b32.xlu0 %v474, 4
        %v734 = vpop.permute.xlu0 %733
        %735 = vrot.lane.b32.xlu0 %v477, 4
        %v736 = vpop.permute.xlu0 %735
        %737 = vrot.lane.b32.xlu0 %v489, 4
        %v738 = vpop.permute.xlu0 %737
        %739 = vrot.lane.b32.xlu0 %v492, 4
        %v740 = vpop.permute.xlu0 %739
        %741 = vrot.lane.b32.xlu0 %v504, 4
        %v742 = vpop.permute.xlu0 %741
        %743 = vrot.lane.b32.xlu0 %v507, 4
        %v744 = vpop.permute.xlu0 %743
        %745 = vrot.lane.b32.xlu0 %v519, 4
        %v746 = vpop.permute.xlu0 %745
        %747 = vrot.lane.b32.xlu0 %v522, 4
        %v748 = vpop.permute.xlu0 %747
        %749 = vrot.lane.b32.xlu0 %v534, 4
        %v750 = vpop.permute.xlu0 %749
        %751 = vrot.lane.b32.xlu0 %v537, 4
        %v752 = vpop.permute.xlu0 %751
        %753 = vrot.lane.b32.xlu0 %v549, 4
        %v754 = vpop.permute.xlu0 %753
        %755 = vrot.lane.b32.xlu0 %v552, 4
        %v756 = vpop.permute.xlu0 %755
        %757 = vrot.lane.b32.xlu0 %v564, 4
        %v758 = vpop.permute.xlu0 %757
        %759 = vrot.lane.b32.xlu0 %v567, 4
        %v760 = vpop.permute.xlu0 %759
        %761 = vrot.lane.b32.xlu0 %v579, 4
        %v762 = vpop.permute.xlu0 %761
        %763 = vrot.lane.b32.xlu0 %v582, 4
        %v764 = vpop.permute.xlu0 %763
        %765 = vrot.lane.b32.xlu0 %v594, 4
        %v766 = vpop.permute.xlu0 %765
        %767 = vrot.lane.b32.xlu0 %v597, 4
        %v768 = vpop.permute.xlu0 %767
        %769 = vrot.lane.b32.xlu0 %v609, 4
        %v770 = vpop.permute.xlu0 %769
        %771 = vrot.lane.b32.xlu0 %v612, 4
        %v772 = vpop.permute.xlu0 %771
        %773 = vrot.lane.b32.xlu0 %v624, 4
        %v774 = vpop.permute.xlu0 %773
        %775 = vrot.lane.b32.xlu0 %v627, 4
        %v776 = vpop.permute.xlu0 %775
        %777 = vrot.lane.b32.xlu0 %v639, 4
        %v778 = vpop.permute.xlu0 %777
        %779 = vrot.lane.b32.xlu0 %v642, 4
        %v780 = vpop.permute.xlu0 %779
        %781 = vrot.lane.b32.xlu0 %v654, 4
        %v782 = vpop.permute.xlu0 %781
        %783 = vrot.lane.b32.xlu0 %v657, 4
        %v784 = vpop.permute.xlu0 %783
        %785 = vrot.lane.b32.xlu0 %v669, 4
        %v786 = vpop.permute.xlu0 %785
        %787 = vrot.lane.b32.xlu0 %v672, 4
        %v788 = vpop.permute.xlu0 %787
        %789 = vrot.lane.b32.xlu0 %v684, 4
        %v790 = vpop.permute.xlu0 %789
        %791 = vrot.lane.b32.xlu0 %v687, 4
        %v792 = vpop.permute.xlu0 %791
        %793 = vrot.lane.b32.xlu0 %v699, 4
        %v794 = vpop.permute.xlu0 %793
        %795 = vrot.lane.b32.xlu0 %v702, 4
        %v796 = vpop.permute.xlu0 %795
        %797 = vrot.lane.b32.xlu0 %v714, 4
        %v798 = vpop.permute.xlu0 %797
        %799 = vrot.lane.b32.xlu0 %v717, 4
        %v800 = vpop.permute.xlu0 %799
        %801 = vrot.lane.b32.xlu0 %v729, 4
        %v802 = vpop.permute.xlu0 %801
        %803 = vrot.lane.b32.xlu0 %v732, 4
        %v804 = vpop.permute.xlu0 %803
        %vm805 = vcmask 1046528
        %v806 = vrot.slane %v426, 1
        %v807 = vrot.slane %v427, 1
        %v808 = vsel %vm805, %v806, %v807
        %v809 = vrot.slane %v428, 1
        %v810 = vrot.slane %v429, 1
        %v811 = vsel %vm805, %v809, %v810
        %v812 = vrot.slane %v430, 1
        %v813 = vrot.slane %v431, 1
        %v814 = vsel %vm805, %v812, %v813
        %v815 = vrot.slane %v432, 1
        %v816 = vrot.slane %v433, 1
        %v817 = vsel %vm805, %v815, %v816
        %v818 = vrot.slane %v434, 1
        %v819 = vrot.slane %v435, 1
        %v820 = vsel %vm805, %v818, %v819
        %v821 = vrot.slane %v436, 1
        %v822 = vrot.slane %v437, 1
        %v823 = vsel %vm805, %v821, %v822
        %v824 = vrot.slane %v438, 1
        %v825 = vrot.slane %v439, 1
        %v826 = vsel %vm805, %v824, %v825
        %v827 = vrot.slane %v440, 1
        %v828 = vrot.slane %v441, 1
        %v829 = vsel %vm805, %v827, %v828
        %v830 = vrot.slane %v442, 1
        %v831 = vrot.slane %v443, 1
        %v832 = vsel %vm805, %v830, %v831
        %v833 = vrot.slane %v444, 1
        %v834 = vrot.slane %v445, 1
        %v835 = vsel %vm805, %v833, %v834
        %v836 = vrot.slane %v446, 1
        %v837 = vrot.slane %v447, 1
        %v838 = vsel %vm805, %v836, %v837
        %v839 = vrot.slane %v448, 1
        %v840 = vrot.slane %v449, 1
        %v841 = vsel %vm805, %v839, %v840
        %v842 = vrot.slane %v450, 1
        %v843 = vrot.slane %v451, 1
        %v844 = vsel %vm805, %v842, %v843
        %v845 = vrot.slane %v452, 1
        %v846 = vrot.slane %v453, 1
        %v847 = vsel %vm805, %v845, %v846
        %v848 = vrot.slane %v454, 1
        %v849 = vrot.slane %v455, 1
        %v850 = vsel %vm805, %v848, %v849
        %v851 = vrot.slane %v456, 1
        %v852 = vrot.slane %v457, 1
        %v853 = vsel %vm805, %v851, %v852
        %v854 = vrot.slane %v458, 1
        %v855 = vrot.slane %v459, 1
        %v856 = vsel %vm805, %v854, %v855
        %v857 = vrot.slane %v460, 1
        %v858 = vrot.slane %v461, 1
        %v859 = vsel %vm805, %v857, %v858
        %860 = vrot.lane.b32.xlu0 %v808, 8
        %v861 = vpop.permute.xlu0 %860
        %862 = vrot.lane.b32.xlu0 %v807, 8
        %v863 = vpop.permute.xlu0 %862
        %864 = vrot.lane.b32.xlu0 %v811, 8
        %v865 = vpop.permute.xlu0 %864
        %866 = vrot.lane.b32.xlu0 %v810, 8
        %v867 = vpop.permute.xlu0 %866
        %868 = vrot.lane.b32.xlu0 %v814, 8
        %v869 = vpop.permute.xlu0 %868
        %870 = vrot.lane.b32.xlu0 %v813, 8
        %v871 = vpop.permute.xlu0 %870
        %872 = vrot.lane.b32.xlu0 %v817, 8
        %v873 = vpop.permute.xlu0 %872
        %874 = vrot.lane.b32.xlu0 %v816, 8
        %v875 = vpop.permute.xlu0 %874
        %876 = vrot.lane.b32.xlu0 %v820, 8
        %v877 = vpop.permute.xlu0 %876
        %878 = vrot.lane.b32.xlu0 %v819, 8
        %v879 = vpop.permute.xlu0 %878
        %880 = vrot.lane.b32.xlu0 %v823, 8
        %v881 = vpop.permute.xlu0 %880
        %882 = vrot.lane.b32.xlu0 %v822, 8
        %v883 = vpop.permute.xlu0 %882
        %884 = vrot.lane.b32.xlu0 %v826, 8
        %v885 = vpop.permute.xlu0 %884
        %886 = vrot.lane.b32.xlu0 %v825, 8
        %v887 = vpop.permute.xlu0 %886
        %888 = vrot.lane.b32.xlu0 %v829, 8
        %v889 = vpop.permute.xlu0 %888
        %890 = vrot.lane.b32.xlu0 %v828, 8
        %v891 = vpop.permute.xlu0 %890
        %892 = vrot.lane.b32.xlu0 %v832, 8
        %v893 = vpop.permute.xlu0 %892
        %894 = vrot.lane.b32.xlu0 %v831, 8
        %v895 = vpop.permute.xlu0 %894
        %896 = vrot.lane.b32.xlu0 %v835, 8
        %v897 = vpop.permute.xlu0 %896
        %898 = vrot.lane.b32.xlu0 %v834, 8
        %v899 = vpop.permute.xlu0 %898
        %900 = vrot.lane.b32.xlu0 %v838, 8
        %v901 = vpop.permute.xlu0 %900
        %902 = vrot.lane.b32.xlu0 %v837, 8
        %v903 = vpop.permute.xlu0 %902
        %904 = vrot.lane.b32.xlu0 %v841, 8
        %v905 = vpop.permute.xlu0 %904
        %906 = vrot.lane.b32.xlu0 %v840, 8
        %v907 = vpop.permute.xlu0 %906
        %908 = vrot.lane.b32.xlu0 %v844, 8
        %v909 = vpop.permute.xlu0 %908
        %910 = vrot.lane.b32.xlu0 %v843, 8
        %v911 = vpop.permute.xlu0 %910
        %912 = vrot.lane.b32.xlu0 %v847, 8
        %v913 = vpop.permute.xlu0 %912
        %914 = vrot.lane.b32.xlu0 %v846, 8
        %v915 = vpop.permute.xlu0 %914
        %916 = vrot.lane.b32.xlu0 %v850, 8
        %v917 = vpop.permute.xlu0 %916
        %918 = vrot.lane.b32.xlu0 %v849, 8
        %v919 = vpop.permute.xlu0 %918
        %920 = vrot.lane.b32.xlu0 %v853, 8
        %v921 = vpop.permute.xlu0 %920
        %922 = vrot.lane.b32.xlu0 %v852, 8
        %v923 = vpop.permute.xlu0 %922
        %924 = vrot.lane.b32.xlu0 %v856, 8
        %v925 = vpop.permute.xlu0 %924
        %926 = vrot.lane.b32.xlu0 %v855, 8
        %v927 = vpop.permute.xlu0 %926
        %928 = vrot.lane.b32.xlu0 %v859, 8
        %v929 = vpop.permute.xlu0 %928
        %930 = vrot.lane.b32.xlu0 %v858, 8
        %v931 = vpop.permute.xlu0 %930
        %v935 = vunpack.c.l.b16 %v312
        %v936 = vunpack.c.l.b16 %v313
        %v937 = vunpack.c.l.b16 %v314
        %v938 = vpack.c.b16 %v936, %v935
        %v939 = vpack.c.b16 %v937, %v937
        %940 = vrot.lane.b32.xlu0 %v428, 12
        %v941 = vpop.permute.xlu0 %940
        %942 = vrot.lane.b32.xlu0 %v429, 12
        %v943 = vpop.permute.xlu0 %942
        %944 = vrot.lane.b32.xlu0 %v430, 12
        %v945 = vpop.permute.xlu0 %944
        %946 = vrot.lane.b32.xlu0 %v431, 12
        %v947 = vpop.permute.xlu0 %946
        %948 = vrot.lane.b32.xlu0 %v432, 12
        %v949 = vpop.permute.xlu0 %948
        %950 = vrot.lane.b32.xlu0 %v433, 12
        %v951 = vpop.permute.xlu0 %950
        %952 = vrot.lane.b32.xlu0 %v434, 12
        %v953 = vpop.permute.xlu0 %952
        %954 = vrot.lane.b32.xlu0 %v435, 12
        %v955 = vpop.permute.xlu0 %954
        %956 = vrot.lane.b32.xlu0 %v436, 12
        %v957 = vpop.permute.xlu0 %956
        %958 = vrot.lane.b32.xlu0 %v437, 12
        %v959 = vpop.permute.xlu0 %958
        %960 = vrot.lane.b32.xlu0 %v438, 12
        %v961 = vpop.permute.xlu0 %960
        %962 = vrot.lane.b32.xlu0 %v439, 12
        %v963 = vpop.permute.xlu0 %962
        %964 = vrot.lane.b32.xlu0 %v440, 12
        %v965 = vpop.permute.xlu0 %964
        %966 = vrot.lane.b32.xlu0 %v441, 12
        %v967 = vpop.permute.xlu0 %966
        %968 = vrot.lane.b32.xlu0 %v442, 12
        %v969 = vpop.permute.xlu0 %968
        %970 = vrot.lane.b32.xlu0 %v443, 12
        %v971 = vpop.permute.xlu0 %970
        %972 = vrot.lane.b32.xlu0 %v444, 12
        %v973 = vpop.permute.xlu0 %972
        %974 = vrot.lane.b32.xlu0 %v445, 12
        %v975 = vpop.permute.xlu0 %974
        %976 = vrot.lane.b32.xlu0 %v446, 12
        %v977 = vpop.permute.xlu0 %976
        %978 = vrot.lane.b32.xlu0 %v447, 12
        %v979 = vpop.permute.xlu0 %978
        %980 = vrot.lane.b32.xlu0 %v448, 12
        %v981 = vpop.permute.xlu0 %980
        %982 = vrot.lane.b32.xlu0 %v449, 12
        %v983 = vpop.permute.xlu0 %982
        %984 = vrot.lane.b32.xlu0 %v450, 12
        %v985 = vpop.permute.xlu0 %984
        %986 = vrot.lane.b32.xlu0 %v451, 12
        %v987 = vpop.permute.xlu0 %986
        %988 = vrot.lane.b32.xlu0 %v452, 12
        %v989 = vpop.permute.xlu0 %988
        %990 = vrot.lane.b32.xlu0 %v453, 12
        %v991 = vpop.permute.xlu0 %990
        %992 = vrot.lane.b32.xlu0 %v454, 12
        %v993 = vpop.permute.xlu0 %992
        %994 = vrot.lane.b32.xlu0 %v455, 12
        %v995 = vpop.permute.xlu0 %994
        %996 = vrot.lane.b32.xlu0 %v456, 12
        %v997 = vpop.permute.xlu0 %996
        %998 = vrot.lane.b32.xlu0 %v457, 12
        %v999 = vpop.permute.xlu0 %998
        %1000 = vrot.lane.b32.xlu0 %v458, 12
        %v1001 = vpop.permute.xlu0 %1000
        %1002 = vrot.lane.b32.xlu0 %v459, 12
        %v1003 = vpop.permute.xlu0 %1002
        %1004 = vrot.lane.b32.xlu0 %v460, 12
        %v1005 = vpop.permute.xlu0 %1004
        %1006 = vrot.lane.b32.xlu0 %v461, 12
        %v1007 = vpop.permute.xlu0 %1006
        %1008 = vrot.lane.b32.xlu0 %v938, 12
        %v1009 = vpop.permute.xlu0 %1008
        %1010 = vrot.lane.b32.xlu0 %v939, 12
        %v1011 = vpop.permute.xlu0 %1010
        %v1013 = vshrl.u32 %v938, 16
        %v1015 = vshll.u32 %v938, 16
        %v1017 = vrot.slane %v1015, 1
        %v1018 = vor.u32 %v1013, %v1017
        %v1020 = vshll.u32 %v939, 16
        %v1022 = vrot.slane %v1020, 1
        %v1023 = vsel %vm462, %v1018, %v1022
        %v1024 = vshrl.u32 %v939, 16
        %v1026 = vor.u32 %v1024, %v1022
        %1027 = vrot.lane.b32.xlu0 %v489, 16
        %v1028 = vpop.permute.xlu0 %1027
        %1029 = vrot.lane.b32.xlu0 %v492, 16
        %v1030 = vpop.permute.xlu0 %1029
        %1031 = vrot.lane.b32.xlu0 %v504, 16
        %v1032 = vpop.permute.xlu0 %1031
        %1033 = vrot.lane.b32.xlu0 %v507, 16
        %v1034 = vpop.permute.xlu0 %1033
        %1035 = vrot.lane.b32.xlu0 %v519, 16
        %v1036 = vpop.permute.xlu0 %1035
        %1037 = vrot.lane.b32.xlu0 %v522, 16
        %v1038 = vpop.permute.xlu0 %1037
        %1039 = vrot.lane.b32.xlu0 %v534, 16
        %v1040 = vpop.permute.xlu0 %1039
        %1041 = vrot.lane.b32.xlu0 %v537, 16
        %v1042 = vpop.permute.xlu0 %1041
        %1043 = vrot.lane.b32.xlu0 %v549, 16
        %v1044 = vpop.permute.xlu0 %1043
        %1045 = vrot.lane.b32.xlu0 %v552, 16
        %v1046 = vpop.permute.xlu0 %1045
        %1047 = vrot.lane.b32.xlu0 %v564, 16
        %v1048 = vpop.permute.xlu0 %1047
        %1049 = vrot.lane.b32.xlu0 %v567, 16
        %v1050 = vpop.permute.xlu0 %1049
        %1051 = vrot.lane.b32.xlu0 %v579, 16
        %v1052 = vpop.permute.xlu0 %1051
        %1053 = vrot.lane.b32.xlu0 %v582, 16
        %v1054 = vpop.permute.xlu0 %1053
        %1055 = vrot.lane.b32.xlu0 %v594, 16
        %v1056 = vpop.permute.xlu0 %1055
        %1057 = vrot.lane.b32.xlu0 %v597, 16
        %v1058 = vpop.permute.xlu0 %1057
        %1059 = vrot.lane.b32.xlu0 %v609, 16
        %v1060 = vpop.permute.xlu0 %1059
        %1061 = vrot.lane.b32.xlu0 %v612, 16
        %v1062 = vpop.permute.xlu0 %1061
        %1063 = vrot.lane.b32.xlu0 %v624, 16
        %v1064 = vpop.permute.xlu0 %1063
        %1065 = vrot.lane.b32.xlu0 %v627, 16
        %v1066 = vpop.permute.xlu0 %1065
        %1067 = vrot.lane.b32.xlu0 %v639, 16
        %v1068 = vpop.permute.xlu0 %1067
        %1069 = vrot.lane.b32.xlu0 %v642, 16
        %v1070 = vpop.permute.xlu0 %1069
        %1071 = vrot.lane.b32.xlu0 %v654, 16
        %v1072 = vpop.permute.xlu0 %1071
        %1073 = vrot.lane.b32.xlu0 %v657, 16
        %v1074 = vpop.permute.xlu0 %1073
        %1075 = vrot.lane.b32.xlu0 %v669, 16
        %v1076 = vpop.permute.xlu0 %1075
        %1077 = vrot.lane.b32.xlu0 %v672, 16
        %v1078 = vpop.permute.xlu0 %1077
        %1079 = vrot.lane.b32.xlu0 %v684, 16
        %v1080 = vpop.permute.xlu0 %1079
        %1081 = vrot.lane.b32.xlu0 %v687, 16
        %v1082 = vpop.permute.xlu0 %1081
        %1083 = vrot.lane.b32.xlu0 %v699, 16
        %v1084 = vpop.permute.xlu0 %1083
        %1085 = vrot.lane.b32.xlu0 %v702, 16
        %v1086 = vpop.permute.xlu0 %1085
        %1087 = vrot.lane.b32.xlu0 %v714, 16
        %v1088 = vpop.permute.xlu0 %1087
        %1089 = vrot.lane.b32.xlu0 %v717, 16
        %v1090 = vpop.permute.xlu0 %1089
        %1091 = vrot.lane.b32.xlu0 %v729, 16
        %v1092 = vpop.permute.xlu0 %1091
        %1093 = vrot.lane.b32.xlu0 %v732, 16
        %v1094 = vpop.permute.xlu0 %1093
        %1095 = vrot.lane.b32.xlu0 %v1023, 16
        %v1096 = vpop.permute.xlu0 %1095
        %1097 = vrot.lane.b32.xlu0 %v1026, 16
        %v1098 = vpop.permute.xlu0 %1097
        %v1099 = vrot.slane %v938, 1
        %v1100 = vrot.slane %v939, 1
        %v1101 = vsel %vm805, %v1099, %v1100
        %1102 = vrot.lane.b32.xlu0 %v811, 20
        %v1103 = vpop.permute.xlu0 %1102
        %1104 = vrot.lane.b32.xlu0 %v810, 20
        %v1105 = vpop.permute.xlu0 %1104
        %1106 = vrot.lane.b32.xlu0 %v814, 20
        %v1107 = vpop.permute.xlu0 %1106
        %1108 = vrot.lane.b32.xlu0 %v813, 20
        %v1109 = vpop.permute.xlu0 %1108
        %1110 = vrot.lane.b32.xlu0 %v817, 20
        %v1111 = vpop.permute.xlu0 %1110
        %1112 = vrot.lane.b32.xlu0 %v816, 20
        %v1113 = vpop.permute.xlu0 %1112
        %1114 = vrot.lane.b32.xlu0 %v820, 20
        %v1115 = vpop.permute.xlu0 %1114
        %1116 = vrot.lane.b32.xlu0 %v819, 20
        %v1117 = vpop.permute.xlu0 %1116
        %1118 = vrot.lane.b32.xlu0 %v823, 20
        %v1119 = vpop.permute.xlu0 %1118
        %1120 = vrot.lane.b32.xlu0 %v822, 20
        %v1121 = vpop.permute.xlu0 %1120
        %1122 = vrot.lane.b32.xlu0 %v826, 20
        %v1123 = vpop.permute.xlu0 %1122
        %1124 = vrot.lane.b32.xlu0 %v825, 20
        %v1125 = vpop.permute.xlu0 %1124
        %1126 = vrot.lane.b32.xlu0 %v829, 20
        %v1127 = vpop.permute.xlu0 %1126
        %1128 = vrot.lane.b32.xlu0 %v828, 20
        %v1129 = vpop.permute.xlu0 %1128
        %1130 = vrot.lane.b32.xlu0 %v832, 20
        %v1131 = vpop.permute.xlu0 %1130
        %1132 = vrot.lane.b32.xlu0 %v831, 20
        %v1133 = vpop.permute.xlu0 %1132
        %1134 = vrot.lane.b32.xlu0 %v835, 20
        %v1135 = vpop.permute.xlu0 %1134
        %1136 = vrot.lane.b32.xlu0 %v834, 20
        %v1137 = vpop.permute.xlu0 %1136
        %1138 = vrot.lane.b32.xlu0 %v838, 20
        %v1139 = vpop.permute.xlu0 %1138
        %1140 = vrot.lane.b32.xlu0 %v837, 20
        %v1141 = vpop.permute.xlu0 %1140
        %1142 = vrot.lane.b32.xlu0 %v841, 20
        %v1143 = vpop.permute.xlu0 %1142
        %1144 = vrot.lane.b32.xlu0 %v840, 20
        %v1145 = vpop.permute.xlu0 %1144
        %1146 = vrot.lane.b32.xlu0 %v844, 20
        %v1147 = vpop.permute.xlu0 %1146
        %1148 = vrot.lane.b32.xlu0 %v843, 20
        %v1149 = vpop.permute.xlu0 %1148
        %1150 = vrot.lane.b32.xlu0 %v847, 20
        %v1151 = vpop.permute.xlu0 %1150
        %1152 = vrot.lane.b32.xlu0 %v846, 20
        %v1153 = vpop.permute.xlu0 %1152
        %1154 = vrot.lane.b32.xlu0 %v850, 20
        %v1155 = vpop.permute.xlu0 %1154
        %1156 = vrot.lane.b32.xlu0 %v849, 20
        %v1157 = vpop.permute.xlu0 %1156
        %1158 = vrot.lane.b32.xlu0 %v853, 20
        %v1159 = vpop.permute.xlu0 %1158
        %1160 = vrot.lane.b32.xlu0 %v852, 20
        %v1161 = vpop.permute.xlu0 %1160
        %1162 = vrot.lane.b32.xlu0 %v856, 20
        %v1163 = vpop.permute.xlu0 %1162
        %1164 = vrot.lane.b32.xlu0 %v855, 20
        %v1165 = vpop.permute.xlu0 %1164
        %1166 = vrot.lane.b32.xlu0 %v859, 20
        %v1167 = vpop.permute.xlu0 %1166
        %1168 = vrot.lane.b32.xlu0 %v858, 20
        %v1169 = vpop.permute.xlu0 %1168
        %1170 = vrot.lane.b32.xlu0 %v1101, 20
        %v1171 = vpop.permute.xlu0 %1170
        %1172 = vrot.lane.b32.xlu0 %v1100, 20
        %v1173 = vpop.permute.xlu0 %1172
        %v1177 = vunpack.c.l.b16 %v315
        %v1178 = vunpack.c.l.b16 %v316
        %v1179 = vunpack.c.l.b16 %v317
        %v1180 = vpack.c.b16 %v1178, %v1177
        %v1181 = vpack.c.b16 %v1179, %v1179
        %1182 = vrot.lane.b32.xlu0 %v430, 24
        %v1183 = vpop.permute.xlu0 %1182
        %1184 = vrot.lane.b32.xlu0 %v431, 24
        %v1185 = vpop.permute.xlu0 %1184
        %1186 = vrot.lane.b32.xlu0 %v432, 24
        %v1187 = vpop.permute.xlu0 %1186
        %1188 = vrot.lane.b32.xlu0 %v433, 24
        %v1189 = vpop.permute.xlu0 %1188
        %1190 = vrot.lane.b32.xlu0 %v434, 24
        %v1191 = vpop.permute.xlu0 %1190
        %1192 = vrot.lane.b32.xlu0 %v435, 24
        %v1193 = vpop.permute.xlu0 %1192
        %1194 = vrot.lane.b32.xlu0 %v436, 24
        %v1195 = vpop.permute.xlu0 %1194
        %1196 = vrot.lane.b32.xlu0 %v437, 24
        %v1197 = vpop.permute.xlu0 %1196
        %1198 = vrot.lane.b32.xlu0 %v438, 24
        %v1199 = vpop.permute.xlu0 %1198
        %1200 = vrot.lane.b32.xlu0 %v439, 24
        %v1201 = vpop.permute.xlu0 %1200
        %1202 = vrot.lane.b32.xlu0 %v440, 24
        %v1203 = vpop.permute.xlu0 %1202
        %1204 = vrot.lane.b32.xlu0 %v441, 24
        %v1205 = vpop.permute.xlu0 %1204
        %1206 = vrot.lane.b32.xlu0 %v442, 24
        %v1207 = vpop.permute.xlu0 %1206
        %1208 = vrot.lane.b32.xlu0 %v443, 24
        %v1209 = vpop.permute.xlu0 %1208
        %1210 = vrot.lane.b32.xlu0 %v444, 24
        %v1211 = vpop.permute.xlu0 %1210
        %1212 = vrot.lane.b32.xlu0 %v445, 24
        %v1213 = vpop.permute.xlu0 %1212
        %1214 = vrot.lane.b32.xlu0 %v446, 24
        %v1215 = vpop.permute.xlu0 %1214
        %1216 = vrot.lane.b32.xlu0 %v447, 24
        %v1217 = vpop.permute.xlu0 %1216
        %1218 = vrot.lane.b32.xlu0 %v448, 24
        %v1219 = vpop.permute.xlu0 %1218
        %1220 = vrot.lane.b32.xlu0 %v449, 24
        %v1221 = vpop.permute.xlu0 %1220
        %1222 = vrot.lane.b32.xlu0 %v450, 24
        %v1223 = vpop.permute.xlu0 %1222
        %1224 = vrot.lane.b32.xlu0 %v451, 24
        %v1225 = vpop.permute.xlu0 %1224
        %1226 = vrot.lane.b32.xlu0 %v452, 24
        %v1227 = vpop.permute.xlu0 %1226
        %1228 = vrot.lane.b32.xlu0 %v453, 24
        %v1229 = vpop.permute.xlu0 %1228
        %1230 = vrot.lane.b32.xlu0 %v454, 24
        %v1231 = vpop.permute.xlu0 %1230
        %1232 = vrot.lane.b32.xlu0 %v455, 24
        %v1233 = vpop.permute.xlu0 %1232
        %1234 = vrot.lane.b32.xlu0 %v456, 24
        %v1235 = vpop.permute.xlu0 %1234
        %1236 = vrot.lane.b32.xlu0 %v457, 24
        %v1237 = vpop.permute.xlu0 %1236
        %1238 = vrot.lane.b32.xlu0 %v458, 24
        %v1239 = vpop.permute.xlu0 %1238
        %1240 = vrot.lane.b32.xlu0 %v459, 24
        %v1241 = vpop.permute.xlu0 %1240
        %1242 = vrot.lane.b32.xlu0 %v460, 24
        %v1243 = vpop.permute.xlu0 %1242
        %1244 = vrot.lane.b32.xlu0 %v461, 24
        %v1245 = vpop.permute.xlu0 %1244
        %1246 = vrot.lane.b32.xlu0 %v938, 24
        %v1247 = vpop.permute.xlu0 %1246
        %1248 = vrot.lane.b32.xlu0 %v939, 24
        %v1249 = vpop.permute.xlu0 %1248
        %1250 = vrot.lane.b32.xlu0 %v1180, 24
        %v1251 = vpop.permute.xlu0 %1250
        %1252 = vrot.lane.b32.xlu0 %v1181, 24
        %v1253 = vpop.permute.xlu0 %1252
        %v1255 = vshrl.u32 %v1180, 16
        %v1257 = vshll.u32 %v1180, 16
        %v1259 = vrot.slane %v1257, 1
        %v1260 = vor.u32 %v1255, %v1259
        %v1262 = vshll.u32 %v1181, 16
        %v1264 = vrot.slane %v1262, 1
        %v1265 = vsel %vm462, %v1260, %v1264
        %v1266 = vshrl.u32 %v1181, 16
        %v1268 = vor.u32 %v1266, %v1264
        %1269 = vrot.lane.b32.xlu0 %v504, 28
        %v1270 = vpop.permute.xlu0 %1269
        %1271 = vrot.lane.b32.xlu0 %v507, 28
        %v1272 = vpop.permute.xlu0 %1271
        %1273 = vrot.lane.b32.xlu0 %v519, 28
        %v1274 = vpop.permute.xlu0 %1273
        %1275 = vrot.lane.b32.xlu0 %v522, 28
        %v1276 = vpop.permute.xlu0 %1275
        %1277 = vrot.lane.b32.xlu0 %v534, 28
        %v1278 = vpop.permute.xlu0 %1277
        %1279 = vrot.lane.b32.xlu0 %v537, 28
        %v1280 = vpop.permute.xlu0 %1279
        %1281 = vrot.lane.b32.xlu0 %v549, 28
        %v1282 = vpop.permute.xlu0 %1281
        %1283 = vrot.lane.b32.xlu0 %v552, 28
        %v1284 = vpop.permute.xlu0 %1283
        %1285 = vrot.lane.b32.xlu0 %v564, 28
        %v1286 = vpop.permute.xlu0 %1285
        %1287 = vrot.lane.b32.xlu0 %v567, 28
        %v1288 = vpop.permute.xlu0 %1287
        %1289 = vrot.lane.b32.xlu0 %v579, 28
        %v1290 = vpop.permute.xlu0 %1289
        %1291 = vrot.lane.b32.xlu0 %v582, 28
        %v1292 = vpop.permute.xlu0 %1291
        %1293 = vrot.lane.b32.xlu0 %v594, 28
        %v1294 = vpop.permute.xlu0 %1293
        %1295 = vrot.lane.b32.xlu0 %v597, 28
        %v1296 = vpop.permute.xlu0 %1295
        %1297 = vrot.lane.b32.xlu0 %v609, 28
        %v1298 = vpop.permute.xlu0 %1297
        %1299 = vrot.lane.b32.xlu0 %v612, 28
        %v1300 = vpop.permute.xlu0 %1299
        %1301 = vrot.lane.b32.xlu0 %v624, 28
        %v1302 = vpop.permute.xlu0 %1301
        %1303 = vrot.lane.b32.xlu0 %v627, 28
        %v1304 = vpop.permute.xlu0 %1303
        %1305 = vrot.lane.b32.xlu0 %v639, 28
        %v1306 = vpop.permute.xlu0 %1305
        %1307 = vrot.lane.b32.xlu0 %v642, 28
        %v1308 = vpop.permute.xlu0 %1307
        %1309 = vrot.lane.b32.xlu0 %v654, 28
        %v1310 = vpop.permute.xlu0 %1309
        %1311 = vrot.lane.b32.xlu0 %v657, 28
        %v1312 = vpop.permute.xlu0 %1311
        %1313 = vrot.lane.b32.xlu0 %v669, 28
        %v1314 = vpop.permute.xlu0 %1313
        %1315 = vrot.lane.b32.xlu0 %v672, 28
        %v1316 = vpop.permute.xlu0 %1315
        %1317 = vrot.lane.b32.xlu0 %v684, 28
        %v1318 = vpop.permute.xlu0 %1317
        %1319 = vrot.lane.b32.xlu0 %v687, 28
        %v1320 = vpop.permute.xlu0 %1319
        %1321 = vrot.lane.b32.xlu0 %v699, 28
        %v1322 = vpop.permute.xlu0 %1321
        %1323 = vrot.lane.b32.xlu0 %v702, 28
        %v1324 = vpop.permute.xlu0 %1323
        %1325 = vrot.lane.b32.xlu0 %v714, 28
        %v1326 = vpop.permute.xlu0 %1325
        %1327 = vrot.lane.b32.xlu0 %v717, 28
        %v1328 = vpop.permute.xlu0 %1327
        %1329 = vrot.lane.b32.xlu0 %v729, 28
        %v1330 = vpop.permute.xlu0 %1329
        %1331 = vrot.lane.b32.xlu0 %v732, 28
        %v1332 = vpop.permute.xlu0 %1331
        %1333 = vrot.lane.b32.xlu0 %v1023, 28
        %v1334 = vpop.permute.xlu0 %1333
        %1335 = vrot.lane.b32.xlu0 %v1026, 28
        %v1336 = vpop.permute.xlu0 %1335
        %1337 = vrot.lane.b32.xlu0 %v1265, 28
        %v1338 = vpop.permute.xlu0 %1337
        %1339 = vrot.lane.b32.xlu0 %v1268, 28
        %v1340 = vpop.permute.xlu0 %1339
        %v1341 = vrot.slane %v1180, 1
        %v1342 = vrot.slane %v1181, 1
        %v1343 = vsel %vm805, %v1341, %v1342
        %1344 = vrot.lane.b32.xlu0 %v814, 32
        %v1345 = vpop.permute.xlu0 %1344
        %1346 = vrot.lane.b32.xlu0 %v813, 32
        %v1347 = vpop.permute.xlu0 %1346
        %1348 = vrot.lane.b32.xlu0 %v817, 32
        %v1349 = vpop.permute.xlu0 %1348
        %1350 = vrot.lane.b32.xlu0 %v816, 32
        %v1351 = vpop.permute.xlu0 %1350
        %1352 = vrot.lane.b32.xlu0 %v820, 32
        %v1353 = vpop.permute.xlu0 %1352
        %1354 = vrot.lane.b32.xlu0 %v819, 32
        %v1355 = vpop.permute.xlu0 %1354
        %1356 = vrot.lane.b32.xlu0 %v823, 32
        %v1357 = vpop.permute.xlu0 %1356
        %1358 = vrot.lane.b32.xlu0 %v822, 32
        %v1359 = vpop.permute.xlu0 %1358
        %1360 = vrot.lane.b32.xlu0 %v826, 32
        %v1361 = vpop.permute.xlu0 %1360
        %1362 = vrot.lane.b32.xlu0 %v825, 32
        %v1363 = vpop.permute.xlu0 %1362
        %1364 = vrot.lane.b32.xlu0 %v829, 32
        %v1365 = vpop.permute.xlu0 %1364
        %1366 = vrot.lane.b32.xlu0 %v828, 32
        %v1367 = vpop.permute.xlu0 %1366
        %1368 = vrot.lane.b32.xlu0 %v832, 32
        %v1369 = vpop.permute.xlu0 %1368
        %1370 = vrot.lane.b32.xlu0 %v831, 32
        %v1371 = vpop.permute.xlu0 %1370
        %1372 = vrot.lane.b32.xlu0 %v835, 32
        %v1373 = vpop.permute.xlu0 %1372
        %1374 = vrot.lane.b32.xlu0 %v834, 32
        %v1375 = vpop.permute.xlu0 %1374
        %1376 = vrot.lane.b32.xlu0 %v838, 32
        %v1377 = vpop.permute.xlu0 %1376
        %1378 = vrot.lane.b32.xlu0 %v837, 32
        %v1379 = vpop.permute.xlu0 %1378
        %1380 = vrot.lane.b32.xlu0 %v841, 32
        %v1381 = vpop.permute.xlu0 %1380
        %1382 = vrot.lane.b32.xlu0 %v840, 32
        %v1383 = vpop.permute.xlu0 %1382
        %1384 = vrot.lane.b32.xlu0 %v844, 32
        %v1385 = vpop.permute.xlu0 %1384
        %1386 = vrot.lane.b32.xlu0 %v843, 32
        %v1387 = vpop.permute.xlu0 %1386
        %1388 = vrot.lane.b32.xlu0 %v847, 32
        %v1389 = vpop.permute.xlu0 %1388
        %1390 = vrot.lane.b32.xlu0 %v846, 32
        %v1391 = vpop.permute.xlu0 %1390
        %1392 = vrot.lane.b32.xlu0 %v850, 32
        %v1393 = vpop.permute.xlu0 %1392
        %1394 = vrot.lane.b32.xlu0 %v849, 32
        %v1395 = vpop.permute.xlu0 %1394
        %1396 = vrot.lane.b32.xlu0 %v853, 32
        %v1397 = vpop.permute.xlu0 %1396
        %1398 = vrot.lane.b32.xlu0 %v852, 32
        %v1399 = vpop.permute.xlu0 %1398
        %1400 = vrot.lane.b32.xlu0 %v856, 32
        %v1401 = vpop.permute.xlu0 %1400
        %1402 = vrot.lane.b32.xlu0 %v855, 32
        %v1403 = vpop.permute.xlu0 %1402
        %1404 = vrot.lane.b32.xlu0 %v859, 32
        %v1405 = vpop.permute.xlu0 %1404
        %1406 = vrot.lane.b32.xlu0 %v858, 32
        %v1407 = vpop.permute.xlu0 %1406
        %1408 = vrot.lane.b32.xlu0 %v1101, 32
        %v1409 = vpop.permute.xlu0 %1408
        %1410 = vrot.lane.b32.xlu0 %v1100, 32
        %v1411 = vpop.permute.xlu0 %1410
        %1412 = vrot.lane.b32.xlu0 %v1343, 32
        %v1413 = vpop.permute.xlu0 %1412
        %1414 = vrot.lane.b32.xlu0 %v1342, 32
        %v1415 = vpop.permute.xlu0 %1414
        %vm1416 = vcmask 31744
        %v1418 = vsel %vm1416, %v426, %v734
        %v1420 = vsel %vm1416, %v427, %v736
        %v1422 = vsel %vm1416, %v428, %v738
        %v1424 = vsel %vm1416, %v429, %v740
        %v1426 = vsel %vm1416, %v430, %v742
        %v1428 = vsel %vm1416, %v431, %v744
        %v1430 = vsel %vm1416, %v432, %v746
        %v1432 = vsel %vm1416, %v433, %v748
        %v1434 = vsel %vm1416, %v434, %v750
        %v1436 = vsel %vm1416, %v435, %v752
        %v1438 = vsel %vm1416, %v436, %v754
        %v1440 = vsel %vm1416, %v437, %v756
        %v1442 = vsel %vm1416, %v438, %v758
        %v1444 = vsel %vm1416, %v439, %v760
        %v1446 = vsel %vm1416, %v440, %v762
        %v1448 = vsel %vm1416, %v441, %v764
        %v1450 = vsel %vm1416, %v442, %v766
        %v1452 = vsel %vm1416, %v443, %v768
        %v1454 = vsel %vm1416, %v444, %v770
        %v1456 = vsel %vm1416, %v445, %v772
        %v1458 = vsel %vm1416, %v446, %v774
        %v1460 = vsel %vm1416, %v447, %v776
        %v1462 = vsel %vm1416, %v448, %v778
        %v1464 = vsel %vm1416, %v449, %v780
        %v1466 = vsel %vm1416, %v450, %v782
        %v1468 = vsel %vm1416, %v451, %v784
        %v1470 = vsel %vm1416, %v452, %v786
        %v1472 = vsel %vm1416, %v453, %v788
        %v1474 = vsel %vm1416, %v454, %v790
        %v1476 = vsel %vm1416, %v455, %v792
        %v1478 = vsel %vm1416, %v456, %v794
        %v1480 = vsel %vm1416, %v457, %v796
        %v1482 = vsel %vm1416, %v458, %v798
        %v1484 = vsel %vm1416, %v459, %v800
        %v1486 = vsel %vm1416, %v460, %v802
        %v1488 = vsel %vm1416, %v461, %v804
        %vm1489 = vcmask 64512
        %v1491 = vsel %vm1489, %v1418, %v861
        %v1493 = vsel %vm1489, %v1420, %v863
        %v1495 = vsel %vm1489, %v1422, %v865
        %v1497 = vsel %vm1489, %v1424, %v867
        %v1499 = vsel %vm1489, %v1426, %v869
        %v1501 = vsel %vm1489, %v1428, %v871
        %v1503 = vsel %vm1489, %v1430, %v873
        %v1505 = vsel %vm1489, %v1432, %v875
        %v1507 = vsel %vm1489, %v1434, %v877
        %v1509 = vsel %vm1489, %v1436, %v879
        %v1511 = vsel %vm1489, %v1438, %v881
        %v1513 = vsel %vm1489, %v1440, %v883
        %v1515 = vsel %vm1489, %v1442, %v885
        %v1517 = vsel %vm1489, %v1444, %v887
        %v1519 = vsel %vm1489, %v1446, %v889
        %v1521 = vsel %vm1489, %v1448, %v891
        %v1523 = vsel %vm1489, %v1450, %v893
        %v1525 = vsel %vm1489, %v1452, %v895
        %v1527 = vsel %vm1489, %v1454, %v897
        %v1529 = vsel %vm1489, %v1456, %v899
        %v1531 = vsel %vm1489, %v1458, %v901
        %v1533 = vsel %vm1489, %v1460, %v903
        %v1535 = vsel %vm1489, %v1462, %v905
        %v1537 = vsel %vm1489, %v1464, %v907
        %v1539 = vsel %vm1489, %v1466, %v909
        %v1541 = vsel %vm1489, %v1468, %v911
        %v1543 = vsel %vm1489, %v1470, %v913
        %v1545 = vsel %vm1489, %v1472, %v915
        %v1547 = vsel %vm1489, %v1474, %v917
        %v1549 = vsel %vm1489, %v1476, %v919
        %v1551 = vsel %vm1489, %v1478, %v921
        %v1553 = vsel %vm1489, %v1480, %v923
        %v1555 = vsel %vm1489, %v1482, %v925
        %v1557 = vsel %vm1489, %v1484, %v927
        %v1559 = vsel %vm1489, %v1486, %v929
        %v1561 = vsel %vm1489, %v1488, %v931
        %vm1562 = vcmask 97280
        %v1564 = vsel %vm1562, %v1491, %v941
        %v1566 = vsel %vm1562, %v1493, %v943
        %v1568 = vsel %vm1562, %v1495, %v945
        %v1570 = vsel %vm1562, %v1497, %v947
        %v1572 = vsel %vm1562, %v1499, %v949
        %v1574 = vsel %vm1562, %v1501, %v951
        %v1576 = vsel %vm1562, %v1503, %v953
        %v1578 = vsel %vm1562, %v1505, %v955
        %v1580 = vsel %vm1562, %v1507, %v957
        %v1582 = vsel %vm1562, %v1509, %v959
        %v1584 = vsel %vm1562, %v1511, %v961
        %v1586 = vsel %vm1562, %v1513, %v963
        %v1588 = vsel %vm1562, %v1515, %v965
        %v1590 = vsel %vm1562, %v1517, %v967
        %v1592 = vsel %vm1562, %v1519, %v969
        %v1594 = vsel %vm1562, %v1521, %v971
        %v1596 = vsel %vm1562, %v1523, %v973
        %v1598 = vsel %vm1562, %v1525, %v975
        %v1600 = vsel %vm1562, %v1527, %v977
        %v1602 = vsel %vm1562, %v1529, %v979
        %v1604 = vsel %vm1562, %v1531, %v981
        %v1606 = vsel %vm1562, %v1533, %v983
        %v1608 = vsel %vm1562, %v1535, %v985
        %v1610 = vsel %vm1562, %v1537, %v987
        %v1612 = vsel %vm1562, %v1539, %v989
        %v1614 = vsel %vm1562, %v1541, %v991
        %v1616 = vsel %vm1562, %v1543, %v993
        %v1618 = vsel %vm1562, %v1545, %v995
        %v1620 = vsel %vm1562, %v1547, %v997
        %v1622 = vsel %vm1562, %v1549, %v999
        %v1624 = vsel %vm1562, %v1551, %v1001
        %v1626 = vsel %vm1562, %v1553, %v1003
        %v1628 = vsel %vm1562, %v1555, %v1005
        %v1630 = vsel %vm1562, %v1557, %v1007
        %v1632 = vsel %vm1562, %v1559, %v1009
        %v1634 = vsel %vm1562, %v1561, %v1011
        %vm1635 = vcmask 130048
        %v1637 = vsel %vm1635, %v1564, %v1028
        %v1639 = vsel %vm1635, %v1566, %v1030
        %v1641 = vsel %vm1635, %v1568, %v1032
        %v1643 = vsel %vm1635, %v1570, %v1034
        %v1645 = vsel %vm1635, %v1572, %v1036
        %v1647 = vsel %vm1635, %v1574, %v1038
        %v1649 = vsel %vm1635, %v1576, %v1040
        %v1651 = vsel %vm1635, %v1578, %v1042
        %v1653 = vsel %vm1635, %v1580, %v1044
        %v1655 = vsel %vm1635, %v1582, %v1046
        %v1657 = vsel %vm1635, %v1584, %v1048
        %v1659 = vsel %vm1635, %v1586, %v1050
        %v1661 = vsel %vm1635, %v1588, %v1052
        %v1663 = vsel %vm1635, %v1590, %v1054
        %v1665 = vsel %vm1635, %v1592, %v1056
        %v1667 = vsel %vm1635, %v1594, %v1058
        %v1669 = vsel %vm1635, %v1596, %v1060
        %v1671 = vsel %vm1635, %v1598, %v1062
        %v1673 = vsel %vm1635, %v1600, %v1064
        %v1675 = vsel %vm1635, %v1602, %v1066
        %v1677 = vsel %vm1635, %v1604, %v1068
        %v1679 = vsel %vm1635, %v1606, %v1070
        %v1681 = vsel %vm1635, %v1608, %v1072
        %v1683 = vsel %vm1635, %v1610, %v1074
        %v1685 = vsel %vm1635, %v1612, %v1076
        %v1687 = vsel %vm1635, %v1614, %v1078
        %v1689 = vsel %vm1635, %v1616, %v1080
        %v1691 = vsel %vm1635, %v1618, %v1082
        %v1693 = vsel %vm1635, %v1620, %v1084
        %v1695 = vsel %vm1635, %v1622, %v1086
        %v1697 = vsel %vm1635, %v1624, %v1088
        %v1699 = vsel %vm1635, %v1626, %v1090
        %v1701 = vsel %vm1635, %v1628, %v1092
        %v1703 = vsel %vm1635, %v1630, %v1094
        %v1705 = vsel %vm1635, %v1632, %v1096
        %v1707 = vsel %vm1635, %v1634, %v1098
        %vm1708 = vcmask 162816
        %v1710 = vsel %vm1708, %v1637, %v1103
        %v1712 = vsel %vm1708, %v1639, %v1105
        %v1714 = vsel %vm1708, %v1641, %v1107
        %v1716 = vsel %vm1708, %v1643, %v1109
        %v1718 = vsel %vm1708, %v1645, %v1111
        %v1720 = vsel %vm1708, %v1647, %v1113
        %v1722 = vsel %vm1708, %v1649, %v1115
        %v1724 = vsel %vm1708, %v1651, %v1117
        %v1726 = vsel %vm1708, %v1653, %v1119
        %v1728 = vsel %vm1708, %v1655, %v1121
        %v1730 = vsel %vm1708, %v1657, %v1123
        %v1732 = vsel %vm1708, %v1659, %v1125
        %v1734 = vsel %vm1708, %v1661, %v1127
        %v1736 = vsel %vm1708, %v1663, %v1129
        %v1738 = vsel %vm1708, %v1665, %v1131
        %v1740 = vsel %vm1708, %v1667, %v1133
        %v1742 = vsel %vm1708, %v1669, %v1135
        %v1744 = vsel %vm1708, %v1671, %v1137
        %v1746 = vsel %vm1708, %v1673, %v1139
        %v1748 = vsel %vm1708, %v1675, %v1141
        %v1750 = vsel %vm1708, %v1677, %v1143
        %v1752 = vsel %vm1708, %v1679, %v1145
        %v1754 = vsel %vm1708, %v1681, %v1147
        %v1756 = vsel %vm1708, %v1683, %v1149
        %v1758 = vsel %vm1708, %v1685, %v1151
        %v1760 = vsel %vm1708, %v1687, %v1153
        %v1762 = vsel %vm1708, %v1689, %v1155
        %v1764 = vsel %vm1708, %v1691, %v1157
        %v1766 = vsel %vm1708, %v1693, %v1159
        %v1768 = vsel %vm1708, %v1695, %v1161
        %v1770 = vsel %vm1708, %v1697, %v1163
        %v1772 = vsel %vm1708, %v1699, %v1165
        %v1774 = vsel %vm1708, %v1701, %v1167
        %v1776 = vsel %vm1708, %v1703, %v1169
        %v1778 = vsel %vm1708, %v1705, %v1171
        %v1780 = vsel %vm1708, %v1707, %v1173
        %vm1781 = vcmask 195584
        %v1783 = vsel %vm1781, %v1710, %v1183
        %v1785 = vsel %vm1781, %v1712, %v1185
        %v1787 = vsel %vm1781, %v1714, %v1187
        %v1789 = vsel %vm1781, %v1716, %v1189
        %v1791 = vsel %vm1781, %v1718, %v1191
        %v1793 = vsel %vm1781, %v1720, %v1193
        %v1795 = vsel %vm1781, %v1722, %v1195
        %v1797 = vsel %vm1781, %v1724, %v1197
        %v1799 = vsel %vm1781, %v1726, %v1199
        %v1801 = vsel %vm1781, %v1728, %v1201
        %v1803 = vsel %vm1781, %v1730, %v1203
        %v1805 = vsel %vm1781, %v1732, %v1205
        %v1807 = vsel %vm1781, %v1734, %v1207
        %v1809 = vsel %vm1781, %v1736, %v1209
        %v1811 = vsel %vm1781, %v1738, %v1211
        %v1813 = vsel %vm1781, %v1740, %v1213
        %v1815 = vsel %vm1781, %v1742, %v1215
        %v1817 = vsel %vm1781, %v1744, %v1217
        %v1819 = vsel %vm1781, %v1746, %v1219
        %v1821 = vsel %vm1781, %v1748, %v1221
        %v1823 = vsel %vm1781, %v1750, %v1223
        %v1825 = vsel %vm1781, %v1752, %v1225
        %v1827 = vsel %vm1781, %v1754, %v1227
        %v1829 = vsel %vm1781, %v1756, %v1229
        %v1831 = vsel %vm1781, %v1758, %v1231
        %v1833 = vsel %vm1781, %v1760, %v1233
        %v1835 = vsel %vm1781, %v1762, %v1235
        %v1837 = vsel %vm1781, %v1764, %v1237
        %v1839 = vsel %vm1781, %v1766, %v1239
        %v1841 = vsel %vm1781, %v1768, %v1241
        %v1843 = vsel %vm1781, %v1770, %v1243
        %v1845 = vsel %vm1781, %v1772, %v1245
        %v1847 = vsel %vm1781, %v1774, %v1247
        %v1849 = vsel %vm1781, %v1776, %v1249
        %v1851 = vsel %vm1781, %v1778, %v1251
        %v1853 = vsel %vm1781, %v1780, %v1253
        %vm1854 = vcmask 228352
        %v1856 = vsel %vm1854, %v1783, %v1270
        %v1858 = vsel %vm1854, %v1785, %v1272
        %v1860 = vsel %vm1854, %v1787, %v1274
        %v1862 = vsel %vm1854, %v1789, %v1276
        %v1864 = vsel %vm1854, %v1791, %v1278
        %v1866 = vsel %vm1854, %v1793, %v1280
        %v1868 = vsel %vm1854, %v1795, %v1282
        %v1870 = vsel %vm1854, %v1797, %v1284
        %v1872 = vsel %vm1854, %v1799, %v1286
        %v1874 = vsel %vm1854, %v1801, %v1288
        %v1876 = vsel %vm1854, %v1803, %v1290
        %v1878 = vsel %vm1854, %v1805, %v1292
        %v1880 = vsel %vm1854, %v1807, %v1294
        %v1882 = vsel %vm1854, %v1809, %v1296
        %v1884 = vsel %vm1854, %v1811, %v1298
        %v1886 = vsel %vm1854, %v1813, %v1300
        %v1888 = vsel %vm1854, %v1815, %v1302
        %v1890 = vsel %vm1854, %v1817, %v1304
        %v1892 = vsel %vm1854, %v1819, %v1306
        %v1894 = vsel %vm1854, %v1821, %v1308
        %v1896 = vsel %vm1854, %v1823, %v1310
        %v1898 = vsel %vm1854, %v1825, %v1312
        %v1900 = vsel %vm1854, %v1827, %v1314
        %v1902 = vsel %vm1854, %v1829, %v1316
        %v1904 = vsel %vm1854, %v1831, %v1318
        %v1906 = vsel %vm1854, %v1833, %v1320
        %v1908 = vsel %vm1854, %v1835, %v1322
        %v1910 = vsel %vm1854, %v1837, %v1324
        %v1912 = vsel %vm1854, %v1839, %v1326
        %v1914 = vsel %vm1854, %v1841, %v1328
        %v1916 = vsel %vm1854, %v1843, %v1330
        %v1918 = vsel %vm1854, %v1845, %v1332
        %v1920 = vsel %vm1854, %v1847, %v1334
        %v1922 = vsel %vm1854, %v1849, %v1336
        %v1924 = vsel %vm1854, %v1851, %v1338
        %v1926 = vsel %vm1854, %v1853, %v1340
        %vm1927 = vcmask 261120
        %v1929 = vsel %vm1927, %v1856, %v1345
        %v1931 = vsel %vm1927, %v1858, %v1347
        %v1933 = vsel %vm1927, %v1860, %v1349
        %v1935 = vsel %vm1927, %v1862, %v1351
        %v1937 = vsel %vm1927, %v1864, %v1353
        %v1939 = vsel %vm1927, %v1866, %v1355
        %v1941 = vsel %vm1927, %v1868, %v1357
        %v1943 = vsel %vm1927, %v1870, %v1359
        %v1945 = vsel %vm1927, %v1872, %v1361
        %v1947 = vsel %vm1927, %v1874, %v1363
        %v1949 = vsel %vm1927, %v1876, %v1365
        %v1951 = vsel %vm1927, %v1878, %v1367
        %v1953 = vsel %vm1927, %v1880, %v1369
        %v1955 = vsel %vm1927, %v1882, %v1371
        %v1957 = vsel %vm1927, %v1884, %v1373
        %v1959 = vsel %vm1927, %v1886, %v1375
        %v1961 = vsel %vm1927, %v1888, %v1377
        %v1963 = vsel %vm1927, %v1890, %v1379
        %v1965 = vsel %vm1927, %v1892, %v1381
        %v1967 = vsel %vm1927, %v1894, %v1383
        %v1969 = vsel %vm1927, %v1896, %v1385
        %v1971 = vsel %vm1927, %v1898, %v1387
        %v1973 = vsel %vm1927, %v1900, %v1389
        %v1975 = vsel %vm1927, %v1902, %v1391
        %v1977 = vsel %vm1927, %v1904, %v1393
        %v1979 = vsel %vm1927, %v1906, %v1395
        %v1981 = vsel %vm1927, %v1908, %v1397
        %v1983 = vsel %vm1927, %v1910, %v1399
        %v1985 = vsel %vm1927, %v1912, %v1401
        %v1987 = vsel %vm1927, %v1914, %v1403
        %v1989 = vsel %vm1927, %v1916, %v1405
        %v1991 = vsel %vm1927, %v1918, %v1407
        %v1993 = vsel %vm1927, %v1920, %v1409
        %v1995 = vsel %vm1927, %v1922, %v1411
        %v1997 = vsel %vm1927, %v1924, %v1413
        %v1999 = vsel %vm1927, %v1926, %v1415
        %v2000 = vld [vmem:[%s1] sm:$0xf]
        %v2001 = vld [vmem:[%s1 + $0x4] sm:$0xf]
        %v2002 = vld [vmem:[%s1 + $0x8] sm:$0xf]
        %v2003 = vld [vmem:[%s1 + $0xc] sm:$0xf]
        %v2004 = vld [vmem:[%s1 + $0x10] sm:$0x3]
        %v2005 = vld [vmem:[%s2] sm:$0x1]
        %v2007 = vlaneseq
        %v2008 = vshrl.u32 %v2007, 7
        %v2009 = vsub.s32 0, %v2008
        %v2010 = vrot.slane %v2005, %v2009
        %v2047 = vcombine.high %v1929, %v1929
        %v2049 = vunpack.c.l.s4 1966171168
        %v2050 = vunpack.c.0.s8 %v2049
        %v2051 = vlaneseq
        %v2052 = vshrl.u32 %v2051, 7
        %v2053 = vsub.s32 %v2050, %v2052
        %v2054 = vrot.slane %v1929, %v2053
        %v2056 = vunpack.c.l.s4 1966171168
        %v2057 = vunpack.c.0.s8 %v2056
        %v2058 = vlaneseq
        %v2059 = vshrl.u32 %v2058, 7
        %v2060 = vsub.s32 %v2057, %v2059
        %v2061 = vrot.slane %v2047, %v2060
        %v2062 = vcombine.high %v2054, %v2054
        %v2063 = vcombine.high %v2061, %v2061
        %v2065 = vunpack.c.l.s4 1966171168
        %v2066 = vunpack.c.0.s8 %v2065
        %v2067 = vlaneseq
        %v2068 = vshrl.u32 %v2067, 7
        %v2069 = vsub.s32 %v2066, %v2068
        %v2070 = vrot.slane %v2054, %v2069
        %v2072 = vunpack.c.l.s4 1966171168
        %v2073 = vunpack.c.0.s8 %v2072
        %v2074 = vlaneseq
        %v2075 = vshrl.u32 %v2074, 7
        %v2076 = vsub.s32 %v2073, %v2075
        %v2077 = vrot.slane %v2061, %v2076
        %v2079 = vunpack.c.l.s4 1966171168
        %v2080 = vunpack.c.0.s8 %v2079
        %v2081 = vlaneseq
        %v2082 = vshrl.u32 %v2081, 7
        %v2083 = vsub.s32 %v2080, %v2082
        %v2084 = vrot.slane %v2062, %v2083
        %v2086 = vunpack.c.l.s4 1966171168
        %v2087 = vunpack.c.0.s8 %v2086
        %v2088 = vlaneseq
        %v2089 = vshrl.u32 %v2088, 7
        %v2090 = vsub.s32 %v2087, %v2089
        %v2091 = vrot.slane %v2063, %v2090
        %v2092 = vcombine.high %v2070, %v2070
        %v2093 = vcombine.high %v2077, %v2077
        %v2094 = vcombine.high %v2084, %v2084
        %v2095 = vcombine.high %v2091, %v2091
        %v2097 = vunpack.c.l.s4 1966171168
        %v2098 = vunpack.c.0.s8 %v2097
        %v2099 = vlaneseq
        %v2100 = vshrl.u32 %v2099, 7
        %v2101 = vsub.s32 %v2098, %v2100
        %v2102 = vrot.slane %v1931, %v2101
        %v2104 = vunpack.c.l.s4 1966171168
        %v2105 = vunpack.c.0.s8 %v2104
        %v2106 = vlaneseq
        %v2107 = vshrl.u32 %v2106, 7
        %v2108 = vsub.s32 %v2105, %v2107
        %v2109 = vrot.slane %v2102, %v2108
        %v2110 = vcombine.high %v1933, %v1933
        %v2112 = vunpack.c.l.s4 1966171168
        %v2113 = vunpack.c.0.s8 %v2112
        %v2114 = vlaneseq
        %v2115 = vshrl.u32 %v2114, 7
        %v2116 = vsub.s32 %v2113, %v2115
        %v2117 = vrot.slane %v1933, %v2116
        %v2119 = vunpack.c.l.s4 1966171168
        %v2120 = vunpack.c.0.s8 %v2119
        %v2121 = vlaneseq
        %v2122 = vshrl.u32 %v2121, 7
        %v2123 = vsub.s32 %v2120, %v2122
        %v2124 = vrot.slane %v2110, %v2123
        %v2125 = vcombine.high %v2117, %v2117
        %v2126 = vcombine.high %v2124, %v2124
        %v2128 = vunpack.c.l.s4 1966171168
        %v2129 = vunpack.c.0.s8 %v2128
        %v2130 = vlaneseq
        %v2131 = vshrl.u32 %v2130, 7
        %v2132 = vsub.s32 %v2129, %v2131
        %v2133 = vrot.slane %v2117, %v2132
        %v2135 = vunpack.c.l.s4 1966171168
        %v2136 = vunpack.c.0.s8 %v2135
        %v2137 = vlaneseq
        %v2138 = vshrl.u32 %v2137, 7
        %v2139 = vsub.s32 %v2136, %v2138
        %v2140 = vrot.slane %v2124, %v2139
        %v2142 = vunpack.c.l.s4 1966171168
        %v2143 = vunpack.c.0.s8 %v2142
        %v2144 = vlaneseq
        %v2145 = vshrl.u32 %v2144, 7
        %v2146 = vsub.s32 %v2143, %v2145
        %v2147 = vrot.slane %v2125, %v2146
        %v2149 = vunpack.c.l.s4 1966171168
        %v2150 = vunpack.c.0.s8 %v2149
        %v2151 = vlaneseq
        %v2152 = vshrl.u32 %v2151, 7
        %v2153 = vsub.s32 %v2150, %v2152
        %v2154 = vrot.slane %v2126, %v2153
        %v2155 = vcombine.high %v2133, %v2133
        %v2156 = vcombine.high %v2140, %v2140
        %v2157 = vcombine.high %v2147, %v2147
        %v2158 = vcombine.high %v2154, %v2154
        %v2160 = vunpack.c.l.s4 1966171168
        %v2161 = vunpack.c.0.s8 %v2160
        %v2162 = vlaneseq
        %v2163 = vshrl.u32 %v2162, 7
        %v2164 = vsub.s32 %v2161, %v2163
        %v2165 = vrot.slane %v1935, %v2164
        %v2167 = vunpack.c.l.s4 1966171168
        %v2168 = vunpack.c.0.s8 %v2167
        %v2169 = vlaneseq
        %v2170 = vshrl.u32 %v2169, 7
        %v2171 = vsub.s32 %v2168, %v2170
        %v2172 = vrot.slane %v2165, %v2171
        %v2173 = vcombine.high %v1937, %v1937
        %v2175 = vunpack.c.l.s4 1966171168
        %v2176 = vunpack.c.0.s8 %v2175
        %v2177 = vlaneseq
        %v2178 = vshrl.u32 %v2177, 7
        %v2179 = vsub.s32 %v2176, %v2178
        %v2180 = vrot.slane %v1937, %v2179
        %v2182 = vunpack.c.l.s4 1966171168
        %v2183 = vunpack.c.0.s8 %v2182
        %v2184 = vlaneseq
        %v2185 = vshrl.u32 %v2184, 7
        %v2186 = vsub.s32 %v2183, %v2185
        %v2187 = vrot.slane %v2173, %v2186
        %v2188 = vcombine.high %v2180, %v2180
        %v2189 = vcombine.high %v2187, %v2187
        %v2191 = vunpack.c.l.s4 1966171168
        %v2192 = vunpack.c.0.s8 %v2191
        %v2193 = vlaneseq
        %v2194 = vshrl.u32 %v2193, 7
        %v2195 = vsub.s32 %v2192, %v2194
        %v2196 = vrot.slane %v2180, %v2195
        %v2198 = vunpack.c.l.s4 1966171168
        %v2199 = vunpack.c.0.s8 %v2198
        %v2200 = vlaneseq
        %v2201 = vshrl.u32 %v2200, 7
        %v2202 = vsub.s32 %v2199, %v2201
        %v2203 = vrot.slane %v2187, %v2202
        %v2205 = vunpack.c.l.s4 1966171168
        %v2206 = vunpack.c.0.s8 %v2205
        %v2207 = vlaneseq
        %v2208 = vshrl.u32 %v2207, 7
        %v2209 = vsub.s32 %v2206, %v2208
        %v2210 = vrot.slane %v2188, %v2209
        %v2212 = vunpack.c.l.s4 1966171168
        %v2213 = vunpack.c.0.s8 %v2212
        %v2214 = vlaneseq
        %v2215 = vshrl.u32 %v2214, 7
        %v2216 = vsub.s32 %v2213, %v2215
        %v2217 = vrot.slane %v2189, %v2216
        %v2218 = vcombine.high %v2196, %v2196
        %v2219 = vcombine.high %v2203, %v2203
        %v2220 = vcombine.high %v2210, %v2210
        %v2221 = vcombine.high %v2217, %v2217
        %v2223 = vunpack.c.l.s4 1966171168
        %v2224 = vunpack.c.0.s8 %v2223
        %v2225 = vlaneseq
        %v2226 = vshrl.u32 %v2225, 7
        %v2227 = vsub.s32 %v2224, %v2226
        %v2228 = vrot.slane %v1939, %v2227
        %v2230 = vunpack.c.l.s4 1966171168
        %v2231 = vunpack.c.0.s8 %v2230
        %v2232 = vlaneseq
        %v2233 = vshrl.u32 %v2232, 7
        %v2234 = vsub.s32 %v2231, %v2233
        %v2235 = vrot.slane %v2228, %v2234
        %v2236 = vcombine.high %v1941, %v1941
        %v2238 = vunpack.c.l.s4 1966171168
        %v2239 = vunpack.c.0.s8 %v2238
        %v2240 = vlaneseq
        %v2241 = vshrl.u32 %v2240, 7
        %v2242 = vsub.s32 %v2239, %v2241
        %v2243 = vrot.slane %v1941, %v2242
        %v2245 = vunpack.c.l.s4 1966171168
        %v2246 = vunpack.c.0.s8 %v2245
        %v2247 = vlaneseq
        %v2248 = vshrl.u32 %v2247, 7
        %v2249 = vsub.s32 %v2246, %v2248
        %v2250 = vrot.slane %v2236, %v2249
        %v2251 = vcombine.high %v2243, %v2243
        %v2252 = vcombine.high %v2250, %v2250
        %v2254 = vunpack.c.l.s4 1966171168
        %v2255 = vunpack.c.0.s8 %v2254
        %v2256 = vlaneseq
        %v2257 = vshrl.u32 %v2256, 7
        %v2258 = vsub.s32 %v2255, %v2257
        %v2259 = vrot.slane %v2243, %v2258
        %v2261 = vunpack.c.l.s4 1966171168
        %v2262 = vunpack.c.0.s8 %v2261
        %v2263 = vlaneseq
        %v2264 = vshrl.u32 %v2263, 7
        %v2265 = vsub.s32 %v2262, %v2264
        %v2266 = vrot.slane %v2250, %v2265
        %v2268 = vunpack.c.l.s4 1966171168
        %v2269 = vunpack.c.0.s8 %v2268
        %v2270 = vlaneseq
        %v2271 = vshrl.u32 %v2270, 7
        %v2272 = vsub.s32 %v2269, %v2271
        %v2273 = vrot.slane %v2251, %v2272
        %v2275 = vunpack.c.l.s4 1966171168
        %v2276 = vunpack.c.0.s8 %v2275
        %v2277 = vlaneseq
        %v2278 = vshrl.u32 %v2277, 7
        %v2279 = vsub.s32 %v2276, %v2278
        %v2280 = vrot.slane %v2252, %v2279
        %v2281 = vcombine.high %v2259, %v2259
        %v2282 = vcombine.high %v2266, %v2266
        %v2283 = vcombine.high %v2273, %v2273
        %v2284 = vcombine.high %v2280, %v2280
        %v2286 = vunpack.c.l.s4 1966171168
        %v2287 = vunpack.c.0.s8 %v2286
        %v2288 = vlaneseq
        %v2289 = vshrl.u32 %v2288, 7
        %v2290 = vsub.s32 %v2287, %v2289
        %v2291 = vrot.slane %v1943, %v2290
        %v2293 = vunpack.c.l.s4 1966171168
        %v2294 = vunpack.c.0.s8 %v2293
        %v2295 = vlaneseq
        %v2296 = vshrl.u32 %v2295, 7
        %v2297 = vsub.s32 %v2294, %v2296
        %v2298 = vrot.slane %v2291, %v2297
        %v2299 = vcombine.high %v1945, %v1945
        %v2301 = vunpack.c.l.s4 1966171168
        %v2302 = vunpack.c.0.s8 %v2301
        %v2303 = vlaneseq
        %v2304 = vshrl.u32 %v2303, 7
        %v2305 = vsub.s32 %v2302, %v2304
        %v2306 = vrot.slane %v1945, %v2305
        %v2308 = vunpack.c.l.s4 1966171168
        %v2309 = vunpack.c.0.s8 %v2308
        %v2310 = vlaneseq
        %v2311 = vshrl.u32 %v2310, 7
        %v2312 = vsub.s32 %v2309, %v2311
        %v2313 = vrot.slane %v2299, %v2312
        %v2314 = vcombine.high %v2306, %v2306
        %v2315 = vcombine.high %v2313, %v2313
        %v2317 = vunpack.c.l.s4 1966171168
        %v2318 = vunpack.c.0.s8 %v2317
        %v2319 = vlaneseq
        %v2320 = vshrl.u32 %v2319, 7
        %v2321 = vsub.s32 %v2318, %v2320
        %v2322 = vrot.slane %v2306, %v2321
        %v2324 = vunpack.c.l.s4 1966171168
        %v2325 = vunpack.c.0.s8 %v2324
        %v2326 = vlaneseq
        %v2327 = vshrl.u32 %v2326, 7
        %v2328 = vsub.s32 %v2325, %v2327
        %v2329 = vrot.slane %v2313, %v2328
        %v2331 = vunpack.c.l.s4 1966171168
        %v2332 = vunpack.c.0.s8 %v2331
        %v2333 = vlaneseq
        %v2334 = vshrl.u32 %v2333, 7
        %v2335 = vsub.s32 %v2332, %v2334
        %v2336 = vrot.slane %v2314, %v2335
        %v2338 = vunpack.c.l.s4 1966171168
        %v2339 = vunpack.c.0.s8 %v2338
        %v2340 = vlaneseq
        %v2341 = vshrl.u32 %v2340, 7
        %v2342 = vsub.s32 %v2339, %v2341
        %v2343 = vrot.slane %v2315, %v2342
        %v2344 = vcombine.high %v2322, %v2322
        %v2345 = vcombine.high %v2329, %v2329
        %v2346 = vcombine.high %v2336, %v2336
        %v2347 = vcombine.high %v2343, %v2343
        %v2349 = vunpack.c.l.s4 1966171168
        %v2350 = vunpack.c.0.s8 %v2349
        %v2351 = vlaneseq
        %v2352 = vshrl.u32 %v2351, 7
        %v2353 = vsub.s32 %v2350, %v2352
        %v2354 = vrot.slane %v1947, %v2353
        %v2356 = vunpack.c.l.s4 1966171168
        %v2357 = vunpack.c.0.s8 %v2356
        %v2358 = vlaneseq
        %v2359 = vshrl.u32 %v2358, 7
        %v2360 = vsub.s32 %v2357, %v2359
        %v2361 = vrot.slane %v2354, %v2360
        %v2362 = vcombine.high %v1949, %v1949
        %v2364 = vunpack.c.l.s4 1966171168
        %v2365 = vunpack.c.0.s8 %v2364
        %v2366 = vlaneseq
        %v2367 = vshrl.u32 %v2366, 7
        %v2368 = vsub.s32 %v2365, %v2367
        %v2369 = vrot.slane %v1949, %v2368
        %v2371 = vunpack.c.l.s4 1966171168
        %v2372 = vunpack.c.0.s8 %v2371
        %v2373 = vlaneseq
        %v2374 = vshrl.u32 %v2373, 7
        %v2375 = vsub.s32 %v2372, %v2374
        %v2376 = vrot.slane %v2362, %v2375
        %v2377 = vcombine.high %v2369, %v2369
        %v2378 = vcombine.high %v2376, %v2376
        %v2380 = vunpack.c.l.s4 1966171168
        %v2381 = vunpack.c.0.s8 %v2380
        %v2382 = vlaneseq
        %v2383 = vshrl.u32 %v2382, 7
        %v2384 = vsub.s32 %v2381, %v2383
        %v2385 = vrot.slane %v2369, %v2384
        %v2387 = vunpack.c.l.s4 1966171168
        %v2388 = vunpack.c.0.s8 %v2387
        %v2389 = vlaneseq
        %v2390 = vshrl.u32 %v2389, 7
        %v2391 = vsub.s32 %v2388, %v2390
        %v2392 = vrot.slane %v2376, %v2391
        %v2394 = vunpack.c.l.s4 1966171168
        %v2395 = vunpack.c.0.s8 %v2394
        %v2396 = vlaneseq
        %v2397 = vshrl.u32 %v2396, 7
        %v2398 = vsub.s32 %v2395, %v2397
        %v2399 = vrot.slane %v2377, %v2398
        %v2401 = vunpack.c.l.s4 1966171168
        %v2402 = vunpack.c.0.s8 %v2401
        %v2403 = vlaneseq
        %v2404 = vshrl.u32 %v2403, 7
        %v2405 = vsub.s32 %v2402, %v2404
        %v2406 = vrot.slane %v2378, %v2405
        %v2407 = vcombine.high %v2385, %v2385
        %v2408 = vcombine.high %v2392, %v2392
        %v2409 = vcombine.high %v2399, %v2399
        %v2410 = vcombine.high %v2406, %v2406
        %v2412 = vunpack.c.l.s4 1966171168
        %v2413 = vunpack.c.0.s8 %v2412
        %v2414 = vlaneseq
        %v2415 = vshrl.u32 %v2414, 7
        %v2416 = vsub.s32 %v2413, %v2415
        %v2417 = vrot.slane %v1951, %v2416
        %v2419 = vunpack.c.l.s4 1966171168
        %v2420 = vunpack.c.0.s8 %v2419
        %v2421 = vlaneseq
        %v2422 = vshrl.u32 %v2421, 7
        %v2423 = vsub.s32 %v2420, %v2422
        %v2424 = vrot.slane %v2417, %v2423
        %v2425 = vcombine.high %v1953, %v1953
        %v2427 = vunpack.c.l.s4 1966171168
        %v2428 = vunpack.c.0.s8 %v2427
        %v2429 = vlaneseq
        %v2430 = vshrl.u32 %v2429, 7
        %v2431 = vsub.s32 %v2428, %v2430
        %v2432 = vrot.slane %v1953, %v2431
        %v2434 = vunpack.c.l.s4 1966171168
        %v2435 = vunpack.c.0.s8 %v2434
        %v2436 = vlaneseq
        %v2437 = vshrl.u32 %v2436, 7
        %v2438 = vsub.s32 %v2435, %v2437
        %v2439 = vrot.slane %v2425, %v2438
        %v2440 = vcombine.high %v2432, %v2432
        %v2441 = vcombine.high %v2439, %v2439
        %v2443 = vunpack.c.l.s4 1966171168
        %v2444 = vunpack.c.0.s8 %v2443
        %v2445 = vlaneseq
        %v2446 = vshrl.u32 %v2445, 7
        %v2447 = vsub.s32 %v2444, %v2446
        %v2448 = vrot.slane %v2432, %v2447
        %v2450 = vunpack.c.l.s4 1966171168
        %v2451 = vunpack.c.0.s8 %v2450
        %v2452 = vlaneseq
        %v2453 = vshrl.u32 %v2452, 7
        %v2454 = vsub.s32 %v2451, %v2453
        %v2455 = vrot.slane %v2439, %v2454
        %v2457 = vunpack.c.l.s4 1966171168
        %v2458 = vunpack.c.0.s8 %v2457
        %v2459 = vlaneseq
        %v2460 = vshrl.u32 %v2459, 7
        %v2461 = vsub.s32 %v2458, %v2460
        %v2462 = vrot.slane %v2440, %v2461
        %v2464 = vunpack.c.l.s4 1966171168
        %v2465 = vunpack.c.0.s8 %v2464
        %v2466 = vlaneseq
        %v2467 = vshrl.u32 %v2466, 7
        %v2468 = vsub.s32 %v2465, %v2467
        %v2469 = vrot.slane %v2441, %v2468
        %v2470 = vcombine.high %v2448, %v2448
        %v2471 = vcombine.high %v2455, %v2455
        %v2472 = vcombine.high %v2462, %v2462
        %v2473 = vcombine.high %v2469, %v2469
        %v2475 = vunpack.c.l.s4 1966171168
        %v2476 = vunpack.c.0.s8 %v2475
        %v2477 = vlaneseq
        %v2478 = vshrl.u32 %v2477, 7
        %v2479 = vsub.s32 %v2476, %v2478
        %v2480 = vrot.slane %v1955, %v2479
        %v2482 = vunpack.c.l.s4 1966171168
        %v2483 = vunpack.c.0.s8 %v2482
        %v2484 = vlaneseq
        %v2485 = vshrl.u32 %v2484, 7
        %v2486 = vsub.s32 %v2483, %v2485
        %v2487 = vrot.slane %v2480, %v2486
        %v2488 = vcombine.high %v1957, %v1957
        %v2490 = vunpack.c.l.s4 1966171168
        %v2491 = vunpack.c.0.s8 %v2490
        %v2492 = vlaneseq
        %v2493 = vshrl.u32 %v2492, 7
        %v2494 = vsub.s32 %v2491, %v2493
        %v2495 = vrot.slane %v1957, %v2494
        %v2497 = vunpack.c.l.s4 1966171168
        %v2498 = vunpack.c.0.s8 %v2497
        %v2499 = vlaneseq
        %v2500 = vshrl.u32 %v2499, 7
        %v2501 = vsub.s32 %v2498, %v2500
        %v2502 = vrot.slane %v2488, %v2501
        %v2503 = vcombine.high %v2495, %v2495
        %v2504 = vcombine.high %v2502, %v2502
        %v2506 = vunpack.c.l.s4 1966171168
        %v2507 = vunpack.c.0.s8 %v2506
        %v2508 = vlaneseq
        %v2509 = vshrl.u32 %v2508, 7
        %v2510 = vsub.s32 %v2507, %v2509
        %v2511 = vrot.slane %v2495, %v2510
        %v2513 = vunpack.c.l.s4 1966171168
        %v2514 = vunpack.c.0.s8 %v2513
        %v2515 = vlaneseq
        %v2516 = vshrl.u32 %v2515, 7
        %v2517 = vsub.s32 %v2514, %v2516
        %v2518 = vrot.slane %v2502, %v2517
        %v2520 = vunpack.c.l.s4 1966171168
        %v2521 = vunpack.c.0.s8 %v2520
        %v2522 = vlaneseq
        %v2523 = vshrl.u32 %v2522, 7
        %v2524 = vsub.s32 %v2521, %v2523
        %v2525 = vrot.slane %v2503, %v2524
        %v2527 = vunpack.c.l.s4 1966171168
        %v2528 = vunpack.c.0.s8 %v2527
        %v2529 = vlaneseq
        %v2530 = vshrl.u32 %v2529, 7
        %v2531 = vsub.s32 %v2528, %v2530
        %v2532 = vrot.slane %v2504, %v2531
        %v2533 = vcombine.high %v2511, %v2511
        %v2534 = vcombine.high %v2518, %v2518
        %v2535 = vcombine.high %v2525, %v2525
        %v2536 = vcombine.high %v2532, %v2532
        %v2538 = vunpack.c.l.s4 1966171168
        %v2539 = vunpack.c.0.s8 %v2538
        %v2540 = vlaneseq
        %v2541 = vshrl.u32 %v2540, 7
        %v2542 = vsub.s32 %v2539, %v2541
        %v2543 = vrot.slane %v1959, %v2542
        %v2545 = vunpack.c.l.s4 1966171168
        %v2546 = vunpack.c.0.s8 %v2545
        %v2547 = vlaneseq
        %v2548 = vshrl.u32 %v2547, 7
        %v2549 = vsub.s32 %v2546, %v2548
        %v2550 = vrot.slane %v2543, %v2549
        %v2551 = vcombine.high %v1961, %v1961
        %v2553 = vunpack.c.l.s4 1966171168
        %v2554 = vunpack.c.0.s8 %v2553
        %v2555 = vlaneseq
        %v2556 = vshrl.u32 %v2555, 7
        %v2557 = vsub.s32 %v2554, %v2556
        %v2558 = vrot.slane %v1961, %v2557
        %v2560 = vunpack.c.l.s4 1966171168
        %v2561 = vunpack.c.0.s8 %v2560
        %v2562 = vlaneseq
        %v2563 = vshrl.u32 %v2562, 7
        %v2564 = vsub.s32 %v2561, %v2563
        %v2565 = vrot.slane %v2551, %v2564
        %v2566 = vcombine.high %v2558, %v2558
        %v2567 = vcombine.high %v2565, %v2565
        %v2569 = vunpack.c.l.s4 1966171168
        %v2570 = vunpack.c.0.s8 %v2569
        %v2571 = vlaneseq
        %v2572 = vshrl.u32 %v2571, 7
        %v2573 = vsub.s32 %v2570, %v2572
        %v2574 = vrot.slane %v2558, %v2573
        %v2576 = vunpack.c.l.s4 1966171168
        %v2577 = vunpack.c.0.s8 %v2576
        %v2578 = vlaneseq
        %v2579 = vshrl.u32 %v2578, 7
        %v2580 = vsub.s32 %v2577, %v2579
        %v2581 = vrot.slane %v2565, %v2580
        %v2583 = vunpack.c.l.s4 1966171168
        %v2584 = vunpack.c.0.s8 %v2583
        %v2585 = vlaneseq
        %v2586 = vshrl.u32 %v2585, 7
        %v2587 = vsub.s32 %v2584, %v2586
        %v2588 = vrot.slane %v2566, %v2587
        %v2590 = vunpack.c.l.s4 1966171168
        %v2591 = vunpack.c.0.s8 %v2590
        %v2592 = vlaneseq
        %v2593 = vshrl.u32 %v2592, 7
        %v2594 = vsub.s32 %v2591, %v2593
        %v2595 = vrot.slane %v2567, %v2594
        %v2596 = vcombine.high %v2574, %v2574
        %v2597 = vcombine.high %v2581, %v2581
        %v2598 = vcombine.high %v2588, %v2588
        %v2599 = vcombine.high %v2595, %v2595
        %v2601 = vunpack.c.l.s4 1966171168
        %v2602 = vunpack.c.0.s8 %v2601
        %v2603 = vlaneseq
        %v2604 = vshrl.u32 %v2603, 7
        %v2605 = vsub.s32 %v2602, %v2604
        %v2606 = vrot.slane %v1963, %v2605
        %v2608 = vunpack.c.l.s4 1966171168
        %v2609 = vunpack.c.0.s8 %v2608
        %v2610 = vlaneseq
        %v2611 = vshrl.u32 %v2610, 7
        %v2612 = vsub.s32 %v2609, %v2611
        %v2613 = vrot.slane %v2606, %v2612
        %v2614 = vcombine.high %v1965, %v1965
        %v2616 = vunpack.c.l.s4 1966171168
        %v2617 = vunpack.c.0.s8 %v2616
        %v2618 = vlaneseq
        %v2619 = vshrl.u32 %v2618, 7
        %v2620 = vsub.s32 %v2617, %v2619
        %v2621 = vrot.slane %v1965, %v2620
        %v2623 = vunpack.c.l.s4 1966171168
        %v2624 = vunpack.c.0.s8 %v2623
        %v2625 = vlaneseq
        %v2626 = vshrl.u32 %v2625, 7
        %v2627 = vsub.s32 %v2624, %v2626
        %v2628 = vrot.slane %v2614, %v2627
        %v2629 = vcombine.high %v2621, %v2621
        %v2630 = vcombine.high %v2628, %v2628
        %v2632 = vunpack.c.l.s4 1966171168
        %v2633 = vunpack.c.0.s8 %v2632
        %v2634 = vlaneseq
        %v2635 = vshrl.u32 %v2634, 7
        %v2636 = vsub.s32 %v2633, %v2635
        %v2637 = vrot.slane %v2621, %v2636
        %v2639 = vunpack.c.l.s4 1966171168
        %v2640 = vunpack.c.0.s8 %v2639
        %v2641 = vlaneseq
        %v2642 = vshrl.u32 %v2641, 7
        %v2643 = vsub.s32 %v2640, %v2642
        %v2644 = vrot.slane %v2628, %v2643
        %v2646 = vunpack.c.l.s4 1966171168
        %v2647 = vunpack.c.0.s8 %v2646
        %v2648 = vlaneseq
        %v2649 = vshrl.u32 %v2648, 7
        %v2650 = vsub.s32 %v2647, %v2649
        %v2651 = vrot.slane %v2629, %v2650
        %v2653 = vunpack.c.l.s4 1966171168
        %v2654 = vunpack.c.0.s8 %v2653
        %v2655 = vlaneseq
        %v2656 = vshrl.u32 %v2655, 7
        %v2657 = vsub.s32 %v2654, %v2656
        %v2658 = vrot.slane %v2630, %v2657
        %v2659 = vcombine.high %v2637, %v2637
        %v2660 = vcombine.high %v2644, %v2644
        %v2661 = vcombine.high %v2651, %v2651
        %v2662 = vcombine.high %v2658, %v2658
        %v2664 = vunpack.c.l.s4 1966171168
        %v2665 = vunpack.c.0.s8 %v2664
        %v2666 = vlaneseq
        %v2667 = vshrl.u32 %v2666, 7
        %v2668 = vsub.s32 %v2665, %v2667
        %v2669 = vrot.slane %v1967, %v2668
        %v2671 = vunpack.c.l.s4 1966171168
        %v2672 = vunpack.c.0.s8 %v2671
        %v2673 = vlaneseq
        %v2674 = vshrl.u32 %v2673, 7
        %v2675 = vsub.s32 %v2672, %v2674
        %v2676 = vrot.slane %v2669, %v2675
        %v2677 = vcombine.high %v1969, %v1969
        %v2679 = vunpack.c.l.s4 1966171168
        %v2680 = vunpack.c.0.s8 %v2679
        %v2681 = vlaneseq
        %v2682 = vshrl.u32 %v2681, 7
        %v2683 = vsub.s32 %v2680, %v2682
        %v2684 = vrot.slane %v1969, %v2683
        %v2686 = vunpack.c.l.s4 1966171168
        %v2687 = vunpack.c.0.s8 %v2686
        %v2688 = vlaneseq
        %v2689 = vshrl.u32 %v2688, 7
        %v2690 = vsub.s32 %v2687, %v2689
        %v2691 = vrot.slane %v2677, %v2690
        %v2692 = vcombine.high %v2684, %v2684
        %v2693 = vcombine.high %v2691, %v2691
        %v2695 = vunpack.c.l.s4 1966171168
        %v2696 = vunpack.c.0.s8 %v2695
        %v2697 = vlaneseq
        %v2698 = vshrl.u32 %v2697, 7
        %v2699 = vsub.s32 %v2696, %v2698
        %v2700 = vrot.slane %v2684, %v2699
        %v2702 = vunpack.c.l.s4 1966171168
        %v2703 = vunpack.c.0.s8 %v2702
        %v2704 = vlaneseq
        %v2705 = vshrl.u32 %v2704, 7
        %v2706 = vsub.s32 %v2703, %v2705
        %v2707 = vrot.slane %v2691, %v2706
        %v2709 = vunpack.c.l.s4 1966171168
        %v2710 = vunpack.c.0.s8 %v2709
        %v2711 = vlaneseq
        %v2712 = vshrl.u32 %v2711, 7
        %v2713 = vsub.s32 %v2710, %v2712
        %v2714 = vrot.slane %v2692, %v2713
        %v2716 = vunpack.c.l.s4 1966171168
        %v2717 = vunpack.c.0.s8 %v2716
        %v2718 = vlaneseq
        %v2719 = vshrl.u32 %v2718, 7
        %v2720 = vsub.s32 %v2717, %v2719
        %v2721 = vrot.slane %v2693, %v2720
        %v2722 = vcombine.high %v2700, %v2700
        %v2723 = vcombine.high %v2707, %v2707
        %v2724 = vcombine.high %v2714, %v2714
        %v2725 = vcombine.high %v2721, %v2721
        %v2727 = vunpack.c.l.s4 1966171168
        %v2728 = vunpack.c.0.s8 %v2727
        %v2729 = vlaneseq
        %v2730 = vshrl.u32 %v2729, 7
        %v2731 = vsub.s32 %v2728, %v2730
        %v2732 = vrot.slane %v1971, %v2731
        %v2734 = vunpack.c.l.s4 1966171168
        %v2735 = vunpack.c.0.s8 %v2734
        %v2736 = vlaneseq
        %v2737 = vshrl.u32 %v2736, 7
        %v2738 = vsub.s32 %v2735, %v2737
        %v2739 = vrot.slane %v2732, %v2738
        %v2740 = vcombine.high %v1973, %v1973
        %v2742 = vunpack.c.l.s4 1966171168
        %v2743 = vunpack.c.0.s8 %v2742
        %v2744 = vlaneseq
        %v2745 = vshrl.u32 %v2744, 7
        %v2746 = vsub.s32 %v2743, %v2745
        %v2747 = vrot.slane %v1973, %v2746
        %v2749 = vunpack.c.l.s4 1966171168
        %v2750 = vunpack.c.0.s8 %v2749
        %v2751 = vlaneseq
        %v2752 = vshrl.u32 %v2751, 7
        %v2753 = vsub.s32 %v2750, %v2752
        %v2754 = vrot.slane %v2740, %v2753
        %v2755 = vcombine.high %v2747, %v2747
        %v2756 = vcombine.high %v2754, %v2754
        %v2758 = vunpack.c.l.s4 1966171168
        %v2759 = vunpack.c.0.s8 %v2758
        %v2760 = vlaneseq
        %v2761 = vshrl.u32 %v2760, 7
        %v2762 = vsub.s32 %v2759, %v2761
        %v2763 = vrot.slane %v2747, %v2762
        %v2765 = vunpack.c.l.s4 1966171168
        %v2766 = vunpack.c.0.s8 %v2765
        %v2767 = vlaneseq
        %v2768 = vshrl.u32 %v2767, 7
        %v2769 = vsub.s32 %v2766, %v2768
        %v2770 = vrot.slane %v2754, %v2769
        %v2772 = vunpack.c.l.s4 1966171168
        %v2773 = vunpack.c.0.s8 %v2772
        %v2774 = vlaneseq
        %v2775 = vshrl.u32 %v2774, 7
        %v2776 = vsub.s32 %v2773, %v2775
        %v2777 = vrot.slane %v2755, %v2776
        %v2779 = vunpack.c.l.s4 1966171168
        %v2780 = vunpack.c.0.s8 %v2779
        %v2781 = vlaneseq
        %v2782 = vshrl.u32 %v2781, 7
        %v2783 = vsub.s32 %v2780, %v2782
        %v2784 = vrot.slane %v2756, %v2783
        %v2785 = vcombine.high %v2763, %v2763
        %v2786 = vcombine.high %v2770, %v2770
        %v2787 = vcombine.high %v2777, %v2777
        %v2788 = vcombine.high %v2784, %v2784
        %v2790 = vunpack.c.l.s4 1966171168
        %v2791 = vunpack.c.0.s8 %v2790
        %v2792 = vlaneseq
        %v2793 = vshrl.u32 %v2792, 7
        %v2794 = vsub.s32 %v2791, %v2793
        %v2795 = vrot.slane %v1975, %v2794
        %v2797 = vunpack.c.l.s4 1966171168
        %v2798 = vunpack.c.0.s8 %v2797
        %v2799 = vlaneseq
        %v2800 = vshrl.u32 %v2799, 7
        %v2801 = vsub.s32 %v2798, %v2800
        %v2802 = vrot.slane %v2795, %v2801
        %v2803 = vcombine.high %v1977, %v1977
        %v2805 = vunpack.c.l.s4 1966171168
        %v2806 = vunpack.c.0.s8 %v2805
        %v2807 = vlaneseq
        %v2808 = vshrl.u32 %v2807, 7
        %v2809 = vsub.s32 %v2806, %v2808
        %v2810 = vrot.slane %v1977, %v2809
        %v2812 = vunpack.c.l.s4 1966171168
        %v2813 = vunpack.c.0.s8 %v2812
        %v2814 = vlaneseq
        %v2815 = vshrl.u32 %v2814, 7
        %v2816 = vsub.s32 %v2813, %v2815
        %v2817 = vrot.slane %v2803, %v2816
        %v2818 = vcombine.high %v2810, %v2810
        %v2819 = vcombine.high %v2817, %v2817
        %v2821 = vunpack.c.l.s4 1966171168
        %v2822 = vunpack.c.0.s8 %v2821
        %v2823 = vlaneseq
        %v2824 = vshrl.u32 %v2823, 7
        %v2825 = vsub.s32 %v2822, %v2824
        %v2826 = vrot.slane %v2810, %v2825
        %v2828 = vunpack.c.l.s4 1966171168
        %v2829 = vunpack.c.0.s8 %v2828
        %v2830 = vlaneseq
        %v2831 = vshrl.u32 %v2830, 7
        %v2832 = vsub.s32 %v2829, %v2831
        %v2833 = vrot.slane %v2817, %v2832
        %v2835 = vunpack.c.l.s4 1966171168
        %v2836 = vunpack.c.0.s8 %v2835
        %v2837 = vlaneseq
        %v2838 = vshrl.u32 %v2837, 7
        %v2839 = vsub.s32 %v2836, %v2838
        %v2840 = vrot.slane %v2818, %v2839
        %v2842 = vunpack.c.l.s4 1966171168
        %v2843 = vunpack.c.0.s8 %v2842
        %v2844 = vlaneseq
        %v2845 = vshrl.u32 %v2844, 7
        %v2846 = vsub.s32 %v2843, %v2845
        %v2847 = vrot.slane %v2819, %v2846
        %v2848 = vcombine.high %v2826, %v2826
        %v2849 = vcombine.high %v2833, %v2833
        %v2850 = vcombine.high %v2840, %v2840
        %v2851 = vcombine.high %v2847, %v2847
        %v2853 = vunpack.c.l.s4 1966171168
        %v2854 = vunpack.c.0.s8 %v2853
        %v2855 = vlaneseq
        %v2856 = vshrl.u32 %v2855, 7
        %v2857 = vsub.s32 %v2854, %v2856
        %v2858 = vrot.slane %v1979, %v2857
        %v2860 = vunpack.c.l.s4 1966171168
        %v2861 = vunpack.c.0.s8 %v2860
        %v2862 = vlaneseq
        %v2863 = vshrl.u32 %v2862, 7
        %v2864 = vsub.s32 %v2861, %v2863
        %v2865 = vrot.slane %v2858, %v2864
        %v2866 = vcombine.high %v1981, %v1981
        %v2868 = vunpack.c.l.s4 1966171168
        %v2869 = vunpack.c.0.s8 %v2868
        %v2870 = vlaneseq
        %v2871 = vshrl.u32 %v2870, 7
        %v2872 = vsub.s32 %v2869, %v2871
        %v2873 = vrot.slane %v1981, %v2872
        %v2875 = vunpack.c.l.s4 1966171168
        %v2876 = vunpack.c.0.s8 %v2875
        %v2877 = vlaneseq
        %v2878 = vshrl.u32 %v2877, 7
        %v2879 = vsub.s32 %v2876, %v2878
        %v2880 = vrot.slane %v2866, %v2879
        %v2881 = vcombine.high %v2873, %v2873
        %v2882 = vcombine.high %v2880, %v2880
        %v2884 = vunpack.c.l.s4 1966171168
        %v2885 = vunpack.c.0.s8 %v2884
        %v2886 = vlaneseq
        %v2887 = vshrl.u32 %v2886, 7
        %v2888 = vsub.s32 %v2885, %v2887
        %v2889 = vrot.slane %v2873, %v2888
        %v2891 = vunpack.c.l.s4 1966171168
        %v2892 = vunpack.c.0.s8 %v2891
        %v2893 = vlaneseq
        %v2894 = vshrl.u32 %v2893, 7
        %v2895 = vsub.s32 %v2892, %v2894
        %v2896 = vrot.slane %v2880, %v2895
        %v2898 = vunpack.c.l.s4 1966171168
        %v2899 = vunpack.c.0.s8 %v2898
        %v2900 = vlaneseq
        %v2901 = vshrl.u32 %v2900, 7
        %v2902 = vsub.s32 %v2899, %v2901
        %v2903 = vrot.slane %v2881, %v2902
        %v2905 = vunpack.c.l.s4 1966171168
        %v2906 = vunpack.c.0.s8 %v2905
        %v2907 = vlaneseq
        %v2908 = vshrl.u32 %v2907, 7
        %v2909 = vsub.s32 %v2906, %v2908
        %v2910 = vrot.slane %v2882, %v2909
        %v2911 = vcombine.high %v2889, %v2889
        %v2912 = vcombine.high %v2896, %v2896
        %v2913 = vcombine.high %v2903, %v2903
        %v2914 = vcombine.high %v2910, %v2910
        %v2916 = vunpack.c.l.s4 1966171168
        %v2917 = vunpack.c.0.s8 %v2916
        %v2918 = vlaneseq
        %v2919 = vshrl.u32 %v2918, 7
        %v2920 = vsub.s32 %v2917, %v2919
        %v2921 = vrot.slane %v1983, %v2920
        %v2923 = vunpack.c.l.s4 1966171168
        %v2924 = vunpack.c.0.s8 %v2923
        %v2925 = vlaneseq
        %v2926 = vshrl.u32 %v2925, 7
        %v2927 = vsub.s32 %v2924, %v2926
        %v2928 = vrot.slane %v2921, %v2927
        %v2929 = vcombine.high %v1985, %v1985
        %v2931 = vunpack.c.l.s4 1966171168
        %v2932 = vunpack.c.0.s8 %v2931
        %v2933 = vlaneseq
        %v2934 = vshrl.u32 %v2933, 7
        %v2935 = vsub.s32 %v2932, %v2934
        %v2936 = vrot.slane %v1985, %v2935
        %v2938 = vunpack.c.l.s4 1966171168
        %v2939 = vunpack.c.0.s8 %v2938
        %v2940 = vlaneseq
        %v2941 = vshrl.u32 %v2940, 7
        %v2942 = vsub.s32 %v2939, %v2941
        %v2943 = vrot.slane %v2929, %v2942
        %v2944 = vcombine.high %v2936, %v2936
        %v2945 = vcombine.high %v2943, %v2943
        %v2947 = vunpack.c.l.s4 1966171168
        %v2948 = vunpack.c.0.s8 %v2947
        %v2949 = vlaneseq
        %v2950 = vshrl.u32 %v2949, 7
        %v2951 = vsub.s32 %v2948, %v2950
        %v2952 = vrot.slane %v2936, %v2951
        %v2954 = vunpack.c.l.s4 1966171168
        %v2955 = vunpack.c.0.s8 %v2954
        %v2956 = vlaneseq
        %v2957 = vshrl.u32 %v2956, 7
        %v2958 = vsub.s32 %v2955, %v2957
        %v2959 = vrot.slane %v2943, %v2958
        %v2961 = vunpack.c.l.s4 1966171168
        %v2962 = vunpack.c.0.s8 %v2961
        %v2963 = vlaneseq
        %v2964 = vshrl.u32 %v2963, 7
        %v2965 = vsub.s32 %v2962, %v2964
        %v2966 = vrot.slane %v2944, %v2965
        %v2968 = vunpack.c.l.s4 1966171168
        %v2969 = vunpack.c.0.s8 %v2968
        %v2970 = vlaneseq
        %v2971 = vshrl.u32 %v2970, 7
        %v2972 = vsub.s32 %v2969, %v2971
        %v2973 = vrot.slane %v2945, %v2972
        %v2974 = vcombine.high %v2952, %v2952
        %v2975 = vcombine.high %v2959, %v2959
        %v2976 = vcombine.high %v2966, %v2966
        %v2977 = vcombine.high %v2973, %v2973
        %v2979 = vunpack.c.l.s4 1966171168
        %v2980 = vunpack.c.0.s8 %v2979
        %v2981 = vlaneseq
        %v2982 = vshrl.u32 %v2981, 7
        %v2983 = vsub.s32 %v2980, %v2982
        %v2984 = vrot.slane %v1987, %v2983
        %v2986 = vunpack.c.l.s4 1966171168
        %v2987 = vunpack.c.0.s8 %v2986
        %v2988 = vlaneseq
        %v2989 = vshrl.u32 %v2988, 7
        %v2990 = vsub.s32 %v2987, %v2989
        %v2991 = vrot.slane %v2984, %v2990
        %v2992 = vcombine.high %v1989, %v1989
        %v2994 = vunpack.c.l.s4 1966171168
        %v2995 = vunpack.c.0.s8 %v2994
        %v2996 = vlaneseq
        %v2997 = vshrl.u32 %v2996, 7
        %v2998 = vsub.s32 %v2995, %v2997
        %v2999 = vrot.slane %v1989, %v2998
        %v3001 = vunpack.c.l.s4 1966171168
        %v3002 = vunpack.c.0.s8 %v3001
        %v3003 = vlaneseq
        %v3004 = vshrl.u32 %v3003, 7
        %v3005 = vsub.s32 %v3002, %v3004
        %v3006 = vrot.slane %v2992, %v3005
        %v3007 = vcombine.high %v2999, %v2999
        %v3008 = vcombine.high %v3006, %v3006
        %v3010 = vunpack.c.l.s4 1966171168
        %v3011 = vunpack.c.0.s8 %v3010
        %v3012 = vlaneseq
        %v3013 = vshrl.u32 %v3012, 7
        %v3014 = vsub.s32 %v3011, %v3013
        %v3015 = vrot.slane %v2999, %v3014
        %v3017 = vunpack.c.l.s4 1966171168
        %v3018 = vunpack.c.0.s8 %v3017
        %v3019 = vlaneseq
        %v3020 = vshrl.u32 %v3019, 7
        %v3021 = vsub.s32 %v3018, %v3020
        %v3022 = vrot.slane %v3006, %v3021
        %v3024 = vunpack.c.l.s4 1966171168
        %v3025 = vunpack.c.0.s8 %v3024
        %v3026 = vlaneseq
        %v3027 = vshrl.u32 %v3026, 7
        %v3028 = vsub.s32 %v3025, %v3027
        %v3029 = vrot.slane %v3007, %v3028
        %v3031 = vunpack.c.l.s4 1966171168
        %v3032 = vunpack.c.0.s8 %v3031
        %v3033 = vlaneseq
        %v3034 = vshrl.u32 %v3033, 7
        %v3035 = vsub.s32 %v3032, %v3034
        %v3036 = vrot.slane %v3008, %v3035
        %v3037 = vcombine.high %v3015, %v3015
        %v3038 = vcombine.high %v3022, %v3022
        %v3039 = vcombine.high %v3029, %v3029
        %v3040 = vcombine.high %v3036, %v3036
        %v3042 = vunpack.c.l.s4 1966171168
        %v3043 = vunpack.c.0.s8 %v3042
        %v3044 = vlaneseq
        %v3045 = vshrl.u32 %v3044, 7
        %v3046 = vsub.s32 %v3043, %v3045
        %v3047 = vrot.slane %v1991, %v3046
        %v3049 = vunpack.c.l.s4 1966171168
        %v3050 = vunpack.c.0.s8 %v3049
        %v3051 = vlaneseq
        %v3052 = vshrl.u32 %v3051, 7
        %v3053 = vsub.s32 %v3050, %v3052
        %v3054 = vrot.slane %v3047, %v3053
        %v3055 = vcombine.high %v1993, %v1993
        %v3057 = vunpack.c.l.s4 1966171168
        %v3058 = vunpack.c.0.s8 %v3057
        %v3059 = vlaneseq
        %v3060 = vshrl.u32 %v3059, 7
        %v3061 = vsub.s32 %v3058, %v3060
        %v3062 = vrot.slane %v1993, %v3061
        %v3064 = vunpack.c.l.s4 1966171168
        %v3065 = vunpack.c.0.s8 %v3064
        %v3066 = vlaneseq
        %v3067 = vshrl.u32 %v3066, 7
        %v3068 = vsub.s32 %v3065, %v3067
        %v3069 = vrot.slane %v3055, %v3068
        %v3070 = vcombine.high %v3062, %v3062
        %v3071 = vcombine.high %v3069, %v3069
        %v3073 = vunpack.c.l.s4 1966171168
        %v3074 = vunpack.c.0.s8 %v3073
        %v3075 = vlaneseq
        %v3076 = vshrl.u32 %v3075, 7
        %v3077 = vsub.s32 %v3074, %v3076
        %v3078 = vrot.slane %v3062, %v3077
        %v3080 = vunpack.c.l.s4 1966171168
        %v3081 = vunpack.c.0.s8 %v3080
        %v3082 = vlaneseq
        %v3083 = vshrl.u32 %v3082, 7
        %v3084 = vsub.s32 %v3081, %v3083
        %v3085 = vrot.slane %v3069, %v3084
        %v3087 = vunpack.c.l.s4 1966171168
        %v3088 = vunpack.c.0.s8 %v3087
        %v3089 = vlaneseq
        %v3090 = vshrl.u32 %v3089, 7
        %v3091 = vsub.s32 %v3088, %v3090
        %v3092 = vrot.slane %v3070, %v3091
        %v3094 = vunpack.c.l.s4 1966171168
        %v3095 = vunpack.c.0.s8 %v3094
        %v3096 = vlaneseq
        %v3097 = vshrl.u32 %v3096, 7
        %v3098 = vsub.s32 %v3095, %v3097
        %v3099 = vrot.slane %v3071, %v3098
        %v3100 = vcombine.high %v3078, %v3078
        %v3101 = vcombine.high %v3085, %v3085
        %v3102 = vcombine.high %v3092, %v3092
        %v3103 = vcombine.high %v3099, %v3099
        %v3105 = vunpack.c.l.s4 1966171168
        %v3106 = vunpack.c.0.s8 %v3105
        %v3107 = vlaneseq
        %v3108 = vshrl.u32 %v3107, 7
        %v3109 = vsub.s32 %v3106, %v3108
        %v3110 = vrot.slane %v1995, %v3109
        %v3112 = vunpack.c.l.s4 1966171168
        %v3113 = vunpack.c.0.s8 %v3112
        %v3114 = vlaneseq
        %v3115 = vshrl.u32 %v3114, 7
        %v3116 = vsub.s32 %v3113, %v3115
        %v3117 = vrot.slane %v3110, %v3116
        %v3118 = vcombine.high %v1997, %v1997
        %v3120 = vunpack.c.l.s4 1966171168
        %v3121 = vunpack.c.0.s8 %v3120
        %v3122 = vlaneseq
        %v3123 = vshrl.u32 %v3122, 7
        %v3124 = vsub.s32 %v3121, %v3123
        %v3125 = vrot.slane %v1997, %v3124
        %v3127 = vunpack.c.l.s4 1966171168
        %v3128 = vunpack.c.0.s8 %v3127
        %v3129 = vlaneseq
        %v3130 = vshrl.u32 %v3129, 7
        %v3131 = vsub.s32 %v3128, %v3130
        %v3132 = vrot.slane %v3118, %v3131
        %v3133 = vcombine.high %v3125, %v3125
        %v3134 = vcombine.high %v3132, %v3132
        %v3136 = vunpack.c.l.s4 1966171168
        %v3137 = vunpack.c.0.s8 %v3136
        %v3138 = vlaneseq
        %v3139 = vshrl.u32 %v3138, 7
        %v3140 = vsub.s32 %v3137, %v3139
        %v3141 = vrot.slane %v3125, %v3140
        %v3143 = vunpack.c.l.s4 1966171168
        %v3144 = vunpack.c.0.s8 %v3143
        %v3145 = vlaneseq
        %v3146 = vshrl.u32 %v3145, 7
        %v3147 = vsub.s32 %v3144, %v3146
        %v3148 = vrot.slane %v3132, %v3147
        %v3150 = vunpack.c.l.s4 1966171168
        %v3151 = vunpack.c.0.s8 %v3150
        %v3152 = vlaneseq
        %v3153 = vshrl.u32 %v3152, 7
        %v3154 = vsub.s32 %v3151, %v3153
        %v3155 = vrot.slane %v3133, %v3154
        %v3157 = vunpack.c.l.s4 1966171168
        %v3158 = vunpack.c.0.s8 %v3157
        %v3159 = vlaneseq
        %v3160 = vshrl.u32 %v3159, 7
        %v3161 = vsub.s32 %v3158, %v3160
        %v3162 = vrot.slane %v3134, %v3161
        %v3163 = vcombine.high %v3141, %v3141
        %v3164 = vcombine.high %v3148, %v3148
        %v3165 = vcombine.high %v3155, %v3155
        %v3166 = vcombine.high %v3162, %v3162
        %v3168 = vunpack.c.l.s4 1966171168
        %v3169 = vunpack.c.0.s8 %v3168
        %v3170 = vlaneseq
        %v3171 = vshrl.u32 %v3170, 7
        %v3172 = vsub.s32 %v3169, %v3171
        %v3173 = vrot.slane %v1999, %v3172
        %v3175 = vunpack.c.l.s4 1966171168
        %v3176 = vunpack.c.0.s8 %v3175
        %v3177 = vlaneseq
        %v3178 = vshrl.u32 %v3177, 7
        %v3179 = vsub.s32 %v3176, %v3178
        %v3180 = vrot.slane %v3173, %v3179
        %v3181 = vcombine.high %v2010, %v2010
        %v3183 = vunpack.c.l.s4 1983009808
        %v3184 = vunpack.c.0.s8 %v3183
        %v3185 = vlaneseq
        %v3186 = vshrl.u32 %v3185, 7
        %v3187 = vsub.s32 %v3184, %v3186
        %v3188 = vrot.slane %v2010, %v3187
        %v3190 = vunpack.c.l.s4 1983009808
        %v3191 = vunpack.c.0.s8 %v3190
        %v3192 = vlaneseq
        %v3193 = vshrl.u32 %v3192, 7
        %v3194 = vsub.s32 %v3191, %v3193
        %v3195 = vrot.slane %v3181, %v3194
        %v3196 = vcombine.high %v3188, %v3188
        %v3197 = vcombine.high %v3195, %v3195
        %v3198 = vcombine.low %v2070, %v2084
        %v3199 = vcombine.low %v2092, %v2094
        %v3200 = vcombine.low %v2077, %v2091
        %v3201 = vcombine.low %v2093, %v2095
        %v3203 = vunpack.c.l.s4 1966171168
        %v3204 = vunpack.c.0.s8 %v3203
        %v3205 = vlaneseq
        %v3206 = vshrl.u32 %v3205, 7
        %v3207 = vsub.s32 %v3204, %v3206
        %v3208 = vrot.slane %v3198, %v3207
        %v3210 = vunpack.c.l.s4 1966171168
        %v3211 = vunpack.c.0.s8 %v3210
        %v3212 = vlaneseq
        %v3213 = vshrl.u32 %v3212, 7
        %v3214 = vsub.s32 %v3211, %v3213
        %v3215 = vrot.slane %v3199, %v3214
        %v3217 = vunpack.c.l.s4 1966171168
        %v3218 = vunpack.c.0.s8 %v3217
        %v3219 = vlaneseq
        %v3220 = vshrl.u32 %v3219, 7
        %v3221 = vsub.s32 %v3218, %v3220
        %v3222 = vrot.slane %v3200, %v3221
        %v3224 = vunpack.c.l.s4 1966171168
        %v3225 = vunpack.c.0.s8 %v3224
        %v3226 = vlaneseq
        %v3227 = vshrl.u32 %v3226, 7
        %v3228 = vsub.s32 %v3225, %v3227
        %v3229 = vrot.slane %v3201, %v3228
        %v3230 = vcombine.low %v3208, %v3215
        %v3231 = vcombine.low %v3222, %v3229
        %v3233 = vunpack.c.l.s4 1966171168
        %v3234 = vunpack.c.0.s8 %v3233
        %v3235 = vlaneseq
        %v3236 = vshrl.u32 %v3235, 7
        %v3237 = vsub.s32 %v3234, %v3236
        %v3238 = vrot.slane %v3230, %v3237
        %v3240 = vunpack.c.l.s4 1966171168
        %v3241 = vunpack.c.0.s8 %v3240
        %v3242 = vlaneseq
        %v3243 = vshrl.u32 %v3242, 7
        %v3244 = vsub.s32 %v3241, %v3243
        %v3245 = vrot.slane %v3231, %v3244
        %v3246 = vcombine.low %v3238, %v3245
        %v3247 = vcombine.low %v2109, %v2133
        %v3248 = vcombine.low %v2147, %v2155
        %v3249 = vcombine.low %v2157, %v2140
        %v3250 = vcombine.low %v2154, %v2156
        %v3252 = vunpack.c.l.s4 1966171168
        %v3253 = vunpack.c.0.s8 %v3252
        %v3254 = vlaneseq
        %v3255 = vshrl.u32 %v3254, 7
        %v3256 = vsub.s32 %v3253, %v3255
        %v3257 = vrot.slane %v3247, %v3256
        %v3259 = vunpack.c.l.s4 1966171168
        %v3260 = vunpack.c.0.s8 %v3259
        %v3261 = vlaneseq
        %v3262 = vshrl.u32 %v3261, 7
        %v3263 = vsub.s32 %v3260, %v3262
        %v3264 = vrot.slane %v3248, %v3263
        %v3266 = vunpack.c.l.s4 1966171168
        %v3267 = vunpack.c.0.s8 %v3266
        %v3268 = vlaneseq
        %v3269 = vshrl.u32 %v3268, 7
        %v3270 = vsub.s32 %v3267, %v3269
        %v3271 = vrot.slane %v3249, %v3270
        %v3273 = vunpack.c.l.s4 1966171168
        %v3274 = vunpack.c.0.s8 %v3273
        %v3275 = vlaneseq
        %v3276 = vshrl.u32 %v3275, 7
        %v3277 = vsub.s32 %v3274, %v3276
        %v3278 = vrot.slane %v3250, %v3277
        %v3279 = vcombine.low %v3257, %v3264
        %v3280 = vcombine.low %v3271, %v3278
        %v3282 = vunpack.c.l.s4 1966171168
        %v3283 = vunpack.c.0.s8 %v3282
        %v3284 = vlaneseq
        %v3285 = vshrl.u32 %v3284, 7
        %v3286 = vsub.s32 %v3283, %v3285
        %v3287 = vrot.slane %v3279, %v3286
        %v3289 = vunpack.c.l.s4 1966171168
        %v3290 = vunpack.c.0.s8 %v3289
        %v3291 = vlaneseq
        %v3292 = vshrl.u32 %v3291, 7
        %v3293 = vsub.s32 %v3290, %v3292
        %v3294 = vrot.slane %v3280, %v3293
        %v3295 = vcombine.low %v3287, %v3294
        %v3296 = vcombine.low %v2158, %v2172
        %v3297 = vcombine.low %v2196, %v2210
        %v3298 = vcombine.low %v2218, %v2220
        %v3299 = vcombine.low %v2203, %v2217
        %v3301 = vunpack.c.l.s4 1966171168
        %v3302 = vunpack.c.0.s8 %v3301
        %v3303 = vlaneseq
        %v3304 = vshrl.u32 %v3303, 7
        %v3305 = vsub.s32 %v3302, %v3304
        %v3306 = vrot.slane %v3296, %v3305
        %v3308 = vunpack.c.l.s4 1966171168
        %v3309 = vunpack.c.0.s8 %v3308
        %v3310 = vlaneseq
        %v3311 = vshrl.u32 %v3310, 7
        %v3312 = vsub.s32 %v3309, %v3311
        %v3313 = vrot.slane %v3297, %v3312
        %v3315 = vunpack.c.l.s4 1966171168
        %v3316 = vunpack.c.0.s8 %v3315
        %v3317 = vlaneseq
        %v3318 = vshrl.u32 %v3317, 7
        %v3319 = vsub.s32 %v3316, %v3318
        %v3320 = vrot.slane %v3298, %v3319
        %v3322 = vunpack.c.l.s4 1966171168
        %v3323 = vunpack.c.0.s8 %v3322
        %v3324 = vlaneseq
        %v3325 = vshrl.u32 %v3324, 7
        %v3326 = vsub.s32 %v3323, %v3325
        %v3327 = vrot.slane %v3299, %v3326
        %v3328 = vcombine.low %v3306, %v3313
        %v3329 = vcombine.low %v3320, %v3327
        %v3331 = vunpack.c.l.s4 1966171168
        %v3332 = vunpack.c.0.s8 %v3331
        %v3333 = vlaneseq
        %v3334 = vshrl.u32 %v3333, 7
        %v3335 = vsub.s32 %v3332, %v3334
        %v3336 = vrot.slane %v3328, %v3335
        %v3338 = vunpack.c.l.s4 1966171168
        %v3339 = vunpack.c.0.s8 %v3338
        %v3340 = vlaneseq
        %v3341 = vshrl.u32 %v3340, 7
        %v3342 = vsub.s32 %v3339, %v3341
        %v3343 = vrot.slane %v3329, %v3342
        %v3344 = vcombine.low %v3336, %v3343
        %v3345 = vcombine.low %v2219, %v2221
        %v3346 = vcombine.low %v2235, %v2259
        %v3347 = vcombine.low %v2273, %v2281
        %v3348 = vcombine.low %v2283, %v2266
        %v3350 = vunpack.c.l.s4 1966171168
        %v3351 = vunpack.c.0.s8 %v3350
        %v3352 = vlaneseq
        %v3353 = vshrl.u32 %v3352, 7
        %v3354 = vsub.s32 %v3351, %v3353
        %v3355 = vrot.slane %v3345, %v3354
        %v3357 = vunpack.c.l.s4 1966171168
        %v3358 = vunpack.c.0.s8 %v3357
        %v3359 = vlaneseq
        %v3360 = vshrl.u32 %v3359, 7
        %v3361 = vsub.s32 %v3358, %v3360
        %v3362 = vrot.slane %v3346, %v3361
        %v3364 = vunpack.c.l.s4 1966171168
        %v3365 = vunpack.c.0.s8 %v3364
        %v3366 = vlaneseq
        %v3367 = vshrl.u32 %v3366, 7
        %v3368 = vsub.s32 %v3365, %v3367
        %v3369 = vrot.slane %v3347, %v3368
        %v3371 = vunpack.c.l.s4 1966171168
        %v3372 = vunpack.c.0.s8 %v3371
        %v3373 = vlaneseq
        %v3374 = vshrl.u32 %v3373, 7
        %v3375 = vsub.s32 %v3372, %v3374
        %v3376 = vrot.slane %v3348, %v3375
        %v3377 = vcombine.low %v3355, %v3362
        %v3378 = vcombine.low %v3369, %v3376
        %v3380 = vunpack.c.l.s4 1966171168
        %v3381 = vunpack.c.0.s8 %v3380
        %v3382 = vlaneseq
        %v3383 = vshrl.u32 %v3382, 7
        %v3384 = vsub.s32 %v3381, %v3383
        %v3385 = vrot.slane %v3377, %v3384
        %v3387 = vunpack.c.l.s4 1966171168
        %v3388 = vunpack.c.0.s8 %v3387
        %v3389 = vlaneseq
        %v3390 = vshrl.u32 %v3389, 7
        %v3391 = vsub.s32 %v3388, %v3390
        %v3392 = vrot.slane %v3378, %v3391
        %v3393 = vcombine.low %v3385, %v3392
        %v3394 = vcombine.low %v2280, %v2282
        %v3395 = vcombine.low %v2284, %v2298
        %v3396 = vcombine.low %v2322, %v2336
        %v3397 = vcombine.low %v2344, %v2346
        %v3399 = vunpack.c.l.s4 1966171168
        %v3400 = vunpack.c.0.s8 %v3399
        %v3401 = vlaneseq
        %v3402 = vshrl.u32 %v3401, 7
        %v3403 = vsub.s32 %v3400, %v3402
        %v3404 = vrot.slane %v3394, %v3403
        %v3406 = vunpack.c.l.s4 1966171168
        %v3407 = vunpack.c.0.s8 %v3406
        %v3408 = vlaneseq
        %v3409 = vshrl.u32 %v3408, 7
        %v3410 = vsub.s32 %v3407, %v3409
        %v3411 = vrot.slane %v3395, %v3410
        %v3413 = vunpack.c.l.s4 1966171168
        %v3414 = vunpack.c.0.s8 %v3413
        %v3415 = vlaneseq
        %v3416 = vshrl.u32 %v3415, 7
        %v3417 = vsub.s32 %v3414, %v3416
        %v3418 = vrot.slane %v3396, %v3417
        %v3420 = vunpack.c.l.s4 1966171168
        %v3421 = vunpack.c.0.s8 %v3420
        %v3422 = vlaneseq
        %v3423 = vshrl.u32 %v3422, 7
        %v3424 = vsub.s32 %v3421, %v3423
        %v3425 = vrot.slane %v3397, %v3424
        %v3426 = vcombine.low %v3404, %v3411
        %v3427 = vcombine.low %v3418, %v3425
        %v3429 = vunpack.c.l.s4 1966171168
        %v3430 = vunpack.c.0.s8 %v3429
        %v3431 = vlaneseq
        %v3432 = vshrl.u32 %v3431, 7
        %v3433 = vsub.s32 %v3430, %v3432
        %v3434 = vrot.slane %v3426, %v3433
        %v3436 = vunpack.c.l.s4 1966171168
        %v3437 = vunpack.c.0.s8 %v3436
        %v3438 = vlaneseq
        %v3439 = vshrl.u32 %v3438, 7
        %v3440 = vsub.s32 %v3437, %v3439
        %v3441 = vrot.slane %v3427, %v3440
        %v3442 = vcombine.low %v3434, %v3441
        %v3443 = vcombine.low %v2329, %v2343
        %v3444 = vcombine.low %v2345, %v2347
        %v3445 = vcombine.low %v2361, %v2385
        %v3446 = vcombine.low %v2399, %v2407
        %v3448 = vunpack.c.l.s4 1966171168
        %v3449 = vunpack.c.0.s8 %v3448
        %v3450 = vlaneseq
        %v3451 = vshrl.u32 %v3450, 7
        %v3452 = vsub.s32 %v3449, %v3451
        %v3453 = vrot.slane %v3443, %v3452
        %v3455 = vunpack.c.l.s4 1966171168
        %v3456 = vunpack.c.0.s8 %v3455
        %v3457 = vlaneseq
        %v3458 = vshrl.u32 %v3457, 7
        %v3459 = vsub.s32 %v3456, %v3458
        %v3460 = vrot.slane %v3444, %v3459
        %v3462 = vunpack.c.l.s4 1966171168
        %v3463 = vunpack.c.0.s8 %v3462
        %v3464 = vlaneseq
        %v3465 = vshrl.u32 %v3464, 7
        %v3466 = vsub.s32 %v3463, %v3465
        %v3467 = vrot.slane %v3445, %v3466
        %v3469 = vunpack.c.l.s4 1966171168
        %v3470 = vunpack.c.0.s8 %v3469
        %v3471 = vlaneseq
        %v3472 = vshrl.u32 %v3471, 7
        %v3473 = vsub.s32 %v3470, %v3472
        %v3474 = vrot.slane %v3446, %v3473
        %v3475 = vcombine.low %v3453, %v3460
        %v3476 = vcombine.low %v3467, %v3474
        %v3478 = vunpack.c.l.s4 1966171168
        %v3479 = vunpack.c.0.s8 %v3478
        %v3480 = vlaneseq
        %v3481 = vshrl.u32 %v3480, 7
        %v3482 = vsub.s32 %v3479, %v3481
        %v3483 = vrot.slane %v3475, %v3482
        %v3485 = vunpack.c.l.s4 1966171168
        %v3486 = vunpack.c.0.s8 %v3485
        %v3487 = vlaneseq
        %v3488 = vshrl.u32 %v3487, 7
        %v3489 = vsub.s32 %v3486, %v3488
        %v3490 = vrot.slane %v3476, %v3489
        %v3491 = vcombine.low %v3483, %v3490
        %v3492 = vcombine.low %v2409, %v2392
        %v3493 = vcombine.low %v2406, %v2408
        %v3494 = vcombine.low %v2410, %v2424
        %v3495 = vcombine.low %v2448, %v2462
        %v3497 = vunpack.c.l.s4 1966171168
        %v3498 = vunpack.c.0.s8 %v3497
        %v3499 = vlaneseq
        %v3500 = vshrl.u32 %v3499, 7
        %v3501 = vsub.s32 %v3498, %v3500
        %v3502 = vrot.slane %v3492, %v3501
        %v3504 = vunpack.c.l.s4 1966171168
        %v3505 = vunpack.c.0.s8 %v3504
        %v3506 = vlaneseq
        %v3507 = vshrl.u32 %v3506, 7
        %v3508 = vsub.s32 %v3505, %v3507
        %v3509 = vrot.slane %v3493, %v3508
        %v3511 = vunpack.c.l.s4 1966171168
        %v3512 = vunpack.c.0.s8 %v3511
        %v3513 = vlaneseq
        %v3514 = vshrl.u32 %v3513, 7
        %v3515 = vsub.s32 %v3512, %v3514
        %v3516 = vrot.slane %v3494, %v3515
        %v3518 = vunpack.c.l.s4 1966171168
        %v3519 = vunpack.c.0.s8 %v3518
        %v3520 = vlaneseq
        %v3521 = vshrl.u32 %v3520, 7
        %v3522 = vsub.s32 %v3519, %v3521
        %v3523 = vrot.slane %v3495, %v3522
        %v3524 = vcombine.low %v3502, %v3509
        %v3525 = vcombine.low %v3516, %v3523
        %v3527 = vunpack.c.l.s4 1966171168
        %v3528 = vunpack.c.0.s8 %v3527
        %v3529 = vlaneseq
        %v3530 = vshrl.u32 %v3529, 7
        %v3531 = vsub.s32 %v3528, %v3530
        %v3532 = vrot.slane %v3524, %v3531
        %v3534 = vunpack.c.l.s4 1966171168
        %v3535 = vunpack.c.0.s8 %v3534
        %v3536 = vlaneseq
        %v3537 = vshrl.u32 %v3536, 7
        %v3538 = vsub.s32 %v3535, %v3537
        %v3539 = vrot.slane %v3525, %v3538
        %v3540 = vcombine.low %v3532, %v3539
        %v3541 = vcombine.low %v2470, %v2472
        %v3542 = vcombine.low %v2455, %v2469
        %v3543 = vcombine.low %v2471, %v2473
        %v3544 = vcombine.low %v2487, %v2511
        %v3546 = vunpack.c.l.s4 1966171168
        %v3547 = vunpack.c.0.s8 %v3546
        %v3548 = vlaneseq
        %v3549 = vshrl.u32 %v3548, 7
        %v3550 = vsub.s32 %v3547, %v3549
        %v3551 = vrot.slane %v3541, %v3550
        %v3553 = vunpack.c.l.s4 1966171168
        %v3554 = vunpack.c.0.s8 %v3553
        %v3555 = vlaneseq
        %v3556 = vshrl.u32 %v3555, 7
        %v3557 = vsub.s32 %v3554, %v3556
        %v3558 = vrot.slane %v3542, %v3557
        %v3560 = vunpack.c.l.s4 1966171168
        %v3561 = vunpack.c.0.s8 %v3560
        %v3562 = vlaneseq
        %v3563 = vshrl.u32 %v3562, 7
        %v3564 = vsub.s32 %v3561, %v3563
        %v3565 = vrot.slane %v3543, %v3564
        %v3567 = vunpack.c.l.s4 1966171168
        %v3568 = vunpack.c.0.s8 %v3567
        %v3569 = vlaneseq
        %v3570 = vshrl.u32 %v3569, 7
        %v3571 = vsub.s32 %v3568, %v3570
        %v3572 = vrot.slane %v3544, %v3571
        %v3573 = vcombine.low %v3551, %v3558
        %v3574 = vcombine.low %v3565, %v3572
        %v3576 = vunpack.c.l.s4 1966171168
        %v3577 = vunpack.c.0.s8 %v3576
        %v3578 = vlaneseq
        %v3579 = vshrl.u32 %v3578, 7
        %v3580 = vsub.s32 %v3577, %v3579
        %v3581 = vrot.slane %v3573, %v3580
        %v3583 = vunpack.c.l.s4 1966171168
        %v3584 = vunpack.c.0.s8 %v3583
        %v3585 = vlaneseq
        %v3586 = vshrl.u32 %v3585, 7
        %v3587 = vsub.s32 %v3584, %v3586
        %v3588 = vrot.slane %v3574, %v3587
        %v3589 = vcombine.low %v3581, %v3588
        %v3590 = vcombine.low %v2525, %v2533
        %v3591 = vcombine.low %v2535, %v2518
        %v3592 = vcombine.low %v2532, %v2534
        %v3593 = vcombine.low %v2536, %v2550
        %v3595 = vunpack.c.l.s4 1966171168
        %v3596 = vunpack.c.0.s8 %v3595
        %v3597 = vlaneseq
        %v3598 = vshrl.u32 %v3597, 7
        %v3599 = vsub.s32 %v3596, %v3598
        %v3600 = vrot.slane %v3590, %v3599
        %v3602 = vunpack.c.l.s4 1966171168
        %v3603 = vunpack.c.0.s8 %v3602
        %v3604 = vlaneseq
        %v3605 = vshrl.u32 %v3604, 7
        %v3606 = vsub.s32 %v3603, %v3605
        %v3607 = vrot.slane %v3591, %v3606
        %v3609 = vunpack.c.l.s4 1966171168
        %v3610 = vunpack.c.0.s8 %v3609
        %v3611 = vlaneseq
        %v3612 = vshrl.u32 %v3611, 7
        %v3613 = vsub.s32 %v3610, %v3612
        %v3614 = vrot.slane %v3592, %v3613
        %v3616 = vunpack.c.l.s4 1966171168
        %v3617 = vunpack.c.0.s8 %v3616
        %v3618 = vlaneseq
        %v3619 = vshrl.u32 %v3618, 7
        %v3620 = vsub.s32 %v3617, %v3619
        %v3621 = vrot.slane %v3593, %v3620
        %v3622 = vcombine.low %v3600, %v3607
        %v3623 = vcombine.low %v3614, %v3621
        %v3625 = vunpack.c.l.s4 1966171168
        %v3626 = vunpack.c.0.s8 %v3625
        %v3627 = vlaneseq
        %v3628 = vshrl.u32 %v3627, 7
        %v3629 = vsub.s32 %v3626, %v3628
        %v3630 = vrot.slane %v3622, %v3629
        %v3632 = vunpack.c.l.s4 1966171168
        %v3633 = vunpack.c.0.s8 %v3632
        %v3634 = vlaneseq
        %v3635 = vshrl.u32 %v3634, 7
        %v3636 = vsub.s32 %v3633, %v3635
        %v3637 = vrot.slane %v3623, %v3636
        %v3638 = vcombine.low %v3630, %v3637
        %v3639 = vcombine.low %v2574, %v2588
        %v3640 = vcombine.low %v2596, %v2598
        %v3641 = vcombine.low %v2581, %v2595
        %v3642 = vcombine.low %v2597, %v2599
        %v3644 = vunpack.c.l.s4 1966171168
        %v3645 = vunpack.c.0.s8 %v3644
        %v3646 = vlaneseq
        %v3647 = vshrl.u32 %v3646, 7
        %v3648 = vsub.s32 %v3645, %v3647
        %v3649 = vrot.slane %v3639, %v3648
        %v3651 = vunpack.c.l.s4 1966171168
        %v3652 = vunpack.c.0.s8 %v3651
        %v3653 = vlaneseq
        %v3654 = vshrl.u32 %v3653, 7
        %v3655 = vsub.s32 %v3652, %v3654
        %v3656 = vrot.slane %v3640, %v3655
        %v3658 = vunpack.c.l.s4 1966171168
        %v3659 = vunpack.c.0.s8 %v3658
        %v3660 = vlaneseq
        %v3661 = vshrl.u32 %v3660, 7
        %v3662 = vsub.s32 %v3659, %v3661
        %v3663 = vrot.slane %v3641, %v3662
        %v3665 = vunpack.c.l.s4 1966171168
        %v3666 = vunpack.c.0.s8 %v3665
        %v3667 = vlaneseq
        %v3668 = vshrl.u32 %v3667, 7
        %v3669 = vsub.s32 %v3666, %v3668
        %v3670 = vrot.slane %v3642, %v3669
        %v3671 = vcombine.low %v3649, %v3656
        %v3672 = vcombine.low %v3663, %v3670
        %v3674 = vunpack.c.l.s4 1966171168
        %v3675 = vunpack.c.0.s8 %v3674
        %v3676 = vlaneseq
        %v3677 = vshrl.u32 %v3676, 7
        %v3678 = vsub.s32 %v3675, %v3677
        %v3679 = vrot.slane %v3671, %v3678
        %v3681 = vunpack.c.l.s4 1966171168
        %v3682 = vunpack.c.0.s8 %v3681
        %v3683 = vlaneseq
        %v3684 = vshrl.u32 %v3683, 7
        %v3685 = vsub.s32 %v3682, %v3684
        %v3686 = vrot.slane %v3672, %v3685
        %v3687 = vcombine.low %v3679, %v3686
        %v3688 = vcombine.low %v2613, %v2637
        %v3689 = vcombine.low %v2651, %v2659
        %v3690 = vcombine.low %v2661, %v2644
        %v3691 = vcombine.low %v2658, %v2660
        %v3693 = vunpack.c.l.s4 1966171168
        %v3694 = vunpack.c.0.s8 %v3693
        %v3695 = vlaneseq
        %v3696 = vshrl.u32 %v3695, 7
        %v3697 = vsub.s32 %v3694, %v3696
        %v3698 = vrot.slane %v3688, %v3697
        %v3700 = vunpack.c.l.s4 1966171168
        %v3701 = vunpack.c.0.s8 %v3700
        %v3702 = vlaneseq
        %v3703 = vshrl.u32 %v3702, 7
        %v3704 = vsub.s32 %v3701, %v3703
        %v3705 = vrot.slane %v3689, %v3704
        %v3707 = vunpack.c.l.s4 1966171168
        %v3708 = vunpack.c.0.s8 %v3707
        %v3709 = vlaneseq
        %v3710 = vshrl.u32 %v3709, 7
        %v3711 = vsub.s32 %v3708, %v3710
        %v3712 = vrot.slane %v3690, %v3711
        %v3714 = vunpack.c.l.s4 1966171168
        %v3715 = vunpack.c.0.s8 %v3714
        %v3716 = vlaneseq
        %v3717 = vshrl.u32 %v3716, 7
        %v3718 = vsub.s32 %v3715, %v3717
        %v3719 = vrot.slane %v3691, %v3718
        %v3720 = vcombine.low %v3698, %v3705
        %v3721 = vcombine.low %v3712, %v3719
        %v3723 = vunpack.c.l.s4 1966171168
        %v3724 = vunpack.c.0.s8 %v3723
        %v3725 = vlaneseq
        %v3726 = vshrl.u32 %v3725, 7
        %v3727 = vsub.s32 %v3724, %v3726
        %v3728 = vrot.slane %v3720, %v3727
        %v3730 = vunpack.c.l.s4 1966171168
        %v3731 = vunpack.c.0.s8 %v3730
        %v3732 = vlaneseq
        %v3733 = vshrl.u32 %v3732, 7
        %v3734 = vsub.s32 %v3731, %v3733
        %v3735 = vrot.slane %v3721, %v3734
        %v3736 = vcombine.low %v3728, %v3735
        %v3737 = vcombine.low %v2662, %v2676
        %v3738 = vcombine.low %v2700, %v2714
        %v3739 = vcombine.low %v2722, %v2724
        %v3740 = vcombine.low %v2707, %v2721
        %v3742 = vunpack.c.l.s4 1966171168
        %v3743 = vunpack.c.0.s8 %v3742
        %v3744 = vlaneseq
        %v3745 = vshrl.u32 %v3744, 7
        %v3746 = vsub.s32 %v3743, %v3745
        %v3747 = vrot.slane %v3737, %v3746
        %v3749 = vunpack.c.l.s4 1966171168
        %v3750 = vunpack.c.0.s8 %v3749
        %v3751 = vlaneseq
        %v3752 = vshrl.u32 %v3751, 7
        %v3753 = vsub.s32 %v3750, %v3752
        %v3754 = vrot.slane %v3738, %v3753
        %v3756 = vunpack.c.l.s4 1966171168
        %v3757 = vunpack.c.0.s8 %v3756
        %v3758 = vlaneseq
        %v3759 = vshrl.u32 %v3758, 7
        %v3760 = vsub.s32 %v3757, %v3759
        %v3761 = vrot.slane %v3739, %v3760
        %v3763 = vunpack.c.l.s4 1966171168
        %v3764 = vunpack.c.0.s8 %v3763
        %v3765 = vlaneseq
        %v3766 = vshrl.u32 %v3765, 7
        %v3767 = vsub.s32 %v3764, %v3766
        %v3768 = vrot.slane %v3740, %v3767
        %v3769 = vcombine.low %v3747, %v3754
        %v3770 = vcombine.low %v3761, %v3768
        %v3772 = vunpack.c.l.s4 1966171168
        %v3773 = vunpack.c.0.s8 %v3772
        %v3774 = vlaneseq
        %v3775 = vshrl.u32 %v3774, 7
        %v3776 = vsub.s32 %v3773, %v3775
        %v3777 = vrot.slane %v3769, %v3776
        %v3779 = vunpack.c.l.s4 1966171168
        %v3780 = vunpack.c.0.s8 %v3779
        %v3781 = vlaneseq
        %v3782 = vshrl.u32 %v3781, 7
        %v3783 = vsub.s32 %v3780, %v3782
        %v3784 = vrot.slane %v3770, %v3783
        %v3785 = vcombine.low %v3777, %v3784
        %v3786 = vcombine.low %v2723, %v2725
        %v3787 = vcombine.low %v2739, %v2763
        %v3788 = vcombine.low %v2777, %v2785
        %v3789 = vcombine.low %v2787, %v2770
        %v3791 = vunpack.c.l.s4 1966171168
        %v3792 = vunpack.c.0.s8 %v3791
        %v3793 = vlaneseq
        %v3794 = vshrl.u32 %v3793, 7
        %v3795 = vsub.s32 %v3792, %v3794
        %v3796 = vrot.slane %v3786, %v3795
        %v3798 = vunpack.c.l.s4 1966171168
        %v3799 = vunpack.c.0.s8 %v3798
        %v3800 = vlaneseq
        %v3801 = vshrl.u32 %v3800, 7
        %v3802 = vsub.s32 %v3799, %v3801
        %v3803 = vrot.slane %v3787, %v3802
        %v3805 = vunpack.c.l.s4 1966171168
        %v3806 = vunpack.c.0.s8 %v3805
        %v3807 = vlaneseq
        %v3808 = vshrl.u32 %v3807, 7
        %v3809 = vsub.s32 %v3806, %v3808
        %v3810 = vrot.slane %v3788, %v3809
        %v3812 = vunpack.c.l.s4 1966171168
        %v3813 = vunpack.c.0.s8 %v3812
        %v3814 = vlaneseq
        %v3815 = vshrl.u32 %v3814, 7
        %v3816 = vsub.s32 %v3813, %v3815
        %v3817 = vrot.slane %v3789, %v3816
        %v3818 = vcombine.low %v3796, %v3803
        %v3819 = vcombine.low %v3810, %v3817
        %v3821 = vunpack.c.l.s4 1966171168
        %v3822 = vunpack.c.0.s8 %v3821
        %v3823 = vlaneseq
        %v3824 = vshrl.u32 %v3823, 7
        %v3825 = vsub.s32 %v3822, %v3824
        %v3826 = vrot.slane %v3818, %v3825
        %v3828 = vunpack.c.l.s4 1966171168
        %v3829 = vunpack.c.0.s8 %v3828
        %v3830 = vlaneseq
        %v3831 = vshrl.u32 %v3830, 7
        %v3832 = vsub.s32 %v3829, %v3831
        %v3833 = vrot.slane %v3819, %v3832
        %v3834 = vcombine.low %v3826, %v3833
        %v3835 = vcombine.low %v2784, %v2786
        %v3836 = vcombine.low %v2788, %v2802
        %v3837 = vcombine.low %v2826, %v2840
        %v3838 = vcombine.low %v2848, %v2850
        %v3840 = vunpack.c.l.s4 1966171168
        %v3841 = vunpack.c.0.s8 %v3840
        %v3842 = vlaneseq
        %v3843 = vshrl.u32 %v3842, 7
        %v3844 = vsub.s32 %v3841, %v3843
        %v3845 = vrot.slane %v3835, %v3844
        %v3847 = vunpack.c.l.s4 1966171168
        %v3848 = vunpack.c.0.s8 %v3847
        %v3849 = vlaneseq
        %v3850 = vshrl.u32 %v3849, 7
        %v3851 = vsub.s32 %v3848, %v3850
        %v3852 = vrot.slane %v3836, %v3851
        %v3854 = vunpack.c.l.s4 1966171168
        %v3855 = vunpack.c.0.s8 %v3854
        %v3856 = vlaneseq
        %v3857 = vshrl.u32 %v3856, 7
        %v3858 = vsub.s32 %v3855, %v3857
        %v3859 = vrot.slane %v3837, %v3858
        %v3861 = vunpack.c.l.s4 1966171168
        %v3862 = vunpack.c.0.s8 %v3861
        %v3863 = vlaneseq
        %v3864 = vshrl.u32 %v3863, 7
        %v3865 = vsub.s32 %v3862, %v3864
        %v3866 = vrot.slane %v3838, %v3865
        %v3867 = vcombine.low %v3845, %v3852
        %v3868 = vcombine.low %v3859, %v3866
        %v3870 = vunpack.c.l.s4 1966171168
        %v3871 = vunpack.c.0.s8 %v3870
        %v3872 = vlaneseq
        %v3873 = vshrl.u32 %v3872, 7
        %v3874 = vsub.s32 %v3871, %v3873
        %v3875 = vrot.slane %v3867, %v3874
        %v3877 = vunpack.c.l.s4 1966171168
        %v3878 = vunpack.c.0.s8 %v3877
        %v3879 = vlaneseq
        %v3880 = vshrl.u32 %v3879, 7
        %v3881 = vsub.s32 %v3878, %v3880
        %v3882 = vrot.slane %v3868, %v3881
        %v3883 = vcombine.low %v3875, %v3882
        %v3884 = vcombine.low %v2833, %v2847
        %v3885 = vcombine.low %v2849, %v2851
        %v3886 = vcombine.low %v2865, %v2889
        %v3887 = vcombine.low %v2903, %v2911
        %v3889 = vunpack.c.l.s4 1966171168
        %v3890 = vunpack.c.0.s8 %v3889
        %v3891 = vlaneseq
        %v3892 = vshrl.u32 %v3891, 7
        %v3893 = vsub.s32 %v3890, %v3892
        %v3894 = vrot.slane %v3884, %v3893
        %v3896 = vunpack.c.l.s4 1966171168
        %v3897 = vunpack.c.0.s8 %v3896
        %v3898 = vlaneseq
        %v3899 = vshrl.u32 %v3898, 7
        %v3900 = vsub.s32 %v3897, %v3899
        %v3901 = vrot.slane %v3885, %v3900
        %v3903 = vunpack.c.l.s4 1966171168
        %v3904 = vunpack.c.0.s8 %v3903
        %v3905 = vlaneseq
        %v3906 = vshrl.u32 %v3905, 7
        %v3907 = vsub.s32 %v3904, %v3906
        %v3908 = vrot.slane %v3886, %v3907
        %v3910 = vunpack.c.l.s4 1966171168
        %v3911 = vunpack.c.0.s8 %v3910
        %v3912 = vlaneseq
        %v3913 = vshrl.u32 %v3912, 7
        %v3914 = vsub.s32 %v3911, %v3913
        %v3915 = vrot.slane %v3887, %v3914
        %v3916 = vcombine.low %v3894, %v3901
        %v3917 = vcombine.low %v3908, %v3915
        %v3919 = vunpack.c.l.s4 1966171168
        %v3920 = vunpack.c.0.s8 %v3919
        %v3921 = vlaneseq
        %v3922 = vshrl.u32 %v3921, 7
        %v3923 = vsub.s32 %v3920, %v3922
        %v3924 = vrot.slane %v3916, %v3923
        %v3926 = vunpack.c.l.s4 1966171168
        %v3927 = vunpack.c.0.s8 %v3926
        %v3928 = vlaneseq
        %v3929 = vshrl.u32 %v3928, 7
        %v3930 = vsub.s32 %v3927, %v3929
        %v3931 = vrot.slane %v3917, %v3930
        %v3932 = vcombine.low %v3924, %v3931
        %v3933 = vcombine.low %v2913, %v2896
        %v3934 = vcombine.low %v2910, %v2912
        %v3935 = vcombine.low %v2914, %v2928
        %v3936 = vcombine.low %v2952, %v2966
        %v3938 = vunpack.c.l.s4 1966171168
        %v3939 = vunpack.c.0.s8 %v3938
        %v3940 = vlaneseq
        %v3941 = vshrl.u32 %v3940, 7
        %v3942 = vsub.s32 %v3939, %v3941
        %v3943 = vrot.slane %v3933, %v3942
        %v3945 = vunpack.c.l.s4 1966171168
        %v3946 = vunpack.c.0.s8 %v3945
        %v3947 = vlaneseq
        %v3948 = vshrl.u32 %v3947, 7
        %v3949 = vsub.s32 %v3946, %v3948
        %v3950 = vrot.slane %v3934, %v3949
        %v3952 = vunpack.c.l.s4 1966171168
        %v3953 = vunpack.c.0.s8 %v3952
        %v3954 = vlaneseq
        %v3955 = vshrl.u32 %v3954, 7
        %v3956 = vsub.s32 %v3953, %v3955
        %v3957 = vrot.slane %v3935, %v3956
        %v3959 = vunpack.c.l.s4 1966171168
        %v3960 = vunpack.c.0.s8 %v3959
        %v3961 = vlaneseq
        %v3962 = vshrl.u32 %v3961, 7
        %v3963 = vsub.s32 %v3960, %v3962
        %v3964 = vrot.slane %v3936, %v3963
        %v3965 = vcombine.low %v3943, %v3950
        %v3966 = vcombine.low %v3957, %v3964
        %v3968 = vunpack.c.l.s4 1966171168
        %v3969 = vunpack.c.0.s8 %v3968
        %v3970 = vlaneseq
        %v3971 = vshrl.u32 %v3970, 7
        %v3972 = vsub.s32 %v3969, %v3971
        %v3973 = vrot.slane %v3965, %v3972
        %v3975 = vunpack.c.l.s4 1966171168
        %v3976 = vunpack.c.0.s8 %v3975
        %v3977 = vlaneseq
        %v3978 = vshrl.u32 %v3977, 7
        %v3979 = vsub.s32 %v3976, %v3978
        %v3980 = vrot.slane %v3966, %v3979
        %v3981 = vcombine.low %v3973, %v3980
        %v3982 = vcombine.low %v2974, %v2976
        %v3983 = vcombine.low %v2959, %v2973
        %v3984 = vcombine.low %v2975, %v2977
        %v3985 = vcombine.low %v2991, %v3015
        %v3987 = vunpack.c.l.s4 1966171168
        %v3988 = vunpack.c.0.s8 %v3987
        %v3989 = vlaneseq
        %v3990 = vshrl.u32 %v3989, 7
        %v3991 = vsub.s32 %v3988, %v3990
        %v3992 = vrot.slane %v3982, %v3991
        %v3994 = vunpack.c.l.s4 1966171168
        %v3995 = vunpack.c.0.s8 %v3994
        %v3996 = vlaneseq
        %v3997 = vshrl.u32 %v3996, 7
        %v3998 = vsub.s32 %v3995, %v3997
        %v3999 = vrot.slane %v3983, %v3998
        %v4001 = vunpack.c.l.s4 1966171168
        %v4002 = vunpack.c.0.s8 %v4001
        %v4003 = vlaneseq
        %v4004 = vshrl.u32 %v4003, 7
        %v4005 = vsub.s32 %v4002, %v4004
        %v4006 = vrot.slane %v3984, %v4005
        %v4008 = vunpack.c.l.s4 1966171168
        %v4009 = vunpack.c.0.s8 %v4008
        %v4010 = vlaneseq
        %v4011 = vshrl.u32 %v4010, 7
        %v4012 = vsub.s32 %v4009, %v4011
        %v4013 = vrot.slane %v3985, %v4012
        %v4014 = vcombine.low %v3992, %v3999
        %v4015 = vcombine.low %v4006, %v4013
        %v4017 = vunpack.c.l.s4 1966171168
        %v4018 = vunpack.c.0.s8 %v4017
        %v4019 = vlaneseq
        %v4020 = vshrl.u32 %v4019, 7
        %v4021 = vsub.s32 %v4018, %v4020
        %v4022 = vrot.slane %v4014, %v4021
        %v4024 = vunpack.c.l.s4 1966171168
        %v4025 = vunpack.c.0.s8 %v4024
        %v4026 = vlaneseq
        %v4027 = vshrl.u32 %v4026, 7
        %v4028 = vsub.s32 %v4025, %v4027
        %v4029 = vrot.slane %v4015, %v4028
        %v4030 = vcombine.low %v4022, %v4029
        %v4031 = vcombine.low %v3029, %v3037
        %v4032 = vcombine.low %v3039, %v3022
        %v4033 = vcombine.low %v3036, %v3038
        %v4034 = vcombine.low %v3040, %v3054
        %v4036 = vunpack.c.l.s4 1966171168
        %v4037 = vunpack.c.0.s8 %v4036
        %v4038 = vlaneseq
        %v4039 = vshrl.u32 %v4038, 7
        %v4040 = vsub.s32 %v4037, %v4039
        %v4041 = vrot.slane %v4031, %v4040
        %v4043 = vunpack.c.l.s4 1966171168
        %v4044 = vunpack.c.0.s8 %v4043
        %v4045 = vlaneseq
        %v4046 = vshrl.u32 %v4045, 7
        %v4047 = vsub.s32 %v4044, %v4046
        %v4048 = vrot.slane %v4032, %v4047
        %v4050 = vunpack.c.l.s4 1966171168
        %v4051 = vunpack.c.0.s8 %v4050
        %v4052 = vlaneseq
        %v4053 = vshrl.u32 %v4052, 7
        %v4054 = vsub.s32 %v4051, %v4053
        %v4055 = vrot.slane %v4033, %v4054
        %v4057 = vunpack.c.l.s4 1966171168
        %v4058 = vunpack.c.0.s8 %v4057
        %v4059 = vlaneseq
        %v4060 = vshrl.u32 %v4059, 7
        %v4061 = vsub.s32 %v4058, %v4060
        %v4062 = vrot.slane %v4034, %v4061
        %v4063 = vcombine.low %v4041, %v4048
        %v4064 = vcombine.low %v4055, %v4062
        %v4066 = vunpack.c.l.s4 1966171168
        %v4067 = vunpack.c.0.s8 %v4066
        %v4068 = vlaneseq
        %v4069 = vshrl.u32 %v4068, 7
        %v4070 = vsub.s32 %v4067, %v4069
        %v4071 = vrot.slane %v4063, %v4070
        %v4073 = vunpack.c.l.s4 1966171168
        %v4074 = vunpack.c.0.s8 %v4073
        %v4075 = vlaneseq
        %v4076 = vshrl.u32 %v4075, 7
        %v4077 = vsub.s32 %v4074, %v4076
        %v4078 = vrot.slane %v4064, %v4077
        %v4079 = vcombine.low %v4071, %v4078
        %v4080 = vcombine.low %v3078, %v3092
        %v4081 = vcombine.low %v3100, %v3102
        %v4082 = vcombine.low %v3085, %v3099
        %v4083 = vcombine.low %v3101, %v3103
        %v4085 = vunpack.c.l.s4 1966171168
        %v4086 = vunpack.c.0.s8 %v4085
        %v4087 = vlaneseq
        %v4088 = vshrl.u32 %v4087, 7
        %v4089 = vsub.s32 %v4086, %v4088
        %v4090 = vrot.slane %v4080, %v4089
        %v4092 = vunpack.c.l.s4 1966171168
        %v4093 = vunpack.c.0.s8 %v4092
        %v4094 = vlaneseq
        %v4095 = vshrl.u32 %v4094, 7
        %v4096 = vsub.s32 %v4093, %v4095
        %v4097 = vrot.slane %v4081, %v4096
        %v4099 = vunpack.c.l.s4 1966171168
        %v4100 = vunpack.c.0.s8 %v4099
        %v4101 = vlaneseq
        %v4102 = vshrl.u32 %v4101, 7
        %v4103 = vsub.s32 %v4100, %v4102
        %v4104 = vrot.slane %v4082, %v4103
        %v4106 = vunpack.c.l.s4 1966171168
        %v4107 = vunpack.c.0.s8 %v4106
        %v4108 = vlaneseq
        %v4109 = vshrl.u32 %v4108, 7
        %v4110 = vsub.s32 %v4107, %v4109
        %v4111 = vrot.slane %v4083, %v4110
        %v4112 = vcombine.low %v4090, %v4097
        %v4113 = vcombine.low %v4104, %v4111
        %v4115 = vunpack.c.l.s4 1966171168
        %v4116 = vunpack.c.0.s8 %v4115
        %v4117 = vlaneseq
        %v4118 = vshrl.u32 %v4117, 7
        %v4119 = vsub.s32 %v4116, %v4118
        %v4120 = vrot.slane %v4112, %v4119
        %v4122 = vunpack.c.l.s4 1966171168
        %v4123 = vunpack.c.0.s8 %v4122
        %v4124 = vlaneseq
        %v4125 = vshrl.u32 %v4124, 7
        %v4126 = vsub.s32 %v4123, %v4125
        %v4127 = vrot.slane %v4113, %v4126
        %v4128 = vcombine.low %v4120, %v4127
        %v4129 = vcombine.low %v3117, %v3141
        %v4130 = vcombine.low %v3155, %v3163
        %v4131 = vcombine.low %v3165, %v3148
        %v4132 = vcombine.low %v3162, %v3164
        %v4134 = vunpack.c.l.s4 1966171168
        %v4135 = vunpack.c.0.s8 %v4134
        %v4136 = vlaneseq
        %v4137 = vshrl.u32 %v4136, 7
        %v4138 = vsub.s32 %v4135, %v4137
        %v4139 = vrot.slane %v4129, %v4138
        %v4141 = vunpack.c.l.s4 1966171168
        %v4142 = vunpack.c.0.s8 %v4141
        %v4143 = vlaneseq
        %v4144 = vshrl.u32 %v4143, 7
        %v4145 = vsub.s32 %v4142, %v4144
        %v4146 = vrot.slane %v4130, %v4145
        %v4148 = vunpack.c.l.s4 1966171168
        %v4149 = vunpack.c.0.s8 %v4148
        %v4150 = vlaneseq
        %v4151 = vshrl.u32 %v4150, 7
        %v4152 = vsub.s32 %v4149, %v4151
        %v4153 = vrot.slane %v4131, %v4152
        %v4155 = vunpack.c.l.s4 1966171168
        %v4156 = vunpack.c.0.s8 %v4155
        %v4157 = vlaneseq
        %v4158 = vshrl.u32 %v4157, 7
        %v4159 = vsub.s32 %v4156, %v4158
        %v4160 = vrot.slane %v4132, %v4159
        %v4161 = vcombine.low %v4139, %v4146
        %v4162 = vcombine.low %v4153, %v4160
        %v4164 = vunpack.c.l.s4 1966171168
        %v4165 = vunpack.c.0.s8 %v4164
        %v4166 = vlaneseq
        %v4167 = vshrl.u32 %v4166, 7
        %v4168 = vsub.s32 %v4165, %v4167
        %v4169 = vrot.slane %v4161, %v4168
        %v4171 = vunpack.c.l.s4 1966171168
        %v4172 = vunpack.c.0.s8 %v4171
        %v4173 = vlaneseq
        %v4174 = vshrl.u32 %v4173, 7
        %v4175 = vsub.s32 %v4172, %v4174
        %v4176 = vrot.slane %v4162, %v4175
        %v4177 = vcombine.low %v4169, %v4176
        %v4178 = vcombine.low %v3166, %v3180
        %v4180 = vunpack.c.l.s4 1966171168
        %v4181 = vunpack.c.0.s8 %v4180
        %v4182 = vlaneseq
        %v4183 = vshrl.u32 %v4182, 7
        %v4184 = vsub.s32 %v4181, %v4183
        %v4185 = vrot.slane %v4178, %v4184
        %v4187 = vunpack.c.l.s4 1966171168
        %v4188 = vunpack.c.0.s8 %v4187
        %v4189 = vlaneseq
        %v4190 = vshrl.u32 %v4189, 7
        %v4191 = vsub.s32 %v4188, %v4190
        %v4192 = vrot.slane %v4185, %v4191
        %v4198 = vunpack.c.l.b16 %v2000
        %v4199 = vunpack.c.l.b16 %v2001
        %v4200 = vunpack.c.l.b16 %v2002
        %v4201 = vunpack.c.l.b16 %v2003
        %v4202 = vunpack.c.l.b16 %v2004
        %v4203 = vpack.c.b16 %v4199, %v4198
        %v4204 = vpack.c.b16 %v4201, %v4200
        %v4205 = vpack.c.b16 %v4202, %v4202
        %v4208 = vcombine.low %v3188, %v3196
        %v4209 = vcombine.low %v3195, %v3197
        %v4211 = vunpack.c.l.s4 1983009808
        %v4212 = vunpack.c.0.s8 %v4211
        %v4213 = vlaneseq
        %v4214 = vshrl.u32 %v4213, 7
        %v4215 = vsub.s32 %v4212, %v4214
        %v4216 = vrot.slane %v4208, %v4215
        %v4218 = vunpack.c.l.s4 1983009808
        %v4219 = vunpack.c.0.s8 %v4218
        %v4220 = vlaneseq
        %v4221 = vshrl.u32 %v4220, 7
        %v4222 = vsub.s32 %v4219, %v4221
        %v4223 = vrot.slane %v4209, %v4222
        %v4224 = vcombine.low %v4216, %v4223
        %v4225 = vcombine.low %v3188, %v3188
        %v4226 = vcombine.low %v3196, %v3195
        %v4228 = vunpack.c.l.s4 1983009808
        %v4229 = vunpack.c.0.s8 %v4228
        %v4230 = vlaneseq
        %v4231 = vshrl.u32 %v4230, 7
        %v4232 = vsub.s32 %v4229, %v4231
        %v4233 = vrot.slane %v4225, %v4232
        %v4235 = vunpack.c.l.s4 1983009808
        %v4236 = vunpack.c.0.s8 %v4235
        %v4237 = vlaneseq
        %v4238 = vshrl.u32 %v4237, 7
        %v4239 = vsub.s32 %v4236, %v4238
        %v4240 = vrot.slane %v4226, %v4239
        %v4241 = vcombine.low %v4233, %v4240
        %v4242 = vcombine.low %v3197, %v3188
        %v4244 = vunpack.c.l.s4 1983009808
        %v4245 = vunpack.c.0.s8 %v4244
        %v4246 = vlaneseq
        %v4247 = vshrl.u32 %v4246, 7
        %v4248 = vsub.s32 %v4245, %v4247
        %v4249 = vrot.slane %v4242, %v4248
        %v4250 = vcombine.low %v4249, %v4240
        %v4251 = vcombine.low %v4249, %v4216
        %v4252 = vcombine.low %v4223, %v4216
        %v4253 = vcombine.low %v4223, %v4233
        %v4254 = vcombine.low %v4240, %v4249
        %vm4263 = vcmask 293888
        %v4265 = vsel %vm4263, %v3246, 0
        %v4268 = vsel %vm4263, %v3295, 0
        %v4271 = vsel %vm4263, %v3344, 0
        %v4274 = vsel %vm4263, %v3393, 0
        %v4277 = vsel %vm4263, %v3442, 0
        %v4280 = vsel %vm4263, %v3491, 0
        %v4283 = vsel %vm4263, %v3540, 0
        %v4286 = vsel %vm4263, %v3589, 0
        %v4289 = vsel %vm4263, %v3638, 0
        %v4292 = vsel %vm4263, %v3687, 0
        %v4295 = vsel %vm4263, %v3736, 0
        %v4298 = vsel %vm4263, %v3785, 0
        %v4301 = vsel %vm4263, %v3834, 0
        %v4304 = vsel %vm4263, %v3883, 0
        %v4307 = vsel %vm4263, %v3932, 0
        %v4310 = vsel %vm4263, %v3981, 0
        %v4313 = vsel %vm4263, %v4030, 0
        %v4316 = vsel %vm4263, %v4079, 0
        %v4319 = vsel %vm4263, %v4128, 0
        %v4322 = vsel %vm4263, %v4177, 0
        %v4325 = vsel %vm4263, %v4192, 0
        %vm4327 = vcmask 1041408
        %v4329 = vsel %vm4327, %v4205, 0
        %4331 = vmatprep.subr.bf16.mxu0 0
        %4332 = vmatpush1.bf16.msra.mxu0 0
        %4333 = vmatprep.subr.bf16.mxu0 0
        %4334 = vmatpush1.bf16.msra.mxu0 0
        %4335 = vmatprep.subr.bf16.mxu0 0
        %4336 = vmatpush1.bf16.msra.mxu0 0
        %4337 = vmatprep.subr.bf16.mxu0 0
        %4338 = vmatpush1.bf16.msra.mxu0 0
        %4339 = vmatprep.subr.bf16.mxu0 0
        %4340 = vmatpush1.bf16.msra.mxu0 0
        %4341 = vmatprep.subr.bf16.mxu0 0
        %4342 = vmatpush1.bf16.msra.mxu0 %v4329
        %4343 = vmatprep.subr.bf16.mxu0 0
        %4344 = vmatpush1.bf16.msra.mxu0 %v4204
        %4345 = vmatprep.subr.bf16.mxu0 0
        %4346 = vmatpush1.bf16.msra.mxu0 %v4203
        %4347 = vmatprep.subr.bf16.mxu0 0
        %4348 = vmatpush2.bf16.msra.mxu0 0
        %4349 = vmatprep.subr.bf16.mxu0 0
        %4350 = vmatpush2.bf16.msra.mxu0 0
        %4351 = vmatprep.subr.bf16.mxu0 0
        %4352 = vmatpush2.bf16.msra.mxu0 0
        %4353 = vmatprep.subr.bf16.mxu0 0
        %4354 = vmatpush2.bf16.msra.mxu0 0
        %4355 = vmatprep.subr.bf16.mxu0 0
        %4356 = vmatpush2.bf16.msra.mxu0 0
        %4357 = vmatprep.subr.bf16.mxu0 0
        %4358 = vmatpush2.bf16.msra.mxu0 0
        %4359 = vmatprep.subr.bf16.mxu0 0
        %4360 = vmatpush2.bf16.msra.mxu0 0
        %4361 = vmatprep.subr.bf16.mxu0 0
        %4362 = vmatpush2.bf16.msra.mxu0 0
        %4363 = vmatprep.mubr.bf16.mxu0 0
        %4364 = vmatmul.mubr.bf16.gmra.mxu0 %v4265
        %v4365 = vpop.f32.mrf.mxu0
        %v4366 = vadd.f32 %v4224, %v4365
        %v4367 = vpop.f32.mrf.mxu0
        %v4368 = vpop.f32.mrf.mxu0
        %v4369 = vadd.f32 %v4224, %v4368
        %v4370 = vpop.f32.mrf.mxu0
        %4371 = vmatprep.mubr.bf16.mxu0 0
        %4372 = vmatmul.mubr.bf16.gmra.mxu0 %v4268
        %v4373 = vpop.f32.mrf.mxu0
        %v4374 = vadd.f32 %v4241, %v4373
        %v4375 = vpop.f32.mrf.mxu0
        %v4376 = vpop.f32.mrf.mxu0
        %v4377 = vadd.f32 %v4250, %v4376
        %v4378 = vpop.f32.mrf.mxu0
        %4379 = vmatprep.mubr.bf16.mxu0 0
        %4380 = vmatmul.mubr.bf16.gmra.mxu0 %v4271
        %v4381 = vpop.f32.mrf.mxu0
        %v4382 = vadd.f32 %v4251, %v4381
        %v4383 = vpop.f32.mrf.mxu0
        %v4384 = vpop.f32.mrf.mxu0
        %v4385 = vadd.f32 %v4252, %v4384
        %v4386 = vpop.f32.mrf.mxu0
        %4387 = vmatprep.mubr.bf16.mxu0 0
        %4388 = vmatmul.mubr.bf16.gmra.mxu0 %v4274
        %v4389 = vpop.f32.mrf.mxu0
        %v4390 = vadd.f32 %v4253, %v4389
        %v4391 = vpop.f32.mrf.mxu0
        %v4392 = vpop.f32.mrf.mxu0
        %v4393 = vadd.f32 %v4254, %v4392
        %v4394 = vpop.f32.mrf.mxu0
        %4395 = vmatprep.mubr.bf16.mxu0 0
        %4396 = vmatmul.mubr.bf16.gmra.mxu0 %v4277
        %v4397 = vpop.f32.mrf.mxu0
        %v4398 = vadd.f32 %v4254, %v4397
        %v4399 = vpop.f32.mrf.mxu0
        %v4400 = vpop.f32.mrf.mxu0
        %v4401 = vadd.f32 %v4224, %v4400
        %v4402 = vpop.f32.mrf.mxu0
        %4403 = vmatprep.mubr.bf16.mxu0 0
        %4404 = vmatmul.mubr.bf16.gmra.mxu0 %v4280
        %v4405 = vpop.f32.mrf.mxu0
        %v4406 = vadd.f32 %v4224, %v4405
        %v4407 = vpop.f32.mrf.mxu0
        %v4408 = vpop.f32.mrf.mxu0
        %v4409 = vadd.f32 %v4241, %v4408
        %v4410 = vpop.f32.mrf.mxu0
        %4411 = vmatprep.mubr.bf16.mxu0 0
        %4412 = vmatmul.mubr.bf16.gmra.mxu0 %v4283
        %v4413 = vpop.f32.mrf.mxu0
        %v4414 = vadd.f32 %v4250, %v4413
        %v4415 = vpop.f32.mrf.mxu0
        %v4416 = vpop.f32.mrf.mxu0
        %v4417 = vadd.f32 %v4251, %v4416
        %v4418 = vpop.f32.mrf.mxu0
        %4419 = vmatprep.mubr.bf16.mxu0 0
        %4420 = vmatmul.mubr.bf16.gmra.mxu0 %v4286
        %v4421 = vpop.f32.mrf.mxu0
        %v4422 = vadd.f32 %v4252, %v4421
        %v4423 = vpop.f32.mrf.mxu0
        %v4424 = vpop.f32.mrf.mxu0
        %v4425 = vadd.f32 %v4253, %v4424
        %v4426 = vpop.f32.mrf.mxu0
        %4427 = vmatprep.mubr.bf16.mxu0 0
        %4428 = vmatmul.mubr.bf16.gmra.mxu0 %v4289
        %v4429 = vpop.f32.mrf.mxu0
        %v4430 = vadd.f32 %v4254, %v4429
        %v4431 = vpop.f32.mrf.mxu0
        %v4432 = vpop.f32.mrf.mxu0
        %v4433 = vadd.f32 %v4254, %v4432
        %v4434 = vpop.f32.mrf.mxu0
        %4435 = vmatprep.mubr.bf16.mxu0 0
        %4436 = vmatmul.mubr.bf16.gmra.mxu0 %v4292
        %v4437 = vpop.f32.mrf.mxu0
        %v4438 = vadd.f32 %v4224, %v4437
        %v4439 = vpop.f32.mrf.mxu0
        %v4440 = vpop.f32.mrf.mxu0
        %v4441 = vadd.f32 %v4224, %v4440
        %v4442 = vpop.f32.mrf.mxu0
        %4443 = vmatprep.mubr.bf16.mxu0 0
        %4444 = vmatmul.mubr.bf16.gmra.mxu0 %v4295
        %v4445 = vpop.f32.mrf.mxu0
        %v4446 = vadd.f32 %v4241, %v4445
        %v4447 = vpop.f32.mrf.mxu0
        %v4448 = vpop.f32.mrf.mxu0
        %v4449 = vadd.f32 %v4250, %v4448
        %v4450 = vpop.f32.mrf.mxu0
        %4451 = vmatprep.mubr.bf16.mxu0 0
        %4452 = vmatmul.mubr.bf16.gmra.mxu0 %v4298
        %v4453 = vpop.f32.mrf.mxu0
        %v4454 = vadd.f32 %v4251, %v4453
        %v4455 = vpop.f32.mrf.mxu0
        %v4456 = vpop.f32.mrf.mxu0
        %v4457 = vadd.f32 %v4252, %v4456
        %v4458 = vpop.f32.mrf.mxu0
        %4459 = vmatprep.mubr.bf16.mxu0 0
        %4460 = vmatmul.mubr.bf16.gmra.mxu0 %v4301
        %v4461 = vpop.f32.mrf.mxu0
        %v4462 = vadd.f32 %v4253, %v4461
        %v4463 = vpop.f32.mrf.mxu0
        %v4464 = vpop.f32.mrf.mxu0
        %v4465 = vadd.f32 %v4254, %v4464
        %v4466 = vpop.f32.mrf.mxu0
        %4467 = vmatprep.mubr.bf16.mxu0 0
        %4468 = vmatmul.mubr.bf16.gmra.mxu0 %v4304
        %v4469 = vpop.f32.mrf.mxu0
        %v4470 = vadd.f32 %v4254, %v4469
        %v4471 = vpop.f32.mrf.mxu0
        %v4472 = vpop.f32.mrf.mxu0
        %v4473 = vadd.f32 %v4224, %v4472
        %v4474 = vpop.f32.mrf.mxu0
        %4475 = vmatprep.mubr.bf16.mxu0 0
        %4476 = vmatmul.mubr.bf16.gmra.mxu0 %v4307
        %v4477 = vpop.f32.mrf.mxu0
        %v4478 = vadd.f32 %v4224, %v4477
        %v4479 = vpop.f32.mrf.mxu0
        %v4480 = vpop.f32.mrf.mxu0
        %v4481 = vadd.f32 %v4241, %v4480
        %v4482 = vpop.f32.mrf.mxu0
        %4483 = vmatprep.mubr.bf16.mxu0 0
        %4484 = vmatmul.mubr.bf16.gmra.mxu0 %v4310
        %v4485 = vpop.f32.mrf.mxu0
        %v4486 = vadd.f32 %v4250, %v4485
        %v4487 = vpop.f32.mrf.mxu0
        %v4488 = vpop.f32.mrf.mxu0
        %v4489 = vadd.f32 %v4251, %v4488
        %v4490 = vpop.f32.mrf.mxu0
        %4491 = vmatprep.mubr.bf16.mxu0 0
        %4492 = vmatmul.mubr.bf16.gmra.mxu0 %v4313
        %v4493 = vpop.f32.mrf.mxu0
        %v4494 = vadd.f32 %v4252, %v4493
        %v4495 = vpop.f32.mrf.mxu0
        %v4496 = vpop.f32.mrf.mxu0
        %v4497 = vadd.f32 %v4253, %v4496
        %v4498 = vpop.f32.mrf.mxu0
        %4499 = vmatprep.mubr.bf16.mxu0 0
        %4500 = vmatmul.mubr.bf16.gmra.mxu0 %v4316
        %v4501 = vpop.f32.mrf.mxu0
        %v4502 = vadd.f32 %v4254, %v4501
        %v4503 = vpop.f32.mrf.mxu0
        %v4504 = vpop.f32.mrf.mxu0
        %v4505 = vadd.f32 %v4254, %v4504
        %v4506 = vpop.f32.mrf.mxu0
        %4507 = vmatprep.mubr.bf16.mxu0 0
        %4508 = vmatmul.mubr.bf16.gmra.mxu0 %v4319
        %v4509 = vpop.f32.mrf.mxu0
        %v4510 = vadd.f32 %v4224, %v4509
        %v4511 = vpop.f32.mrf.mxu0
        %v4512 = vpop.f32.mrf.mxu0
        %v4513 = vadd.f32 %v4224, %v4512
        %v4514 = vpop.f32.mrf.mxu0
        %4515 = vmatprep.mubr.bf16.mxu0 0
        %4516 = vmatmul.mubr.bf16.gmra.mxu0 %v4322
        %v4517 = vpop.f32.mrf.mxu0
        %v4518 = vadd.f32 %v4241, %v4517
        %v4519 = vpop.f32.mrf.mxu0
        %v4520 = vpop.f32.mrf.mxu0
        %v4521 = vadd.f32 %v4250, %v4520
        %v4522 = vpop.f32.mrf.mxu0
        %4523 = vmatprep.mubr.bf16.mxu0 0
        %4524 = vmatmul.mubr.bf16.gmra.mxu0 %v4325
        %v4525 = vpop.f32.mrf.mxu0
        %v4526 = vadd.f32 %v4249, %v4525
        %v4527 = vpop.f32.mrf.mxu0
        %v4528 = vpop.f32.mrf.mxu0
        %v4529 = vpop.f32.mrf.mxu0
        %4530 = vdwg.mxu0
        %v4572 = vcombine.high %v4366, %v4366
        %v4574 = vunpack.c.l.s4 1983009808
        %v4575 = vunpack.c.0.s8 %v4574
        %v4576 = vlaneseq
        %v4577 = vshrl.u32 %v4576, 7
        %v4578 = vsub.s32 %v4575, %v4577
        %v4579 = vrot.slane %v4366, %v4578
        %v4581 = vunpack.c.l.s4 1983009808
        %v4582 = vunpack.c.0.s8 %v4581
        %v4583 = vlaneseq
        %v4584 = vshrl.u32 %v4583, 7
        %v4585 = vsub.s32 %v4582, %v4584
        %v4586 = vrot.slane %v4572, %v4585
        %v4587 = vcombine.high %v4579, %v4579
        %v4588 = vcombine.high %v4586, %v4586
        %v4589 = vcombine.high %v4369, %v4369
        %v4591 = vunpack.c.l.s4 1983009808
        %v4592 = vunpack.c.0.s8 %v4591
        %v4593 = vlaneseq
        %v4594 = vshrl.u32 %v4593, 7
        %v4595 = vsub.s32 %v4592, %v4594
        %v4596 = vrot.slane %v4369, %v4595
        %v4598 = vunpack.c.l.s4 1983009808
        %v4599 = vunpack.c.0.s8 %v4598
        %v4600 = vlaneseq
        %v4601 = vshrl.u32 %v4600, 7
        %v4602 = vsub.s32 %v4599, %v4601
        %v4603 = vrot.slane %v4589, %v4602
        %v4604 = vcombine.high %v4596, %v4596
        %v4605 = vcombine.high %v4603, %v4603
        %v4606 = vcombine.high %v4374, %v4374
        %v4608 = vunpack.c.l.s4 1983009808
        %v4609 = vunpack.c.0.s8 %v4608
        %v4610 = vlaneseq
        %v4611 = vshrl.u32 %v4610, 7
        %v4612 = vsub.s32 %v4609, %v4611
        %v4613 = vrot.slane %v4374, %v4612
        %v4615 = vunpack.c.l.s4 1983009808
        %v4616 = vunpack.c.0.s8 %v4615
        %v4617 = vlaneseq
        %v4618 = vshrl.u32 %v4617, 7
        %v4619 = vsub.s32 %v4616, %v4618
        %v4620 = vrot.slane %v4606, %v4619
        %v4621 = vcombine.high %v4613, %v4613
        %v4622 = vcombine.high %v4620, %v4620
        %v4623 = vcombine.high %v4377, %v4377
        %v4625 = vunpack.c.l.s4 1983009808
        %v4626 = vunpack.c.0.s8 %v4625
        %v4627 = vlaneseq
        %v4628 = vshrl.u32 %v4627, 7
        %v4629 = vsub.s32 %v4626, %v4628
        %v4630 = vrot.slane %v4377, %v4629
        %v4632 = vunpack.c.l.s4 1983009808
        %v4633 = vunpack.c.0.s8 %v4632
        %v4634 = vlaneseq
        %v4635 = vshrl.u32 %v4634, 7
        %v4636 = vsub.s32 %v4633, %v4635
        %v4637 = vrot.slane %v4623, %v4636
        %v4638 = vcombine.high %v4630, %v4630
        %v4639 = vcombine.high %v4637, %v4637
        %v4640 = vcombine.high %v4382, %v4382
        %v4642 = vunpack.c.l.s4 1983009808
        %v4643 = vunpack.c.0.s8 %v4642
        %v4644 = vlaneseq
        %v4645 = vshrl.u32 %v4644, 7
        %v4646 = vsub.s32 %v4643, %v4645
        %v4647 = vrot.slane %v4382, %v4646
        %v4649 = vunpack.c.l.s4 1983009808
        %v4650 = vunpack.c.0.s8 %v4649
        %v4651 = vlaneseq
        %v4652 = vshrl.u32 %v4651, 7
        %v4653 = vsub.s32 %v4650, %v4652
        %v4654 = vrot.slane %v4640, %v4653
        %v4655 = vcombine.high %v4647, %v4647
        %v4656 = vcombine.high %v4654, %v4654
        %v4657 = vcombine.high %v4385, %v4385
        %v4659 = vunpack.c.l.s4 1983009808
        %v4660 = vunpack.c.0.s8 %v4659
        %v4661 = vlaneseq
        %v4662 = vshrl.u32 %v4661, 7
        %v4663 = vsub.s32 %v4660, %v4662
        %v4664 = vrot.slane %v4385, %v4663
        %v4666 = vunpack.c.l.s4 1983009808
        %v4667 = vunpack.c.0.s8 %v4666
        %v4668 = vlaneseq
        %v4669 = vshrl.u32 %v4668, 7
        %v4670 = vsub.s32 %v4667, %v4669
        %v4671 = vrot.slane %v4657, %v4670
        %v4672 = vcombine.high %v4664, %v4664
        %v4673 = vcombine.high %v4671, %v4671
        %v4674 = vcombine.high %v4390, %v4390
        %v4676 = vunpack.c.l.s4 1983009808
        %v4677 = vunpack.c.0.s8 %v4676
        %v4678 = vlaneseq
        %v4679 = vshrl.u32 %v4678, 7
        %v4680 = vsub.s32 %v4677, %v4679
        %v4681 = vrot.slane %v4390, %v4680
        %v4683 = vunpack.c.l.s4 1983009808
        %v4684 = vunpack.c.0.s8 %v4683
        %v4685 = vlaneseq
        %v4686 = vshrl.u32 %v4685, 7
        %v4687 = vsub.s32 %v4684, %v4686
        %v4688 = vrot.slane %v4674, %v4687
        %v4689 = vcombine.high %v4681, %v4681
        %v4690 = vcombine.high %v4688, %v4688
        %v4691 = vcombine.high %v4393, %v4393
        %v4693 = vunpack.c.l.s4 1983009808
        %v4694 = vunpack.c.0.s8 %v4693
        %v4695 = vlaneseq
        %v4696 = vshrl.u32 %v4695, 7
        %v4697 = vsub.s32 %v4694, %v4696
        %v4698 = vrot.slane %v4393, %v4697
        %v4700 = vunpack.c.l.s4 1983009808
        %v4701 = vunpack.c.0.s8 %v4700
        %v4702 = vlaneseq
        %v4703 = vshrl.u32 %v4702, 7
        %v4704 = vsub.s32 %v4701, %v4703
        %v4705 = vrot.slane %v4691, %v4704
        %v4706 = vcombine.high %v4698, %v4698
        %v4707 = vcombine.high %v4705, %v4705
        %v4708 = vcombine.high %v4398, %v4398
        %v4710 = vunpack.c.l.s4 1983009808
        %v4711 = vunpack.c.0.s8 %v4710
        %v4712 = vlaneseq
        %v4713 = vshrl.u32 %v4712, 7
        %v4714 = vsub.s32 %v4711, %v4713
        %v4715 = vrot.slane %v4398, %v4714
        %v4717 = vunpack.c.l.s4 1983009808
        %v4718 = vunpack.c.0.s8 %v4717
        %v4719 = vlaneseq
        %v4720 = vshrl.u32 %v4719, 7
        %v4721 = vsub.s32 %v4718, %v4720
        %v4722 = vrot.slane %v4708, %v4721
        %v4723 = vcombine.high %v4715, %v4715
        %v4724 = vcombine.high %v4722, %v4722
        %v4725 = vcombine.high %v4401, %v4401
        %v4727 = vunpack.c.l.s4 1983009808
        %v4728 = vunpack.c.0.s8 %v4727
        %v4729 = vlaneseq
        %v4730 = vshrl.u32 %v4729, 7
        %v4731 = vsub.s32 %v4728, %v4730
        %v4732 = vrot.slane %v4401, %v4731
        %v4734 = vunpack.c.l.s4 1983009808
        %v4735 = vunpack.c.0.s8 %v4734
        %v4736 = vlaneseq
        %v4737 = vshrl.u32 %v4736, 7
        %v4738 = vsub.s32 %v4735, %v4737
        %v4739 = vrot.slane %v4725, %v4738
        %v4740 = vcombine.high %v4732, %v4732
        %v4741 = vcombine.high %v4739, %v4739
        %v4742 = vcombine.high %v4406, %v4406
        %v4744 = vunpack.c.l.s4 1983009808
        %v4745 = vunpack.c.0.s8 %v4744
        %v4746 = vlaneseq
        %v4747 = vshrl.u32 %v4746, 7
        %v4748 = vsub.s32 %v4745, %v4747
        %v4749 = vrot.slane %v4406, %v4748
        %v4751 = vunpack.c.l.s4 1983009808
        %v4752 = vunpack.c.0.s8 %v4751
        %v4753 = vlaneseq
        %v4754 = vshrl.u32 %v4753, 7
        %v4755 = vsub.s32 %v4752, %v4754
        %v4756 = vrot.slane %v4742, %v4755
        %v4757 = vcombine.high %v4749, %v4749
        %v4758 = vcombine.high %v4756, %v4756
        %v4759 = vcombine.high %v4409, %v4409
        %v4761 = vunpack.c.l.s4 1983009808
        %v4762 = vunpack.c.0.s8 %v4761
        %v4763 = vlaneseq
        %v4764 = vshrl.u32 %v4763, 7
        %v4765 = vsub.s32 %v4762, %v4764
        %v4766 = vrot.slane %v4409, %v4765
        %v4768 = vunpack.c.l.s4 1983009808
        %v4769 = vunpack.c.0.s8 %v4768
        %v4770 = vlaneseq
        %v4771 = vshrl.u32 %v4770, 7
        %v4772 = vsub.s32 %v4769, %v4771
        %v4773 = vrot.slane %v4759, %v4772
        %v4774 = vcombine.high %v4766, %v4766
        %v4775 = vcombine.high %v4773, %v4773
        %v4776 = vcombine.high %v4414, %v4414
        %v4778 = vunpack.c.l.s4 1983009808
        %v4779 = vunpack.c.0.s8 %v4778
        %v4780 = vlaneseq
        %v4781 = vshrl.u32 %v4780, 7
        %v4782 = vsub.s32 %v4779, %v4781
        %v4783 = vrot.slane %v4414, %v4782
        %v4785 = vunpack.c.l.s4 1983009808
        %v4786 = vunpack.c.0.s8 %v4785
        %v4787 = vlaneseq
        %v4788 = vshrl.u32 %v4787, 7
        %v4789 = vsub.s32 %v4786, %v4788
        %v4790 = vrot.slane %v4776, %v4789
        %v4791 = vcombine.high %v4783, %v4783
        %v4792 = vcombine.high %v4790, %v4790
        %v4793 = vcombine.high %v4417, %v4417
        %v4795 = vunpack.c.l.s4 1983009808
        %v4796 = vunpack.c.0.s8 %v4795
        %v4797 = vlaneseq
        %v4798 = vshrl.u32 %v4797, 7
        %v4799 = vsub.s32 %v4796, %v4798
        %v4800 = vrot.slane %v4417, %v4799
        %v4802 = vunpack.c.l.s4 1983009808
        %v4803 = vunpack.c.0.s8 %v4802
        %v4804 = vlaneseq
        %v4805 = vshrl.u32 %v4804, 7
        %v4806 = vsub.s32 %v4803, %v4805
        %v4807 = vrot.slane %v4793, %v4806
        %v4808 = vcombine.high %v4800, %v4800
        %v4809 = vcombine.high %v4807, %v4807
        %v4810 = vcombine.high %v4422, %v4422
        %v4812 = vunpack.c.l.s4 1983009808
        %v4813 = vunpack.c.0.s8 %v4812
        %v4814 = vlaneseq
        %v4815 = vshrl.u32 %v4814, 7
        %v4816 = vsub.s32 %v4813, %v4815
        %v4817 = vrot.slane %v4422, %v4816
        %v4819 = vunpack.c.l.s4 1983009808
        %v4820 = vunpack.c.0.s8 %v4819
        %v4821 = vlaneseq
        %v4822 = vshrl.u32 %v4821, 7
        %v4823 = vsub.s32 %v4820, %v4822
        %v4824 = vrot.slane %v4810, %v4823
        %v4825 = vcombine.high %v4817, %v4817
        %v4826 = vcombine.high %v4824, %v4824
        %v4827 = vcombine.high %v4425, %v4425
        %v4829 = vunpack.c.l.s4 1983009808
        %v4830 = vunpack.c.0.s8 %v4829
        %v4831 = vlaneseq
        %v4832 = vshrl.u32 %v4831, 7
        %v4833 = vsub.s32 %v4830, %v4832
        %v4834 = vrot.slane %v4425, %v4833
        %v4836 = vunpack.c.l.s4 1983009808
        %v4837 = vunpack.c.0.s8 %v4836
        %v4838 = vlaneseq
        %v4839 = vshrl.u32 %v4838, 7
        %v4840 = vsub.s32 %v4837, %v4839
        %v4841 = vrot.slane %v4827, %v4840
        %v4842 = vcombine.high %v4834, %v4834
        %v4843 = vcombine.high %v4841, %v4841
        %v4844 = vcombine.high %v4430, %v4430
        %v4846 = vunpack.c.l.s4 1983009808
        %v4847 = vunpack.c.0.s8 %v4846
        %v4848 = vlaneseq
        %v4849 = vshrl.u32 %v4848, 7
        %v4850 = vsub.s32 %v4847, %v4849
        %v4851 = vrot.slane %v4430, %v4850
        %v4853 = vunpack.c.l.s4 1983009808
        %v4854 = vunpack.c.0.s8 %v4853
        %v4855 = vlaneseq
        %v4856 = vshrl.u32 %v4855, 7
        %v4857 = vsub.s32 %v4854, %v4856
        %v4858 = vrot.slane %v4844, %v4857
        %v4859 = vcombine.high %v4851, %v4851
        %v4860 = vcombine.high %v4858, %v4858
        %v4861 = vcombine.high %v4433, %v4433
        %v4863 = vunpack.c.l.s4 1983009808
        %v4864 = vunpack.c.0.s8 %v4863
        %v4865 = vlaneseq
        %v4866 = vshrl.u32 %v4865, 7
        %v4867 = vsub.s32 %v4864, %v4866
        %v4868 = vrot.slane %v4433, %v4867
        %v4870 = vunpack.c.l.s4 1983009808
        %v4871 = vunpack.c.0.s8 %v4870
        %v4872 = vlaneseq
        %v4873 = vshrl.u32 %v4872, 7
        %v4874 = vsub.s32 %v4871, %v4873
        %v4875 = vrot.slane %v4861, %v4874
        %v4876 = vcombine.high %v4868, %v4868
        %v4877 = vcombine.high %v4875, %v4875
        %v4878 = vcombine.high %v4438, %v4438
        %v4880 = vunpack.c.l.s4 1983009808
        %v4881 = vunpack.c.0.s8 %v4880
        %v4882 = vlaneseq
        %v4883 = vshrl.u32 %v4882, 7
        %v4884 = vsub.s32 %v4881, %v4883
        %v4885 = vrot.slane %v4438, %v4884
        %v4887 = vunpack.c.l.s4 1983009808
        %v4888 = vunpack.c.0.s8 %v4887
        %v4889 = vlaneseq
        %v4890 = vshrl.u32 %v4889, 7
        %v4891 = vsub.s32 %v4888, %v4890
        %v4892 = vrot.slane %v4878, %v4891
        %v4893 = vcombine.high %v4885, %v4885
        %v4894 = vcombine.high %v4892, %v4892
        %v4895 = vcombine.high %v4441, %v4441
        %v4897 = vunpack.c.l.s4 1983009808
        %v4898 = vunpack.c.0.s8 %v4897
        %v4899 = vlaneseq
        %v4900 = vshrl.u32 %v4899, 7
        %v4901 = vsub.s32 %v4898, %v4900
        %v4902 = vrot.slane %v4441, %v4901
        %v4904 = vunpack.c.l.s4 1983009808
        %v4905 = vunpack.c.0.s8 %v4904
        %v4906 = vlaneseq
        %v4907 = vshrl.u32 %v4906, 7
        %v4908 = vsub.s32 %v4905, %v4907
        %v4909 = vrot.slane %v4895, %v4908
        %v4910 = vcombine.high %v4902, %v4902
        %v4911 = vcombine.high %v4909, %v4909
        %v4912 = vcombine.high %v4446, %v4446
        %v4914 = vunpack.c.l.s4 1983009808
        %v4915 = vunpack.c.0.s8 %v4914
        %v4916 = vlaneseq
        %v4917 = vshrl.u32 %v4916, 7
        %v4918 = vsub.s32 %v4915, %v4917
        %v4919 = vrot.slane %v4446, %v4918
        %v4921 = vunpack.c.l.s4 1983009808
        %v4922 = vunpack.c.0.s8 %v4921
        %v4923 = vlaneseq
        %v4924 = vshrl.u32 %v4923, 7
        %v4925 = vsub.s32 %v4922, %v4924
        %v4926 = vrot.slane %v4912, %v4925
        %v4927 = vcombine.high %v4919, %v4919
        %v4928 = vcombine.high %v4926, %v4926
        %v4929 = vcombine.high %v4449, %v4449
        %v4931 = vunpack.c.l.s4 1983009808
        %v4932 = vunpack.c.0.s8 %v4931
        %v4933 = vlaneseq
        %v4934 = vshrl.u32 %v4933, 7
        %v4935 = vsub.s32 %v4932, %v4934
        %v4936 = vrot.slane %v4449, %v4935
        %v4938 = vunpack.c.l.s4 1983009808
        %v4939 = vunpack.c.0.s8 %v4938
        %v4940 = vlaneseq
        %v4941 = vshrl.u32 %v4940, 7
        %v4942 = vsub.s32 %v4939, %v4941
        %v4943 = vrot.slane %v4929, %v4942
        %v4944 = vcombine.high %v4936, %v4936
        %v4945 = vcombine.high %v4943, %v4943
        %v4946 = vcombine.high %v4454, %v4454
        %v4948 = vunpack.c.l.s4 1983009808
        %v4949 = vunpack.c.0.s8 %v4948
        %v4950 = vlaneseq
        %v4951 = vshrl.u32 %v4950, 7
        %v4952 = vsub.s32 %v4949, %v4951
        %v4953 = vrot.slane %v4454, %v4952
        %v4955 = vunpack.c.l.s4 1983009808
        %v4956 = vunpack.c.0.s8 %v4955
        %v4957 = vlaneseq
        %v4958 = vshrl.u32 %v4957, 7
        %v4959 = vsub.s32 %v4956, %v4958
        %v4960 = vrot.slane %v4946, %v4959
        %v4961 = vcombine.high %v4953, %v4953
        %v4962 = vcombine.high %v4960, %v4960
        %v4963 = vcombine.high %v4457, %v4457
        %v4965 = vunpack.c.l.s4 1983009808
        %v4966 = vunpack.c.0.s8 %v4965
        %v4967 = vlaneseq
        %v4968 = vshrl.u32 %v4967, 7
        %v4969 = vsub.s32 %v4966, %v4968
        %v4970 = vrot.slane %v4457, %v4969
        %v4972 = vunpack.c.l.s4 1983009808
        %v4973 = vunpack.c.0.s8 %v4972
        %v4974 = vlaneseq
        %v4975 = vshrl.u32 %v4974, 7
        %v4976 = vsub.s32 %v4973, %v4975
        %v4977 = vrot.slane %v4963, %v4976
        %v4978 = vcombine.high %v4970, %v4970
        %v4979 = vcombine.high %v4977, %v4977
        %v4980 = vcombine.high %v4462, %v4462
        %v4982 = vunpack.c.l.s4 1983009808
        %v4983 = vunpack.c.0.s8 %v4982
        %v4984 = vlaneseq
        %v4985 = vshrl.u32 %v4984, 7
        %v4986 = vsub.s32 %v4983, %v4985
        %v4987 = vrot.slane %v4462, %v4986
        %v4989 = vunpack.c.l.s4 1983009808
        %v4990 = vunpack.c.0.s8 %v4989
        %v4991 = vlaneseq
        %v4992 = vshrl.u32 %v4991, 7
        %v4993 = vsub.s32 %v4990, %v4992
        %v4994 = vrot.slane %v4980, %v4993
        %v4995 = vcombine.high %v4987, %v4987
        %v4996 = vcombine.high %v4994, %v4994
        %v4997 = vcombine.high %v4465, %v4465
        %v4999 = vunpack.c.l.s4 1983009808
        %v5000 = vunpack.c.0.s8 %v4999
        %v5001 = vlaneseq
        %v5002 = vshrl.u32 %v5001, 7
        %v5003 = vsub.s32 %v5000, %v5002
        %v5004 = vrot.slane %v4465, %v5003
        %v5006 = vunpack.c.l.s4 1983009808
        %v5007 = vunpack.c.0.s8 %v5006
        %v5008 = vlaneseq
        %v5009 = vshrl.u32 %v5008, 7
        %v5010 = vsub.s32 %v5007, %v5009
        %v5011 = vrot.slane %v4997, %v5010
        %v5012 = vcombine.high %v5004, %v5004
        %v5013 = vcombine.high %v5011, %v5011
        %v5014 = vcombine.high %v4470, %v4470
        %v5016 = vunpack.c.l.s4 1983009808
        %v5017 = vunpack.c.0.s8 %v5016
        %v5018 = vlaneseq
        %v5019 = vshrl.u32 %v5018, 7
        %v5020 = vsub.s32 %v5017, %v5019
        %v5021 = vrot.slane %v4470, %v5020
        %v5023 = vunpack.c.l.s4 1983009808
        %v5024 = vunpack.c.0.s8 %v5023
        %v5025 = vlaneseq
        %v5026 = vshrl.u32 %v5025, 7
        %v5027 = vsub.s32 %v5024, %v5026
        %v5028 = vrot.slane %v5014, %v5027
        %v5029 = vcombine.high %v5021, %v5021
        %v5030 = vcombine.high %v5028, %v5028
        %v5031 = vcombine.high %v4473, %v4473
        %v5033 = vunpack.c.l.s4 1983009808
        %v5034 = vunpack.c.0.s8 %v5033
        %v5035 = vlaneseq
        %v5036 = vshrl.u32 %v5035, 7
        %v5037 = vsub.s32 %v5034, %v5036
        %v5038 = vrot.slane %v4473, %v5037
        %v5040 = vunpack.c.l.s4 1983009808
        %v5041 = vunpack.c.0.s8 %v5040
        %v5042 = vlaneseq
        %v5043 = vshrl.u32 %v5042, 7
        %v5044 = vsub.s32 %v5041, %v5043
        %v5045 = vrot.slane %v5031, %v5044
        %v5046 = vcombine.high %v5038, %v5038
        %v5047 = vcombine.high %v5045, %v5045
        %v5048 = vcombine.high %v4478, %v4478
        %v5050 = vunpack.c.l.s4 1983009808
        %v5051 = vunpack.c.0.s8 %v5050
        %v5052 = vlaneseq
        %v5053 = vshrl.u32 %v5052, 7
        %v5054 = vsub.s32 %v5051, %v5053
        %v5055 = vrot.slane %v4478, %v5054
        %v5057 = vunpack.c.l.s4 1983009808
        %v5058 = vunpack.c.0.s8 %v5057
        %v5059 = vlaneseq
        %v5060 = vshrl.u32 %v5059, 7
        %v5061 = vsub.s32 %v5058, %v5060
        %v5062 = vrot.slane %v5048, %v5061
        %v5063 = vcombine.high %v5055, %v5055
        %v5064 = vcombine.high %v5062, %v5062
        %v5065 = vcombine.high %v4481, %v4481
        %v5067 = vunpack.c.l.s4 1983009808
        %v5068 = vunpack.c.0.s8 %v5067
        %v5069 = vlaneseq
        %v5070 = vshrl.u32 %v5069, 7
        %v5071 = vsub.s32 %v5068, %v5070
        %v5072 = vrot.slane %v4481, %v5071
        %v5074 = vunpack.c.l.s4 1983009808
        %v5075 = vunpack.c.0.s8 %v5074
        %v5076 = vlaneseq
        %v5077 = vshrl.u32 %v5076, 7
        %v5078 = vsub.s32 %v5075, %v5077
        %v5079 = vrot.slane %v5065, %v5078
        %v5080 = vcombine.high %v5072, %v5072
        %v5081 = vcombine.high %v5079, %v5079
        %v5082 = vcombine.high %v4486, %v4486
        %v5084 = vunpack.c.l.s4 1983009808
        %v5085 = vunpack.c.0.s8 %v5084
        %v5086 = vlaneseq
        %v5087 = vshrl.u32 %v5086, 7
        %v5088 = vsub.s32 %v5085, %v5087
        %v5089 = vrot.slane %v4486, %v5088
        %v5091 = vunpack.c.l.s4 1983009808
        %v5092 = vunpack.c.0.s8 %v5091
        %v5093 = vlaneseq
        %v5094 = vshrl.u32 %v5093, 7
        %v5095 = vsub.s32 %v5092, %v5094
        %v5096 = vrot.slane %v5082, %v5095
        %v5097 = vcombine.high %v5089, %v5089
        %v5098 = vcombine.high %v5096, %v5096
        %v5099 = vcombine.high %v4489, %v4489
        %v5101 = vunpack.c.l.s4 1983009808
        %v5102 = vunpack.c.0.s8 %v5101
        %v5103 = vlaneseq
        %v5104 = vshrl.u32 %v5103, 7
        %v5105 = vsub.s32 %v5102, %v5104
        %v5106 = vrot.slane %v4489, %v5105
        %v5108 = vunpack.c.l.s4 1983009808
        %v5109 = vunpack.c.0.s8 %v5108
        %v5110 = vlaneseq
        %v5111 = vshrl.u32 %v5110, 7
        %v5112 = vsub.s32 %v5109, %v5111
        %v5113 = vrot.slane %v5099, %v5112
        %v5114 = vcombine.high %v5106, %v5106
        %v5115 = vcombine.high %v5113, %v5113
        %v5116 = vcombine.high %v4494, %v4494
        %v5118 = vunpack.c.l.s4 1983009808
        %v5119 = vunpack.c.0.s8 %v5118
        %v5120 = vlaneseq
        %v5121 = vshrl.u32 %v5120, 7
        %v5122 = vsub.s32 %v5119, %v5121
        %v5123 = vrot.slane %v4494, %v5122
        %v5125 = vunpack.c.l.s4 1983009808
        %v5126 = vunpack.c.0.s8 %v5125
        %v5127 = vlaneseq
        %v5128 = vshrl.u32 %v5127, 7
        %v5129 = vsub.s32 %v5126, %v5128
        %v5130 = vrot.slane %v5116, %v5129
        %v5131 = vcombine.high %v5123, %v5123
        %v5132 = vcombine.high %v5130, %v5130
        %v5133 = vcombine.high %v4497, %v4497
        %v5135 = vunpack.c.l.s4 1983009808
        %v5136 = vunpack.c.0.s8 %v5135
        %v5137 = vlaneseq
        %v5138 = vshrl.u32 %v5137, 7
        %v5139 = vsub.s32 %v5136, %v5138
        %v5140 = vrot.slane %v4497, %v5139
        %v5142 = vunpack.c.l.s4 1983009808
        %v5143 = vunpack.c.0.s8 %v5142
        %v5144 = vlaneseq
        %v5145 = vshrl.u32 %v5144, 7
        %v5146 = vsub.s32 %v5143, %v5145
        %v5147 = vrot.slane %v5133, %v5146
        %v5148 = vcombine.high %v5140, %v5140
        %v5149 = vcombine.high %v5147, %v5147
        %v5150 = vcombine.high %v4502, %v4502
        %v5152 = vunpack.c.l.s4 1983009808
        %v5153 = vunpack.c.0.s8 %v5152
        %v5154 = vlaneseq
        %v5155 = vshrl.u32 %v5154, 7
        %v5156 = vsub.s32 %v5153, %v5155
        %v5157 = vrot.slane %v4502, %v5156
        %v5159 = vunpack.c.l.s4 1983009808
        %v5160 = vunpack.c.0.s8 %v5159
        %v5161 = vlaneseq
        %v5162 = vshrl.u32 %v5161, 7
        %v5163 = vsub.s32 %v5160, %v5162
        %v5164 = vrot.slane %v5150, %v5163
        %v5165 = vcombine.high %v5157, %v5157
        %v5166 = vcombine.high %v5164, %v5164
        %v5167 = vcombine.high %v4505, %v4505
        %v5169 = vunpack.c.l.s4 1983009808
        %v5170 = vunpack.c.0.s8 %v5169
        %v5171 = vlaneseq
        %v5172 = vshrl.u32 %v5171, 7
        %v5173 = vsub.s32 %v5170, %v5172
        %v5174 = vrot.slane %v4505, %v5173
        %v5176 = vunpack.c.l.s4 1983009808
        %v5177 = vunpack.c.0.s8 %v5176
        %v5178 = vlaneseq
        %v5179 = vshrl.u32 %v5178, 7
        %v5180 = vsub.s32 %v5177, %v5179
        %v5181 = vrot.slane %v5167, %v5180
        %v5182 = vcombine.high %v5174, %v5174
        %v5183 = vcombine.high %v5181, %v5181
        %v5184 = vcombine.high %v4510, %v4510
        %v5186 = vunpack.c.l.s4 1983009808
        %v5187 = vunpack.c.0.s8 %v5186
        %v5188 = vlaneseq
        %v5189 = vshrl.u32 %v5188, 7
        %v5190 = vsub.s32 %v5187, %v5189
        %v5191 = vrot.slane %v4510, %v5190
        %v5193 = vunpack.c.l.s4 1983009808
        %v5194 = vunpack.c.0.s8 %v5193
        %v5195 = vlaneseq
        %v5196 = vshrl.u32 %v5195, 7
        %v5197 = vsub.s32 %v5194, %v5196
        %v5198 = vrot.slane %v5184, %v5197
        %v5199 = vcombine.high %v5191, %v5191
        %v5200 = vcombine.high %v5198, %v5198
        %v5201 = vcombine.high %v4513, %v4513
        %v5203 = vunpack.c.l.s4 1983009808
        %v5204 = vunpack.c.0.s8 %v5203
        %v5205 = vlaneseq
        %v5206 = vshrl.u32 %v5205, 7
        %v5207 = vsub.s32 %v5204, %v5206
        %v5208 = vrot.slane %v4513, %v5207
        %v5210 = vunpack.c.l.s4 1983009808
        %v5211 = vunpack.c.0.s8 %v5210
        %v5212 = vlaneseq
        %v5213 = vshrl.u32 %v5212, 7
        %v5214 = vsub.s32 %v5211, %v5213
        %v5215 = vrot.slane %v5201, %v5214
        %v5216 = vcombine.high %v5208, %v5208
        %v5217 = vcombine.high %v5215, %v5215
        %v5218 = vcombine.high %v4518, %v4518
        %v5220 = vunpack.c.l.s4 1983009808
        %v5221 = vunpack.c.0.s8 %v5220
        %v5222 = vlaneseq
        %v5223 = vshrl.u32 %v5222, 7
        %v5224 = vsub.s32 %v5221, %v5223
        %v5225 = vrot.slane %v4518, %v5224
        %v5227 = vunpack.c.l.s4 1983009808
        %v5228 = vunpack.c.0.s8 %v5227
        %v5229 = vlaneseq
        %v5230 = vshrl.u32 %v5229, 7
        %v5231 = vsub.s32 %v5228, %v5230
        %v5232 = vrot.slane %v5218, %v5231
        %v5233 = vcombine.high %v5225, %v5225
        %v5234 = vcombine.high %v5232, %v5232
        %v5235 = vcombine.high %v4521, %v4521
        %v5237 = vunpack.c.l.s4 1983009808
        %v5238 = vunpack.c.0.s8 %v5237
        %v5239 = vlaneseq
        %v5240 = vshrl.u32 %v5239, 7
        %v5241 = vsub.s32 %v5238, %v5240
        %v5242 = vrot.slane %v4521, %v5241
        %v5244 = vunpack.c.l.s4 1983009808
        %v5245 = vunpack.c.0.s8 %v5244
        %v5246 = vlaneseq
        %v5247 = vshrl.u32 %v5246, 7
        %v5248 = vsub.s32 %v5245, %v5247
        %v5249 = vrot.slane %v5235, %v5248
        %v5250 = vcombine.high %v5242, %v5242
        %v5251 = vcombine.high %v5249, %v5249
        %v5253 = vunpack.c.l.s4 1983009808
        %v5254 = vunpack.c.0.s8 %v5253
        %v5255 = vlaneseq
        %v5256 = vshrl.u32 %v5255, 7
        %v5257 = vsub.s32 %v5254, %v5256
        %v5258 = vrot.slane %v4526, %v5257
        %v5259 = vcombine.high %v5258, %v5258
        %v5422 = vmax.f32 %v4579, 0.0
        %v5423 = vmax.f32 %v4587, 0.0
        %v5424 = vmax.f32 %v4586, 0.0
        %v5425 = vmax.f32 %v4588, 0.0
        %v5426 = vmax.f32 %v4596, 0.0
        %v5427 = vmax.f32 %v4604, 0.0
        %v5428 = vmax.f32 %v4603, 0.0
        %v5429 = vmax.f32 %v4605, 0.0
        %v5430 = vmax.f32 %v4613, 0.0
        %v5431 = vmax.f32 %v4621, 0.0
        %v5432 = vmax.f32 %v4620, 0.0
        %v5433 = vmax.f32 %v4622, 0.0
        %v5434 = vmax.f32 %v4630, 0.0
        %v5435 = vmax.f32 %v4638, 0.0
        %v5436 = vmax.f32 %v4637, 0.0
        %v5437 = vmax.f32 %v4639, 0.0
        %v5438 = vmax.f32 %v4647, 0.0
        %v5439 = vmax.f32 %v4655, 0.0
        %v5440 = vmax.f32 %v4654, 0.0
        %v5441 = vmax.f32 %v4656, 0.0
        %v5442 = vmax.f32 %v4664, 0.0
        %v5443 = vmax.f32 %v4672, 0.0
        %v5444 = vmax.f32 %v4671, 0.0
        %v5445 = vmax.f32 %v4673, 0.0
        %v5446 = vmax.f32 %v4681, 0.0
        %v5447 = vmax.f32 %v4689, 0.0
        %v5448 = vmax.f32 %v4688, 0.0
        %v5449 = vmax.f32 %v4690, 0.0
        %v5450 = vmax.f32 %v4698, 0.0
        %v5451 = vmax.f32 %v4706, 0.0
        %v5452 = vmax.f32 %v4705, 0.0
        %v5453 = vmax.f32 %v4707, 0.0
        %v5454 = vmax.f32 %v4715, 0.0
        %v5455 = vmax.f32 %v4723, 0.0
        %v5456 = vmax.f32 %v4722, 0.0
        %v5457 = vmax.f32 %v4724, 0.0
        %v5458 = vmax.f32 %v4732, 0.0
        %v5459 = vmax.f32 %v4740, 0.0
        %v5460 = vmax.f32 %v4739, 0.0
        %v5461 = vmax.f32 %v4741, 0.0
        %v5462 = vmax.f32 %v4749, 0.0
        %v5463 = vmax.f32 %v4757, 0.0
        %v5464 = vmax.f32 %v4756, 0.0
        %v5465 = vmax.f32 %v4758, 0.0
        %v5466 = vmax.f32 %v4766, 0.0
        %v5467 = vmax.f32 %v4774, 0.0
        %v5468 = vmax.f32 %v4773, 0.0
        %v5469 = vmax.f32 %v4775, 0.0
        %v5470 = vmax.f32 %v4783, 0.0
        %v5471 = vmax.f32 %v4791, 0.0
        %v5472 = vmax.f32 %v4790, 0.0
        %v5473 = vmax.f32 %v4792, 0.0
        %v5474 = vmax.f32 %v4800, 0.0
        %v5475 = vmax.f32 %v4808, 0.0
        %v5476 = vmax.f32 %v4807, 0.0
        %v5477 = vmax.f32 %v4809, 0.0
        %v5478 = vmax.f32 %v4817, 0.0
        %v5479 = vmax.f32 %v4825, 0.0
        %v5480 = vmax.f32 %v4824, 0.0
        %v5481 = vmax.f32 %v4826, 0.0
        %v5482 = vmax.f32 %v4834, 0.0
        %v5483 = vmax.f32 %v4842, 0.0
        %v5484 = vmax.f32 %v4841, 0.0
        %v5485 = vmax.f32 %v4843, 0.0
        %v5486 = vmax.f32 %v4851, 0.0
        %v5487 = vmax.f32 %v4859, 0.0
        %v5488 = vmax.f32 %v4858, 0.0
        %v5489 = vmax.f32 %v4860, 0.0
        %v5490 = vmax.f32 %v4868, 0.0
        %v5491 = vmax.f32 %v4876, 0.0
        %v5492 = vmax.f32 %v4875, 0.0
        %v5493 = vmax.f32 %v4877, 0.0
        %v5494 = vmax.f32 %v4885, 0.0
        %v5495 = vmax.f32 %v4893, 0.0
        %v5496 = vmax.f32 %v4892, 0.0
        %v5497 = vmax.f32 %v4894, 0.0
        %v5498 = vmax.f32 %v4902, 0.0
        %v5499 = vmax.f32 %v4910, 0.0
        %v5500 = vmax.f32 %v4909, 0.0
        %v5501 = vmax.f32 %v4911, 0.0
        %v5502 = vmax.f32 %v4919, 0.0
        %v5503 = vmax.f32 %v4927, 0.0
        %v5504 = vmax.f32 %v4926, 0.0
        %v5505 = vmax.f32 %v4928, 0.0
        %v5506 = vmax.f32 %v4936, 0.0
        %v5507 = vmax.f32 %v4944, 0.0
        %v5508 = vmax.f32 %v4943, 0.0
        %v5509 = vmax.f32 %v4945, 0.0
        %v5510 = vmax.f32 %v4953, 0.0
        %v5511 = vmax.f32 %v4961, 0.0
        %v5512 = vmax.f32 %v4960, 0.0
        %v5513 = vmax.f32 %v4962, 0.0
        %v5514 = vmax.f32 %v4970, 0.0
        %v5515 = vmax.f32 %v4978, 0.0
        %v5516 = vmax.f32 %v4977, 0.0
        %v5517 = vmax.f32 %v4979, 0.0
        %v5518 = vmax.f32 %v4987, 0.0
        %v5519 = vmax.f32 %v4995, 0.0
        %v5520 = vmax.f32 %v4994, 0.0
        %v5521 = vmax.f32 %v4996, 0.0
        %v5522 = vmax.f32 %v5004, 0.0
        %v5523 = vmax.f32 %v5012, 0.0
        %v5524 = vmax.f32 %v5011, 0.0
        %v5525 = vmax.f32 %v5013, 0.0
        %v5526 = vmax.f32 %v5021, 0.0
        %v5527 = vmax.f32 %v5029, 0.0
        %v5528 = vmax.f32 %v5028, 0.0
        %v5529 = vmax.f32 %v5030, 0.0
        %v5530 = vmax.f32 %v5038, 0.0
        %v5531 = vmax.f32 %v5046, 0.0
        %v5532 = vmax.f32 %v5045, 0.0
        %v5533 = vmax.f32 %v5047, 0.0
        %v5534 = vmax.f32 %v5055, 0.0
        %v5535 = vmax.f32 %v5063, 0.0
        %v5536 = vmax.f32 %v5062, 0.0
        %v5537 = vmax.f32 %v5064, 0.0
        %v5538 = vmax.f32 %v5072, 0.0
        %v5539 = vmax.f32 %v5080, 0.0
        %v5540 = vmax.f32 %v5079, 0.0
        %v5541 = vmax.f32 %v5081, 0.0
        %v5542 = vmax.f32 %v5089, 0.0
        %v5543 = vmax.f32 %v5097, 0.0
        %v5544 = vmax.f32 %v5096, 0.0
        %v5545 = vmax.f32 %v5098, 0.0
        %v5546 = vmax.f32 %v5106, 0.0
        %v5547 = vmax.f32 %v5114, 0.0
        %v5548 = vmax.f32 %v5113, 0.0
        %v5549 = vmax.f32 %v5115, 0.0
        %v5550 = vmax.f32 %v5123, 0.0
        %v5551 = vmax.f32 %v5131, 0.0
        %v5552 = vmax.f32 %v5130, 0.0
        %v5553 = vmax.f32 %v5132, 0.0
        %v5554 = vmax.f32 %v5140, 0.0
        %v5555 = vmax.f32 %v5148, 0.0
        %v5556 = vmax.f32 %v5147, 0.0
        %v5557 = vmax.f32 %v5149, 0.0
        %v5558 = vmax.f32 %v5157, 0.0
        %v5559 = vmax.f32 %v5165, 0.0
        %v5560 = vmax.f32 %v5164, 0.0
        %v5561 = vmax.f32 %v5166, 0.0
        %v5562 = vmax.f32 %v5174, 0.0
        %v5563 = vmax.f32 %v5182, 0.0
        %v5564 = vmax.f32 %v5181, 0.0
        %v5565 = vmax.f32 %v5183, 0.0
        %v5566 = vmax.f32 %v5191, 0.0
        %v5567 = vmax.f32 %v5199, 0.0
        %v5568 = vmax.f32 %v5198, 0.0
        %v5569 = vmax.f32 %v5200, 0.0
        %v5570 = vmax.f32 %v5208, 0.0
        %v5571 = vmax.f32 %v5216, 0.0
        %v5572 = vmax.f32 %v5215, 0.0
        %v5573 = vmax.f32 %v5217, 0.0
        %v5574 = vmax.f32 %v5225, 0.0
        %v5575 = vmax.f32 %v5233, 0.0
        %v5576 = vmax.f32 %v5232, 0.0
        %v5577 = vmax.f32 %v5234, 0.0
        %v5578 = vmax.f32 %v5242, 0.0
        %v5579 = vmax.f32 %v5250, 0.0
        %v5580 = vmax.f32 %v5249, 0.0
        %v5581 = vmax.f32 %v5251, 0.0
        %v5582 = vmax.f32 %v5258, 0.0
        %v5583 = vmax.f32 %v5259, 0.0
        %s5584 = ssub.s32 %s254, 1
        %v5585 = vstv %s5584
        %v5586 = vadd.s32 %v5585, 1
        %v5587 = vadd.s32 %v5585, 2
        %v5588 = vadd.s32 %v5585, 3
        %v5589 = vadd.s32 %v5585, 4
        %v5590 = vadd.s32 %v5585, 5
        %v5591 = vadd.s32 %v5585, 6
        %v5592 = vadd.s32 %v5585, 7
        %v5593 = vadd.s32 %v5585, 8
        %v5594 = vadd.s32 %v5585, 9
        %v5595 = vadd.s32 %v5585, 10
        %v5596 = vadd.s32 %v5585, 11
        %v5597 = vadd.s32 %v5585, 12
        %v5598 = vadd.s32 %v5585, 13
        %v5599 = vadd.s32 %v5585, 14
        %v5600 = vadd.s32 %v5585, 15
        %v5601 = vadd.s32 %v5585, 16
        %v5602 = vadd.s32 %v5585, 17
        %v5603 = vlaneseq
        %v5604 = vshrl.u32 %v5603, 7
        %v5605 = vadd.s32 %v5604, 8
        %v5606 = vadd.s32 %v5604, 16
        %v5607 = vsub.s32 %v5604, 1
        %v5608 = vsub.s32 %v5605, 1
        %v5609 = vsub.s32 %v5606, 1
        %vm5610 = vcmp.ge.s32.totalorder %v5585, 0
        %vm5611 = vcmp.ge.s32.totalorder %v5586, 0
        %vm5612 = vcmp.ge.s32.totalorder %v5587, 0
        %vm5613 = vcmp.ge.s32.totalorder %v5588, 0
        %vm5614 = vcmp.ge.s32.totalorder %v5589, 0
        %vm5615 = vcmp.ge.s32.totalorder %v5590, 0
        %vm5616 = vcmp.ge.s32.totalorder %v5591, 0
        %vm5617 = vcmp.ge.s32.totalorder %v5592, 0
        %vm5618 = vcmp.ge.s32.totalorder %v5593, 0
        %vm5619 = vcmp.ge.s32.totalorder %v5594, 0
        %vm5620 = vcmp.ge.s32.totalorder %v5595, 0
        %vm5621 = vcmp.ge.s32.totalorder %v5596, 0
        %vm5622 = vcmp.ge.s32.totalorder %v5597, 0
        %vm5623 = vcmp.ge.s32.totalorder %v5598, 0
        %vm5624 = vcmp.ge.s32.totalorder %v5599, 0
        %vm5625 = vcmp.ge.s32.totalorder %v5600, 0
        %vm5626 = vcmp.ge.s32.totalorder %v5601, 0
        %vm5627 = vcmp.ge.s32.totalorder %v5602, 0
        %vm5628 = vcmp.lt.s32.totalorder %v5585, 16
        %vm5629 = vcmp.lt.s32.totalorder %v5586, 16
        %vm5630 = vcmp.lt.s32.totalorder %v5587, 16
        %vm5631 = vcmp.lt.s32.totalorder %v5588, 16
        %vm5632 = vcmp.lt.s32.totalorder %v5589, 16
        %vm5633 = vcmp.lt.s32.totalorder %v5590, 16
        %vm5634 = vcmp.lt.s32.totalorder %v5591, 16
        %vm5635 = vcmp.lt.s32.totalorder %v5592, 16
        %vm5636 = vcmp.lt.s32.totalorder %v5593, 16
        %vm5637 = vcmp.lt.s32.totalorder %v5594, 16
        %vm5638 = vcmp.lt.s32.totalorder %v5595, 16
        %vm5639 = vcmp.lt.s32.totalorder %v5596, 16
        %vm5640 = vcmp.lt.s32.totalorder %v5597, 16
        %vm5641 = vcmp.lt.s32.totalorder %v5598, 16
        %vm5642 = vcmp.lt.s32.totalorder %v5599, 16
        %vm5643 = vcmp.lt.s32.totalorder %v5600, 16
        %vm5644 = vcmp.lt.s32.totalorder %v5601, 16
        %vm5645 = vcmp.lt.s32.totalorder %v5602, 16
        %vm5646 = vmand %vm5610, %vm5628
        %vm5647 = vmand %vm5611, %vm5629
        %vm5648 = vmand %vm5612, %vm5630
        %vm5649 = vmand %vm5613, %vm5631
        %vm5650 = vmand %vm5614, %vm5632
        %vm5651 = vmand %vm5615, %vm5633
        %vm5652 = vmand %vm5616, %vm5634
        %vm5653 = vmand %vm5617, %vm5635
        %vm5654 = vmand %vm5618, %vm5636
        %vm5655 = vmand %vm5619, %vm5637
        %vm5656 = vmand %vm5620, %vm5638
        %vm5657 = vmand %vm5621, %vm5639
        %vm5658 = vmand %vm5622, %vm5640
        %vm5659 = vmand %vm5623, %vm5641
        %vm5660 = vmand %vm5624, %vm5642
        %vm5661 = vmand %vm5625, %vm5643
        %vm5662 = vmand %vm5626, %vm5644
        %vm5663 = vmand %vm5627, %vm5645
        %vm5664 = vcmp.ge.s32.totalorder %v5607, 0
        %vm5665 = vcmp.ge.s32.totalorder %v5608, 0
        %vm5666 = vcmp.ge.s32.totalorder %v5609, 0
        %vm5667 = vmand %vm5646, %vm5664
        %vm5668 = vmand %vm5646, %vm5665
        %vm5669 = vmand %vm5646, %vm5666
        %vm5670 = vmand %vm5647, %vm5664
        %vm5671 = vmand %vm5647, %vm5665
        %vm5672 = vmand %vm5647, %vm5666
        %vm5673 = vmand %vm5648, %vm5664
        %vm5674 = vmand %vm5648, %vm5665
        %vm5675 = vmand %vm5648, %vm5666
        %vm5676 = vmand %vm5649, %vm5664
        %vm5677 = vmand %vm5649, %vm5665
        %vm5678 = vmand %vm5649, %vm5666
        %vm5679 = vmand %vm5650, %vm5664
        %vm5680 = vmand %vm5650, %vm5665
        %vm5681 = vmand %vm5650, %vm5666
        %vm5682 = vmand %vm5651, %vm5664
        %vm5683 = vmand %vm5651, %vm5665
        %vm5684 = vmand %vm5651, %vm5666
        %vm5685 = vmand %vm5652, %vm5664
        %vm5686 = vmand %vm5652, %vm5665
        %vm5687 = vmand %vm5652, %vm5666
        %vm5688 = vmand %vm5653, %vm5664
        %vm5689 = vmand %vm5653, %vm5665
        %vm5690 = vmand %vm5653, %vm5666
        %vm5691 = vmand %vm5654, %vm5664
        %vm5692 = vmand %vm5654, %vm5665
        %vm5693 = vmand %vm5654, %vm5666
        %vm5694 = vmand %vm5655, %vm5664
        %vm5695 = vmand %vm5655, %vm5665
        %vm5696 = vmand %vm5655, %vm5666
        %vm5697 = vmand %vm5656, %vm5664
        %vm5698 = vmand %vm5656, %vm5665
        %vm5699 = vmand %vm5656, %vm5666
        %vm5700 = vmand %vm5657, %vm5664
        %vm5701 = vmand %vm5657, %vm5665
        %vm5702 = vmand %vm5657, %vm5666
        %vm5703 = vmand %vm5658, %vm5664
        %vm5704 = vmand %vm5658, %vm5665
        %vm5705 = vmand %vm5658, %vm5666
        %vm5706 = vmand %vm5659, %vm5664
        %vm5707 = vmand %vm5659, %vm5665
        %vm5708 = vmand %vm5659, %vm5666
        %vm5709 = vmand %vm5660, %vm5664
        %vm5710 = vmand %vm5660, %vm5665
        %vm5711 = vmand %vm5660, %vm5666
        %vm5712 = vmand %vm5661, %vm5664
        %vm5713 = vmand %vm5661, %vm5665
        %vm5714 = vmand %vm5661, %vm5666
        %vm5715 = vmand %vm5662, %vm5664
        %vm5716 = vmand %vm5662, %vm5665
        %vm5717 = vmand %vm5662, %vm5666
        %vm5718 = vmand %vm5663, %vm5664
        %vm5719 = vmand %vm5663, %vm5665
        %vm5720 = vmand %vm5663, %vm5666
        %vm5721 = vcmp.lt.s32.totalorder %v5607, 16
        %vm5722 = vcmp.lt.s32.totalorder %v5608, 16
        %vm5723 = vcmp.lt.s32.totalorder %v5609, 16
        %vm5724 = vmand %vm5667, %vm5721
        %vm5725 = vmand %vm5668, %vm5722
        %vm5726 = vmand %vm5669, %vm5723
        %vm5727 = vmand %vm5670, %vm5721
        %vm5728 = vmand %vm5671, %vm5722
        %vm5729 = vmand %vm5672, %vm5723
        %vm5730 = vmand %vm5673, %vm5721
        %vm5731 = vmand %vm5674, %vm5722
        %vm5732 = vmand %vm5675, %vm5723
        %vm5733 = vmand %vm5676, %vm5721
        %vm5734 = vmand %vm5677, %vm5722
        %vm5735 = vmand %vm5678, %vm5723
        %vm5736 = vmand %vm5679, %vm5721
        %vm5737 = vmand %vm5680, %vm5722
        %vm5738 = vmand %vm5681, %vm5723
        %vm5739 = vmand %vm5682, %vm5721
        %vm5740 = vmand %vm5683, %vm5722
        %vm5741 = vmand %vm5684, %vm5723
        %vm5742 = vmand %vm5685, %vm5721
        %vm5743 = vmand %vm5686, %vm5722
        %vm5744 = vmand %vm5687, %vm5723
        %vm5745 = vmand %vm5688, %vm5721
        %vm5746 = vmand %vm5689, %vm5722
        %vm5747 = vmand %vm5690, %vm5723
        %vm5748 = vmand %vm5691, %vm5721
        %vm5749 = vmand %vm5692, %vm5722
        %vm5750 = vmand %vm5693, %vm5723
        %vm5751 = vmand %vm5694, %vm5721
        %vm5752 = vmand %vm5695, %vm5722
        %vm5753 = vmand %vm5696, %vm5723
        %vm5754 = vmand %vm5697, %vm5721
        %vm5755 = vmand %vm5698, %vm5722
        %vm5756 = vmand %vm5699, %vm5723
        %vm5757 = vmand %vm5700, %vm5721
        %vm5758 = vmand %vm5701, %vm5722
        %vm5759 = vmand %vm5702, %vm5723
        %vm5760 = vmand %vm5703, %vm5721
        %vm5761 = vmand %vm5704, %vm5722
        %vm5762 = vmand %vm5705, %vm5723
        %vm5763 = vmand %vm5706, %vm5721
        %vm5764 = vmand %vm5707, %vm5722
        %vm5765 = vmand %vm5708, %vm5723
        %vm5766 = vmand %vm5709, %vm5721
        %vm5767 = vmand %vm5710, %vm5722
        %vm5768 = vmand %vm5711, %vm5723
        %vm5769 = vmand %vm5712, %vm5721
        %vm5770 = vmand %vm5713, %vm5722
        %vm5771 = vmand %vm5714, %vm5723
        %vm5772 = vmand %vm5715, %vm5721
        %vm5773 = vmand %vm5716, %vm5722
        %vm5774 = vmand %vm5717, %vm5723
        %vm5775 = vmand %vm5718, %vm5721
        %vm5776 = vmand %vm5719, %vm5722
        %vm5777 = vmand %vm5720, %vm5723
        %v5778 = vsel %vm5724, 1, 0
        %v5779 = vsel %vm5725, 1, 0
        %v5780 = vsel %vm5726, 1, 0
        %v5781 = vsel %vm5727, 1, 0
        %v5782 = vsel %vm5728, 1, 0
        %v5783 = vsel %vm5729, 1, 0
        %v5784 = vsel %vm5730, 1, 0
        %v5785 = vsel %vm5731, 1, 0
        %v5786 = vsel %vm5732, 1, 0
        %v5787 = vsel %vm5733, 1, 0
        %v5788 = vsel %vm5734, 1, 0
        %v5789 = vsel %vm5735, 1, 0
        %v5790 = vsel %vm5736, 1, 0
        %v5791 = vsel %vm5737, 1, 0
        %v5792 = vsel %vm5738, 1, 0
        %v5793 = vsel %vm5739, 1, 0
        %v5794 = vsel %vm5740, 1, 0
        %v5795 = vsel %vm5741, 1, 0
        %v5796 = vsel %vm5742, 1, 0
        %v5797 = vsel %vm5743, 1, 0
        %v5798 = vsel %vm5744, 1, 0
        %v5799 = vsel %vm5745, 1, 0
        %v5800 = vsel %vm5746, 1, 0
        %v5801 = vsel %vm5747, 1, 0
        %v5802 = vsel %vm5748, 1, 0
        %v5803 = vsel %vm5749, 1, 0
        %v5804 = vsel %vm5750, 1, 0
        %v5805 = vsel %vm5751, 1, 0
        %v5806 = vsel %vm5752, 1, 0
        %v5807 = vsel %vm5753, 1, 0
        %v5808 = vsel %vm5754, 1, 0
        %v5809 = vsel %vm5755, 1, 0
        %v5810 = vsel %vm5756, 1, 0
        %v5811 = vsel %vm5757, 1, 0
        %v5812 = vsel %vm5758, 1, 0
        %v5813 = vsel %vm5759, 1, 0
        %v5814 = vsel %vm5760, 1, 0
        %v5815 = vsel %vm5761, 1, 0
        %v5816 = vsel %vm5762, 1, 0
        %v5817 = vsel %vm5763, 1, 0
        %v5818 = vsel %vm5764, 1, 0
        %v5819 = vsel %vm5765, 1, 0
        %v5820 = vsel %vm5766, 1, 0
        %v5821 = vsel %vm5767, 1, 0
        %v5822 = vsel %vm5768, 1, 0
        %v5823 = vsel %vm5769, 1, 0
        %v5824 = vsel %vm5770, 1, 0
        %v5825 = vsel %vm5771, 1, 0
        %v5826 = vsel %vm5772, 1, 0
        %v5827 = vsel %vm5773, 1, 0
        %v5828 = vsel %vm5774, 1, 0
        %v5829 = vsel %vm5775, 1, 0
        %v5830 = vsel %vm5776, 1, 0
        %v5831 = vsel %vm5777, 1, 0
        %vm5832 = vcmp.eq.s32.totalorder %v5778, 1
        %vm5833 = vcmp.eq.s32.totalorder %v5779, 1
        %vm5834 = vcmp.eq.s32.totalorder %v5780, 1
        %vm5835 = vcmp.eq.s32.totalorder %v5781, 1
        %vm5836 = vcmp.eq.s32.totalorder %v5782, 1
        %vm5837 = vcmp.eq.s32.totalorder %v5783, 1
        %vm5838 = vcmp.eq.s32.totalorder %v5784, 1
        %vm5839 = vcmp.eq.s32.totalorder %v5785, 1
        %vm5840 = vcmp.eq.s32.totalorder %v5786, 1
        %vm5841 = vcmp.eq.s32.totalorder %v5787, 1
        %vm5842 = vcmp.eq.s32.totalorder %v5788, 1
        %vm5843 = vcmp.eq.s32.totalorder %v5789, 1
        %vm5844 = vcmp.eq.s32.totalorder %v5790, 1
        %vm5845 = vcmp.eq.s32.totalorder %v5791, 1
        %vm5846 = vcmp.eq.s32.totalorder %v5792, 1
        %vm5847 = vcmp.eq.s32.totalorder %v5793, 1
        %vm5848 = vcmp.eq.s32.totalorder %v5794, 1
        %vm5849 = vcmp.eq.s32.totalorder %v5795, 1
        %vm5850 = vcmp.eq.s32.totalorder %v5796, 1
        %vm5851 = vcmp.eq.s32.totalorder %v5797, 1
        %vm5852 = vcmp.eq.s32.totalorder %v5798, 1
        %vm5853 = vcmp.eq.s32.totalorder %v5799, 1
        %vm5854 = vcmp.eq.s32.totalorder %v5800, 1
        %vm5855 = vcmp.eq.s32.totalorder %v5801, 1
        %vm5856 = vcmp.eq.s32.totalorder %v5802, 1
        %vm5857 = vcmp.eq.s32.totalorder %v5803, 1
        %vm5858 = vcmp.eq.s32.totalorder %v5804, 1
        %vm5859 = vcmp.eq.s32.totalorder %v5805, 1
        %vm5860 = vcmp.eq.s32.totalorder %v5806, 1
        %vm5861 = vcmp.eq.s32.totalorder %v5807, 1
        %vm5862 = vcmp.eq.s32.totalorder %v5808, 1
        %vm5863 = vcmp.eq.s32.totalorder %v5809, 1
        %vm5864 = vcmp.eq.s32.totalorder %v5810, 1
        %vm5865 = vcmp.eq.s32.totalorder %v5811, 1
        %vm5866 = vcmp.eq.s32.totalorder %v5812, 1
        %vm5867 = vcmp.eq.s32.totalorder %v5813, 1
        %vm5868 = vcmp.eq.s32.totalorder %v5814, 1
        %vm5869 = vcmp.eq.s32.totalorder %v5815, 1
        %vm5870 = vcmp.eq.s32.totalorder %v5816, 1
        %vm5871 = vcmp.eq.s32.totalorder %v5817, 1
        %vm5872 = vcmp.eq.s32.totalorder %v5818, 1
        %vm5873 = vcmp.eq.s32.totalorder %v5819, 1
        %vm5874 = vcmp.eq.s32.totalorder %v5820, 1
        %vm5875 = vcmp.eq.s32.totalorder %v5821, 1
        %vm5876 = vcmp.eq.s32.totalorder %v5822, 1
        %vm5877 = vcmp.eq.s32.totalorder %v5823, 1
        %vm5878 = vcmp.eq.s32.totalorder %v5824, 1
        %vm5879 = vcmp.eq.s32.totalorder %v5825, 1
        %vm5880 = vcmp.eq.s32.totalorder %v5826, 1
        %vm5881 = vcmp.eq.s32.totalorder %v5827, 1
        %vm5882 = vcmp.eq.s32.totalorder %v5828, 1
        %vm5883 = vcmp.eq.s32.totalorder %v5829, 1
        %vm5884 = vcmp.eq.s32.totalorder %v5830, 1
        %vm5885 = vcmp.eq.s32.totalorder %v5831, 1
        %v6048 = vcombine.low %v5422, %v5423
        %v6049 = vcombine.low %v5424, %v5425
        %v6051 = vunpack.c.l.s4 1983009808
        %v6052 = vunpack.c.0.s8 %v6051
        %v6053 = vlaneseq
        %v6054 = vshrl.u32 %v6053, 7
        %v6055 = vsub.s32 %v6052, %v6054
        %v6056 = vrot.slane %v6048, %v6055
        %v6058 = vunpack.c.l.s4 1983009808
        %v6059 = vunpack.c.0.s8 %v6058
        %v6060 = vlaneseq
        %v6061 = vshrl.u32 %v6060, 7
        %v6062 = vsub.s32 %v6059, %v6061
        %v6063 = vrot.slane %v6049, %v6062
        %v6064 = vcombine.low %v6056, %v6063
        %v6065 = vcombine.low %v5426, %v5427
        %v6066 = vcombine.low %v5428, %v5429
        %v6068 = vunpack.c.l.s4 1983009808
        %v6069 = vunpack.c.0.s8 %v6068
        %v6070 = vlaneseq
        %v6071 = vshrl.u32 %v6070, 7
        %v6072 = vsub.s32 %v6069, %v6071
        %v6073 = vrot.slane %v6065, %v6072
        %v6075 = vunpack.c.l.s4 1983009808
        %v6076 = vunpack.c.0.s8 %v6075
        %v6077 = vlaneseq
        %v6078 = vshrl.u32 %v6077, 7
        %v6079 = vsub.s32 %v6076, %v6078
        %v6080 = vrot.slane %v6066, %v6079
        %v6081 = vcombine.low %v6073, %v6080
        %v6083 = vunpack.c.l.s4 1983009808
        %v6084 = vunpack.c.0.s8 %v6083
        %v6085 = vlaneseq
        %v6086 = vshrl.u32 %v6085, 7
        %v6087 = vsub.s32 %v6084, %v6086
        %v6088 = vrot.slane %v5430, %v6087
        %v6089 = vcombine.low %v5431, %v5432
        %v6090 = vcombine.low %v5433, %v5434
        %v6092 = vunpack.c.l.s4 1983009808
        %v6093 = vunpack.c.0.s8 %v6092
        %v6094 = vlaneseq
        %v6095 = vshrl.u32 %v6094, 7
        %v6096 = vsub.s32 %v6093, %v6095
        %v6097 = vrot.slane %v6089, %v6096
        %v6099 = vunpack.c.l.s4 1983009808
        %v6100 = vunpack.c.0.s8 %v6099
        %v6101 = vlaneseq
        %v6102 = vshrl.u32 %v6101, 7
        %v6103 = vsub.s32 %v6100, %v6102
        %v6104 = vrot.slane %v6090, %v6103
        %v6105 = vcombine.low %v6097, %v6104
        %v6106 = vcombine.low %v5435, %v5436
        %v6107 = vcombine.low %v5437, %v5438
        %v6109 = vunpack.c.l.s4 1983009808
        %v6110 = vunpack.c.0.s8 %v6109
        %v6111 = vlaneseq
        %v6112 = vshrl.u32 %v6111, 7
        %v6113 = vsub.s32 %v6110, %v6112
        %v6114 = vrot.slane %v6106, %v6113
        %v6116 = vunpack.c.l.s4 1983009808
        %v6117 = vunpack.c.0.s8 %v6116
        %v6118 = vlaneseq
        %v6119 = vshrl.u32 %v6118, 7
        %v6120 = vsub.s32 %v6117, %v6119
        %v6121 = vrot.slane %v6107, %v6120
        %v6122 = vcombine.low %v6114, %v6121
        %v6124 = vunpack.c.l.s4 1983009808
        %v6125 = vunpack.c.0.s8 %v6124
        %v6126 = vlaneseq
        %v6127 = vshrl.u32 %v6126, 7
        %v6128 = vsub.s32 %v6125, %v6127
        %v6129 = vrot.slane %v5439, %v6128
        %v6130 = vcombine.low %v5440, %v5441
        %v6131 = vcombine.low %v5442, %v5443
        %v6133 = vunpack.c.l.s4 1983009808
        %v6134 = vunpack.c.0.s8 %v6133
        %v6135 = vlaneseq
        %v6136 = vshrl.u32 %v6135, 7
        %v6137 = vsub.s32 %v6134, %v6136
        %v6138 = vrot.slane %v6130, %v6137
        %v6140 = vunpack.c.l.s4 1983009808
        %v6141 = vunpack.c.0.s8 %v6140
        %v6142 = vlaneseq
        %v6143 = vshrl.u32 %v6142, 7
        %v6144 = vsub.s32 %v6141, %v6143
        %v6145 = vrot.slane %v6131, %v6144
        %v6146 = vcombine.low %v6138, %v6145
        %v6147 = vcombine.low %v5444, %v5445
        %v6148 = vcombine.low %v5446, %v5447
        %v6150 = vunpack.c.l.s4 1983009808
        %v6151 = vunpack.c.0.s8 %v6150
        %v6152 = vlaneseq
        %v6153 = vshrl.u32 %v6152, 7
        %v6154 = vsub.s32 %v6151, %v6153
        %v6155 = vrot.slane %v6147, %v6154
        %v6157 = vunpack.c.l.s4 1983009808
        %v6158 = vunpack.c.0.s8 %v6157
        %v6159 = vlaneseq
        %v6160 = vshrl.u32 %v6159, 7
        %v6161 = vsub.s32 %v6158, %v6160
        %v6162 = vrot.slane %v6148, %v6161
        %v6163 = vcombine.low %v6155, %v6162
        %v6165 = vunpack.c.l.s4 1983009808
        %v6166 = vunpack.c.0.s8 %v6165
        %v6167 = vlaneseq
        %v6168 = vshrl.u32 %v6167, 7
        %v6169 = vsub.s32 %v6166, %v6168
        %v6170 = vrot.slane %v5448, %v6169
        %v6171 = vcombine.low %v5449, %v5450
        %v6172 = vcombine.low %v5451, %v5452
        %v6174 = vunpack.c.l.s4 1983009808
        %v6175 = vunpack.c.0.s8 %v6174
        %v6176 = vlaneseq
        %v6177 = vshrl.u32 %v6176, 7
        %v6178 = vsub.s32 %v6175, %v6177
        %v6179 = vrot.slane %v6171, %v6178
        %v6181 = vunpack.c.l.s4 1983009808
        %v6182 = vunpack.c.0.s8 %v6181
        %v6183 = vlaneseq
        %v6184 = vshrl.u32 %v6183, 7
        %v6185 = vsub.s32 %v6182, %v6184
        %v6186 = vrot.slane %v6172, %v6185
        %v6187 = vcombine.low %v6179, %v6186
        %v6188 = vcombine.low %v5453, %v5454
        %v6189 = vcombine.low %v5455, %v5456
        %v6191 = vunpack.c.l.s4 1983009808
        %v6192 = vunpack.c.0.s8 %v6191
        %v6193 = vlaneseq
        %v6194 = vshrl.u32 %v6193, 7
        %v6195 = vsub.s32 %v6192, %v6194
        %v6196 = vrot.slane %v6188, %v6195
        %v6198 = vunpack.c.l.s4 1983009808
        %v6199 = vunpack.c.0.s8 %v6198
        %v6200 = vlaneseq
        %v6201 = vshrl.u32 %v6200, 7
        %v6202 = vsub.s32 %v6199, %v6201
        %v6203 = vrot.slane %v6189, %v6202
        %v6204 = vcombine.low %v6196, %v6203
        %v6206 = vunpack.c.l.s4 1983009808
        %v6207 = vunpack.c.0.s8 %v6206
        %v6208 = vlaneseq
        %v6209 = vshrl.u32 %v6208, 7
        %v6210 = vsub.s32 %v6207, %v6209
        %v6211 = vrot.slane %v5457, %v6210
        %v6212 = vcombine.low %v5458, %v5459
        %v6213 = vcombine.low %v5460, %v5461
        %v6215 = vunpack.c.l.s4 1983009808
        %v6216 = vunpack.c.0.s8 %v6215
        %v6217 = vlaneseq
        %v6218 = vshrl.u32 %v6217, 7
        %v6219 = vsub.s32 %v6216, %v6218
        %v6220 = vrot.slane %v6212, %v6219
        %v6222 = vunpack.c.l.s4 1983009808
        %v6223 = vunpack.c.0.s8 %v6222
        %v6224 = vlaneseq
        %v6225 = vshrl.u32 %v6224, 7
        %v6226 = vsub.s32 %v6223, %v6225
        %v6227 = vrot.slane %v6213, %v6226
        %v6228 = vcombine.low %v6220, %v6227
        %v6229 = vcombine.low %v5462, %v5463
        %v6230 = vcombine.low %v5464, %v5465
        %v6232 = vunpack.c.l.s4 1983009808
        %v6233 = vunpack.c.0.s8 %v6232
        %v6234 = vlaneseq
        %v6235 = vshrl.u32 %v6234, 7
        %v6236 = vsub.s32 %v6233, %v6235
        %v6237 = vrot.slane %v6229, %v6236
        %v6239 = vunpack.c.l.s4 1983009808
        %v6240 = vunpack.c.0.s8 %v6239
        %v6241 = vlaneseq
        %v6242 = vshrl.u32 %v6241, 7
        %v6243 = vsub.s32 %v6240, %v6242
        %v6244 = vrot.slane %v6230, %v6243
        %v6245 = vcombine.low %v6237, %v6244
        %v6247 = vunpack.c.l.s4 1983009808
        %v6248 = vunpack.c.0.s8 %v6247
        %v6249 = vlaneseq
        %v6250 = vshrl.u32 %v6249, 7
        %v6251 = vsub.s32 %v6248, %v6250
        %v6252 = vrot.slane %v5466, %v6251
        %v6253 = vcombine.low %v5467, %v5468
        %v6254 = vcombine.low %v5469, %v5470
        %v6256 = vunpack.c.l.s4 1983009808
        %v6257 = vunpack.c.0.s8 %v6256
        %v6258 = vlaneseq
        %v6259 = vshrl.u32 %v6258, 7
        %v6260 = vsub.s32 %v6257, %v6259
        %v6261 = vrot.slane %v6253, %v6260
        %v6263 = vunpack.c.l.s4 1983009808
        %v6264 = vunpack.c.0.s8 %v6263
        %v6265 = vlaneseq
        %v6266 = vshrl.u32 %v6265, 7
        %v6267 = vsub.s32 %v6264, %v6266
        %v6268 = vrot.slane %v6254, %v6267
        %v6269 = vcombine.low %v6261, %v6268
        %v6270 = vcombine.low %v5471, %v5472
        %v6271 = vcombine.low %v5473, %v5474
        %v6273 = vunpack.c.l.s4 1983009808
        %v6274 = vunpack.c.0.s8 %v6273
        %v6275 = vlaneseq
        %v6276 = vshrl.u32 %v6275, 7
        %v6277 = vsub.s32 %v6274, %v6276
        %v6278 = vrot.slane %v6270, %v6277
        %v6280 = vunpack.c.l.s4 1983009808
        %v6281 = vunpack.c.0.s8 %v6280
        %v6282 = vlaneseq
        %v6283 = vshrl.u32 %v6282, 7
        %v6284 = vsub.s32 %v6281, %v6283
        %v6285 = vrot.slane %v6271, %v6284
        %v6286 = vcombine.low %v6278, %v6285
        %v6288 = vunpack.c.l.s4 1983009808
        %v6289 = vunpack.c.0.s8 %v6288
        %v6290 = vlaneseq
        %v6291 = vshrl.u32 %v6290, 7
        %v6292 = vsub.s32 %v6289, %v6291
        %v6293 = vrot.slane %v5475, %v6292
        %v6294 = vcombine.low %v5476, %v5477
        %v6295 = vcombine.low %v5478, %v5479
        %v6297 = vunpack.c.l.s4 1983009808
        %v6298 = vunpack.c.0.s8 %v6297
        %v6299 = vlaneseq
        %v6300 = vshrl.u32 %v6299, 7
        %v6301 = vsub.s32 %v6298, %v6300
        %v6302 = vrot.slane %v6294, %v6301
        %v6304 = vunpack.c.l.s4 1983009808
        %v6305 = vunpack.c.0.s8 %v6304
        %v6306 = vlaneseq
        %v6307 = vshrl.u32 %v6306, 7
        %v6308 = vsub.s32 %v6305, %v6307
        %v6309 = vrot.slane %v6295, %v6308
        %v6310 = vcombine.low %v6302, %v6309
        %v6311 = vcombine.low %v5480, %v5481
        %v6312 = vcombine.low %v5482, %v5483
        %v6314 = vunpack.c.l.s4 1983009808
        %v6315 = vunpack.c.0.s8 %v6314
        %v6316 = vlaneseq
        %v6317 = vshrl.u32 %v6316, 7
        %v6318 = vsub.s32 %v6315, %v6317
        %v6319 = vrot.slane %v6311, %v6318
        %v6321 = vunpack.c.l.s4 1983009808
        %v6322 = vunpack.c.0.s8 %v6321
        %v6323 = vlaneseq
        %v6324 = vshrl.u32 %v6323, 7
        %v6325 = vsub.s32 %v6322, %v6324
        %v6326 = vrot.slane %v6312, %v6325
        %v6327 = vcombine.low %v6319, %v6326
        %v6329 = vunpack.c.l.s4 1983009808
        %v6330 = vunpack.c.0.s8 %v6329
        %v6331 = vlaneseq
        %v6332 = vshrl.u32 %v6331, 7
        %v6333 = vsub.s32 %v6330, %v6332
        %v6334 = vrot.slane %v5484, %v6333
        %v6335 = vcombine.low %v5485, %v5486
        %v6336 = vcombine.low %v5487, %v5488
        %v6338 = vunpack.c.l.s4 1983009808
        %v6339 = vunpack.c.0.s8 %v6338
        %v6340 = vlaneseq
        %v6341 = vshrl.u32 %v6340, 7
        %v6342 = vsub.s32 %v6339, %v6341
        %v6343 = vrot.slane %v6335, %v6342
        %v6345 = vunpack.c.l.s4 1983009808
        %v6346 = vunpack.c.0.s8 %v6345
        %v6347 = vlaneseq
        %v6348 = vshrl.u32 %v6347, 7
        %v6349 = vsub.s32 %v6346, %v6348
        %v6350 = vrot.slane %v6336, %v6349
        %v6351 = vcombine.low %v6343, %v6350
        %v6352 = vcombine.low %v5489, %v5490
        %v6353 = vcombine.low %v5491, %v5492
        %v6355 = vunpack.c.l.s4 1983009808
        %v6356 = vunpack.c.0.s8 %v6355
        %v6357 = vlaneseq
        %v6358 = vshrl.u32 %v6357, 7
        %v6359 = vsub.s32 %v6356, %v6358
        %v6360 = vrot.slane %v6352, %v6359
        %v6362 = vunpack.c.l.s4 1983009808
        %v6363 = vunpack.c.0.s8 %v6362
        %v6364 = vlaneseq
        %v6365 = vshrl.u32 %v6364, 7
        %v6366 = vsub.s32 %v6363, %v6365
        %v6367 = vrot.slane %v6353, %v6366
        %v6368 = vcombine.low %v6360, %v6367
        %v6370 = vunpack.c.l.s4 1983009808
        %v6371 = vunpack.c.0.s8 %v6370
        %v6372 = vlaneseq
        %v6373 = vshrl.u32 %v6372, 7
        %v6374 = vsub.s32 %v6371, %v6373
        %v6375 = vrot.slane %v5493, %v6374
        %v6376 = vcombine.low %v5494, %v5495
        %v6377 = vcombine.low %v5496, %v5497
        %v6379 = vunpack.c.l.s4 1983009808
        %v6380 = vunpack.c.0.s8 %v6379
        %v6381 = vlaneseq
        %v6382 = vshrl.u32 %v6381, 7
        %v6383 = vsub.s32 %v6380, %v6382
        %v6384 = vrot.slane %v6376, %v6383
        %v6386 = vunpack.c.l.s4 1983009808
        %v6387 = vunpack.c.0.s8 %v6386
        %v6388 = vlaneseq
        %v6389 = vshrl.u32 %v6388, 7
        %v6390 = vsub.s32 %v6387, %v6389
        %v6391 = vrot.slane %v6377, %v6390
        %v6392 = vcombine.low %v6384, %v6391
        %v6393 = vcombine.low %v5498, %v5499
        %v6394 = vcombine.low %v5500, %v5501
        %v6396 = vunpack.c.l.s4 1983009808
        %v6397 = vunpack.c.0.s8 %v6396
        %v6398 = vlaneseq
        %v6399 = vshrl.u32 %v6398, 7
        %v6400 = vsub.s32 %v6397, %v6399
        %v6401 = vrot.slane %v6393, %v6400
        %v6403 = vunpack.c.l.s4 1983009808
        %v6404 = vunpack.c.0.s8 %v6403
        %v6405 = vlaneseq
        %v6406 = vshrl.u32 %v6405, 7
        %v6407 = vsub.s32 %v6404, %v6406
        %v6408 = vrot.slane %v6394, %v6407
        %v6409 = vcombine.low %v6401, %v6408
        %v6411 = vunpack.c.l.s4 1983009808
        %v6412 = vunpack.c.0.s8 %v6411
        %v6413 = vlaneseq
        %v6414 = vshrl.u32 %v6413, 7
        %v6415 = vsub.s32 %v6412, %v6414
        %v6416 = vrot.slane %v5502, %v6415
        %v6417 = vcombine.low %v5503, %v5504
        %v6418 = vcombine.low %v5505, %v5506
        %v6420 = vunpack.c.l.s4 1983009808
        %v6421 = vunpack.c.0.s8 %v6420
        %v6422 = vlaneseq
        %v6423 = vshrl.u32 %v6422, 7
        %v6424 = vsub.s32 %v6421, %v6423
        %v6425 = vrot.slane %v6417, %v6424
        %v6427 = vunpack.c.l.s4 1983009808
        %v6428 = vunpack.c.0.s8 %v6427
        %v6429 = vlaneseq
        %v6430 = vshrl.u32 %v6429, 7
        %v6431 = vsub.s32 %v6428, %v6430
        %v6432 = vrot.slane %v6418, %v6431
        %v6433 = vcombine.low %v6425, %v6432
        %v6434 = vcombine.low %v5507, %v5508
        %v6435 = vcombine.low %v5509, %v5510
        %v6437 = vunpack.c.l.s4 1983009808
        %v6438 = vunpack.c.0.s8 %v6437
        %v6439 = vlaneseq
        %v6440 = vshrl.u32 %v6439, 7
        %v6441 = vsub.s32 %v6438, %v6440
        %v6442 = vrot.slane %v6434, %v6441
        %v6444 = vunpack.c.l.s4 1983009808
        %v6445 = vunpack.c.0.s8 %v6444
        %v6446 = vlaneseq
        %v6447 = vshrl.u32 %v6446, 7
        %v6448 = vsub.s32 %v6445, %v6447
        %v6449 = vrot.slane %v6435, %v6448
        %v6450 = vcombine.low %v6442, %v6449
        %v6452 = vunpack.c.l.s4 1983009808
        %v6453 = vunpack.c.0.s8 %v6452
        %v6454 = vlaneseq
        %v6455 = vshrl.u32 %v6454, 7
        %v6456 = vsub.s32 %v6453, %v6455
        %v6457 = vrot.slane %v5511, %v6456
        %v6458 = vcombine.low %v5512, %v5513
        %v6459 = vcombine.low %v5514, %v5515
        %v6461 = vunpack.c.l.s4 1983009808
        %v6462 = vunpack.c.0.s8 %v6461
        %v6463 = vlaneseq
        %v6464 = vshrl.u32 %v6463, 7
        %v6465 = vsub.s32 %v6462, %v6464
        %v6466 = vrot.slane %v6458, %v6465
        %v6468 = vunpack.c.l.s4 1983009808
        %v6469 = vunpack.c.0.s8 %v6468
        %v6470 = vlaneseq
        %v6471 = vshrl.u32 %v6470, 7
        %v6472 = vsub.s32 %v6469, %v6471
        %v6473 = vrot.slane %v6459, %v6472
        %v6474 = vcombine.low %v6466, %v6473
        %v6475 = vcombine.low %v5516, %v5517
        %v6476 = vcombine.low %v5518, %v5519
        %v6478 = vunpack.c.l.s4 1983009808
        %v6479 = vunpack.c.0.s8 %v6478
        %v6480 = vlaneseq
        %v6481 = vshrl.u32 %v6480, 7
        %v6482 = vsub.s32 %v6479, %v6481
        %v6483 = vrot.slane %v6475, %v6482
        %v6485 = vunpack.c.l.s4 1983009808
        %v6486 = vunpack.c.0.s8 %v6485
        %v6487 = vlaneseq
        %v6488 = vshrl.u32 %v6487, 7
        %v6489 = vsub.s32 %v6486, %v6488
        %v6490 = vrot.slane %v6476, %v6489
        %v6491 = vcombine.low %v6483, %v6490
        %v6493 = vunpack.c.l.s4 1983009808
        %v6494 = vunpack.c.0.s8 %v6493
        %v6495 = vlaneseq
        %v6496 = vshrl.u32 %v6495, 7
        %v6497 = vsub.s32 %v6494, %v6496
        %v6498 = vrot.slane %v5520, %v6497
        %v6499 = vcombine.low %v5521, %v5522
        %v6500 = vcombine.low %v5523, %v5524
        %v6502 = vunpack.c.l.s4 1983009808
        %v6503 = vunpack.c.0.s8 %v6502
        %v6504 = vlaneseq
        %v6505 = vshrl.u32 %v6504, 7
        %v6506 = vsub.s32 %v6503, %v6505
        %v6507 = vrot.slane %v6499, %v6506
        %v6509 = vunpack.c.l.s4 1983009808
        %v6510 = vunpack.c.0.s8 %v6509
        %v6511 = vlaneseq
        %v6512 = vshrl.u32 %v6511, 7
        %v6513 = vsub.s32 %v6510, %v6512
        %v6514 = vrot.slane %v6500, %v6513
        %v6515 = vcombine.low %v6507, %v6514
        %v6516 = vcombine.low %v5525, %v5526
        %v6517 = vcombine.low %v5527, %v5528
        %v6519 = vunpack.c.l.s4 1983009808
        %v6520 = vunpack.c.0.s8 %v6519
        %v6521 = vlaneseq
        %v6522 = vshrl.u32 %v6521, 7
        %v6523 = vsub.s32 %v6520, %v6522
        %v6524 = vrot.slane %v6516, %v6523
        %v6526 = vunpack.c.l.s4 1983009808
        %v6527 = vunpack.c.0.s8 %v6526
        %v6528 = vlaneseq
        %v6529 = vshrl.u32 %v6528, 7
        %v6530 = vsub.s32 %v6527, %v6529
        %v6531 = vrot.slane %v6517, %v6530
        %v6532 = vcombine.low %v6524, %v6531
        %v6534 = vunpack.c.l.s4 1983009808
        %v6535 = vunpack.c.0.s8 %v6534
        %v6536 = vlaneseq
        %v6537 = vshrl.u32 %v6536, 7
        %v6538 = vsub.s32 %v6535, %v6537
        %v6539 = vrot.slane %v5529, %v6538
        %v6540 = vcombine.low %v5530, %v5531
        %v6541 = vcombine.low %v5532, %v5533
        %v6543 = vunpack.c.l.s4 1983009808
        %v6544 = vunpack.c.0.s8 %v6543
        %v6545 = vlaneseq
        %v6546 = vshrl.u32 %v6545, 7
        %v6547 = vsub.s32 %v6544, %v6546
        %v6548 = vrot.slane %v6540, %v6547
        %v6550 = vunpack.c.l.s4 1983009808
        %v6551 = vunpack.c.0.s8 %v6550
        %v6552 = vlaneseq
        %v6553 = vshrl.u32 %v6552, 7
        %v6554 = vsub.s32 %v6551, %v6553
        %v6555 = vrot.slane %v6541, %v6554
        %v6556 = vcombine.low %v6548, %v6555
        %v6557 = vcombine.low %v5534, %v5535
        %v6558 = vcombine.low %v5536, %v5537
        %v6560 = vunpack.c.l.s4 1983009808
        %v6561 = vunpack.c.0.s8 %v6560
        %v6562 = vlaneseq
        %v6563 = vshrl.u32 %v6562, 7
        %v6564 = vsub.s32 %v6561, %v6563
        %v6565 = vrot.slane %v6557, %v6564
        %v6567 = vunpack.c.l.s4 1983009808
        %v6568 = vunpack.c.0.s8 %v6567
        %v6569 = vlaneseq
        %v6570 = vshrl.u32 %v6569, 7
        %v6571 = vsub.s32 %v6568, %v6570
        %v6572 = vrot.slane %v6558, %v6571
        %v6573 = vcombine.low %v6565, %v6572
        %v6575 = vunpack.c.l.s4 1983009808
        %v6576 = vunpack.c.0.s8 %v6575
        %v6577 = vlaneseq
        %v6578 = vshrl.u32 %v6577, 7
        %v6579 = vsub.s32 %v6576, %v6578
        %v6580 = vrot.slane %v5538, %v6579
        %v6581 = vcombine.low %v5539, %v5540
        %v6582 = vcombine.low %v5541, %v5542
        %v6584 = vunpack.c.l.s4 1983009808
        %v6585 = vunpack.c.0.s8 %v6584
        %v6586 = vlaneseq
        %v6587 = vshrl.u32 %v6586, 7
        %v6588 = vsub.s32 %v6585, %v6587
        %v6589 = vrot.slane %v6581, %v6588
        %v6591 = vunpack.c.l.s4 1983009808
        %v6592 = vunpack.c.0.s8 %v6591
        %v6593 = vlaneseq
        %v6594 = vshrl.u32 %v6593, 7
        %v6595 = vsub.s32 %v6592, %v6594
        %v6596 = vrot.slane %v6582, %v6595
        %v6597 = vcombine.low %v6589, %v6596
        %v6598 = vcombine.low %v5543, %v5544
        %v6599 = vcombine.low %v5545, %v5546
        %v6601 = vunpack.c.l.s4 1983009808
        %v6602 = vunpack.c.0.s8 %v6601
        %v6603 = vlaneseq
        %v6604 = vshrl.u32 %v6603, 7
        %v6605 = vsub.s32 %v6602, %v6604
        %v6606 = vrot.slane %v6598, %v6605
        %v6608 = vunpack.c.l.s4 1983009808
        %v6609 = vunpack.c.0.s8 %v6608
        %v6610 = vlaneseq
        %v6611 = vshrl.u32 %v6610, 7
        %v6612 = vsub.s32 %v6609, %v6611
        %v6613 = vrot.slane %v6599, %v6612
        %v6614 = vcombine.low %v6606, %v6613
        %v6616 = vunpack.c.l.s4 1983009808
        %v6617 = vunpack.c.0.s8 %v6616
        %v6618 = vlaneseq
        %v6619 = vshrl.u32 %v6618, 7
        %v6620 = vsub.s32 %v6617, %v6619
        %v6621 = vrot.slane %v5547, %v6620
        %v6622 = vcombine.low %v5548, %v5549
        %v6623 = vcombine.low %v5550, %v5551
        %v6625 = vunpack.c.l.s4 1983009808
        %v6626 = vunpack.c.0.s8 %v6625
        %v6627 = vlaneseq
        %v6628 = vshrl.u32 %v6627, 7
        %v6629 = vsub.s32 %v6626, %v6628
        %v6630 = vrot.slane %v6622, %v6629
        %v6632 = vunpack.c.l.s4 1983009808
        %v6633 = vunpack.c.0.s8 %v6632
        %v6634 = vlaneseq
        %v6635 = vshrl.u32 %v6634, 7
        %v6636 = vsub.s32 %v6633, %v6635
        %v6637 = vrot.slane %v6623, %v6636
        %v6638 = vcombine.low %v6630, %v6637
        %v6639 = vcombine.low %v5552, %v5553
        %v6640 = vcombine.low %v5554, %v5555
        %v6642 = vunpack.c.l.s4 1983009808
        %v6643 = vunpack.c.0.s8 %v6642
        %v6644 = vlaneseq
        %v6645 = vshrl.u32 %v6644, 7
        %v6646 = vsub.s32 %v6643, %v6645
        %v6647 = vrot.slane %v6639, %v6646
        %v6649 = vunpack.c.l.s4 1983009808
        %v6650 = vunpack.c.0.s8 %v6649
        %v6651 = vlaneseq
        %v6652 = vshrl.u32 %v6651, 7
        %v6653 = vsub.s32 %v6650, %v6652
        %v6654 = vrot.slane %v6640, %v6653
        %v6655 = vcombine.low %v6647, %v6654
        %v6657 = vunpack.c.l.s4 1983009808
        %v6658 = vunpack.c.0.s8 %v6657
        %v6659 = vlaneseq
        %v6660 = vshrl.u32 %v6659, 7
        %v6661 = vsub.s32 %v6658, %v6660
        %v6662 = vrot.slane %v5556, %v6661
        %v6663 = vcombine.low %v5557, %v5558
        %v6664 = vcombine.low %v5559, %v5560
        %v6666 = vunpack.c.l.s4 1983009808
        %v6667 = vunpack.c.0.s8 %v6666
        %v6668 = vlaneseq
        %v6669 = vshrl.u32 %v6668, 7
        %v6670 = vsub.s32 %v6667, %v6669
        %v6671 = vrot.slane %v6663, %v6670
        %v6673 = vunpack.c.l.s4 1983009808
        %v6674 = vunpack.c.0.s8 %v6673
        %v6675 = vlaneseq
        %v6676 = vshrl.u32 %v6675, 7
        %v6677 = vsub.s32 %v6674, %v6676
        %v6678 = vrot.slane %v6664, %v6677
        %v6679 = vcombine.low %v6671, %v6678
        %v6680 = vcombine.low %v5561, %v5562
        %v6681 = vcombine.low %v5563, %v5564
        %v6683 = vunpack.c.l.s4 1983009808
        %v6684 = vunpack.c.0.s8 %v6683
        %v6685 = vlaneseq
        %v6686 = vshrl.u32 %v6685, 7
        %v6687 = vsub.s32 %v6684, %v6686
        %v6688 = vrot.slane %v6680, %v6687
        %v6690 = vunpack.c.l.s4 1983009808
        %v6691 = vunpack.c.0.s8 %v6690
        %v6692 = vlaneseq
        %v6693 = vshrl.u32 %v6692, 7
        %v6694 = vsub.s32 %v6691, %v6693
        %v6695 = vrot.slane %v6681, %v6694
        %v6696 = vcombine.low %v6688, %v6695
        %v6698 = vunpack.c.l.s4 1983009808
        %v6699 = vunpack.c.0.s8 %v6698
        %v6700 = vlaneseq
        %v6701 = vshrl.u32 %v6700, 7
        %v6702 = vsub.s32 %v6699, %v6701
        %v6703 = vrot.slane %v5565, %v6702
        %v6704 = vcombine.low %v5566, %v5567
        %v6705 = vcombine.low %v5568, %v5569
        %v6707 = vunpack.c.l.s4 1983009808
        %v6708 = vunpack.c.0.s8 %v6707
        %v6709 = vlaneseq
        %v6710 = vshrl.u32 %v6709, 7
        %v6711 = vsub.s32 %v6708, %v6710
        %v6712 = vrot.slane %v6704, %v6711
        %v6714 = vunpack.c.l.s4 1983009808
        %v6715 = vunpack.c.0.s8 %v6714
        %v6716 = vlaneseq
        %v6717 = vshrl.u32 %v6716, 7
        %v6718 = vsub.s32 %v6715, %v6717
        %v6719 = vrot.slane %v6705, %v6718
        %v6720 = vcombine.low %v6712, %v6719
        %v6721 = vcombine.low %v5570, %v5571
        %v6722 = vcombine.low %v5572, %v5573
        %v6724 = vunpack.c.l.s4 1983009808
        %v6725 = vunpack.c.0.s8 %v6724
        %v6726 = vlaneseq
        %v6727 = vshrl.u32 %v6726, 7
        %v6728 = vsub.s32 %v6725, %v6727
        %v6729 = vrot.slane %v6721, %v6728
        %v6731 = vunpack.c.l.s4 1983009808
        %v6732 = vunpack.c.0.s8 %v6731
        %v6733 = vlaneseq
        %v6734 = vshrl.u32 %v6733, 7
        %v6735 = vsub.s32 %v6732, %v6734
        %v6736 = vrot.slane %v6722, %v6735
        %v6737 = vcombine.low %v6729, %v6736
        %v6739 = vunpack.c.l.s4 1983009808
        %v6740 = vunpack.c.0.s8 %v6739
        %v6741 = vlaneseq
        %v6742 = vshrl.u32 %v6741, 7
        %v6743 = vsub.s32 %v6740, %v6742
        %v6744 = vrot.slane %v5574, %v6743
        %v6745 = vcombine.low %v5575, %v5576
        %v6746 = vcombine.low %v5577, %v5578
        %v6748 = vunpack.c.l.s4 1983009808
        %v6749 = vunpack.c.0.s8 %v6748
        %v6750 = vlaneseq
        %v6751 = vshrl.u32 %v6750, 7
        %v6752 = vsub.s32 %v6749, %v6751
        %v6753 = vrot.slane %v6745, %v6752
        %v6755 = vunpack.c.l.s4 1983009808
        %v6756 = vunpack.c.0.s8 %v6755
        %v6757 = vlaneseq
        %v6758 = vshrl.u32 %v6757, 7
        %v6759 = vsub.s32 %v6756, %v6758
        %v6760 = vrot.slane %v6746, %v6759
        %v6761 = vcombine.low %v6753, %v6760
        %v6762 = vcombine.low %v5579, %v5580
        %v6763 = vcombine.low %v5581, %v5582
        %v6765 = vunpack.c.l.s4 1983009808
        %v6766 = vunpack.c.0.s8 %v6765
        %v6767 = vlaneseq
        %v6768 = vshrl.u32 %v6767, 7
        %v6769 = vsub.s32 %v6766, %v6768
        %v6770 = vrot.slane %v6762, %v6769
        %v6772 = vunpack.c.l.s4 1983009808
        %v6773 = vunpack.c.0.s8 %v6772
        %v6774 = vlaneseq
        %v6775 = vshrl.u32 %v6774, 7
        %v6776 = vsub.s32 %v6773, %v6775
        %v6777 = vrot.slane %v6763, %v6776
        %v6778 = vcombine.low %v6770, %v6777
        %v6780 = vunpack.c.l.s4 1983009808
        %v6781 = vunpack.c.0.s8 %v6780
        %v6782 = vlaneseq
        %v6783 = vshrl.u32 %v6782, 7
        %v6784 = vsub.s32 %v6781, %v6783
        %v6785 = vrot.slane %v5583, %v6784
        %v6840 = vsel %vm5832, %v6064, 0.0
        %v6841 = vsel %vm5833, %v6081, 0.0
        %v6842 = vsel %vm5834, %v6088, 0.0
        %v6843 = vsel %vm5835, %v6105, 0.0
        %v6844 = vsel %vm5836, %v6122, 0.0
        %v6845 = vsel %vm5837, %v6129, 0.0
        %v6846 = vsel %vm5838, %v6146, 0.0
        %v6847 = vsel %vm5839, %v6163, 0.0
        %v6848 = vsel %vm5840, %v6170, 0.0
        %v6849 = vsel %vm5841, %v6187, 0.0
        %v6850 = vsel %vm5842, %v6204, 0.0
        %v6851 = vsel %vm5843, %v6211, 0.0
        %v6852 = vsel %vm5844, %v6228, 0.0
        %v6853 = vsel %vm5845, %v6245, 0.0
        %v6854 = vsel %vm5846, %v6252, 0.0
        %v6855 = vsel %vm5847, %v6269, 0.0
        %v6856 = vsel %vm5848, %v6286, 0.0
        %v6857 = vsel %vm5849, %v6293, 0.0
        %v6858 = vsel %vm5850, %v6310, 0.0
        %v6859 = vsel %vm5851, %v6327, 0.0
        %v6860 = vsel %vm5852, %v6334, 0.0
        %v6861 = vsel %vm5853, %v6351, 0.0
        %v6862 = vsel %vm5854, %v6368, 0.0
        %v6863 = vsel %vm5855, %v6375, 0.0
        %v6864 = vsel %vm5856, %v6392, 0.0
        %v6865 = vsel %vm5857, %v6409, 0.0
        %v6866 = vsel %vm5858, %v6416, 0.0
        %v6867 = vsel %vm5859, %v6433, 0.0
        %v6868 = vsel %vm5860, %v6450, 0.0
        %v6869 = vsel %vm5861, %v6457, 0.0
        %v6870 = vsel %vm5862, %v6474, 0.0
        %v6871 = vsel %vm5863, %v6491, 0.0
        %v6872 = vsel %vm5864, %v6498, 0.0
        %v6873 = vsel %vm5865, %v6515, 0.0
        %v6874 = vsel %vm5866, %v6532, 0.0
        %v6875 = vsel %vm5867, %v6539, 0.0
        %v6876 = vsel %vm5868, %v6556, 0.0
        %v6877 = vsel %vm5869, %v6573, 0.0
        %v6878 = vsel %vm5870, %v6580, 0.0
        %v6879 = vsel %vm5871, %v6597, 0.0
        %v6880 = vsel %vm5872, %v6614, 0.0
        %v6881 = vsel %vm5873, %v6621, 0.0
        %v6882 = vsel %vm5874, %v6638, 0.0
        %v6883 = vsel %vm5875, %v6655, 0.0
        %v6884 = vsel %vm5876, %v6662, 0.0
        %v6885 = vsel %vm5877, %v6679, 0.0
        %v6886 = vsel %vm5878, %v6696, 0.0
        %v6887 = vsel %vm5879, %v6703, 0.0
        %v6888 = vsel %vm5880, %v6720, 0.0
        %v6889 = vsel %vm5881, %v6737, 0.0
        %v6890 = vsel %vm5882, %v6744, 0.0
        %v6891 = vsel %vm5883, %v6761, 0.0
        %v6892 = vsel %vm5884, %v6778, 0.0
        %v6893 = vsel %vm5885, %v6785, 0.0
        %v6894 = vpack.c.bf16 %v6841, %v6840
        %v6895 = vpack.c.bf16 %v6842, %v6842
        %v6896 = vpack.c.bf16 %v6844, %v6843
        %v6897 = vpack.c.bf16 %v6845, %v6845
        %v6898 = vpack.c.bf16 %v6847, %v6846
        %v6899 = vpack.c.bf16 %v6848, %v6848
        %v6900 = vpack.c.bf16 %v6850, %v6849
        %v6901 = vpack.c.bf16 %v6851, %v6851
        %v6902 = vpack.c.bf16 %v6853, %v6852
        %v6903 = vpack.c.bf16 %v6854, %v6854
        %v6904 = vpack.c.bf16 %v6856, %v6855
        %v6905 = vpack.c.bf16 %v6857, %v6857
        %v6906 = vpack.c.bf16 %v6859, %v6858
        %v6907 = vpack.c.bf16 %v6860, %v6860
        %v6908 = vpack.c.bf16 %v6862, %v6861
        %v6909 = vpack.c.bf16 %v6863, %v6863
        %v6910 = vpack.c.bf16 %v6865, %v6864
        %v6911 = vpack.c.bf16 %v6866, %v6866
        %v6912 = vpack.c.bf16 %v6868, %v6867
        %v6913 = vpack.c.bf16 %v6869, %v6869
        %v6914 = vpack.c.bf16 %v6871, %v6870
        %v6915 = vpack.c.bf16 %v6872, %v6872
        %v6916 = vpack.c.bf16 %v6874, %v6873
        %v6917 = vpack.c.bf16 %v6875, %v6875
        %v6918 = vpack.c.bf16 %v6877, %v6876
        %v6919 = vpack.c.bf16 %v6878, %v6878
        %v6920 = vpack.c.bf16 %v6880, %v6879
        %v6921 = vpack.c.bf16 %v6881, %v6881
        %v6922 = vpack.c.bf16 %v6883, %v6882
        %v6923 = vpack.c.bf16 %v6884, %v6884
        %v6924 = vpack.c.bf16 %v6886, %v6885
        %v6925 = vpack.c.bf16 %v6887, %v6887
        %v6926 = vpack.c.bf16 %v6889, %v6888
        %v6927 = vpack.c.bf16 %v6890, %v6890
        %v6928 = vpack.c.bf16 %v6892, %v6891
        %v6929 = vpack.c.bf16 %v6893, %v6893
        %v6930 = vld [vmem:[#allocation2] sm:$0xf]
        %v6931 = vld [vmem:[#allocation2 + $0x4] sm:$0xf]
        %v6932 = vld [vmem:[#allocation2 + $0x8] sm:$0xf]
        %v6933 = vld [vmem:[#allocation2 + $0xc] sm:$0xf]
        %v6934 = vld [vmem:[#allocation2 + $0x10] sm:$0xf]
        %v6935 = vld [vmem:[#allocation2 + $0x14] sm:$0xf]
        %v6936 = vld [vmem:[#allocation2 + $0x18] sm:$0xf]
        %v6937 = vld [vmem:[#allocation2 + $0x1c] sm:$0xf]
        %v6938 = vld [vmem:[#allocation2 + $0x20] sm:$0xf]
        %v6939 = vld [vmem:[#allocation2 + $0x24] sm:$0xf]
        %v6940 = vld [vmem:[#allocation2 + $0x28] sm:$0xf]
        %v6941 = vld [vmem:[#allocation2 + $0x2c] sm:$0xf]
        %v6942 = vld [vmem:[#allocation2 + $0x30] sm:$0xf]
        %v6943 = vld [vmem:[#allocation2 + $0x34] sm:$0xf]
        %v6944 = vld [vmem:[#allocation2 + $0x38] sm:$0xf]
        %v6945 = vld [vmem:[#allocation2 + $0x3c] sm:$0xf]
        %s6946 = scalar_lea.vmem [#allocation2], 64
        %v6947 = vld [vmem:[%s6946] sm:$0xf]
        %v6948 = vld [vmem:[%s6946 + $0x4] sm:$0xf]
        %v6949 = vld [vmem:[%s6946 + $0x8] sm:$0xf]
        %v6950 = vld [vmem:[%s6946 + $0xc] sm:$0xf]
        %v6951 = vld [vmem:[%s6946 + $0x10] sm:$0xf]
        %v6952 = vld [vmem:[%s6946 + $0x14] sm:$0xf]
        %v6953 = vld [vmem:[%s6946 + $0x18] sm:$0xf]
        %v6954 = vld [vmem:[%s6946 + $0x1c] sm:$0xf]
        %v6955 = vld [vmem:[%s6946 + $0x20] sm:$0xf]
        %v6956 = vld [vmem:[%s6946 + $0x24] sm:$0xf]
        %v6957 = vld [vmem:[%s6946 + $0x28] sm:$0xf]
        %v6958 = vld [vmem:[%s6946 + $0x2c] sm:$0xf]
        %v6959 = vld [vmem:[%s6946 + $0x30] sm:$0xf]
        %v6960 = vld [vmem:[%s6946 + $0x34] sm:$0xf]
        %v6961 = vld [vmem:[%s6946 + $0x38] sm:$0xf]
        %v6962 = vld [vmem:[%s6946 + $0x3c] sm:$0xf]
        %v6964 = vshrl.u32 %v6894, 16
        %v6966 = vshll.u32 %v6894, 16
        %v6968 = vrot.slane %v6966, 1
        %v6969 = vor.u32 %v6964, %v6968
        %v6971 = vshll.u32 %v6895, 16
        %v6973 = vrot.slane %v6971, 1
        %v6974 = vsel %vm462, %v6969, %v6973
        %v6976 = vshrl.u32 %v6896, 16
        %v6978 = vshll.u32 %v6896, 16
        %v6980 = vrot.slane %v6978, 1
        %v6981 = vor.u32 %v6976, %v6980
        %v6983 = vshll.u32 %v6897, 16
        %v6985 = vrot.slane %v6983, 1
        %v6986 = vsel %vm462, %v6981, %v6985
        %v6988 = vshrl.u32 %v6898, 16
        %v6990 = vshll.u32 %v6898, 16
        %v6992 = vrot.slane %v6990, 1
        %v6993 = vor.u32 %v6988, %v6992
        %v6995 = vshll.u32 %v6899, 16
        %v6997 = vrot.slane %v6995, 1
        %v6998 = vsel %vm462, %v6993, %v6997
        %v7000 = vshrl.u32 %v6900, 16
        %v7002 = vshll.u32 %v6900, 16
        %v7004 = vrot.slane %v7002, 1
        %v7005 = vor.u32 %v7000, %v7004
        %v7007 = vshll.u32 %v6901, 16
        %v7009 = vrot.slane %v7007, 1
        %v7010 = vsel %vm462, %v7005, %v7009
        %v7012 = vshrl.u32 %v6902, 16
        %v7014 = vshll.u32 %v6902, 16
        %v7016 = vrot.slane %v7014, 1
        %v7017 = vor.u32 %v7012, %v7016
        %v7019 = vshll.u32 %v6903, 16
        %v7021 = vrot.slane %v7019, 1
        %v7022 = vsel %vm462, %v7017, %v7021
        %v7024 = vshrl.u32 %v6904, 16
        %v7026 = vshll.u32 %v6904, 16
        %v7028 = vrot.slane %v7026, 1
        %v7029 = vor.u32 %v7024, %v7028
        %v7031 = vshll.u32 %v6905, 16
        %v7033 = vrot.slane %v7031, 1
        %v7034 = vsel %vm462, %v7029, %v7033
        %v7036 = vshrl.u32 %v6906, 16
        %v7038 = vshll.u32 %v6906, 16
        %v7040 = vrot.slane %v7038, 1
        %v7041 = vor.u32 %v7036, %v7040
        %v7043 = vshll.u32 %v6907, 16
        %v7045 = vrot.slane %v7043, 1
        %v7046 = vsel %vm462, %v7041, %v7045
        %v7048 = vshrl.u32 %v6908, 16
        %v7050 = vshll.u32 %v6908, 16
        %v7052 = vrot.slane %v7050, 1
        %v7053 = vor.u32 %v7048, %v7052
        %v7055 = vshll.u32 %v6909, 16
        %v7057 = vrot.slane %v7055, 1
        %v7058 = vsel %vm462, %v7053, %v7057
        %v7060 = vshrl.u32 %v6910, 16
        %v7062 = vshll.u32 %v6910, 16
        %v7064 = vrot.slane %v7062, 1
        %v7065 = vor.u32 %v7060, %v7064
        %v7067 = vshll.u32 %v6911, 16
        %v7069 = vrot.slane %v7067, 1
        %v7070 = vsel %vm462, %v7065, %v7069
        %v7072 = vshrl.u32 %v6912, 16
        %v7074 = vshll.u32 %v6912, 16
        %v7076 = vrot.slane %v7074, 1
        %v7077 = vor.u32 %v7072, %v7076
        %v7079 = vshll.u32 %v6913, 16
        %v7081 = vrot.slane %v7079, 1
        %v7082 = vsel %vm462, %v7077, %v7081
        %v7084 = vshrl.u32 %v6914, 16
        %v7086 = vshll.u32 %v6914, 16
        %v7088 = vrot.slane %v7086, 1
        %v7089 = vor.u32 %v7084, %v7088
        %v7091 = vshll.u32 %v6915, 16
        %v7093 = vrot.slane %v7091, 1
        %v7094 = vsel %vm462, %v7089, %v7093
        %v7096 = vshrl.u32 %v6916, 16
        %v7098 = vshll.u32 %v6916, 16
        %v7100 = vrot.slane %v7098, 1
        %v7101 = vor.u32 %v7096, %v7100
        %v7103 = vshll.u32 %v6917, 16
        %v7105 = vrot.slane %v7103, 1
        %v7106 = vsel %vm462, %v7101, %v7105
        %v7108 = vshrl.u32 %v6918, 16
        %v7110 = vshll.u32 %v6918, 16
        %v7112 = vrot.slane %v7110, 1
        %v7113 = vor.u32 %v7108, %v7112
        %v7115 = vshll.u32 %v6919, 16
        %v7117 = vrot.slane %v7115, 1
        %v7118 = vsel %vm462, %v7113, %v7117
        %v7120 = vshrl.u32 %v6920, 16
        %v7122 = vshll.u32 %v6920, 16
        %v7124 = vrot.slane %v7122, 1
        %v7125 = vor.u32 %v7120, %v7124
        %v7127 = vshll.u32 %v6921, 16
        %v7129 = vrot.slane %v7127, 1
        %v7130 = vsel %vm462, %v7125, %v7129
        %v7132 = vshrl.u32 %v6922, 16
        %v7134 = vshll.u32 %v6922, 16
        %v7136 = vrot.slane %v7134, 1
        %v7137 = vor.u32 %v7132, %v7136
        %v7139 = vshll.u32 %v6923, 16
        %v7141 = vrot.slane %v7139, 1
        %v7142 = vsel %vm462, %v7137, %v7141
        %v7144 = vshrl.u32 %v6924, 16
        %v7146 = vshll.u32 %v6924, 16
        %v7148 = vrot.slane %v7146, 1
        %v7149 = vor.u32 %v7144, %v7148
        %v7151 = vshll.u32 %v6925, 16
        %v7153 = vrot.slane %v7151, 1
        %v7154 = vsel %vm462, %v7149, %v7153
        %v7187 = vunpack.c.l.b16 %v6947
        %v7188 = vunpack.c.l.b16 %v6948
        %v7189 = vunpack.c.l.b16 %v6949
        %v7190 = vunpack.c.l.b16 %v6950
        %v7191 = vunpack.c.l.b16 %v6951
        %v7192 = vunpack.c.l.b16 %v6952
        %v7193 = vunpack.c.l.b16 %v6953
        %v7194 = vunpack.c.l.b16 %v6954
        %v7195 = vunpack.c.l.b16 %v6955
        %v7196 = vunpack.c.l.b16 %v6956
        %v7197 = vunpack.c.l.b16 %v6957
        %v7198 = vunpack.c.l.b16 %v6958
        %v7199 = vunpack.c.l.b16 %v6959
        %v7200 = vunpack.c.l.b16 %v6960
        %v7201 = vunpack.c.l.b16 %v6961
        %v7202 = vunpack.c.l.b16 %v6962
        %v7203 = vpack.c.b16 %v7188, %v7187
        %v7204 = vpack.c.b16 %v7190, %v7189
        %v7205 = vpack.c.b16 %v7192, %v7191
        %v7206 = vpack.c.b16 %v7194, %v7193
        %v7207 = vpack.c.b16 %v7196, %v7195
        %v7208 = vpack.c.b16 %v7198, %v7197
        %v7209 = vpack.c.b16 %v7200, %v7199
        %v7210 = vpack.c.b16 %v7202, %v7201
        %7219 = vmatprep.subr.bf16.mxu0 0
        %7220 = vmatpush1.bf16.msra.mxu0 %v7210
        %7221 = vmatprep.subr.bf16.mxu0 0
        %7222 = vmatpush1.bf16.msra.mxu0 %v7209
        %7223 = vmatprep.subr.bf16.mxu0 0
        %7224 = vmatpush1.bf16.msra.mxu0 %v7208
        %7225 = vmatprep.subr.bf16.mxu0 0
        %7226 = vmatpush1.bf16.msra.mxu0 %v7207
        %7227 = vmatprep.subr.bf16.mxu0 0
        %7228 = vmatpush1.bf16.msra.mxu0 %v7206
        %7229 = vmatprep.subr.bf16.mxu0 0
        %7230 = vmatpush1.bf16.msra.mxu0 %v7205
        %7231 = vmatprep.subr.bf16.mxu0 0
        %7232 = vmatpush1.bf16.msra.mxu0 %v7204
        %7233 = vmatprep.subr.bf16.mxu0 0
        %7234 = vmatpush1.bf16.msra.mxu0 %v7203
        %7235 = vmatprep.subr.bf16.mxu0 0
        %7236 = vmatpush2.bf16.msra.mxu0 0
        %7237 = vmatprep.subr.bf16.mxu0 0
        %7238 = vmatpush2.bf16.msra.mxu0 0
        %7239 = vmatprep.subr.bf16.mxu0 0
        %7240 = vmatpush2.bf16.msra.mxu0 0
        %7241 = vmatprep.subr.bf16.mxu0 0
        %7242 = vmatpush2.bf16.msra.mxu0 0
        %7243 = vmatprep.subr.bf16.mxu0 0
        %7244 = vmatpush2.bf16.msra.mxu0 0
        %7245 = vmatprep.subr.bf16.mxu0 0
        %7246 = vmatpush2.bf16.msra.mxu0 0
        %7247 = vmatprep.subr.bf16.mxu0 0
        %7248 = vmatpush2.bf16.msra.mxu0 0
        %7249 = vmatprep.subr.bf16.mxu0 0
        %7250 = vmatpush2.bf16.msra.mxu0 0
        %7251 = vmatprep.mubr.bf16.mxu0 0
        %7252 = vmatmul.mubr.bf16.gmra.mxu0 %v6974
        %v7253 = vpop.f32.mrf.mxu0
        %v7254 = vadd.f32 0.0, %v7253
        %v7255 = vpop.f32.mrf.mxu0
        %v7256 = vpop.f32.mrf.mxu0
        %v7257 = vadd.f32 0.0, %v7256
        %v7258 = vpop.f32.mrf.mxu0
        %7259 = vmatprep.mubr.bf16.mxu0 0
        %7260 = vmatmul.mubr.bf16.gmra.mxu0 %v6986
        %v7261 = vpop.f32.mrf.mxu0
        %v7262 = vadd.f32 0.0, %v7261
        %v7263 = vpop.f32.mrf.mxu0
        %v7264 = vpop.f32.mrf.mxu0
        %v7265 = vadd.f32 0.0, %v7264
        %v7266 = vpop.f32.mrf.mxu0
        %7267 = vmatprep.mubr.bf16.mxu0 0
        %7268 = vmatmul.mubr.bf16.gmra.mxu0 %v6998
        %v7269 = vpop.f32.mrf.mxu0
        %v7270 = vadd.f32 0.0, %v7269
        %v7271 = vpop.f32.mrf.mxu0
        %v7272 = vpop.f32.mrf.mxu0
        %v7273 = vadd.f32 0.0, %v7272
        %v7274 = vpop.f32.mrf.mxu0
        %7275 = vmatprep.mubr.bf16.mxu0 0
        %7276 = vmatmul.mubr.bf16.gmra.mxu0 %v7010
        %v7277 = vpop.f32.mrf.mxu0
        %v7278 = vadd.f32 0.0, %v7277
        %v7279 = vpop.f32.mrf.mxu0
        %v7280 = vpop.f32.mrf.mxu0
        %v7281 = vadd.f32 0.0, %v7280
        %v7282 = vpop.f32.mrf.mxu0
        %7283 = vmatprep.mubr.bf16.mxu0 0
        %7284 = vmatmul.mubr.bf16.gmra.mxu0 %v7022
        %v7285 = vpop.f32.mrf.mxu0
        %v7286 = vadd.f32 0.0, %v7285
        %v7287 = vpop.f32.mrf.mxu0
        %v7288 = vpop.f32.mrf.mxu0
        %v7289 = vadd.f32 0.0, %v7288
        %v7290 = vpop.f32.mrf.mxu0
        %7291 = vmatprep.mubr.bf16.mxu0 0
        %7292 = vmatmul.mubr.bf16.gmra.mxu0 %v7034
        %v7293 = vpop.f32.mrf.mxu0
        %v7294 = vadd.f32 0.0, %v7293
        %v7295 = vpop.f32.mrf.mxu0
        %v7296 = vpop.f32.mrf.mxu0
        %v7297 = vadd.f32 0.0, %v7296
        %v7298 = vpop.f32.mrf.mxu0
        %7299 = vmatprep.mubr.bf16.mxu0 0
        %7300 = vmatmul.mubr.bf16.gmra.mxu0 %v7046
        %v7301 = vpop.f32.mrf.mxu0
        %v7302 = vadd.f32 0.0, %v7301
        %v7303 = vpop.f32.mrf.mxu0
        %v7304 = vpop.f32.mrf.mxu0
        %v7305 = vadd.f32 0.0, %v7304
        %v7306 = vpop.f32.mrf.mxu0
        %7307 = vmatprep.mubr.bf16.mxu0 0
        %7308 = vmatmul.mubr.bf16.gmra.mxu0 %v7058
        %v7309 = vpop.f32.mrf.mxu0
        %v7310 = vadd.f32 0.0, %v7309
        %v7311 = vpop.f32.mrf.mxu0
        %v7312 = vpop.f32.mrf.mxu0
        %v7313 = vadd.f32 0.0, %v7312
        %v7314 = vpop.f32.mrf.mxu0
        %7315 = vmatprep.mubr.bf16.mxu0 0
        %7316 = vmatmul.mubr.bf16.gmra.mxu0 %v7070
        %v7317 = vpop.f32.mrf.mxu0
        %v7318 = vadd.f32 0.0, %v7317
        %v7319 = vpop.f32.mrf.mxu0
        %v7320 = vpop.f32.mrf.mxu0
        %v7321 = vadd.f32 0.0, %v7320
        %v7322 = vpop.f32.mrf.mxu0
        %7323 = vmatprep.mubr.bf16.mxu0 0
        %7324 = vmatmul.mubr.bf16.gmra.mxu0 %v7082
        %v7325 = vpop.f32.mrf.mxu0
        %v7326 = vadd.f32 0.0, %v7325
        %v7327 = vpop.f32.mrf.mxu0
        %v7328 = vpop.f32.mrf.mxu0
        %v7329 = vadd.f32 0.0, %v7328
        %v7330 = vpop.f32.mrf.mxu0
        %7331 = vmatprep.mubr.bf16.mxu0 0
        %7332 = vmatmul.mubr.bf16.gmra.mxu0 %v7094
        %v7333 = vpop.f32.mrf.mxu0
        %v7334 = vadd.f32 0.0, %v7333
        %v7335 = vpop.f32.mrf.mxu0
        %v7336 = vpop.f32.mrf.mxu0
        %v7337 = vadd.f32 0.0, %v7336
        %v7338 = vpop.f32.mrf.mxu0
        %7339 = vmatprep.mubr.bf16.mxu0 0
        %7340 = vmatmul.mubr.bf16.gmra.mxu0 %v7106
        %v7341 = vpop.f32.mrf.mxu0
        %v7342 = vadd.f32 0.0, %v7341
        %v7343 = vpop.f32.mrf.mxu0
        %v7344 = vpop.f32.mrf.mxu0
        %v7345 = vadd.f32 0.0, %v7344
        %v7346 = vpop.f32.mrf.mxu0
        %7347 = vmatprep.mubr.bf16.mxu0 0
        %7348 = vmatmul.mubr.bf16.gmra.mxu0 %v7118
        %v7349 = vpop.f32.mrf.mxu0
        %v7350 = vadd.f32 0.0, %v7349
        %v7351 = vpop.f32.mrf.mxu0
        %v7352 = vpop.f32.mrf.mxu0
        %v7353 = vadd.f32 0.0, %v7352
        %v7354 = vpop.f32.mrf.mxu0
        %7355 = vmatprep.mubr.bf16.mxu0 0
        %7356 = vmatmul.mubr.bf16.gmra.mxu0 %v7130
        %v7357 = vpop.f32.mrf.mxu0
        %v7358 = vadd.f32 0.0, %v7357
        %v7359 = vpop.f32.mrf.mxu0
        %v7360 = vpop.f32.mrf.mxu0
        %v7361 = vadd.f32 0.0, %v7360
        %v7362 = vpop.f32.mrf.mxu0
        %7363 = vmatprep.mubr.bf16.mxu0 0
        %7364 = vmatmul.mubr.bf16.gmra.mxu0 %v7142
        %v7365 = vpop.f32.mrf.mxu0
        %v7366 = vadd.f32 0.0, %v7365
        %v7367 = vpop.f32.mrf.mxu0
        %v7368 = vpop.f32.mrf.mxu0
        %v7369 = vadd.f32 0.0, %v7368
        %v7370 = vpop.f32.mrf.mxu0
        %7371 = vmatprep.mubr.bf16.mxu0 0
        %7372 = vmatmul.mubr.bf16.gmra.mxu0 %v7154
        %v7373 = vpop.f32.mrf.mxu0
        %v7374 = vadd.f32 0.0, %v7373
        %v7375 = vpop.f32.mrf.mxu0
        %v7376 = vpop.f32.mrf.mxu0
        %v7377 = vadd.f32 0.0, %v7376
        %v7378 = vpop.f32.mrf.mxu0
        %7379 = vdwg.mxu0
        %v7396 = vunpack.c.l.b16 %v6930
        %v7397 = vunpack.c.l.b16 %v6931
        %v7398 = vunpack.c.l.b16 %v6932
        %v7399 = vunpack.c.l.b16 %v6933
        %v7400 = vunpack.c.l.b16 %v6934
        %v7401 = vunpack.c.l.b16 %v6935
        %v7402 = vunpack.c.l.b16 %v6936
        %v7403 = vunpack.c.l.b16 %v6937
        %v7404 = vunpack.c.l.b16 %v6938
        %v7405 = vunpack.c.l.b16 %v6939
        %v7406 = vunpack.c.l.b16 %v6940
        %v7407 = vunpack.c.l.b16 %v6941
        %v7408 = vunpack.c.l.b16 %v6942
        %v7409 = vunpack.c.l.b16 %v6943
        %v7410 = vunpack.c.l.b16 %v6944
        %v7411 = vunpack.c.l.b16 %v6945
        %v7412 = vpack.c.b16 %v7397, %v7396
        %v7413 = vpack.c.b16 %v7399, %v7398
        %v7414 = vpack.c.b16 %v7401, %v7400
        %v7415 = vpack.c.b16 %v7403, %v7402
        %v7416 = vpack.c.b16 %v7405, %v7404
        %v7417 = vpack.c.b16 %v7407, %v7406
        %v7418 = vpack.c.b16 %v7409, %v7408
        %v7419 = vpack.c.b16 %v7411, %v7410
        %7428 = vmatprep.subr.bf16.mxu0 0
        %7429 = vmatpush1.bf16.msra.mxu0 %v7419
        %7430 = vmatprep.subr.bf16.mxu0 0
        %7431 = vmatpush1.bf16.msra.mxu0 %v7418
        %7432 = vmatprep.subr.bf16.mxu0 0
        %7433 = vmatpush1.bf16.msra.mxu0 %v7417
        %7434 = vmatprep.subr.bf16.mxu0 0
        %7435 = vmatpush1.bf16.msra.mxu0 %v7416
        %7436 = vmatprep.subr.bf16.mxu0 0
        %7437 = vmatpush1.bf16.msra.mxu0 %v7415
        %7438 = vmatprep.subr.bf16.mxu0 0
        %7439 = vmatpush1.bf16.msra.mxu0 %v7414
        %7440 = vmatprep.subr.bf16.mxu0 0
        %7441 = vmatpush1.bf16.msra.mxu0 %v7413
        %7442 = vmatprep.subr.bf16.mxu0 0
        %7443 = vmatpush1.bf16.msra.mxu0 %v7412
        %7444 = vmatprep.subr.bf16.mxu0 0
        %7445 = vmatpush2.bf16.msra.mxu0 0
        %7446 = vmatprep.subr.bf16.mxu0 0
        %7447 = vmatpush2.bf16.msra.mxu0 0
        %7448 = vmatprep.subr.bf16.mxu0 0
        %7449 = vmatpush2.bf16.msra.mxu0 0
        %7450 = vmatprep.subr.bf16.mxu0 0
        %7451 = vmatpush2.bf16.msra.mxu0 0
        %7452 = vmatprep.subr.bf16.mxu0 0
        %7453 = vmatpush2.bf16.msra.mxu0 0
        %7454 = vmatprep.subr.bf16.mxu0 0
        %7455 = vmatpush2.bf16.msra.mxu0 0
        %7456 = vmatprep.subr.bf16.mxu0 0
        %7457 = vmatpush2.bf16.msra.mxu0 0
        %7458 = vmatprep.subr.bf16.mxu0 0
        %7459 = vmatpush2.bf16.msra.mxu0 0
        %7460 = vmatprep.mubr.bf16.mxu0 0
        %7461 = vmatmul.mubr.bf16.gmra.mxu0 %v6894
        %v7462 = vpop.f32.mrf.mxu0
        %v7463 = vadd.f32 %v7254, %v7462
        %v7464 = vpop.f32.mrf.mxu0
        %v7465 = vpop.f32.mrf.mxu0
        %v7466 = vadd.f32 %v7257, %v7465
        %v7467 = vpop.f32.mrf.mxu0
        %7468 = vmatprep.mubr.bf16.mxu0 0
        %7469 = vmatmul.mubr.bf16.gmra.mxu0 %v6896
        %v7470 = vpop.f32.mrf.mxu0
        %v7471 = vadd.f32 %v7262, %v7470
        %v7472 = vpop.f32.mrf.mxu0
        %v7473 = vpop.f32.mrf.mxu0
        %v7474 = vadd.f32 %v7265, %v7473
        %v7475 = vpop.f32.mrf.mxu0
        %7476 = vmatprep.mubr.bf16.mxu0 0
        %7477 = vmatmul.mubr.bf16.gmra.mxu0 %v6898
        %v7478 = vpop.f32.mrf.mxu0
        %v7479 = vadd.f32 %v7270, %v7478
        %v7480 = vpop.f32.mrf.mxu0
        %v7481 = vpop.f32.mrf.mxu0
        %v7482 = vadd.f32 %v7273, %v7481
        %v7483 = vpop.f32.mrf.mxu0
        %7484 = vmatprep.mubr.bf16.mxu0 0
        %7485 = vmatmul.mubr.bf16.gmra.mxu0 %v6900
        %v7486 = vpop.f32.mrf.mxu0
        %v7487 = vadd.f32 %v7278, %v7486
        %v7488 = vpop.f32.mrf.mxu0
        %v7489 = vpop.f32.mrf.mxu0
        %v7490 = vadd.f32 %v7281, %v7489
        %v7491 = vpop.f32.mrf.mxu0
        %7492 = vmatprep.mubr.bf16.mxu0 0
        %7493 = vmatmul.mubr.bf16.gmra.mxu0 %v6902
        %v7494 = vpop.f32.mrf.mxu0
        %v7495 = vadd.f32 %v7286, %v7494
        %v7496 = vpop.f32.mrf.mxu0
        %v7497 = vpop.f32.mrf.mxu0
        %v7498 = vadd.f32 %v7289, %v7497
        %v7499 = vpop.f32.mrf.mxu0
        %7500 = vmatprep.mubr.bf16.mxu0 0
        %7501 = vmatmul.mubr.bf16.gmra.mxu0 %v6904
        %v7502 = vpop.f32.mrf.mxu0
        %v7503 = vadd.f32 %v7294, %v7502
        %v7504 = vpop.f32.mrf.mxu0
        %v7505 = vpop.f32.mrf.mxu0
        %v7506 = vadd.f32 %v7297, %v7505
        %v7507 = vpop.f32.mrf.mxu0
        %7508 = vmatprep.mubr.bf16.mxu0 0
        %7509 = vmatmul.mubr.bf16.gmra.mxu0 %v6906
        %v7510 = vpop.f32.mrf.mxu0
        %v7511 = vadd.f32 %v7302, %v7510
        %v7512 = vpop.f32.mrf.mxu0
        %v7513 = vpop.f32.mrf.mxu0
        %v7514 = vadd.f32 %v7305, %v7513
        %v7515 = vpop.f32.mrf.mxu0
        %7516 = vmatprep.mubr.bf16.mxu0 0
        %7517 = vmatmul.mubr.bf16.gmra.mxu0 %v6908
        %v7518 = vpop.f32.mrf.mxu0
        %v7519 = vadd.f32 %v7310, %v7518
        %v7520 = vpop.f32.mrf.mxu0
        %v7521 = vpop.f32.mrf.mxu0
        %v7522 = vadd.f32 %v7313, %v7521
        %v7523 = vpop.f32.mrf.mxu0
        %7524 = vmatprep.mubr.bf16.mxu0 0
        %7525 = vmatmul.mubr.bf16.gmra.mxu0 %v6910
        %v7526 = vpop.f32.mrf.mxu0
        %v7527 = vadd.f32 %v7318, %v7526
        %v7528 = vpop.f32.mrf.mxu0
        %v7529 = vpop.f32.mrf.mxu0
        %v7530 = vadd.f32 %v7321, %v7529
        %v7531 = vpop.f32.mrf.mxu0
        %7532 = vmatprep.mubr.bf16.mxu0 0
        %7533 = vmatmul.mubr.bf16.gmra.mxu0 %v6912
        %v7534 = vpop.f32.mrf.mxu0
        %v7535 = vadd.f32 %v7326, %v7534
        %v7536 = vpop.f32.mrf.mxu0
        %v7537 = vpop.f32.mrf.mxu0
        %v7538 = vadd.f32 %v7329, %v7537
        %v7539 = vpop.f32.mrf.mxu0
        %7540 = vmatprep.mubr.bf16.mxu0 0
        %7541 = vmatmul.mubr.bf16.gmra.mxu0 %v6914
        %v7542 = vpop.f32.mrf.mxu0
        %v7543 = vadd.f32 %v7334, %v7542
        %v7544 = vpop.f32.mrf.mxu0
        %v7545 = vpop.f32.mrf.mxu0
        %v7546 = vadd.f32 %v7337, %v7545
        %v7547 = vpop.f32.mrf.mxu0
        %7548 = vmatprep.mubr.bf16.mxu0 0
        %7549 = vmatmul.mubr.bf16.gmra.mxu0 %v6916
        %v7550 = vpop.f32.mrf.mxu0
        %v7551 = vadd.f32 %v7342, %v7550
        %v7552 = vpop.f32.mrf.mxu0
        %v7553 = vpop.f32.mrf.mxu0
        %v7554 = vadd.f32 %v7345, %v7553
        %v7555 = vpop.f32.mrf.mxu0
        %7556 = vmatprep.mubr.bf16.mxu0 0
        %7557 = vmatmul.mubr.bf16.gmra.mxu0 %v6918
        %v7558 = vpop.f32.mrf.mxu0
        %v7559 = vadd.f32 %v7350, %v7558
        %v7560 = vpop.f32.mrf.mxu0
        %v7561 = vpop.f32.mrf.mxu0
        %v7562 = vadd.f32 %v7353, %v7561
        %v7563 = vpop.f32.mrf.mxu0
        %7564 = vmatprep.mubr.bf16.mxu0 0
        %7565 = vmatmul.mubr.bf16.gmra.mxu0 %v6920
        %v7566 = vpop.f32.mrf.mxu0
        %v7567 = vadd.f32 %v7358, %v7566
        %v7568 = vpop.f32.mrf.mxu0
        %v7569 = vpop.f32.mrf.mxu0
        %v7570 = vadd.f32 %v7361, %v7569
        %v7571 = vpop.f32.mrf.mxu0
        %7572 = vmatprep.mubr.bf16.mxu0 0
        %7573 = vmatmul.mubr.bf16.gmra.mxu0 %v6922
        %v7574 = vpop.f32.mrf.mxu0
        %v7575 = vadd.f32 %v7366, %v7574
        %v7576 = vpop.f32.mrf.mxu0
        %v7577 = vpop.f32.mrf.mxu0
        %v7578 = vadd.f32 %v7369, %v7577
        %v7579 = vpop.f32.mrf.mxu0
        %7580 = vmatprep.mubr.bf16.mxu0 0
        %7581 = vmatmul.mubr.bf16.gmra.mxu0 %v6924
        %v7582 = vpop.f32.mrf.mxu0
        %v7583 = vadd.f32 %v7374, %v7582
        %v7584 = vpop.f32.mrf.mxu0
        %v7585 = vpop.f32.mrf.mxu0
        %v7586 = vadd.f32 %v7377, %v7585
        %v7587 = vpop.f32.mrf.mxu0
        %7588 = vdwg.mxu0
        %s7589 = scalar_lea.vmem [#allocation2], 128
        %v7590 = vld [vmem:[%s7589] sm:$0xf]
        %v7591 = vld [vmem:[%s7589 + $0x4] sm:$0xf]
        %v7592 = vld [vmem:[%s7589 + $0x8] sm:$0xf]
        %v7593 = vld [vmem:[%s7589 + $0xc] sm:$0xf]
        %v7594 = vld [vmem:[%s7589 + $0x10] sm:$0xf]
        %v7595 = vld [vmem:[%s7589 + $0x14] sm:$0xf]
        %v7596 = vld [vmem:[%s7589 + $0x18] sm:$0xf]
        %v7597 = vld [vmem:[%s7589 + $0x1c] sm:$0xf]
        %v7598 = vld [vmem:[%s7589 + $0x20] sm:$0xf]
        %v7599 = vld [vmem:[%s7589 + $0x24] sm:$0xf]
        %v7600 = vld [vmem:[%s7589 + $0x28] sm:$0xf]
        %v7601 = vld [vmem:[%s7589 + $0x2c] sm:$0xf]
        %v7602 = vld [vmem:[%s7589 + $0x30] sm:$0xf]
        %v7603 = vld [vmem:[%s7589 + $0x34] sm:$0xf]
        %v7604 = vld [vmem:[%s7589 + $0x38] sm:$0xf]
        %v7605 = vld [vmem:[%s7589 + $0x3c] sm:$0xf]
        %v7638 = vrot.slane %v6894, 1
        %v7639 = vrot.slane %v6895, 1
        %v7640 = vsel %vm805, %v7638, %v7639
        %v7641 = vrot.slane %v6896, 1
        %v7642 = vrot.slane %v6897, 1
        %v7643 = vsel %vm805, %v7641, %v7642
        %v7644 = vrot.slane %v6898, 1
        %v7645 = vrot.slane %v6899, 1
        %v7646 = vsel %vm805, %v7644, %v7645
        %v7647 = vrot.slane %v6900, 1
        %v7648 = vrot.slane %v6901, 1
        %v7649 = vsel %vm805, %v7647, %v7648
        %v7650 = vrot.slane %v6902, 1
        %v7651 = vrot.slane %v6903, 1
        %v7652 = vsel %vm805, %v7650, %v7651
        %v7653 = vrot.slane %v6904, 1
        %v7654 = vrot.slane %v6905, 1
        %v7655 = vsel %vm805, %v7653, %v7654
        %v7656 = vrot.slane %v6906, 1
        %v7657 = vrot.slane %v6907, 1
        %v7658 = vsel %vm805, %v7656, %v7657
        %v7659 = vrot.slane %v6908, 1
        %v7660 = vrot.slane %v6909, 1
        %v7661 = vsel %vm805, %v7659, %v7660
        %v7662 = vrot.slane %v6910, 1
        %v7663 = vrot.slane %v6911, 1
        %v7664 = vsel %vm805, %v7662, %v7663
        %v7665 = vrot.slane %v6912, 1
        %v7666 = vrot.slane %v6913, 1
        %v7667 = vsel %vm805, %v7665, %v7666
        %v7668 = vrot.slane %v6914, 1
        %v7669 = vrot.slane %v6915, 1
        %v7670 = vsel %vm805, %v7668, %v7669
        %v7671 = vrot.slane %v6916, 1
        %v7672 = vrot.slane %v6917, 1
        %v7673 = vsel %vm805, %v7671, %v7672
        %v7674 = vrot.slane %v6918, 1
        %v7675 = vrot.slane %v6919, 1
        %v7676 = vsel %vm805, %v7674, %v7675
        %v7677 = vrot.slane %v6920, 1
        %v7678 = vrot.slane %v6921, 1
        %v7679 = vsel %vm805, %v7677, %v7678
        %v7680 = vrot.slane %v6922, 1
        %v7681 = vrot.slane %v6923, 1
        %v7682 = vsel %vm805, %v7680, %v7681
        %v7683 = vrot.slane %v6924, 1
        %v7684 = vrot.slane %v6925, 1
        %v7685 = vsel %vm805, %v7683, %v7684
        %v7718 = vunpack.c.l.b16 %v7590
        %v7719 = vunpack.c.l.b16 %v7591
        %v7720 = vunpack.c.l.b16 %v7592
        %v7721 = vunpack.c.l.b16 %v7593
        %v7722 = vunpack.c.l.b16 %v7594
        %v7723 = vunpack.c.l.b16 %v7595
        %v7724 = vunpack.c.l.b16 %v7596
        %v7725 = vunpack.c.l.b16 %v7597
        %v7726 = vunpack.c.l.b16 %v7598
        %v7727 = vunpack.c.l.b16 %v7599
        %v7728 = vunpack.c.l.b16 %v7600
        %v7729 = vunpack.c.l.b16 %v7601
        %v7730 = vunpack.c.l.b16 %v7602
        %v7731 = vunpack.c.l.b16 %v7603
        %v7732 = vunpack.c.l.b16 %v7604
        %v7733 = vunpack.c.l.b16 %v7605
        %v7734 = vpack.c.b16 %v7719, %v7718
        %v7735 = vpack.c.b16 %v7721, %v7720
        %v7736 = vpack.c.b16 %v7723, %v7722
        %v7737 = vpack.c.b16 %v7725, %v7724
        %v7738 = vpack.c.b16 %v7727, %v7726
        %v7739 = vpack.c.b16 %v7729, %v7728
        %v7740 = vpack.c.b16 %v7731, %v7730
        %v7741 = vpack.c.b16 %v7733, %v7732
        %7750 = vmatprep.subr.bf16.mxu0 0
        %7751 = vmatpush1.bf16.msra.mxu0 %v7741
        %7752 = vmatprep.subr.bf16.mxu0 0
        %7753 = vmatpush1.bf16.msra.mxu0 %v7740
        %7754 = vmatprep.subr.bf16.mxu0 0
        %7755 = vmatpush1.bf16.msra.mxu0 %v7739
        %7756 = vmatprep.subr.bf16.mxu0 0
        %7757 = vmatpush1.bf16.msra.mxu0 %v7738
        %7758 = vmatprep.subr.bf16.mxu0 0
        %7759 = vmatpush1.bf16.msra.mxu0 %v7737
        %7760 = vmatprep.subr.bf16.mxu0 0
        %7761 = vmatpush1.bf16.msra.mxu0 %v7736
        %7762 = vmatprep.subr.bf16.mxu0 0
        %7763 = vmatpush1.bf16.msra.mxu0 %v7735
        %7764 = vmatprep.subr.bf16.mxu0 0
        %7765 = vmatpush1.bf16.msra.mxu0 %v7734
        %7766 = vmatprep.subr.bf16.mxu0 0
        %7767 = vmatpush2.bf16.msra.mxu0 0
        %7768 = vmatprep.subr.bf16.mxu0 0
        %7769 = vmatpush2.bf16.msra.mxu0 0
        %7770 = vmatprep.subr.bf16.mxu0 0
        %7771 = vmatpush2.bf16.msra.mxu0 0
        %7772 = vmatprep.subr.bf16.mxu0 0
        %7773 = vmatpush2.bf16.msra.mxu0 0
        %7774 = vmatprep.subr.bf16.mxu0 0
        %7775 = vmatpush2.bf16.msra.mxu0 0
        %7776 = vmatprep.subr.bf16.mxu0 0
        %7777 = vmatpush2.bf16.msra.mxu0 0
        %7778 = vmatprep.subr.bf16.mxu0 0
        %7779 = vmatpush2.bf16.msra.mxu0 0
        %7780 = vmatprep.subr.bf16.mxu0 0
        %7781 = vmatpush2.bf16.msra.mxu0 0
        %7782 = vmatprep.mubr.bf16.mxu0 0
        %7783 = vmatmul.mubr.bf16.gmra.mxu0 %v7640
        %v7784 = vpop.f32.mrf.mxu0
        %v7785 = vadd.f32 0.0, %v7784
        %v7786 = vpop.f32.mrf.mxu0
        %v7787 = vpop.f32.mrf.mxu0
        %v7788 = vadd.f32 0.0, %v7787
        %v7789 = vpop.f32.mrf.mxu0
        %7790 = vmatprep.mubr.bf16.mxu0 0
        %7791 = vmatmul.mubr.bf16.gmra.mxu0 %v7643
        %v7792 = vpop.f32.mrf.mxu0
        %v7793 = vadd.f32 0.0, %v7792
        %v7794 = vpop.f32.mrf.mxu0
        %v7795 = vpop.f32.mrf.mxu0
        %v7796 = vadd.f32 0.0, %v7795
        %v7797 = vpop.f32.mrf.mxu0
        %7798 = vmatprep.mubr.bf16.mxu0 0
        %7799 = vmatmul.mubr.bf16.gmra.mxu0 %v7646
        %v7800 = vpop.f32.mrf.mxu0
        %v7801 = vadd.f32 0.0, %v7800
        %v7802 = vpop.f32.mrf.mxu0
        %v7803 = vpop.f32.mrf.mxu0
        %v7804 = vadd.f32 0.0, %v7803
        %v7805 = vpop.f32.mrf.mxu0
        %7806 = vmatprep.mubr.bf16.mxu0 0
        %7807 = vmatmul.mubr.bf16.gmra.mxu0 %v7649
        %v7808 = vpop.f32.mrf.mxu0
        %v7809 = vadd.f32 0.0, %v7808
        %v7810 = vpop.f32.mrf.mxu0
        %v7811 = vpop.f32.mrf.mxu0
        %v7812 = vadd.f32 0.0, %v7811
        %v7813 = vpop.f32.mrf.mxu0
        %7814 = vmatprep.mubr.bf16.mxu0 0
        %7815 = vmatmul.mubr.bf16.gmra.mxu0 %v7652
        %v7816 = vpop.f32.mrf.mxu0
        %v7817 = vadd.f32 0.0, %v7816
        %v7818 = vpop.f32.mrf.mxu0
        %v7819 = vpop.f32.mrf.mxu0
        %v7820 = vadd.f32 0.0, %v7819
        %v7821 = vpop.f32.mrf.mxu0
        %7822 = vmatprep.mubr.bf16.mxu0 0
        %7823 = vmatmul.mubr.bf16.gmra.mxu0 %v7655
        %v7824 = vpop.f32.mrf.mxu0
        %v7825 = vadd.f32 0.0, %v7824
        %v7826 = vpop.f32.mrf.mxu0
        %v7827 = vpop.f32.mrf.mxu0
        %v7828 = vadd.f32 0.0, %v7827
        %v7829 = vpop.f32.mrf.mxu0
        %7830 = vmatprep.mubr.bf16.mxu0 0
        %7831 = vmatmul.mubr.bf16.gmra.mxu0 %v7658
        %v7832 = vpop.f32.mrf.mxu0
        %v7833 = vadd.f32 0.0, %v7832
        %v7834 = vpop.f32.mrf.mxu0
        %v7835 = vpop.f32.mrf.mxu0
        %v7836 = vadd.f32 0.0, %v7835
        %v7837 = vpop.f32.mrf.mxu0
        %7838 = vmatprep.mubr.bf16.mxu0 0
        %7839 = vmatmul.mubr.bf16.gmra.mxu0 %v7661
        %v7840 = vpop.f32.mrf.mxu0
        %v7841 = vadd.f32 0.0, %v7840
        %v7842 = vpop.f32.mrf.mxu0
        %v7843 = vpop.f32.mrf.mxu0
        %v7844 = vadd.f32 0.0, %v7843
        %v7845 = vpop.f32.mrf.mxu0
        %7846 = vmatprep.mubr.bf16.mxu0 0
        %7847 = vmatmul.mubr.bf16.gmra.mxu0 %v7664
        %v7848 = vpop.f32.mrf.mxu0
        %v7849 = vadd.f32 0.0, %v7848
        %v7850 = vpop.f32.mrf.mxu0
        %v7851 = vpop.f32.mrf.mxu0
        %v7852 = vadd.f32 0.0, %v7851
        %v7853 = vpop.f32.mrf.mxu0
        %7854 = vmatprep.mubr.bf16.mxu0 0
        %7855 = vmatmul.mubr.bf16.gmra.mxu0 %v7667
        %v7856 = vpop.f32.mrf.mxu0
        %v7857 = vadd.f32 0.0, %v7856
        %v7858 = vpop.f32.mrf.mxu0
        %v7859 = vpop.f32.mrf.mxu0
        %v7860 = vadd.f32 0.0, %v7859
        %v7861 = vpop.f32.mrf.mxu0
        %7862 = vmatprep.mubr.bf16.mxu0 0
        %7863 = vmatmul.mubr.bf16.gmra.mxu0 %v7670
        %v7864 = vpop.f32.mrf.mxu0
        %v7865 = vadd.f32 0.0, %v7864
        %v7866 = vpop.f32.mrf.mxu0
        %v7867 = vpop.f32.mrf.mxu0
        %v7868 = vadd.f32 0.0, %v7867
        %v7869 = vpop.f32.mrf.mxu0
        %7870 = vmatprep.mubr.bf16.mxu0 0
        %7871 = vmatmul.mubr.bf16.gmra.mxu0 %v7673
        %v7872 = vpop.f32.mrf.mxu0
        %v7873 = vadd.f32 0.0, %v7872
        %v7874 = vpop.f32.mrf.mxu0
        %v7875 = vpop.f32.mrf.mxu0
        %v7876 = vadd.f32 0.0, %v7875
        %v7877 = vpop.f32.mrf.mxu0
        %7878 = vmatprep.mubr.bf16.mxu0 0
        %7879 = vmatmul.mubr.bf16.gmra.mxu0 %v7676
        %v7880 = vpop.f32.mrf.mxu0
        %v7881 = vadd.f32 0.0, %v7880
        %v7882 = vpop.f32.mrf.mxu0
        %v7883 = vpop.f32.mrf.mxu0
        %v7884 = vadd.f32 0.0, %v7883
        %v7885 = vpop.f32.mrf.mxu0
        %7886 = vmatprep.mubr.bf16.mxu0 0
        %7887 = vmatmul.mubr.bf16.gmra.mxu0 %v7679
        %v7888 = vpop.f32.mrf.mxu0
        %v7889 = vadd.f32 0.0, %v7888
        %v7890 = vpop.f32.mrf.mxu0
        %v7891 = vpop.f32.mrf.mxu0
        %v7892 = vadd.f32 0.0, %v7891
        %v7893 = vpop.f32.mrf.mxu0
        %7894 = vmatprep.mubr.bf16.mxu0 0
        %7895 = vmatmul.mubr.bf16.gmra.mxu0 %v7682
        %v7896 = vpop.f32.mrf.mxu0
        %v7897 = vadd.f32 0.0, %v7896
        %v7898 = vpop.f32.mrf.mxu0
        %v7899 = vpop.f32.mrf.mxu0
        %v7900 = vadd.f32 0.0, %v7899
        %v7901 = vpop.f32.mrf.mxu0
        %7902 = vmatprep.mubr.bf16.mxu0 0
        %7903 = vmatmul.mubr.bf16.gmra.mxu0 %v7685
        %v7904 = vpop.f32.mrf.mxu0
        %v7905 = vadd.f32 0.0, %v7904
        %v7906 = vpop.f32.mrf.mxu0
        %v7907 = vpop.f32.mrf.mxu0
        %v7908 = vadd.f32 0.0, %v7907
        %v7909 = vpop.f32.mrf.mxu0
        %7910 = vdwg.mxu0
        %v7911 = vadd.f32 %v7463, %v7785
        %v7912 = vadd.f32 %v7466, %v7788
        %v7913 = vadd.f32 %v7471, %v7793
        %v7914 = vadd.f32 %v7474, %v7796
        %v7915 = vadd.f32 %v7479, %v7801
        %v7916 = vadd.f32 %v7482, %v7804
        %v7917 = vadd.f32 %v7487, %v7809
        %v7918 = vadd.f32 %v7490, %v7812
        %v7919 = vadd.f32 %v7495, %v7817
        %v7920 = vadd.f32 %v7498, %v7820
        %v7921 = vadd.f32 %v7503, %v7825
        %v7922 = vadd.f32 %v7506, %v7828
        %v7923 = vadd.f32 %v7511, %v7833
        %v7924 = vadd.f32 %v7514, %v7836
        %v7925 = vadd.f32 %v7519, %v7841
        %v7926 = vadd.f32 %v7522, %v7844
        %v7927 = vadd.f32 %v7527, %v7849
        %v7928 = vadd.f32 %v7530, %v7852
        %v7929 = vadd.f32 %v7535, %v7857
        %v7930 = vadd.f32 %v7538, %v7860
        %v7931 = vadd.f32 %v7543, %v7865
        %v7932 = vadd.f32 %v7546, %v7868
        %v7933 = vadd.f32 %v7551, %v7873
        %v7934 = vadd.f32 %v7554, %v7876
        %v7935 = vadd.f32 %v7559, %v7881
        %v7936 = vadd.f32 %v7562, %v7884
        %v7937 = vadd.f32 %v7567, %v7889
        %v7938 = vadd.f32 %v7570, %v7892
        %v7939 = vadd.f32 %v7575, %v7897
        %v7940 = vadd.f32 %v7578, %v7900
        %v7941 = vadd.f32 %v7583, %v7905
        %v7942 = vadd.f32 %v7586, %v7908
        %s7943 = scalar_lea.vmem [#allocation2], 192
        %v7944 = vld [vmem:[%s7943] sm:$0xf]
        %v7945 = vld [vmem:[%s7943 + $0x4] sm:$0xf]
        %v7946 = vld [vmem:[%s7943 + $0x8] sm:$0xf]
        %v7947 = vld [vmem:[%s7943 + $0xc] sm:$0xf]
        %v7948 = vld [vmem:[%s7943 + $0x10] sm:$0xf]
        %v7949 = vld [vmem:[%s7943 + $0x14] sm:$0xf]
        %v7950 = vld [vmem:[%s7943 + $0x18] sm:$0xf]
        %v7951 = vld [vmem:[%s7943 + $0x1c] sm:$0xf]
        %v7952 = vld [vmem:[%s7943 + $0x20] sm:$0xf]
        %v7953 = vld [vmem:[%s7943 + $0x24] sm:$0xf]
        %v7954 = vld [vmem:[%s7943 + $0x28] sm:$0xf]
        %v7955 = vld [vmem:[%s7943 + $0x2c] sm:$0xf]
        %v7956 = vld [vmem:[%s7943 + $0x30] sm:$0xf]
        %v7957 = vld [vmem:[%s7943 + $0x34] sm:$0xf]
        %v7958 = vld [vmem:[%s7943 + $0x38] sm:$0xf]
        %v7959 = vld [vmem:[%s7943 + $0x3c] sm:$0xf]
        %v7976 = vunpack.c.l.b16 %v7944
        %v7977 = vunpack.c.l.b16 %v7945
        %v7978 = vunpack.c.l.b16 %v7946
        %v7979 = vunpack.c.l.b16 %v7947
        %v7980 = vunpack.c.l.b16 %v7948
        %v7981 = vunpack.c.l.b16 %v7949
        %v7982 = vunpack.c.l.b16 %v7950
        %v7983 = vunpack.c.l.b16 %v7951
        %v7984 = vunpack.c.l.b16 %v7952
        %v7985 = vunpack.c.l.b16 %v7953
        %v7986 = vunpack.c.l.b16 %v7954
        %v7987 = vunpack.c.l.b16 %v7955
        %v7988 = vunpack.c.l.b16 %v7956
        %v7989 = vunpack.c.l.b16 %v7957
        %v7990 = vunpack.c.l.b16 %v7958
        %v7991 = vunpack.c.l.b16 %v7959
        %v7992 = vpack.c.b16 %v7977, %v7976
        %v7993 = vpack.c.b16 %v7979, %v7978
        %v7994 = vpack.c.b16 %v7981, %v7980
        %v7995 = vpack.c.b16 %v7983, %v7982
        %v7996 = vpack.c.b16 %v7985, %v7984
        %v7997 = vpack.c.b16 %v7987, %v7986
        %v7998 = vpack.c.b16 %v7989, %v7988
        %v7999 = vpack.c.b16 %v7991, %v7990
        %8008 = vmatprep.subr.bf16.mxu0 0
        %8009 = vmatpush1.bf16.msra.mxu0 %v7999
        %8010 = vmatprep.subr.bf16.mxu0 0
        %8011 = vmatpush1.bf16.msra.mxu0 %v7998
        %8012 = vmatprep.subr.bf16.mxu0 0
        %8013 = vmatpush1.bf16.msra.mxu0 %v7997
        %8014 = vmatprep.subr.bf16.mxu0 0
        %8015 = vmatpush1.bf16.msra.mxu0 %v7996
        %8016 = vmatprep.subr.bf16.mxu0 0
        %8017 = vmatpush1.bf16.msra.mxu0 %v7995
        %8018 = vmatprep.subr.bf16.mxu0 0
        %8019 = vmatpush1.bf16.msra.mxu0 %v7994
        %8020 = vmatprep.subr.bf16.mxu0 0
        %8021 = vmatpush1.bf16.msra.mxu0 %v7993
        %8022 = vmatprep.subr.bf16.mxu0 0
        %8023 = vmatpush1.bf16.msra.mxu0 %v7992
        %8024 = vmatprep.subr.bf16.mxu0 0
        %8025 = vmatpush2.bf16.msra.mxu0 0
        %8026 = vmatprep.subr.bf16.mxu0 0
        %8027 = vmatpush2.bf16.msra.mxu0 0
        %8028 = vmatprep.subr.bf16.mxu0 0
        %8029 = vmatpush2.bf16.msra.mxu0 0
        %8030 = vmatprep.subr.bf16.mxu0 0
        %8031 = vmatpush2.bf16.msra.mxu0 0
        %8032 = vmatprep.subr.bf16.mxu0 0
        %8033 = vmatpush2.bf16.msra.mxu0 0
        %8034 = vmatprep.subr.bf16.mxu0 0
        %8035 = vmatpush2.bf16.msra.mxu0 0
        %8036 = vmatprep.subr.bf16.mxu0 0
        %8037 = vmatpush2.bf16.msra.mxu0 0
        %8038 = vmatprep.subr.bf16.mxu0 0
        %8039 = vmatpush2.bf16.msra.mxu0 0
        %8040 = vmatprep.mubr.bf16.mxu0 0
        %8041 = vmatmul.mubr.bf16.gmra.mxu0 %v6896
        %v8042 = vpop.f32.mrf.mxu0
        %v8043 = vadd.f32 0.0, %v8042
        %v8044 = vpop.f32.mrf.mxu0
        %v8045 = vpop.f32.mrf.mxu0
        %v8046 = vadd.f32 0.0, %v8045
        %v8047 = vpop.f32.mrf.mxu0
        %8048 = vmatprep.mubr.bf16.mxu0 0
        %8049 = vmatmul.mubr.bf16.gmra.mxu0 %v6898
        %v8050 = vpop.f32.mrf.mxu0
        %v8051 = vadd.f32 0.0, %v8050
        %v8052 = vpop.f32.mrf.mxu0
        %v8053 = vpop.f32.mrf.mxu0
        %v8054 = vadd.f32 0.0, %v8053
        %v8055 = vpop.f32.mrf.mxu0
        %8056 = vmatprep.mubr.bf16.mxu0 0
        %8057 = vmatmul.mubr.bf16.gmra.mxu0 %v6900
        %v8058 = vpop.f32.mrf.mxu0
        %v8059 = vadd.f32 0.0, %v8058
        %v8060 = vpop.f32.mrf.mxu0
        %v8061 = vpop.f32.mrf.mxu0
        %v8062 = vadd.f32 0.0, %v8061
        %v8063 = vpop.f32.mrf.mxu0
        %8064 = vmatprep.mubr.bf16.mxu0 0
        %8065 = vmatmul.mubr.bf16.gmra.mxu0 %v6902
        %v8066 = vpop.f32.mrf.mxu0
        %v8067 = vadd.f32 0.0, %v8066
        %v8068 = vpop.f32.mrf.mxu0
        %v8069 = vpop.f32.mrf.mxu0
        %v8070 = vadd.f32 0.0, %v8069
        %v8071 = vpop.f32.mrf.mxu0
        %8072 = vmatprep.mubr.bf16.mxu0 0
        %8073 = vmatmul.mubr.bf16.gmra.mxu0 %v6904
        %v8074 = vpop.f32.mrf.mxu0
        %v8075 = vadd.f32 0.0, %v8074
        %v8076 = vpop.f32.mrf.mxu0
        %v8077 = vpop.f32.mrf.mxu0
        %v8078 = vadd.f32 0.0, %v8077
        %v8079 = vpop.f32.mrf.mxu0
        %8080 = vmatprep.mubr.bf16.mxu0 0
        %8081 = vmatmul.mubr.bf16.gmra.mxu0 %v6906
        %v8082 = vpop.f32.mrf.mxu0
        %v8083 = vadd.f32 0.0, %v8082
        %v8084 = vpop.f32.mrf.mxu0
        %v8085 = vpop.f32.mrf.mxu0
        %v8086 = vadd.f32 0.0, %v8085
        %v8087 = vpop.f32.mrf.mxu0
        %8088 = vmatprep.mubr.bf16.mxu0 0
        %8089 = vmatmul.mubr.bf16.gmra.mxu0 %v6908
        %v8090 = vpop.f32.mrf.mxu0
        %v8091 = vadd.f32 0.0, %v8090
        %v8092 = vpop.f32.mrf.mxu0
        %v8093 = vpop.f32.mrf.mxu0
        %v8094 = vadd.f32 0.0, %v8093
        %v8095 = vpop.f32.mrf.mxu0
        %8096 = vmatprep.mubr.bf16.mxu0 0
        %8097 = vmatmul.mubr.bf16.gmra.mxu0 %v6910
        %v8098 = vpop.f32.mrf.mxu0
        %v8099 = vadd.f32 0.0, %v8098
        %v8100 = vpop.f32.mrf.mxu0
        %v8101 = vpop.f32.mrf.mxu0
        %v8102 = vadd.f32 0.0, %v8101
        %v8103 = vpop.f32.mrf.mxu0
        %8104 = vmatprep.mubr.bf16.mxu0 0
        %8105 = vmatmul.mubr.bf16.gmra.mxu0 %v6912
        %v8106 = vpop.f32.mrf.mxu0
        %v8107 = vadd.f32 0.0, %v8106
        %v8108 = vpop.f32.mrf.mxu0
        %v8109 = vpop.f32.mrf.mxu0
        %v8110 = vadd.f32 0.0, %v8109
        %v8111 = vpop.f32.mrf.mxu0
        %8112 = vmatprep.mubr.bf16.mxu0 0
        %8113 = vmatmul.mubr.bf16.gmra.mxu0 %v6914
        %v8114 = vpop.f32.mrf.mxu0
        %v8115 = vadd.f32 0.0, %v8114
        %v8116 = vpop.f32.mrf.mxu0
        %v8117 = vpop.f32.mrf.mxu0
        %v8118 = vadd.f32 0.0, %v8117
        %v8119 = vpop.f32.mrf.mxu0
        %8120 = vmatprep.mubr.bf16.mxu0 0
        %8121 = vmatmul.mubr.bf16.gmra.mxu0 %v6916
        %v8122 = vpop.f32.mrf.mxu0
        %v8123 = vadd.f32 0.0, %v8122
        %v8124 = vpop.f32.mrf.mxu0
        %v8125 = vpop.f32.mrf.mxu0
        %v8126 = vadd.f32 0.0, %v8125
        %v8127 = vpop.f32.mrf.mxu0
        %8128 = vmatprep.mubr.bf16.mxu0 0
        %8129 = vmatmul.mubr.bf16.gmra.mxu0 %v6918
        %v8130 = vpop.f32.mrf.mxu0
        %v8131 = vadd.f32 0.0, %v8130
        %v8132 = vpop.f32.mrf.mxu0
        %v8133 = vpop.f32.mrf.mxu0
        %v8134 = vadd.f32 0.0, %v8133
        %v8135 = vpop.f32.mrf.mxu0
        %8136 = vmatprep.mubr.bf16.mxu0 0
        %8137 = vmatmul.mubr.bf16.gmra.mxu0 %v6920
        %v8138 = vpop.f32.mrf.mxu0
        %v8139 = vadd.f32 0.0, %v8138
        %v8140 = vpop.f32.mrf.mxu0
        %v8141 = vpop.f32.mrf.mxu0
        %v8142 = vadd.f32 0.0, %v8141
        %v8143 = vpop.f32.mrf.mxu0
        %8144 = vmatprep.mubr.bf16.mxu0 0
        %8145 = vmatmul.mubr.bf16.gmra.mxu0 %v6922
        %v8146 = vpop.f32.mrf.mxu0
        %v8147 = vadd.f32 0.0, %v8146
        %v8148 = vpop.f32.mrf.mxu0
        %v8149 = vpop.f32.mrf.mxu0
        %v8150 = vadd.f32 0.0, %v8149
        %v8151 = vpop.f32.mrf.mxu0
        %8152 = vmatprep.mubr.bf16.mxu0 0
        %8153 = vmatmul.mubr.bf16.gmra.mxu0 %v6924
        %v8154 = vpop.f32.mrf.mxu0
        %v8155 = vadd.f32 0.0, %v8154
        %v8156 = vpop.f32.mrf.mxu0
        %v8157 = vpop.f32.mrf.mxu0
        %v8158 = vadd.f32 0.0, %v8157
        %v8159 = vpop.f32.mrf.mxu0
        %8160 = vmatprep.mubr.bf16.mxu0 0
        %8161 = vmatmul.mubr.bf16.gmra.mxu0 %v6926
        %v8162 = vpop.f32.mrf.mxu0
        %v8163 = vadd.f32 0.0, %v8162
        %v8164 = vpop.f32.mrf.mxu0
        %v8165 = vpop.f32.mrf.mxu0
        %v8166 = vadd.f32 0.0, %v8165
        %v8167 = vpop.f32.mrf.mxu0
        %8168 = vdwg.mxu0
        %v8169 = vadd.f32 %v7911, %v8043
        %v8170 = vadd.f32 %v7912, %v8046
        %v8171 = vadd.f32 %v7913, %v8051
        %v8172 = vadd.f32 %v7914, %v8054
        %v8173 = vadd.f32 %v7915, %v8059
        %v8174 = vadd.f32 %v7916, %v8062
        %v8175 = vadd.f32 %v7917, %v8067
        %v8176 = vadd.f32 %v7918, %v8070
        %v8177 = vadd.f32 %v7919, %v8075
        %v8178 = vadd.f32 %v7920, %v8078
        %v8179 = vadd.f32 %v7921, %v8083
        %v8180 = vadd.f32 %v7922, %v8086
        %v8181 = vadd.f32 %v7923, %v8091
        %v8182 = vadd.f32 %v7924, %v8094
        %v8183 = vadd.f32 %v7925, %v8099
        %v8184 = vadd.f32 %v7926, %v8102
        %v8185 = vadd.f32 %v7927, %v8107
        %v8186 = vadd.f32 %v7928, %v8110
        %v8187 = vadd.f32 %v7929, %v8115
        %v8188 = vadd.f32 %v7930, %v8118
        %v8189 = vadd.f32 %v7931, %v8123
        %v8190 = vadd.f32 %v7932, %v8126
        %v8191 = vadd.f32 %v7933, %v8131
        %v8192 = vadd.f32 %v7934, %v8134
        %v8193 = vadd.f32 %v7935, %v8139
        %v8194 = vadd.f32 %v7936, %v8142
        %v8195 = vadd.f32 %v7937, %v8147
        %v8196 = vadd.f32 %v7938, %v8150
        %v8197 = vadd.f32 %v7939, %v8155
        %v8198 = vadd.f32 %v7940, %v8158
        %v8199 = vadd.f32 %v7941, %v8163
        %v8200 = vadd.f32 %v7942, %v8166
        %s8201 = scalar_lea.vmem [#allocation2], 256
        %v8202 = vld [vmem:[%s8201] sm:$0xf]
        %v8203 = vld [vmem:[%s8201 + $0x4] sm:$0xf]
        %v8204 = vld [vmem:[%s8201 + $0x8] sm:$0xf]
        %v8205 = vld [vmem:[%s8201 + $0xc] sm:$0xf]
        %v8206 = vld [vmem:[%s8201 + $0x10] sm:$0xf]
        %v8207 = vld [vmem:[%s8201 + $0x14] sm:$0xf]
        %v8208 = vld [vmem:[%s8201 + $0x18] sm:$0xf]
        %v8209 = vld [vmem:[%s8201 + $0x1c] sm:$0xf]
        %v8210 = vld [vmem:[%s8201 + $0x20] sm:$0xf]
        %v8211 = vld [vmem:[%s8201 + $0x24] sm:$0xf]
        %v8212 = vld [vmem:[%s8201 + $0x28] sm:$0xf]
        %v8213 = vld [vmem:[%s8201 + $0x2c] sm:$0xf]
        %v8214 = vld [vmem:[%s8201 + $0x30] sm:$0xf]
        %v8215 = vld [vmem:[%s8201 + $0x34] sm:$0xf]
        %v8216 = vld [vmem:[%s8201 + $0x38] sm:$0xf]
        %v8217 = vld [vmem:[%s8201 + $0x3c] sm:$0xf]
        %v8219 = vshrl.u32 %v6926, 16
        %v8221 = vshll.u32 %v6926, 16
        %v8223 = vrot.slane %v8221, 1
        %v8224 = vor.u32 %v8219, %v8223
        %v8226 = vshll.u32 %v6927, 16
        %v8228 = vrot.slane %v8226, 1
        %v8229 = vsel %vm462, %v8224, %v8228
        %v8247 = vunpack.c.l.b16 %v8202
        %v8248 = vunpack.c.l.b16 %v8203
        %v8249 = vunpack.c.l.b16 %v8204
        %v8250 = vunpack.c.l.b16 %v8205
        %v8251 = vunpack.c.l.b16 %v8206
        %v8252 = vunpack.c.l.b16 %v8207
        %v8253 = vunpack.c.l.b16 %v8208
        %v8254 = vunpack.c.l.b16 %v8209
        %v8255 = vunpack.c.l.b16 %v8210
        %v8256 = vunpack.c.l.b16 %v8211
        %v8257 = vunpack.c.l.b16 %v8212
        %v8258 = vunpack.c.l.b16 %v8213
        %v8259 = vunpack.c.l.b16 %v8214
        %v8260 = vunpack.c.l.b16 %v8215
        %v8261 = vunpack.c.l.b16 %v8216
        %v8262 = vunpack.c.l.b16 %v8217
        %v8263 = vpack.c.b16 %v8248, %v8247
        %v8264 = vpack.c.b16 %v8250, %v8249
        %v8265 = vpack.c.b16 %v8252, %v8251
        %v8266 = vpack.c.b16 %v8254, %v8253
        %v8267 = vpack.c.b16 %v8256, %v8255
        %v8268 = vpack.c.b16 %v8258, %v8257
        %v8269 = vpack.c.b16 %v8260, %v8259
        %v8270 = vpack.c.b16 %v8262, %v8261
        %8279 = vmatprep.subr.bf16.mxu0 0
        %8280 = vmatpush1.bf16.msra.mxu0 %v8270
        %8281 = vmatprep.subr.bf16.mxu0 0
        %8282 = vmatpush1.bf16.msra.mxu0 %v8269
        %8283 = vmatprep.subr.bf16.mxu0 0
        %8284 = vmatpush1.bf16.msra.mxu0 %v8268
        %8285 = vmatprep.subr.bf16.mxu0 0
        %8286 = vmatpush1.bf16.msra.mxu0 %v8267
        %8287 = vmatprep.subr.bf16.mxu0 0
        %8288 = vmatpush1.bf16.msra.mxu0 %v8266
        %8289 = vmatprep.subr.bf16.mxu0 0
        %8290 = vmatpush1.bf16.msra.mxu0 %v8265
        %8291 = vmatprep.subr.bf16.mxu0 0
        %8292 = vmatpush1.bf16.msra.mxu0 %v8264
        %8293 = vmatprep.subr.bf16.mxu0 0
        %8294 = vmatpush1.bf16.msra.mxu0 %v8263
        %8295 = vmatprep.subr.bf16.mxu0 0
        %8296 = vmatpush2.bf16.msra.mxu0 0
        %8297 = vmatprep.subr.bf16.mxu0 0
        %8298 = vmatpush2.bf16.msra.mxu0 0
        %8299 = vmatprep.subr.bf16.mxu0 0
        %8300 = vmatpush2.bf16.msra.mxu0 0
        %8301 = vmatprep.subr.bf16.mxu0 0
        %8302 = vmatpush2.bf16.msra.mxu0 0
        %8303 = vmatprep.subr.bf16.mxu0 0
        %8304 = vmatpush2.bf16.msra.mxu0 0
        %8305 = vmatprep.subr.bf16.mxu0 0
        %8306 = vmatpush2.bf16.msra.mxu0 0
        %8307 = vmatprep.subr.bf16.mxu0 0
        %8308 = vmatpush2.bf16.msra.mxu0 0
        %8309 = vmatprep.subr.bf16.mxu0 0
        %8310 = vmatpush2.bf16.msra.mxu0 0
        %8311 = vmatprep.mubr.bf16.mxu0 0
        %8312 = vmatmul.mubr.bf16.gmra.mxu0 %v6986
        %v8313 = vpop.f32.mrf.mxu0
        %v8314 = vadd.f32 0.0, %v8313
        %v8315 = vpop.f32.mrf.mxu0
        %v8316 = vpop.f32.mrf.mxu0
        %v8317 = vadd.f32 0.0, %v8316
        %v8318 = vpop.f32.mrf.mxu0
        %8319 = vmatprep.mubr.bf16.mxu0 0
        %8320 = vmatmul.mubr.bf16.gmra.mxu0 %v6998
        %v8321 = vpop.f32.mrf.mxu0
        %v8322 = vadd.f32 0.0, %v8321
        %v8323 = vpop.f32.mrf.mxu0
        %v8324 = vpop.f32.mrf.mxu0
        %v8325 = vadd.f32 0.0, %v8324
        %v8326 = vpop.f32.mrf.mxu0
        %8327 = vmatprep.mubr.bf16.mxu0 0
        %8328 = vmatmul.mubr.bf16.gmra.mxu0 %v7010
        %v8329 = vpop.f32.mrf.mxu0
        %v8330 = vadd.f32 0.0, %v8329
        %v8331 = vpop.f32.mrf.mxu0
        %v8332 = vpop.f32.mrf.mxu0
        %v8333 = vadd.f32 0.0, %v8332
        %v8334 = vpop.f32.mrf.mxu0
        %8335 = vmatprep.mubr.bf16.mxu0 0
        %8336 = vmatmul.mubr.bf16.gmra.mxu0 %v7022
        %v8337 = vpop.f32.mrf.mxu0
        %v8338 = vadd.f32 0.0, %v8337
        %v8339 = vpop.f32.mrf.mxu0
        %v8340 = vpop.f32.mrf.mxu0
        %v8341 = vadd.f32 0.0, %v8340
        %v8342 = vpop.f32.mrf.mxu0
        %8343 = vmatprep.mubr.bf16.mxu0 0
        %8344 = vmatmul.mubr.bf16.gmra.mxu0 %v7034
        %v8345 = vpop.f32.mrf.mxu0
        %v8346 = vadd.f32 0.0, %v8345
        %v8347 = vpop.f32.mrf.mxu0
        %v8348 = vpop.f32.mrf.mxu0
        %v8349 = vadd.f32 0.0, %v8348
        %v8350 = vpop.f32.mrf.mxu0
        %8351 = vmatprep.mubr.bf16.mxu0 0
        %8352 = vmatmul.mubr.bf16.gmra.mxu0 %v7046
        %v8353 = vpop.f32.mrf.mxu0
        %v8354 = vadd.f32 0.0, %v8353
        %v8355 = vpop.f32.mrf.mxu0
        %v8356 = vpop.f32.mrf.mxu0
        %v8357 = vadd.f32 0.0, %v8356
        %v8358 = vpop.f32.mrf.mxu0
        %8359 = vmatprep.mubr.bf16.mxu0 0
        %8360 = vmatmul.mubr.bf16.gmra.mxu0 %v7058
        %v8361 = vpop.f32.mrf.mxu0
        %v8362 = vadd.f32 0.0, %v8361
        %v8363 = vpop.f32.mrf.mxu0
        %v8364 = vpop.f32.mrf.mxu0
        %v8365 = vadd.f32 0.0, %v8364
        %v8366 = vpop.f32.mrf.mxu0
        %8367 = vmatprep.mubr.bf16.mxu0 0
        %8368 = vmatmul.mubr.bf16.gmra.mxu0 %v7070
        %v8369 = vpop.f32.mrf.mxu0
        %v8370 = vadd.f32 0.0, %v8369
        %v8371 = vpop.f32.mrf.mxu0
        %v8372 = vpop.f32.mrf.mxu0
        %v8373 = vadd.f32 0.0, %v8372
        %v8374 = vpop.f32.mrf.mxu0
        %8375 = vmatprep.mubr.bf16.mxu0 0
        %8376 = vmatmul.mubr.bf16.gmra.mxu0 %v7082
        %v8377 = vpop.f32.mrf.mxu0
        %v8378 = vadd.f32 0.0, %v8377
        %v8379 = vpop.f32.mrf.mxu0
        %v8380 = vpop.f32.mrf.mxu0
        %v8381 = vadd.f32 0.0, %v8380
        %v8382 = vpop.f32.mrf.mxu0
        %8383 = vmatprep.mubr.bf16.mxu0 0
        %8384 = vmatmul.mubr.bf16.gmra.mxu0 %v7094
        %v8385 = vpop.f32.mrf.mxu0
        %v8386 = vadd.f32 0.0, %v8385
        %v8387 = vpop.f32.mrf.mxu0
        %v8388 = vpop.f32.mrf.mxu0
        %v8389 = vadd.f32 0.0, %v8388
        %v8390 = vpop.f32.mrf.mxu0
        %8391 = vmatprep.mubr.bf16.mxu0 0
        %8392 = vmatmul.mubr.bf16.gmra.mxu0 %v7106
        %v8393 = vpop.f32.mrf.mxu0
        %v8394 = vadd.f32 0.0, %v8393
        %v8395 = vpop.f32.mrf.mxu0
        %v8396 = vpop.f32.mrf.mxu0
        %v8397 = vadd.f32 0.0, %v8396
        %v8398 = vpop.f32.mrf.mxu0
        %8399 = vmatprep.mubr.bf16.mxu0 0
        %8400 = vmatmul.mubr.bf16.gmra.mxu0 %v7118
        %v8401 = vpop.f32.mrf.mxu0
        %v8402 = vadd.f32 0.0, %v8401
        %v8403 = vpop.f32.mrf.mxu0
        %v8404 = vpop.f32.mrf.mxu0
        %v8405 = vadd.f32 0.0, %v8404
        %v8406 = vpop.f32.mrf.mxu0
        %8407 = vmatprep.mubr.bf16.mxu0 0
        %8408 = vmatmul.mubr.bf16.gmra.mxu0 %v7130
        %v8409 = vpop.f32.mrf.mxu0
        %v8410 = vadd.f32 0.0, %v8409
        %v8411 = vpop.f32.mrf.mxu0
        %v8412 = vpop.f32.mrf.mxu0
        %v8413 = vadd.f32 0.0, %v8412
        %v8414 = vpop.f32.mrf.mxu0
        %8415 = vmatprep.mubr.bf16.mxu0 0
        %8416 = vmatmul.mubr.bf16.gmra.mxu0 %v7142
        %v8417 = vpop.f32.mrf.mxu0
        %v8418 = vadd.f32 0.0, %v8417
        %v8419 = vpop.f32.mrf.mxu0
        %v8420 = vpop.f32.mrf.mxu0
        %v8421 = vadd.f32 0.0, %v8420
        %v8422 = vpop.f32.mrf.mxu0
        %8423 = vmatprep.mubr.bf16.mxu0 0
        %8424 = vmatmul.mubr.bf16.gmra.mxu0 %v7154
        %v8425 = vpop.f32.mrf.mxu0
        %v8426 = vadd.f32 0.0, %v8425
        %v8427 = vpop.f32.mrf.mxu0
        %v8428 = vpop.f32.mrf.mxu0
        %v8429 = vadd.f32 0.0, %v8428
        %v8430 = vpop.f32.mrf.mxu0
        %8431 = vmatprep.mubr.bf16.mxu0 0
        %8432 = vmatmul.mubr.bf16.gmra.mxu0 %v8229
        %v8433 = vpop.f32.mrf.mxu0
        %v8434 = vadd.f32 0.0, %v8433
        %v8435 = vpop.f32.mrf.mxu0
        %v8436 = vpop.f32.mrf.mxu0
        %v8437 = vadd.f32 0.0, %v8436
        %v8438 = vpop.f32.mrf.mxu0
        %8439 = vdwg.mxu0
        %v8440 = vadd.f32 %v8169, %v8314
        %v8441 = vadd.f32 %v8170, %v8317
        %v8442 = vadd.f32 %v8171, %v8322
        %v8443 = vadd.f32 %v8172, %v8325
        %v8444 = vadd.f32 %v8173, %v8330
        %v8445 = vadd.f32 %v8174, %v8333
        %v8446 = vadd.f32 %v8175, %v8338
        %v8447 = vadd.f32 %v8176, %v8341
        %v8448 = vadd.f32 %v8177, %v8346
        %v8449 = vadd.f32 %v8178, %v8349
        %v8450 = vadd.f32 %v8179, %v8354
        %v8451 = vadd.f32 %v8180, %v8357
        %v8452 = vadd.f32 %v8181, %v8362
        %v8453 = vadd.f32 %v8182, %v8365
        %v8454 = vadd.f32 %v8183, %v8370
        %v8455 = vadd.f32 %v8184, %v8373
        %v8456 = vadd.f32 %v8185, %v8378
        %v8457 = vadd.f32 %v8186, %v8381
        %v8458 = vadd.f32 %v8187, %v8386
        %v8459 = vadd.f32 %v8188, %v8389
        %v8460 = vadd.f32 %v8189, %v8394
        %v8461 = vadd.f32 %v8190, %v8397
        %v8462 = vadd.f32 %v8191, %v8402
        %v8463 = vadd.f32 %v8192, %v8405
        %v8464 = vadd.f32 %v8193, %v8410
        %v8465 = vadd.f32 %v8194, %v8413
        %v8466 = vadd.f32 %v8195, %v8418
        %v8467 = vadd.f32 %v8196, %v8421
        %v8468 = vadd.f32 %v8197, %v8426
        %v8469 = vadd.f32 %v8198, %v8429
        %v8470 = vadd.f32 %v8199, %v8434
        %v8471 = vadd.f32 %v8200, %v8437
        %s8472 = scalar_lea.vmem [#allocation2], 320
        %v8473 = vld [vmem:[%s8472] sm:$0xf]
        %v8474 = vld [vmem:[%s8472 + $0x4] sm:$0xf]
        %v8475 = vld [vmem:[%s8472 + $0x8] sm:$0xf]
        %v8476 = vld [vmem:[%s8472 + $0xc] sm:$0xf]
        %v8477 = vld [vmem:[%s8472 + $0x10] sm:$0xf]
        %v8478 = vld [vmem:[%s8472 + $0x14] sm:$0xf]
        %v8479 = vld [vmem:[%s8472 + $0x18] sm:$0xf]
        %v8480 = vld [vmem:[%s8472 + $0x1c] sm:$0xf]
        %v8481 = vld [vmem:[%s8472 + $0x20] sm:$0xf]
        %v8482 = vld [vmem:[%s8472 + $0x24] sm:$0xf]
        %v8483 = vld [vmem:[%s8472 + $0x28] sm:$0xf]
        %v8484 = vld [vmem:[%s8472 + $0x2c] sm:$0xf]
        %v8485 = vld [vmem:[%s8472 + $0x30] sm:$0xf]
        %v8486 = vld [vmem:[%s8472 + $0x34] sm:$0xf]
        %v8487 = vld [vmem:[%s8472 + $0x38] sm:$0xf]
        %v8488 = vld [vmem:[%s8472 + $0x3c] sm:$0xf]
        %v8491 = vrot.slane %v6926, 1
        %v8492 = vrot.slane %v6927, 1
        %v8493 = vsel %vm805, %v8491, %v8492
        %v8511 = vunpack.c.l.b16 %v8473
        %v8512 = vunpack.c.l.b16 %v8474
        %v8513 = vunpack.c.l.b16 %v8475
        %v8514 = vunpack.c.l.b16 %v8476
        %v8515 = vunpack.c.l.b16 %v8477
        %v8516 = vunpack.c.l.b16 %v8478
        %v8517 = vunpack.c.l.b16 %v8479
        %v8518 = vunpack.c.l.b16 %v8480
        %v8519 = vunpack.c.l.b16 %v8481
        %v8520 = vunpack.c.l.b16 %v8482
        %v8521 = vunpack.c.l.b16 %v8483
        %v8522 = vunpack.c.l.b16 %v8484
        %v8523 = vunpack.c.l.b16 %v8485
        %v8524 = vunpack.c.l.b16 %v8486
        %v8525 = vunpack.c.l.b16 %v8487
        %v8526 = vunpack.c.l.b16 %v8488
        %v8527 = vpack.c.b16 %v8512, %v8511
        %v8528 = vpack.c.b16 %v8514, %v8513
        %v8529 = vpack.c.b16 %v8516, %v8515
        %v8530 = vpack.c.b16 %v8518, %v8517
        %v8531 = vpack.c.b16 %v8520, %v8519
        %v8532 = vpack.c.b16 %v8522, %v8521
        %v8533 = vpack.c.b16 %v8524, %v8523
        %v8534 = vpack.c.b16 %v8526, %v8525
        %8543 = vmatprep.subr.bf16.mxu0 0
        %8544 = vmatpush1.bf16.msra.mxu0 %v8534
        %8545 = vmatprep.subr.bf16.mxu0 0
        %8546 = vmatpush1.bf16.msra.mxu0 %v8533
        %8547 = vmatprep.subr.bf16.mxu0 0
        %8548 = vmatpush1.bf16.msra.mxu0 %v8532
        %8549 = vmatprep.subr.bf16.mxu0 0
        %8550 = vmatpush1.bf16.msra.mxu0 %v8531
        %8551 = vmatprep.subr.bf16.mxu0 0
        %8552 = vmatpush1.bf16.msra.mxu0 %v8530
        %8553 = vmatprep.subr.bf16.mxu0 0
        %8554 = vmatpush1.bf16.msra.mxu0 %v8529
        %8555 = vmatprep.subr.bf16.mxu0 0
        %8556 = vmatpush1.bf16.msra.mxu0 %v8528
        %8557 = vmatprep.subr.bf16.mxu0 0
        %8558 = vmatpush1.bf16.msra.mxu0 %v8527
        %8559 = vmatprep.subr.bf16.mxu0 0
        %8560 = vmatpush2.bf16.msra.mxu0 0
        %8561 = vmatprep.subr.bf16.mxu0 0
        %8562 = vmatpush2.bf16.msra.mxu0 0
        %8563 = vmatprep.subr.bf16.mxu0 0
        %8564 = vmatpush2.bf16.msra.mxu0 0
        %8565 = vmatprep.subr.bf16.mxu0 0
        %8566 = vmatpush2.bf16.msra.mxu0 0
        %8567 = vmatprep.subr.bf16.mxu0 0
        %8568 = vmatpush2.bf16.msra.mxu0 0
        %8569 = vmatprep.subr.bf16.mxu0 0
        %8570 = vmatpush2.bf16.msra.mxu0 0
        %8571 = vmatprep.subr.bf16.mxu0 0
        %8572 = vmatpush2.bf16.msra.mxu0 0
        %8573 = vmatprep.subr.bf16.mxu0 0
        %8574 = vmatpush2.bf16.msra.mxu0 0
        %8575 = vmatprep.mubr.bf16.mxu0 0
        %8576 = vmatmul.mubr.bf16.gmra.mxu0 %v7643
        %v8577 = vpop.f32.mrf.mxu0
        %v8578 = vadd.f32 0.0, %v8577
        %v8579 = vpop.f32.mrf.mxu0
        %v8580 = vpop.f32.mrf.mxu0
        %v8581 = vadd.f32 0.0, %v8580
        %v8582 = vpop.f32.mrf.mxu0
        %8583 = vmatprep.mubr.bf16.mxu0 0
        %8584 = vmatmul.mubr.bf16.gmra.mxu0 %v7646
        %v8585 = vpop.f32.mrf.mxu0
        %v8586 = vadd.f32 0.0, %v8585
        %v8587 = vpop.f32.mrf.mxu0
        %v8588 = vpop.f32.mrf.mxu0
        %v8589 = vadd.f32 0.0, %v8588
        %v8590 = vpop.f32.mrf.mxu0
        %8591 = vmatprep.mubr.bf16.mxu0 0
        %8592 = vmatmul.mubr.bf16.gmra.mxu0 %v7649
        %v8593 = vpop.f32.mrf.mxu0
        %v8594 = vadd.f32 0.0, %v8593
        %v8595 = vpop.f32.mrf.mxu0
        %v8596 = vpop.f32.mrf.mxu0
        %v8597 = vadd.f32 0.0, %v8596
        %v8598 = vpop.f32.mrf.mxu0
        %8599 = vmatprep.mubr.bf16.mxu0 0
        %8600 = vmatmul.mubr.bf16.gmra.mxu0 %v7652
        %v8601 = vpop.f32.mrf.mxu0
        %v8602 = vadd.f32 0.0, %v8601
        %v8603 = vpop.f32.mrf.mxu0
        %v8604 = vpop.f32.mrf.mxu0
        %v8605 = vadd.f32 0.0, %v8604
        %v8606 = vpop.f32.mrf.mxu0
        %8607 = vmatprep.mubr.bf16.mxu0 0
        %8608 = vmatmul.mubr.bf16.gmra.mxu0 %v7655
        %v8609 = vpop.f32.mrf.mxu0
        %v8610 = vadd.f32 0.0, %v8609
        %v8611 = vpop.f32.mrf.mxu0
        %v8612 = vpop.f32.mrf.mxu0
        %v8613 = vadd.f32 0.0, %v8612
        %v8614 = vpop.f32.mrf.mxu0
        %8615 = vmatprep.mubr.bf16.mxu0 0
        %8616 = vmatmul.mubr.bf16.gmra.mxu0 %v7658
        %v8617 = vpop.f32.mrf.mxu0
        %v8618 = vadd.f32 0.0, %v8617
        %v8619 = vpop.f32.mrf.mxu0
        %v8620 = vpop.f32.mrf.mxu0
        %v8621 = vadd.f32 0.0, %v8620
        %v8622 = vpop.f32.mrf.mxu0
        %8623 = vmatprep.mubr.bf16.mxu0 0
        %8624 = vmatmul.mubr.bf16.gmra.mxu0 %v7661
        %v8625 = vpop.f32.mrf.mxu0
        %v8626 = vadd.f32 0.0, %v8625
        %v8627 = vpop.f32.mrf.mxu0
        %v8628 = vpop.f32.mrf.mxu0
        %v8629 = vadd.f32 0.0, %v8628
        %v8630 = vpop.f32.mrf.mxu0
        %8631 = vmatprep.mubr.bf16.mxu0 0
        %8632 = vmatmul.mubr.bf16.gmra.mxu0 %v7664
        %v8633 = vpop.f32.mrf.mxu0
        %v8634 = vadd.f32 0.0, %v8633
        %v8635 = vpop.f32.mrf.mxu0
        %v8636 = vpop.f32.mrf.mxu0
        %v8637 = vadd.f32 0.0, %v8636
        %v8638 = vpop.f32.mrf.mxu0
        %8639 = vmatprep.mubr.bf16.mxu0 0
        %8640 = vmatmul.mubr.bf16.gmra.mxu0 %v7667
        %v8641 = vpop.f32.mrf.mxu0
        %v8642 = vadd.f32 0.0, %v8641
        %v8643 = vpop.f32.mrf.mxu0
        %v8644 = vpop.f32.mrf.mxu0
        %v8645 = vadd.f32 0.0, %v8644
        %v8646 = vpop.f32.mrf.mxu0
        %8647 = vmatprep.mubr.bf16.mxu0 0
        %8648 = vmatmul.mubr.bf16.gmra.mxu0 %v7670
        %v8649 = vpop.f32.mrf.mxu0
        %v8650 = vadd.f32 0.0, %v8649
        %v8651 = vpop.f32.mrf.mxu0
        %v8652 = vpop.f32.mrf.mxu0
        %v8653 = vadd.f32 0.0, %v8652
        %v8654 = vpop.f32.mrf.mxu0
        %8655 = vmatprep.mubr.bf16.mxu0 0
        %8656 = vmatmul.mubr.bf16.gmra.mxu0 %v7673
        %v8657 = vpop.f32.mrf.mxu0
        %v8658 = vadd.f32 0.0, %v8657
        %v8659 = vpop.f32.mrf.mxu0
        %v8660 = vpop.f32.mrf.mxu0
        %v8661 = vadd.f32 0.0, %v8660
        %v8662 = vpop.f32.mrf.mxu0
        %8663 = vmatprep.mubr.bf16.mxu0 0
        %8664 = vmatmul.mubr.bf16.gmra.mxu0 %v7676
        %v8665 = vpop.f32.mrf.mxu0
        %v8666 = vadd.f32 0.0, %v8665
        %v8667 = vpop.f32.mrf.mxu0
        %v8668 = vpop.f32.mrf.mxu0
        %v8669 = vadd.f32 0.0, %v8668
        %v8670 = vpop.f32.mrf.mxu0
        %8671 = vmatprep.mubr.bf16.mxu0 0
        %8672 = vmatmul.mubr.bf16.gmra.mxu0 %v7679
        %v8673 = vpop.f32.mrf.mxu0
        %v8674 = vadd.f32 0.0, %v8673
        %v8675 = vpop.f32.mrf.mxu0
        %v8676 = vpop.f32.mrf.mxu0
        %v8677 = vadd.f32 0.0, %v8676
        %v8678 = vpop.f32.mrf.mxu0
        %8679 = vmatprep.mubr.bf16.mxu0 0
        %8680 = vmatmul.mubr.bf16.gmra.mxu0 %v7682
        %v8681 = vpop.f32.mrf.mxu0
        %v8682 = vadd.f32 0.0, %v8681
        %v8683 = vpop.f32.mrf.mxu0
        %v8684 = vpop.f32.mrf.mxu0
        %v8685 = vadd.f32 0.0, %v8684
        %v8686 = vpop.f32.mrf.mxu0
        %8687 = vmatprep.mubr.bf16.mxu0 0
        %8688 = vmatmul.mubr.bf16.gmra.mxu0 %v7685
        %v8689 = vpop.f32.mrf.mxu0
        %v8690 = vadd.f32 0.0, %v8689
        %v8691 = vpop.f32.mrf.mxu0
        %v8692 = vpop.f32.mrf.mxu0
        %v8693 = vadd.f32 0.0, %v8692
        %v8694 = vpop.f32.mrf.mxu0
        %8695 = vmatprep.mubr.bf16.mxu0 0
        %8696 = vmatmul.mubr.bf16.gmra.mxu0 %v8493
        %v8697 = vpop.f32.mrf.mxu0
        %v8698 = vadd.f32 0.0, %v8697
        %v8699 = vpop.f32.mrf.mxu0
        %v8700 = vpop.f32.mrf.mxu0
        %v8701 = vadd.f32 0.0, %v8700
        %v8702 = vpop.f32.mrf.mxu0
        %8703 = vdwg.mxu0
        %v8704 = vadd.f32 %v8440, %v8578
        %v8705 = vadd.f32 %v8441, %v8581
        %v8706 = vadd.f32 %v8442, %v8586
        %v8707 = vadd.f32 %v8443, %v8589
        %v8708 = vadd.f32 %v8444, %v8594
        %v8709 = vadd.f32 %v8445, %v8597
        %v8710 = vadd.f32 %v8446, %v8602
        %v8711 = vadd.f32 %v8447, %v8605
        %v8712 = vadd.f32 %v8448, %v8610
        %v8713 = vadd.f32 %v8449, %v8613
        %v8714 = vadd.f32 %v8450, %v8618
        %v8715 = vadd.f32 %v8451, %v8621
        %v8716 = vadd.f32 %v8452, %v8626
        %v8717 = vadd.f32 %v8453, %v8629
        %v8718 = vadd.f32 %v8454, %v8634
        %v8719 = vadd.f32 %v8455, %v8637
        %v8720 = vadd.f32 %v8456, %v8642
        %v8721 = vadd.f32 %v8457, %v8645
        %v8722 = vadd.f32 %v8458, %v8650
        %v8723 = vadd.f32 %v8459, %v8653
        %v8724 = vadd.f32 %v8460, %v8658
        %v8725 = vadd.f32 %v8461, %v8661
        %v8726 = vadd.f32 %v8462, %v8666
        %v8727 = vadd.f32 %v8463, %v8669
        %v8728 = vadd.f32 %v8464, %v8674
        %v8729 = vadd.f32 %v8465, %v8677
        %v8730 = vadd.f32 %v8466, %v8682
        %v8731 = vadd.f32 %v8467, %v8685
        %v8732 = vadd.f32 %v8468, %v8690
        %v8733 = vadd.f32 %v8469, %v8693
        %v8734 = vadd.f32 %v8470, %v8698
        %v8735 = vadd.f32 %v8471, %v8701
        %s8736 = scalar_lea.vmem [#allocation2], 384
        %v8737 = vld [vmem:[%s8736] sm:$0xf]
        %v8738 = vld [vmem:[%s8736 + $0x4] sm:$0xf]
        %v8739 = vld [vmem:[%s8736 + $0x8] sm:$0xf]
        %v8740 = vld [vmem:[%s8736 + $0xc] sm:$0xf]
        %v8741 = vld [vmem:[%s8736 + $0x10] sm:$0xf]
        %v8742 = vld [vmem:[%s8736 + $0x14] sm:$0xf]
        %v8743 = vld [vmem:[%s8736 + $0x18] sm:$0xf]
        %v8744 = vld [vmem:[%s8736 + $0x1c] sm:$0xf]
        %v8745 = vld [vmem:[%s8736 + $0x20] sm:$0xf]
        %v8746 = vld [vmem:[%s8736 + $0x24] sm:$0xf]
        %v8747 = vld [vmem:[%s8736 + $0x28] sm:$0xf]
        %v8748 = vld [vmem:[%s8736 + $0x2c] sm:$0xf]
        %v8749 = vld [vmem:[%s8736 + $0x30] sm:$0xf]
        %v8750 = vld [vmem:[%s8736 + $0x34] sm:$0xf]
        %v8751 = vld [vmem:[%s8736 + $0x38] sm:$0xf]
        %v8752 = vld [vmem:[%s8736 + $0x3c] sm:$0xf]
        %v8769 = vunpack.c.l.b16 %v8737
        %v8770 = vunpack.c.l.b16 %v8738
        %v8771 = vunpack.c.l.b16 %v8739
        %v8772 = vunpack.c.l.b16 %v8740
        %v8773 = vunpack.c.l.b16 %v8741
        %v8774 = vunpack.c.l.b16 %v8742
        %v8775 = vunpack.c.l.b16 %v8743
        %v8776 = vunpack.c.l.b16 %v8744
        %v8777 = vunpack.c.l.b16 %v8745
        %v8778 = vunpack.c.l.b16 %v8746
        %v8779 = vunpack.c.l.b16 %v8747
        %v8780 = vunpack.c.l.b16 %v8748
        %v8781 = vunpack.c.l.b16 %v8749
        %v8782 = vunpack.c.l.b16 %v8750
        %v8783 = vunpack.c.l.b16 %v8751
        %v8784 = vunpack.c.l.b16 %v8752
        %v8785 = vpack.c.b16 %v8770, %v8769
        %v8786 = vpack.c.b16 %v8772, %v8771
        %v8787 = vpack.c.b16 %v8774, %v8773
        %v8788 = vpack.c.b16 %v8776, %v8775
        %v8789 = vpack.c.b16 %v8778, %v8777
        %v8790 = vpack.c.b16 %v8780, %v8779
        %v8791 = vpack.c.b16 %v8782, %v8781
        %v8792 = vpack.c.b16 %v8784, %v8783
        %8801 = vmatprep.subr.bf16.mxu0 0
        %8802 = vmatpush1.bf16.msra.mxu0 %v8792
        %8803 = vmatprep.subr.bf16.mxu0 0
        %8804 = vmatpush1.bf16.msra.mxu0 %v8791
        %8805 = vmatprep.subr.bf16.mxu0 0
        %8806 = vmatpush1.bf16.msra.mxu0 %v8790
        %8807 = vmatprep.subr.bf16.mxu0 0
        %8808 = vmatpush1.bf16.msra.mxu0 %v8789
        %8809 = vmatprep.subr.bf16.mxu0 0
        %8810 = vmatpush1.bf16.msra.mxu0 %v8788
        %8811 = vmatprep.subr.bf16.mxu0 0
        %8812 = vmatpush1.bf16.msra.mxu0 %v8787
        %8813 = vmatprep.subr.bf16.mxu0 0
        %8814 = vmatpush1.bf16.msra.mxu0 %v8786
        %8815 = vmatprep.subr.bf16.mxu0 0
        %8816 = vmatpush1.bf16.msra.mxu0 %v8785
        %8817 = vmatprep.subr.bf16.mxu0 0
        %8818 = vmatpush2.bf16.msra.mxu0 0
        %8819 = vmatprep.subr.bf16.mxu0 0
        %8820 = vmatpush2.bf16.msra.mxu0 0
        %8821 = vmatprep.subr.bf16.mxu0 0
        %8822 = vmatpush2.bf16.msra.mxu0 0
        %8823 = vmatprep.subr.bf16.mxu0 0
        %8824 = vmatpush2.bf16.msra.mxu0 0
        %8825 = vmatprep.subr.bf16.mxu0 0
        %8826 = vmatpush2.bf16.msra.mxu0 0
        %8827 = vmatprep.subr.bf16.mxu0 0
        %8828 = vmatpush2.bf16.msra.mxu0 0
        %8829 = vmatprep.subr.bf16.mxu0 0
        %8830 = vmatpush2.bf16.msra.mxu0 0
        %8831 = vmatprep.subr.bf16.mxu0 0
        %8832 = vmatpush2.bf16.msra.mxu0 0
        %8833 = vmatprep.mubr.bf16.mxu0 0
        %8834 = vmatmul.mubr.bf16.gmra.mxu0 %v6898
        %v8835 = vpop.f32.mrf.mxu0
        %v8836 = vadd.f32 0.0, %v8835
        %v8837 = vpop.f32.mrf.mxu0
        %v8838 = vpop.f32.mrf.mxu0
        %v8839 = vadd.f32 0.0, %v8838
        %v8840 = vpop.f32.mrf.mxu0
        %8841 = vmatprep.mubr.bf16.mxu0 0
        %8842 = vmatmul.mubr.bf16.gmra.mxu0 %v6900
        %v8843 = vpop.f32.mrf.mxu0
        %v8844 = vadd.f32 0.0, %v8843
        %v8845 = vpop.f32.mrf.mxu0
        %v8846 = vpop.f32.mrf.mxu0
        %v8847 = vadd.f32 0.0, %v8846
        %v8848 = vpop.f32.mrf.mxu0
        %8849 = vmatprep.mubr.bf16.mxu0 0
        %8850 = vmatmul.mubr.bf16.gmra.mxu0 %v6902
        %v8851 = vpop.f32.mrf.mxu0
        %v8852 = vadd.f32 0.0, %v8851
        %v8853 = vpop.f32.mrf.mxu0
        %v8854 = vpop.f32.mrf.mxu0
        %v8855 = vadd.f32 0.0, %v8854
        %v8856 = vpop.f32.mrf.mxu0
        %8857 = vmatprep.mubr.bf16.mxu0 0
        %8858 = vmatmul.mubr.bf16.gmra.mxu0 %v6904
        %v8859 = vpop.f32.mrf.mxu0
        %v8860 = vadd.f32 0.0, %v8859
        %v8861 = vpop.f32.mrf.mxu0
        %v8862 = vpop.f32.mrf.mxu0
        %v8863 = vadd.f32 0.0, %v8862
        %v8864 = vpop.f32.mrf.mxu0
        %8865 = vmatprep.mubr.bf16.mxu0 0
        %8866 = vmatmul.mubr.bf16.gmra.mxu0 %v6906
        %v8867 = vpop.f32.mrf.mxu0
        %v8868 = vadd.f32 0.0, %v8867
        %v8869 = vpop.f32.mrf.mxu0
        %v8870 = vpop.f32.mrf.mxu0
        %v8871 = vadd.f32 0.0, %v8870
        %v8872 = vpop.f32.mrf.mxu0
        %8873 = vmatprep.mubr.bf16.mxu0 0
        %8874 = vmatmul.mubr.bf16.gmra.mxu0 %v6908
        %v8875 = vpop.f32.mrf.mxu0
        %v8876 = vadd.f32 0.0, %v8875
        %v8877 = vpop.f32.mrf.mxu0
        %v8878 = vpop.f32.mrf.mxu0
        %v8879 = vadd.f32 0.0, %v8878
        %v8880 = vpop.f32.mrf.mxu0
        %8881 = vmatprep.mubr.bf16.mxu0 0
        %8882 = vmatmul.mubr.bf16.gmra.mxu0 %v6910
        %v8883 = vpop.f32.mrf.mxu0
        %v8884 = vadd.f32 0.0, %v8883
        %v8885 = vpop.f32.mrf.mxu0
        %v8886 = vpop.f32.mrf.mxu0
        %v8887 = vadd.f32 0.0, %v8886
        %v8888 = vpop.f32.mrf.mxu0
        %8889 = vmatprep.mubr.bf16.mxu0 0
        %8890 = vmatmul.mubr.bf16.gmra.mxu0 %v6912
        %v8891 = vpop.f32.mrf.mxu0
        %v8892 = vadd.f32 0.0, %v8891
        %v8893 = vpop.f32.mrf.mxu0
        %v8894 = vpop.f32.mrf.mxu0
        %v8895 = vadd.f32 0.0, %v8894
        %v8896 = vpop.f32.mrf.mxu0
        %8897 = vmatprep.mubr.bf16.mxu0 0
        %8898 = vmatmul.mubr.bf16.gmra.mxu0 %v6914
        %v8899 = vpop.f32.mrf.mxu0
        %v8900 = vadd.f32 0.0, %v8899
        %v8901 = vpop.f32.mrf.mxu0
        %v8902 = vpop.f32.mrf.mxu0
        %v8903 = vadd.f32 0.0, %v8902
        %v8904 = vpop.f32.mrf.mxu0
        %8905 = vmatprep.mubr.bf16.mxu0 0
        %8906 = vmatmul.mubr.bf16.gmra.mxu0 %v6916
        %v8907 = vpop.f32.mrf.mxu0
        %v8908 = vadd.f32 0.0, %v8907
        %v8909 = vpop.f32.mrf.mxu0
        %v8910 = vpop.f32.mrf.mxu0
        %v8911 = vadd.f32 0.0, %v8910
        %v8912 = vpop.f32.mrf.mxu0
        %8913 = vmatprep.mubr.bf16.mxu0 0
        %8914 = vmatmul.mubr.bf16.gmra.mxu0 %v6918
        %v8915 = vpop.f32.mrf.mxu0
        %v8916 = vadd.f32 0.0, %v8915
        %v8917 = vpop.f32.mrf.mxu0
        %v8918 = vpop.f32.mrf.mxu0
        %v8919 = vadd.f32 0.0, %v8918
        %v8920 = vpop.f32.mrf.mxu0
        %8921 = vmatprep.mubr.bf16.mxu0 0
        %8922 = vmatmul.mubr.bf16.gmra.mxu0 %v6920
        %v8923 = vpop.f32.mrf.mxu0
        %v8924 = vadd.f32 0.0, %v8923
        %v8925 = vpop.f32.mrf.mxu0
        %v8926 = vpop.f32.mrf.mxu0
        %v8927 = vadd.f32 0.0, %v8926
        %v8928 = vpop.f32.mrf.mxu0
        %8929 = vmatprep.mubr.bf16.mxu0 0
        %8930 = vmatmul.mubr.bf16.gmra.mxu0 %v6922
        %v8931 = vpop.f32.mrf.mxu0
        %v8932 = vadd.f32 0.0, %v8931
        %v8933 = vpop.f32.mrf.mxu0
        %v8934 = vpop.f32.mrf.mxu0
        %v8935 = vadd.f32 0.0, %v8934
        %v8936 = vpop.f32.mrf.mxu0
        %8937 = vmatprep.mubr.bf16.mxu0 0
        %8938 = vmatmul.mubr.bf16.gmra.mxu0 %v6924
        %v8939 = vpop.f32.mrf.mxu0
        %v8940 = vadd.f32 0.0, %v8939
        %v8941 = vpop.f32.mrf.mxu0
        %v8942 = vpop.f32.mrf.mxu0
        %v8943 = vadd.f32 0.0, %v8942
        %v8944 = vpop.f32.mrf.mxu0
        %8945 = vmatprep.mubr.bf16.mxu0 0
        %8946 = vmatmul.mubr.bf16.gmra.mxu0 %v6926
        %v8947 = vpop.f32.mrf.mxu0
        %v8948 = vadd.f32 0.0, %v8947
        %v8949 = vpop.f32.mrf.mxu0
        %v8950 = vpop.f32.mrf.mxu0
        %v8951 = vadd.f32 0.0, %v8950
        %v8952 = vpop.f32.mrf.mxu0
        %8953 = vmatprep.mubr.bf16.mxu0 0
        %8954 = vmatmul.mubr.bf16.gmra.mxu0 %v6928
        %v8955 = vpop.f32.mrf.mxu0
        %v8956 = vadd.f32 0.0, %v8955
        %v8957 = vpop.f32.mrf.mxu0
        %v8958 = vpop.f32.mrf.mxu0
        %v8959 = vadd.f32 0.0, %v8958
        %v8960 = vpop.f32.mrf.mxu0
        %8961 = vdwg.mxu0
        %v8962 = vadd.f32 %v8704, %v8836
        %v8963 = vadd.f32 %v8705, %v8839
        %v8964 = vadd.f32 %v8706, %v8844
        %v8965 = vadd.f32 %v8707, %v8847
        %v8966 = vadd.f32 %v8708, %v8852
        %v8967 = vadd.f32 %v8709, %v8855
        %v8968 = vadd.f32 %v8710, %v8860
        %v8969 = vadd.f32 %v8711, %v8863
        %v8970 = vadd.f32 %v8712, %v8868
        %v8971 = vadd.f32 %v8713, %v8871
        %v8972 = vadd.f32 %v8714, %v8876
        %v8973 = vadd.f32 %v8715, %v8879
        %v8974 = vadd.f32 %v8716, %v8884
        %v8975 = vadd.f32 %v8717, %v8887
        %v8976 = vadd.f32 %v8718, %v8892
        %v8977 = vadd.f32 %v8719, %v8895
        %v8978 = vadd.f32 %v8720, %v8900
        %v8979 = vadd.f32 %v8721, %v8903
        %v8980 = vadd.f32 %v8722, %v8908
        %v8981 = vadd.f32 %v8723, %v8911
        %v8982 = vadd.f32 %v8724, %v8916
        %v8983 = vadd.f32 %v8725, %v8919
        %v8984 = vadd.f32 %v8726, %v8924
        %v8985 = vadd.f32 %v8727, %v8927
        %v8986 = vadd.f32 %v8728, %v8932
        %v8987 = vadd.f32 %v8729, %v8935
        %v8988 = vadd.f32 %v8730, %v8940
        %v8989 = vadd.f32 %v8731, %v8943
        %v8990 = vadd.f32 %v8732, %v8948
        %v8991 = vadd.f32 %v8733, %v8951
        %v8992 = vadd.f32 %v8734, %v8956
        %v8993 = vadd.f32 %v8735, %v8959
        %s8994 = scalar_lea.vmem [#allocation2], 448
        %v8995 = vld [vmem:[%s8994] sm:$0xf]
        %v8996 = vld [vmem:[%s8994 + $0x4] sm:$0xf]
        %v8997 = vld [vmem:[%s8994 + $0x8] sm:$0xf]
        %v8998 = vld [vmem:[%s8994 + $0xc] sm:$0xf]
        %v8999 = vld [vmem:[%s8994 + $0x10] sm:$0xf]
        %v9000 = vld [vmem:[%s8994 + $0x14] sm:$0xf]
        %v9001 = vld [vmem:[%s8994 + $0x18] sm:$0xf]
        %v9002 = vld [vmem:[%s8994 + $0x1c] sm:$0xf]
        %v9003 = vld [vmem:[%s8994 + $0x20] sm:$0xf]
        %v9004 = vld [vmem:[%s8994 + $0x24] sm:$0xf]
        %v9005 = vld [vmem:[%s8994 + $0x28] sm:$0xf]
        %v9006 = vld [vmem:[%s8994 + $0x2c] sm:$0xf]
        %v9007 = vld [vmem:[%s8994 + $0x30] sm:$0xf]
        %v9008 = vld [vmem:[%s8994 + $0x34] sm:$0xf]
        %v9009 = vld [vmem:[%s8994 + $0x38] sm:$0xf]
        %v9010 = vld [vmem:[%s8994 + $0x3c] sm:$0xf]
        %v9012 = vshrl.u32 %v6928, 16
        %v9014 = vshll.u32 %v6928, 16
        %v9016 = vrot.slane %v9014, 1
        %v9017 = vor.u32 %v9012, %v9016
        %v9019 = vshll.u32 %v6929, 16
        %v9021 = vrot.slane %v9019, 1
        %v9022 = vsel %vm462, %v9017, %v9021
        %v9040 = vunpack.c.l.b16 %v8995
        %v9041 = vunpack.c.l.b16 %v8996
        %v9042 = vunpack.c.l.b16 %v8997
        %v9043 = vunpack.c.l.b16 %v8998
        %v9044 = vunpack.c.l.b16 %v8999
        %v9045 = vunpack.c.l.b16 %v9000
        %v9046 = vunpack.c.l.b16 %v9001
        %v9047 = vunpack.c.l.b16 %v9002
        %v9048 = vunpack.c.l.b16 %v9003
        %v9049 = vunpack.c.l.b16 %v9004
        %v9050 = vunpack.c.l.b16 %v9005
        %v9051 = vunpack.c.l.b16 %v9006
        %v9052 = vunpack.c.l.b16 %v9007
        %v9053 = vunpack.c.l.b16 %v9008
        %v9054 = vunpack.c.l.b16 %v9009
        %v9055 = vunpack.c.l.b16 %v9010
        %v9056 = vpack.c.b16 %v9041, %v9040
        %v9057 = vpack.c.b16 %v9043, %v9042
        %v9058 = vpack.c.b16 %v9045, %v9044
        %v9059 = vpack.c.b16 %v9047, %v9046
        %v9060 = vpack.c.b16 %v9049, %v9048
        %v9061 = vpack.c.b16 %v9051, %v9050
        %v9062 = vpack.c.b16 %v9053, %v9052
        %v9063 = vpack.c.b16 %v9055, %v9054
        %9072 = vmatprep.subr.bf16.mxu0 0
        %9073 = vmatpush1.bf16.msra.mxu0 %v9063
        %9074 = vmatprep.subr.bf16.mxu0 0
        %9075 = vmatpush1.bf16.msra.mxu0 %v9062
        %9076 = vmatprep.subr.bf16.mxu0 0
        %9077 = vmatpush1.bf16.msra.mxu0 %v9061
        %9078 = vmatprep.subr.bf16.mxu0 0
        %9079 = vmatpush1.bf16.msra.mxu0 %v9060
        %9080 = vmatprep.subr.bf16.mxu0 0
        %9081 = vmatpush1.bf16.msra.mxu0 %v9059
        %9082 = vmatprep.subr.bf16.mxu0 0
        %9083 = vmatpush1.bf16.msra.mxu0 %v9058
        %9084 = vmatprep.subr.bf16.mxu0 0
        %9085 = vmatpush1.bf16.msra.mxu0 %v9057
        %9086 = vmatprep.subr.bf16.mxu0 0
        %9087 = vmatpush1.bf16.msra.mxu0 %v9056
        %9088 = vmatprep.subr.bf16.mxu0 0
        %9089 = vmatpush2.bf16.msra.mxu0 0
        %9090 = vmatprep.subr.bf16.mxu0 0
        %9091 = vmatpush2.bf16.msra.mxu0 0
        %9092 = vmatprep.subr.bf16.mxu0 0
        %9093 = vmatpush2.bf16.msra.mxu0 0
        %9094 = vmatprep.subr.bf16.mxu0 0
        %9095 = vmatpush2.bf16.msra.mxu0 0
        %9096 = vmatprep.subr.bf16.mxu0 0
        %9097 = vmatpush2.bf16.msra.mxu0 0
        %9098 = vmatprep.subr.bf16.mxu0 0
        %9099 = vmatpush2.bf16.msra.mxu0 0
        %9100 = vmatprep.subr.bf16.mxu0 0
        %9101 = vmatpush2.bf16.msra.mxu0 0
        %9102 = vmatprep.subr.bf16.mxu0 0
        %9103 = vmatpush2.bf16.msra.mxu0 0
        %9104 = vmatprep.mubr.bf16.mxu0 0
        %9105 = vmatmul.mubr.bf16.gmra.mxu0 %v6998
        %v9106 = vpop.f32.mrf.mxu0
        %v9107 = vadd.f32 0.0, %v9106
        %v9108 = vpop.f32.mrf.mxu0
        %v9109 = vpop.f32.mrf.mxu0
        %v9110 = vadd.f32 0.0, %v9109
        %v9111 = vpop.f32.mrf.mxu0
        %9112 = vmatprep.mubr.bf16.mxu0 0
        %9113 = vmatmul.mubr.bf16.gmra.mxu0 %v7010
        %v9114 = vpop.f32.mrf.mxu0
        %v9115 = vadd.f32 0.0, %v9114
        %v9116 = vpop.f32.mrf.mxu0
        %v9117 = vpop.f32.mrf.mxu0
        %v9118 = vadd.f32 0.0, %v9117
        %v9119 = vpop.f32.mrf.mxu0
        %9120 = vmatprep.mubr.bf16.mxu0 0
        %9121 = vmatmul.mubr.bf16.gmra.mxu0 %v7022
        %v9122 = vpop.f32.mrf.mxu0
        %v9123 = vadd.f32 0.0, %v9122
        %v9124 = vpop.f32.mrf.mxu0
        %v9125 = vpop.f32.mrf.mxu0
        %v9126 = vadd.f32 0.0, %v9125
        %v9127 = vpop.f32.mrf.mxu0
        %9128 = vmatprep.mubr.bf16.mxu0 0
        %9129 = vmatmul.mubr.bf16.gmra.mxu0 %v7034
        %v9130 = vpop.f32.mrf.mxu0
        %v9131 = vadd.f32 0.0, %v9130
        %v9132 = vpop.f32.mrf.mxu0
        %v9133 = vpop.f32.mrf.mxu0
        %v9134 = vadd.f32 0.0, %v9133
        %v9135 = vpop.f32.mrf.mxu0
        %9136 = vmatprep.mubr.bf16.mxu0 0
        %9137 = vmatmul.mubr.bf16.gmra.mxu0 %v7046
        %v9138 = vpop.f32.mrf.mxu0
        %v9139 = vadd.f32 0.0, %v9138
        %v9140 = vpop.f32.mrf.mxu0
        %v9141 = vpop.f32.mrf.mxu0
        %v9142 = vadd.f32 0.0, %v9141
        %v9143 = vpop.f32.mrf.mxu0
        %9144 = vmatprep.mubr.bf16.mxu0 0
        %9145 = vmatmul.mubr.bf16.gmra.mxu0 %v7058
        %v9146 = vpop.f32.mrf.mxu0
        %v9147 = vadd.f32 0.0, %v9146
        %v9148 = vpop.f32.mrf.mxu0
        %v9149 = vpop.f32.mrf.mxu0
        %v9150 = vadd.f32 0.0, %v9149
        %v9151 = vpop.f32.mrf.mxu0
        %9152 = vmatprep.mubr.bf16.mxu0 0
        %9153 = vmatmul.mubr.bf16.gmra.mxu0 %v7070
        %v9154 = vpop.f32.mrf.mxu0
        %v9155 = vadd.f32 0.0, %v9154
        %v9156 = vpop.f32.mrf.mxu0
        %v9157 = vpop.f32.mrf.mxu0
        %v9158 = vadd.f32 0.0, %v9157
        %v9159 = vpop.f32.mrf.mxu0
        %9160 = vmatprep.mubr.bf16.mxu0 0
        %9161 = vmatmul.mubr.bf16.gmra.mxu0 %v7082
        %v9162 = vpop.f32.mrf.mxu0
        %v9163 = vadd.f32 0.0, %v9162
        %v9164 = vpop.f32.mrf.mxu0
        %v9165 = vpop.f32.mrf.mxu0
        %v9166 = vadd.f32 0.0, %v9165
        %v9167 = vpop.f32.mrf.mxu0
        %9168 = vmatprep.mubr.bf16.mxu0 0
        %9169 = vmatmul.mubr.bf16.gmra.mxu0 %v7094
        %v9170 = vpop.f32.mrf.mxu0
        %v9171 = vadd.f32 0.0, %v9170
        %v9172 = vpop.f32.mrf.mxu0
        %v9173 = vpop.f32.mrf.mxu0
        %v9174 = vadd.f32 0.0, %v9173
        %v9175 = vpop.f32.mrf.mxu0
        %9176 = vmatprep.mubr.bf16.mxu0 0
        %9177 = vmatmul.mubr.bf16.gmra.mxu0 %v7106
        %v9178 = vpop.f32.mrf.mxu0
        %v9179 = vadd.f32 0.0, %v9178
        %v9180 = vpop.f32.mrf.mxu0
        %v9181 = vpop.f32.mrf.mxu0
        %v9182 = vadd.f32 0.0, %v9181
        %v9183 = vpop.f32.mrf.mxu0
        %9184 = vmatprep.mubr.bf16.mxu0 0
        %9185 = vmatmul.mubr.bf16.gmra.mxu0 %v7118
        %v9186 = vpop.f32.mrf.mxu0
        %v9187 = vadd.f32 0.0, %v9186
        %v9188 = vpop.f32.mrf.mxu0
        %v9189 = vpop.f32.mrf.mxu0
        %v9190 = vadd.f32 0.0, %v9189
        %v9191 = vpop.f32.mrf.mxu0
        %9192 = vmatprep.mubr.bf16.mxu0 0
        %9193 = vmatmul.mubr.bf16.gmra.mxu0 %v7130
        %v9194 = vpop.f32.mrf.mxu0
        %v9195 = vadd.f32 0.0, %v9194
        %v9196 = vpop.f32.mrf.mxu0
        %v9197 = vpop.f32.mrf.mxu0
        %v9198 = vadd.f32 0.0, %v9197
        %v9199 = vpop.f32.mrf.mxu0
        %9200 = vmatprep.mubr.bf16.mxu0 0
        %9201 = vmatmul.mubr.bf16.gmra.mxu0 %v7142
        %v9202 = vpop.f32.mrf.mxu0
        %v9203 = vadd.f32 0.0, %v9202
        %v9204 = vpop.f32.mrf.mxu0
        %v9205 = vpop.f32.mrf.mxu0
        %v9206 = vadd.f32 0.0, %v9205
        %v9207 = vpop.f32.mrf.mxu0
        %9208 = vmatprep.mubr.bf16.mxu0 0
        %9209 = vmatmul.mubr.bf16.gmra.mxu0 %v7154
        %v9210 = vpop.f32.mrf.mxu0
        %v9211 = vadd.f32 0.0, %v9210
        %v9212 = vpop.f32.mrf.mxu0
        %v9213 = vpop.f32.mrf.mxu0
        %v9214 = vadd.f32 0.0, %v9213
        %v9215 = vpop.f32.mrf.mxu0
        %9216 = vmatprep.mubr.bf16.mxu0 0
        %9217 = vmatmul.mubr.bf16.gmra.mxu0 %v8229
        %v9218 = vpop.f32.mrf.mxu0
        %v9219 = vadd.f32 0.0, %v9218
        %v9220 = vpop.f32.mrf.mxu0
        %v9221 = vpop.f32.mrf.mxu0
        %v9222 = vadd.f32 0.0, %v9221
        %v9223 = vpop.f32.mrf.mxu0
        %9224 = vmatprep.mubr.bf16.mxu0 0
        %9225 = vmatmul.mubr.bf16.gmra.mxu0 %v9022
        %v9226 = vpop.f32.mrf.mxu0
        %v9227 = vadd.f32 0.0, %v9226
        %v9228 = vpop.f32.mrf.mxu0
        %v9229 = vpop.f32.mrf.mxu0
        %v9230 = vadd.f32 0.0, %v9229
        %v9231 = vpop.f32.mrf.mxu0
        %9232 = vdwg.mxu0
        %v9233 = vadd.f32 %v8962, %v9107
        %v9234 = vadd.f32 %v8963, %v9110
        %v9235 = vadd.f32 %v8964, %v9115
        %v9236 = vadd.f32 %v8965, %v9118
        %v9237 = vadd.f32 %v8966, %v9123
        %v9238 = vadd.f32 %v8967, %v9126
        %v9239 = vadd.f32 %v8968, %v9131
        %v9240 = vadd.f32 %v8969, %v9134
        %v9241 = vadd.f32 %v8970, %v9139
        %v9242 = vadd.f32 %v8971, %v9142
        %v9243 = vadd.f32 %v8972, %v9147
        %v9244 = vadd.f32 %v8973, %v9150
        %v9245 = vadd.f32 %v8974, %v9155
        %v9246 = vadd.f32 %v8975, %v9158
        %v9247 = vadd.f32 %v8976, %v9163
        %v9248 = vadd.f32 %v8977, %v9166
        %v9249 = vadd.f32 %v8978, %v9171
        %v9250 = vadd.f32 %v8979, %v9174
        %v9251 = vadd.f32 %v8980, %v9179
        %v9252 = vadd.f32 %v8981, %v9182
        %v9253 = vadd.f32 %v8982, %v9187
        %v9254 = vadd.f32 %v8983, %v9190
        %v9255 = vadd.f32 %v8984, %v9195
        %v9256 = vadd.f32 %v8985, %v9198
        %v9257 = vadd.f32 %v8986, %v9203
        %v9258 = vadd.f32 %v8987, %v9206
        %v9259 = vadd.f32 %v8988, %v9211
        %v9260 = vadd.f32 %v8989, %v9214
        %v9261 = vadd.f32 %v8990, %v9219
        %v9262 = vadd.f32 %v8991, %v9222
        %v9263 = vadd.f32 %v8992, %v9227
        %v9264 = vadd.f32 %v8993, %v9230
        %s9265 = scalar_lea.vmem [#allocation2], 512
        %v9266 = vld [vmem:[%s9265] sm:$0xf]
        %v9267 = vld [vmem:[%s9265 + $0x4] sm:$0xf]
        %v9268 = vld [vmem:[%s9265 + $0x8] sm:$0xf]
        %v9269 = vld [vmem:[%s9265 + $0xc] sm:$0xf]
        %v9270 = vld [vmem:[%s9265 + $0x10] sm:$0xf]
        %v9271 = vld [vmem:[%s9265 + $0x14] sm:$0xf]
        %v9272 = vld [vmem:[%s9265 + $0x18] sm:$0xf]
        %v9273 = vld [vmem:[%s9265 + $0x1c] sm:$0xf]
        %v9274 = vld [vmem:[%s9265 + $0x20] sm:$0xf]
        %v9275 = vld [vmem:[%s9265 + $0x24] sm:$0xf]
        %v9276 = vld [vmem:[%s9265 + $0x28] sm:$0xf]
        %v9277 = vld [vmem:[%s9265 + $0x2c] sm:$0xf]
        %v9278 = vld [vmem:[%s9265 + $0x30] sm:$0xf]
        %v9279 = vld [vmem:[%s9265 + $0x34] sm:$0xf]
        %v9280 = vld [vmem:[%s9265 + $0x38] sm:$0xf]
        %v9281 = vld [vmem:[%s9265 + $0x3c] sm:$0xf]
        %v9284 = vrot.slane %v6928, 1
        %v9285 = vrot.slane %v6929, 1
        %v9286 = vsel %vm805, %v9284, %v9285
        %v9304 = vunpack.c.l.b16 %v9266
        %v9305 = vunpack.c.l.b16 %v9267
        %v9306 = vunpack.c.l.b16 %v9268
        %v9307 = vunpack.c.l.b16 %v9269
        %v9308 = vunpack.c.l.b16 %v9270
        %v9309 = vunpack.c.l.b16 %v9271
        %v9310 = vunpack.c.l.b16 %v9272
        %v9311 = vunpack.c.l.b16 %v9273
        %v9312 = vunpack.c.l.b16 %v9274
        %v9313 = vunpack.c.l.b16 %v9275
        %v9314 = vunpack.c.l.b16 %v9276
        %v9315 = vunpack.c.l.b16 %v9277
        %v9316 = vunpack.c.l.b16 %v9278
        %v9317 = vunpack.c.l.b16 %v9279
        %v9318 = vunpack.c.l.b16 %v9280
        %v9319 = vunpack.c.l.b16 %v9281
        %v9320 = vpack.c.b16 %v9305, %v9304
        %v9321 = vpack.c.b16 %v9307, %v9306
        %v9322 = vpack.c.b16 %v9309, %v9308
        %v9323 = vpack.c.b16 %v9311, %v9310
        %v9324 = vpack.c.b16 %v9313, %v9312
        %v9325 = vpack.c.b16 %v9315, %v9314
        %v9326 = vpack.c.b16 %v9317, %v9316
        %v9327 = vpack.c.b16 %v9319, %v9318
        %9336 = vmatprep.subr.bf16.mxu0 0
        %9337 = vmatpush1.bf16.msra.mxu0 %v9327
        %9338 = vmatprep.subr.bf16.mxu0 0
        %9339 = vmatpush1.bf16.msra.mxu0 %v9326
        %9340 = vmatprep.subr.bf16.mxu0 0
        %9341 = vmatpush1.bf16.msra.mxu0 %v9325
        %9342 = vmatprep.subr.bf16.mxu0 0
        %9343 = vmatpush1.bf16.msra.mxu0 %v9324
        %9344 = vmatprep.subr.bf16.mxu0 0
        %9345 = vmatpush1.bf16.msra.mxu0 %v9323
        %9346 = vmatprep.subr.bf16.mxu0 0
        %9347 = vmatpush1.bf16.msra.mxu0 %v9322
        %9348 = vmatprep.subr.bf16.mxu0 0
        %9349 = vmatpush1.bf16.msra.mxu0 %v9321
        %9350 = vmatprep.subr.bf16.mxu0 0
        %9351 = vmatpush1.bf16.msra.mxu0 %v9320
        %9352 = vmatprep.subr.bf16.mxu0 0
        %9353 = vmatpush2.bf16.msra.mxu0 0
        %9354 = vmatprep.subr.bf16.mxu0 0
        %9355 = vmatpush2.bf16.msra.mxu0 0
        %9356 = vmatprep.subr.bf16.mxu0 0
        %9357 = vmatpush2.bf16.msra.mxu0 0
        %9358 = vmatprep.subr.bf16.mxu0 0
        %9359 = vmatpush2.bf16.msra.mxu0 0
        %9360 = vmatprep.subr.bf16.mxu0 0
        %9361 = vmatpush2.bf16.msra.mxu0 0
        %9362 = vmatprep.subr.bf16.mxu0 0
        %9363 = vmatpush2.bf16.msra.mxu0 0
        %9364 = vmatprep.subr.bf16.mxu0 0
        %9365 = vmatpush2.bf16.msra.mxu0 0
        %9366 = vmatprep.subr.bf16.mxu0 0
        %9367 = vmatpush2.bf16.msra.mxu0 0
        %9368 = vmatprep.mubr.bf16.mxu0 0
        %9369 = vmatmul.mubr.bf16.gmra.mxu0 %v7646
        %v9370 = vpop.f32.mrf.mxu0
        %v9371 = vadd.f32 0.0, %v9370
        %v9372 = vpop.f32.mrf.mxu0
        %v9373 = vpop.f32.mrf.mxu0
        %v9374 = vadd.f32 0.0, %v9373
        %v9375 = vpop.f32.mrf.mxu0
        %9376 = vmatprep.mubr.bf16.mxu0 0
        %9377 = vmatmul.mubr.bf16.gmra.mxu0 %v7649
        %v9378 = vpop.f32.mrf.mxu0
        %v9379 = vadd.f32 0.0, %v9378
        %v9380 = vpop.f32.mrf.mxu0
        %v9381 = vpop.f32.mrf.mxu0
        %v9382 = vadd.f32 0.0, %v9381
        %v9383 = vpop.f32.mrf.mxu0
        %9384 = vmatprep.mubr.bf16.mxu0 0
        %9385 = vmatmul.mubr.bf16.gmra.mxu0 %v7652
        %v9386 = vpop.f32.mrf.mxu0
        %v9387 = vadd.f32 0.0, %v9386
        %v9388 = vpop.f32.mrf.mxu0
        %v9389 = vpop.f32.mrf.mxu0
        %v9390 = vadd.f32 0.0, %v9389
        %v9391 = vpop.f32.mrf.mxu0
        %9392 = vmatprep.mubr.bf16.mxu0 0
        %9393 = vmatmul.mubr.bf16.gmra.mxu0 %v7655
        %v9394 = vpop.f32.mrf.mxu0
        %v9395 = vadd.f32 0.0, %v9394
        %v9396 = vpop.f32.mrf.mxu0
        %v9397 = vpop.f32.mrf.mxu0
        %v9398 = vadd.f32 0.0, %v9397
        %v9399 = vpop.f32.mrf.mxu0
        %9400 = vmatprep.mubr.bf16.mxu0 0
        %9401 = vmatmul.mubr.bf16.gmra.mxu0 %v7658
        %v9402 = vpop.f32.mrf.mxu0
        %v9403 = vadd.f32 0.0, %v9402
        %v9404 = vpop.f32.mrf.mxu0
        %v9405 = vpop.f32.mrf.mxu0
        %v9406 = vadd.f32 0.0, %v9405
        %v9407 = vpop.f32.mrf.mxu0
        %9408 = vmatprep.mubr.bf16.mxu0 0
        %9409 = vmatmul.mubr.bf16.gmra.mxu0 %v7661
        %v9410 = vpop.f32.mrf.mxu0
        %v9411 = vadd.f32 0.0, %v9410
        %v9412 = vpop.f32.mrf.mxu0
        %v9413 = vpop.f32.mrf.mxu0
        %v9414 = vadd.f32 0.0, %v9413
        %v9415 = vpop.f32.mrf.mxu0
        %9416 = vmatprep.mubr.bf16.mxu0 0
        %9417 = vmatmul.mubr.bf16.gmra.mxu0 %v7664
        %v9418 = vpop.f32.mrf.mxu0
        %v9419 = vadd.f32 0.0, %v9418
        %v9420 = vpop.f32.mrf.mxu0
        %v9421 = vpop.f32.mrf.mxu0
        %v9422 = vadd.f32 0.0, %v9421
        %v9423 = vpop.f32.mrf.mxu0
        %9424 = vmatprep.mubr.bf16.mxu0 0
        %9425 = vmatmul.mubr.bf16.gmra.mxu0 %v7667
        %v9426 = vpop.f32.mrf.mxu0
        %v9427 = vadd.f32 0.0, %v9426
        %v9428 = vpop.f32.mrf.mxu0
        %v9429 = vpop.f32.mrf.mxu0
        %v9430 = vadd.f32 0.0, %v9429
        %v9431 = vpop.f32.mrf.mxu0
        %9432 = vmatprep.mubr.bf16.mxu0 0
        %9433 = vmatmul.mubr.bf16.gmra.mxu0 %v7670
        %v9434 = vpop.f32.mrf.mxu0
        %v9435 = vadd.f32 0.0, %v9434
        %v9436 = vpop.f32.mrf.mxu0
        %v9437 = vpop.f32.mrf.mxu0
        %v9438 = vadd.f32 0.0, %v9437
        %v9439 = vpop.f32.mrf.mxu0
        %9440 = vmatprep.mubr.bf16.mxu0 0
        %9441 = vmatmul.mubr.bf16.gmra.mxu0 %v7673
        %v9442 = vpop.f32.mrf.mxu0
        %v9443 = vadd.f32 0.0, %v9442
        %v9444 = vpop.f32.mrf.mxu0
        %v9445 = vpop.f32.mrf.mxu0
        %v9446 = vadd.f32 0.0, %v9445
        %v9447 = vpop.f32.mrf.mxu0
        %9448 = vmatprep.mubr.bf16.mxu0 0
        %9449 = vmatmul.mubr.bf16.gmra.mxu0 %v7676
        %v9450 = vpop.f32.mrf.mxu0
        %v9451 = vadd.f32 0.0, %v9450
        %v9452 = vpop.f32.mrf.mxu0
        %v9453 = vpop.f32.mrf.mxu0
        %v9454 = vadd.f32 0.0, %v9453
        %v9455 = vpop.f32.mrf.mxu0
        %9456 = vmatprep.mubr.bf16.mxu0 0
        %9457 = vmatmul.mubr.bf16.gmra.mxu0 %v7679
        %v9458 = vpop.f32.mrf.mxu0
        %v9459 = vadd.f32 0.0, %v9458
        %v9460 = vpop.f32.mrf.mxu0
        %v9461 = vpop.f32.mrf.mxu0
        %v9462 = vadd.f32 0.0, %v9461
        %v9463 = vpop.f32.mrf.mxu0
        %9464 = vmatprep.mubr.bf16.mxu0 0
        %9465 = vmatmul.mubr.bf16.gmra.mxu0 %v7682
        %v9466 = vpop.f32.mrf.mxu0
        %v9467 = vadd.f32 0.0, %v9466
        %v9468 = vpop.f32.mrf.mxu0
        %v9469 = vpop.f32.mrf.mxu0
        %v9470 = vadd.f32 0.0, %v9469
        %v9471 = vpop.f32.mrf.mxu0
        %9472 = vmatprep.mubr.bf16.mxu0 0
        %9473 = vmatmul.mubr.bf16.gmra.mxu0 %v7685
        %v9474 = vpop.f32.mrf.mxu0
        %v9475 = vadd.f32 0.0, %v9474
        %v9476 = vpop.f32.mrf.mxu0
        %v9477 = vpop.f32.mrf.mxu0
        %v9478 = vadd.f32 0.0, %v9477
        %v9479 = vpop.f32.mrf.mxu0
        %9480 = vmatprep.mubr.bf16.mxu0 0
        %9481 = vmatmul.mubr.bf16.gmra.mxu0 %v8493
        %v9482 = vpop.f32.mrf.mxu0
        %v9483 = vadd.f32 0.0, %v9482
        %v9484 = vpop.f32.mrf.mxu0
        %v9485 = vpop.f32.mrf.mxu0
        %v9486 = vadd.f32 0.0, %v9485
        %v9487 = vpop.f32.mrf.mxu0
        %9488 = vmatprep.mubr.bf16.mxu0 0
        %9489 = vmatmul.mubr.bf16.gmra.mxu0 %v9286
        %v9490 = vpop.f32.mrf.mxu0
        %v9491 = vadd.f32 0.0, %v9490
        %v9492 = vpop.f32.mrf.mxu0
        %v9493 = vpop.f32.mrf.mxu0
        %v9494 = vadd.f32 0.0, %v9493
        %v9495 = vpop.f32.mrf.mxu0
        %9496 = vdwg.mxu0
        %v9497 = vadd.f32 %v9233, %v9371
        %v9498 = vadd.f32 %v9234, %v9374
        %v9499 = vadd.f32 %v9235, %v9379
        %v9500 = vadd.f32 %v9236, %v9382
        %v9501 = vadd.f32 %v9237, %v9387
        %v9502 = vadd.f32 %v9238, %v9390
        %v9503 = vadd.f32 %v9239, %v9395
        %v9504 = vadd.f32 %v9240, %v9398
        %v9505 = vadd.f32 %v9241, %v9403
        %v9506 = vadd.f32 %v9242, %v9406
        %v9507 = vadd.f32 %v9243, %v9411
        %v9508 = vadd.f32 %v9244, %v9414
        %v9509 = vadd.f32 %v9245, %v9419
        %v9510 = vadd.f32 %v9246, %v9422
        %v9511 = vadd.f32 %v9247, %v9427
        %v9512 = vadd.f32 %v9248, %v9430
        %v9513 = vadd.f32 %v9249, %v9435
        %v9514 = vadd.f32 %v9250, %v9438
        %v9515 = vadd.f32 %v9251, %v9443
        %v9516 = vadd.f32 %v9252, %v9446
        %v9517 = vadd.f32 %v9253, %v9451
        %v9518 = vadd.f32 %v9254, %v9454
        %v9519 = vadd.f32 %v9255, %v9459
        %v9520 = vadd.f32 %v9256, %v9462
        %v9521 = vadd.f32 %v9257, %v9467
        %v9522 = vadd.f32 %v9258, %v9470
        %v9523 = vadd.f32 %v9259, %v9475
        %v9524 = vadd.f32 %v9260, %v9478
        %v9525 = vadd.f32 %v9261, %v9483
        %v9526 = vadd.f32 %v9262, %v9486
        %v9527 = vadd.f32 %v9263, %v9491
        %v9528 = vadd.f32 %v9264, %v9494
        %v9529 = vld [vmem:[%s4] sm:$0x1]
        %v9531 = vlaneseq
        %v9532 = vshrl.u32 %v9531, 7
        %v9533 = vsub.s32 0, %v9532
        %v9534 = vrot.slane %v9529, %v9533
        %v9536 = vadd.f32 %v9497, %v9534
        %v9537 = vadd.f32 %v9498, %v9534
        %v9538 = vadd.f32 %v9499, %v9534
        %v9539 = vadd.f32 %v9500, %v9534
        %v9540 = vadd.f32 %v9501, %v9534
        %v9541 = vadd.f32 %v9502, %v9534
        %v9542 = vadd.f32 %v9503, %v9534
        %v9543 = vadd.f32 %v9504, %v9534
        %v9544 = vadd.f32 %v9505, %v9534
        %v9545 = vadd.f32 %v9506, %v9534
        %v9546 = vadd.f32 %v9507, %v9534
        %v9547 = vadd.f32 %v9508, %v9534
        %v9548 = vadd.f32 %v9509, %v9534
        %v9549 = vadd.f32 %v9510, %v9534
        %v9550 = vadd.f32 %v9511, %v9534
        %v9551 = vadd.f32 %v9512, %v9534
        %v9552 = vadd.f32 %v9513, %v9534
        %v9553 = vadd.f32 %v9514, %v9534
        %v9554 = vadd.f32 %v9515, %v9534
        %v9555 = vadd.f32 %v9516, %v9534
        %v9556 = vadd.f32 %v9517, %v9534
        %v9557 = vadd.f32 %v9518, %v9534
        %v9558 = vadd.f32 %v9519, %v9534
        %v9559 = vadd.f32 %v9520, %v9534
        %v9560 = vadd.f32 %v9521, %v9534
        %v9561 = vadd.f32 %v9522, %v9534
        %v9562 = vadd.f32 %v9523, %v9534
        %v9563 = vadd.f32 %v9524, %v9534
        %v9564 = vadd.f32 %v9525, %v9534
        %v9565 = vadd.f32 %v9526, %v9534
        %v9566 = vadd.f32 %v9527, %v9534
        %v9567 = vadd.f32 %v9528, %v9534
        %v9568 = vmax.f32 %v9536, 0.0
        %v9569 = vmax.f32 %v9537, 0.0
        %v9570 = vmax.f32 %v9538, 0.0
        %v9571 = vmax.f32 %v9539, 0.0
        %v9572 = vmax.f32 %v9540, 0.0
        %v9573 = vmax.f32 %v9541, 0.0
        %v9574 = vmax.f32 %v9542, 0.0
        %v9575 = vmax.f32 %v9543, 0.0
        %v9576 = vmax.f32 %v9544, 0.0
        %v9577 = vmax.f32 %v9545, 0.0
        %v9578 = vmax.f32 %v9546, 0.0
        %v9579 = vmax.f32 %v9547, 0.0
        %v9580 = vmax.f32 %v9548, 0.0
        %v9581 = vmax.f32 %v9549, 0.0
        %v9582 = vmax.f32 %v9550, 0.0
        %v9583 = vmax.f32 %v9551, 0.0
        %v9584 = vmax.f32 %v9552, 0.0
        %v9585 = vmax.f32 %v9553, 0.0
        %v9586 = vmax.f32 %v9554, 0.0
        %v9587 = vmax.f32 %v9555, 0.0
        %v9588 = vmax.f32 %v9556, 0.0
        %v9589 = vmax.f32 %v9557, 0.0
        %v9590 = vmax.f32 %v9558, 0.0
        %v9591 = vmax.f32 %v9559, 0.0
        %v9592 = vmax.f32 %v9560, 0.0
        %v9593 = vmax.f32 %v9561, 0.0
        %v9594 = vmax.f32 %v9562, 0.0
        %v9595 = vmax.f32 %v9563, 0.0
        %v9596 = vmax.f32 %v9564, 0.0
        %v9597 = vmax.f32 %v9565, 0.0
        %v9598 = vmax.f32 %v9566, 0.0
        %v9599 = vmax.f32 %v9567, 0.0
        %9600 = vst [vmem:[%s246] sm:$0xff] %v9568
        %9601 = vst [vmem:[%s246 + $0x8] sm:$0xff] %v9569
        %9602 = vst [vmem:[%s246 + $0x10] sm:$0xff] %v9570
        %9603 = vst [vmem:[%s246 + $0x18] sm:$0xff] %v9571
        %9604 = vst [vmem:[%s246 + $0x20] sm:$0xff] %v9572
        %9605 = vst [vmem:[%s246 + $0x28] sm:$0xff] %v9573
        %9606 = vst [vmem:[%s246 + $0x30] sm:$0xff] %v9574
        %9607 = vst [vmem:[%s246 + $0x38] sm:$0xff] %v9575
        %9608 = vst [vmem:[%s246 + $0x40] sm:$0xff] %v9576
        %9609 = vst [vmem:[%s246 + $0x48] sm:$0xff] %v9577
        %9610 = vst [vmem:[%s246 + $0x50] sm:$0xff] %v9578
        %9611 = vst [vmem:[%s246 + $0x58] sm:$0xff] %v9579
        %9612 = vst [vmem:[%s246 + $0x60] sm:$0xff] %v9580
        %9613 = vst [vmem:[%s246 + $0x68] sm:$0xff] %v9581
        %9614 = vst [vmem:[%s246 + $0x70] sm:$0xff] %v9582
        %9615 = vst [vmem:[%s246 + $0x78] sm:$0xff] %v9583
        %9616 = vst [vmem:[%s246 + $0x80] sm:$0xff] %v9584
        %9617 = vst [vmem:[%s246 + $0x88] sm:$0xff] %v9585
        %9618 = vst [vmem:[%s246 + $0x90] sm:$0xff] %v9586
        %9619 = vst [vmem:[%s246 + $0x98] sm:$0xff] %v9587
        %9620 = vst [vmem:[%s246 + $0xa0] sm:$0xff] %v9588
        %9621 = vst [vmem:[%s246 + $0xa8] sm:$0xff] %v9589
        %9622 = vst [vmem:[%s246 + $0xb0] sm:$0xff] %v9590
        %9623 = vst [vmem:[%s246 + $0xb8] sm:$0xff] %v9591
        %9624 = vst [vmem:[%s246 + $0xc0] sm:$0xff] %v9592
        %9625 = vst [vmem:[%s246 + $0xc8] sm:$0xff] %v9593
        %9626 = vst [vmem:[%s246 + $0xd0] sm:$0xff] %v9594
        %9627 = vst [vmem:[%s246 + $0xd8] sm:$0xff] %v9595
        %9628 = vst [vmem:[%s246 + $0xe0] sm:$0xff] %v9596
        %9629 = vst [vmem:[%s246 + $0xe8] sm:$0xff] %v9597
        %9630 = vst [vmem:[%s246 + $0xf0] sm:$0xff] %v9598
        %9631 = vst [vmem:[%s246 + $0xf8] sm:$0xff] %v9599
        %s9632 = sand.u32 %s152, 1
        %s9633 = scalar_lea.sflag [#allocation4], %s9632
        %s9634 = sand.u32 %s152, 1
        %s9635 = smul.addr %s9634, 256
        %s9636 = scalar_lea.vmem [#allocation5], %s9635
        // Predicated region
        $region45: #{tpu_custom_call.1} parent=39 // pred_check
          %p9637 = pneg %p162
        $region46: #{tpu_custom_call.1} parent=39 // pred_check_branch
          %9639 = sbr.rel (%p9637) target = $region48
        $region47: #{tpu_custom_call.1} parent=39 // pred_region
          %s9640 = smul.u32 16, %s25
          %s9642 = ssub.s32 4096, 4096
          %9643 = vsyncadd %s9633, %s9642
          %s9644 = smul.addr %s9640, 2
          %s9645 = smul.addr %s24, 32
          %s9646 = sadd.s32 %s9644, %s9645
          %s9647 = smul.addr %s9646, 128
          %s9648 = scalar_lea.hbm %s5, %s9647
          %s9649 = sshll.u32 %s9636, 4
          %s9650 = int_to_ptr.vmem [resolvable:$true] %s9649
          %9655 = dma.vmem_to_hbm [thread:$0]  %s9650, 4096, %s9648, %s9633, 128, 128, 8
        $region48: #{tpu_custom_call.1} parent=39 // pred_fallthru
          _
      $region40: #{tpu_custom_call.1} parent=5 // pred_fallthru
        _
      %p9656 = scmp.le.s32.totalorder 2, %s15
      // Predicated region
      $region49: #{tpu_custom_call.1} parent=5 // pred_check
        %p9657 = pneg %p9656
      $region50: #{tpu_custom_call.1} parent=5 // pred_check_branch
        %9659 = sbr.rel (%p9657) target = $region52
      $region51: #{tpu_custom_call.1} parent=5 // pred_region
        %s9660 = ssub.s32 %s15, 2
        // Predicated region
        $region53: #{tpu_custom_call.1} parent=51 // pred_check
          %p9661 = pneg %p168
        $region54: #{tpu_custom_call.1} parent=51 // pred_check_branch
          %9663 = sbr.rel (%p9661) target = $region56
        $region55: #{tpu_custom_call.1} parent=51 // pred_region
          %s9664 = sand.u32 %s153, 1
          %s9665 = scalar_lea.sflag [#allocation4], %s9664
          %s9666 = sand.u32 %s153, 1
          %s9667 = smul.addr %s9666, 256
          %s9668 = scalar_lea.vmem [#allocation5], %s9667
          %9669 = dma.done %s9665, 4096
        $region56: #{tpu_custom_call.1} parent=51 // pred_fallthru
          _
      $region52: #{tpu_custom_call.1} parent=5 // pred_fallthru
        _
    $region6: #{tpu_custom_call.1} parent=1 // loop_footer
      %s19 = sadd.s32 1, %s15
    $region7: #{tpu_custom_call.1} parent=1 // loop_footer_branch
      %14 = sbr.rel target = $region3
    $region8: #{tpu_custom_call.1} parent=1 // loop_exit
      _
    %9670 = vsyncpa [#allocation3], 1
    %s9671 = scalar_lea.sflag [#allocation3], 1
    %9672 = vsyncpa %s9671, 1
    %9673 = vsyncpa [#allocation4], 1
    %s9674 = scalar_lea.sflag [#allocation4], 1
    %9675 = vsyncpa %s9674, 1

</llo_original>
